<compile_context>
chip_gen: v6e
topology: v6e:2x2x1
jax: 0.10.0
libtpu: 0.0.40
codegen_flags: <defaults>
</compile_context>

<pallas_src>
import functools

import jax
import jax.numpy as jnp
from jax import lax
from jax.experimental import pallas as pl
from jax.experimental.pallas import tpu as pltpu


# ----------------------------------------------------------------------------
# Kernel: dilated 3x3 conv (stride 1, pre-padded input) + folded-BN affine + ReLU.
# One grid step handles one batch element and one TCO-wide slice of Cout.
# ----------------------------------------------------------------------------
def _dilated_conv_bn_relu_kernel(x_ref, w_ref, affine_ref, o_ref,
                                 acc_ref, xw_ref, *, dil, ksize):
    # x_ref:      (1, Hp, Wp, Cin)  bf16, zero-padded input, one batch element
    # w_ref:      (k*k, Cin, TCO)   bf16, weight slab for this Cout tile
    # affine_ref: (2, TCO)          f32, row0 = folded BN scale, row1 = folded BN shift
    # o_ref:      (1, Ho*Wo, TCO)   bf16, flattened output tile (lane-dense)
    # acc_ref:    (Ho*Wo, TCO)      f32 VMEM accumulator (keeps the big acc out of vregs)
    # xw_ref:     (Hp*Wo, Cin)      bf16 VMEM slab: input shifted by kw*dil along W, flattened
    _, Hp, Wp, Cin = x_ref.shape
    _, M, tco = o_ref.shape
    Wo = Wp - dil * (ksize - 1)

    first = True
    for kw in range(ksize):
        # One paid sublane-shift relayout per kw (3 total instead of 9): slice the W axis
        # once and flatten (Hp, Wo, Cin) -> (Hp*Wo, Cin).  The flatten keeps the lane dim
        # (Cin) minor, so it is a free re-label.
        xw_ref[...] = x_ref[0, :, pl.ds(kw * dil, Wo), :].reshape(Hp * Wo, Cin)
        for kh in range(ksize):
            # kh taps are cheap, aligned major-axis row windows of the flattened slab.
            r0 = kh * dil * Wo
            patch = xw_ref[r0:r0 + M, :]                                # (M, Cin) bf16
            contrib = jnp.dot(patch, w_ref[kh * ksize + kw],
                              preferred_element_type=jnp.float32)       # (M, TCO) f32
            if first:
                acc_ref[...] = contrib                                  # no zero-init store
                first = False
            else:
                acc_ref[...] += contrib

    # Folded BatchNorm affine + ReLU, applied once on the whole (M, TCO) tile
    # (epilogue stays f32: v5e has no bf16 VPU); output cast to bf16 at the store.
    aff = affine_ref[...]                                               # (2, TCO) f32
    y = jnp.maximum(acc_ref[...] * aff[0:1, :] + aff[1:2, :], 0.0)
    o_ref[...] = y.astype(o_ref.dtype).reshape(o_ref.shape)


def _pick_cout_tile(cout):
    """256-wide Cout tiles on 256-wide MXUs (v6e/v7x); 128 on v4/v5 (128-wide MXU)."""
    try:
        kind = jax.devices()[0].device_kind.lower()
    except Exception:
        kind = ""
    width = 128 if ("v4" in kind or "v5" in kind) else 256
    tco = min(width, cout)
    while tco > 1 and cout % tco != 0:
        tco //= 2
    return max(tco, 1)


def dilated_block_pallas(x_nhwc, w, affine, *, rates, ksize=3, pad=2, tco=None):
    """Fused dilated 3x3 conv + folded-BN affine + ReLU.

    x_nhwc: (N, H, W, Cin) float32/bfloat16 (NHWC).
    w:      (ksize*ksize, Cin, Cout) bfloat16.  A PyTorch Conv2d weight (Cout, Cin, kh, kw)
            converts via w.transpose(2, 3, 1, 0).reshape(k*k, Cin, Cout).
    affine: (2, Cout) float32: row0 = gamma/sqrt(var+eps), row1 = beta - mean*scale (+ bias*scale).
    Returns (N, Ho, Wo, Cout) bfloat16.
    """
    N, H, W, Cin = x_nhwc.shape
    kk, Cin_w, Cout = w.shape
    assert kk == ksize * ksize and Cin_w == Cin
    if tco is None:
        tco = _pick_cout_tile(Cout)
    tco = min(tco, Cout)
    assert Cout % tco == 0
    J = Cout // tco

    Hp, Wp = H + 2 * pad, W + 2 * pad
    Ho = Hp - rates * (ksize - 1)
    Wo = Wp - rates * (ksize - 1)
    assert Ho > 0 and Wo > 0
    M = Ho * Wo

    # TODO(synk): the NCHW->NHWC transpose (caller) plus this bf16 cast + zero-pad are XLA
    #             glue ops that move ~as many HBM bytes as the kernel at these shapes; the
    #             production path is to accept pre-padded NHWC bf16 from the producer layer.
    xp = jnp.pad(x_nhwc.astype(jnp.bfloat16),
                 ((0, 0), (pad, pad), (pad, pad), (0, 0)))

    # Explicit scoped-VMEM budget: double-buffered blocks + VMEM scratch + margin.
    x_blk = Hp * Wp * Cin * 2            # bf16 input block
    w_blk = kk * Cin * tco * 2           # bf16 weight slab
    o_blk = M * tco * 2                  # bf16 output block
    a_blk = 2 * tco * 4                  # f32 affine
    scr = M * tco * 4 + Hp * Wo * Cin * 2
    vmem_limit = int(min(64 * 1024 * 1024,
                         2 * (x_blk + w_blk + o_blk + a_blk) + scr + (8 << 20)))

    kernel = functools.partial(_dilated_conv_bn_relu_kernel, dil=rates, ksize=ksize)
    out = pl.pallas_call(
        kernel,
        out_shape=jax.ShapeDtypeStruct((N, M, Cout), jnp.bfloat16),
        # Batch axis innermost: the weight block index depends only on j, so the big
        # weight slab is DMA'd once per Cout tile and reused across the whole batch.
        grid=(J, N),
        in_specs=[
            pl.BlockSpec((1, Hp, Wp, Cin), lambda j, n: (n, 0, 0, 0)),
            pl.BlockSpec((kk, Cin, tco), lambda j, n: (0, 0, j)),
            pl.BlockSpec((2, tco), lambda j, n: (0, j)),
        ],
        out_specs=pl.BlockSpec((1, M, tco), lambda j, n: (n, 0, j)),
        scratch_shapes=[
            pltpu.VMEM((M, tco), jnp.float32),          # accumulator
            pltpu.VMEM((Hp * Wo, Cin), jnp.bfloat16),   # kw-shifted flattened input slab
        ],
        compiler_params=pltpu.CompilerParams(
            dimension_semantics=("parallel", "parallel"),
            vmem_limit_bytes=vmem_limit),
    )(xp, w, affine)

    # TODO(synk): at production spatial/channel sizes (v7x has only 64 MiB physical VMEM),
    #             add an Ho-tile grid axis with a rates*(ksize-1) input halo; it also
    #             guarantees >=2 parallel steps for the v7x megacore when N == 1.
    return out.reshape(N, Ho, Wo, Cout)   # free reshape of the flattened lane-dense output


# ----------------------------------------------------------------------------
# Module-level wrapper (PyTorch NCHW in/out) and deterministic synthetic params.
# ----------------------------------------------------------------------------
@functools.partial(jax.jit, static_argnames=("rates",))
def dilated_block_forward(params, x_nchw, *, rates):
    x = jnp.transpose(x_nchw, (0, 2, 3, 1))                      # NCHW -> NHWC
    y = dilated_block_pallas(x, params["w"], params["affine"], rates=rates)
    return jnp.transpose(y, (0, 3, 1, 2))                        # NHWC -> NCHW (bf16)


def build_dilated_block_params(key, dim, *, use_bias=False):
    kw_, kb, kg, kbe, km, kv = jax.random.split(key, 6)
    std = (3 * 3 * dim) ** -0.5
    # Weight generated directly in kernel layout (k*k, Cin, Cout), stored in bf16.
    w = (std * jax.random.normal(kw_, (9, dim, dim), jnp.float32)).astype(jnp.bfloat16)
    # Inference-mode BatchNorm folded into per-channel scale/shift.
    gamma = 1.0 + 0.1 * jax.random.normal(kg, (dim,), jnp.float32)
    beta = 0.1 * jax.random.normal(kbe, (dim,), jnp.float32)
    mean = 0.1 * jax.random.normal(km, (dim,), jnp.float32)
    var = 1.0 + 0.1 * jax.random.uniform(kv, (dim,), jnp.float32)
    scale = gamma / jnp.sqrt(var + 1e-5)
    shift = beta - mean * scale
    if use_bias:
        bias = 0.1 * jax.random.normal(kb, (dim,), jnp.float32)
        shift = shift + bias * scale
    affine = jnp.stack([scale, shift], axis=0)                   # (2, dim) f32
    return dict(w=w, affine=affine)


def dilated_block_ref(params, x_nchw, *, rates, pad=2):
    """Pure-JAX reference (same bf16 operands, f32 accumulation, bf16 output)."""
    x = jnp.transpose(x_nchw, (0, 2, 3, 1)).astype(jnp.bfloat16)
    w = params["w"]
    kk, cin, cout = w.shape
    k = int(round(kk ** 0.5))
    w4 = w.reshape(k, k, cin, cout)                              # HWIO
    y = lax.conv_general_dilated(
        x, w4, window_strides=(1, 1),
        padding=[(pad, pad), (pad, pad)],
        rhs_dilation=(rates, rates),
        dimension_numbers=("NHWC", "HWIO", "NHWC"),
        preferred_element_type=jnp.float32)
    scale = params["affine"][0].reshape(1, 1, 1, cout)
    shift = params["affine"][1].reshape(1, 1, 1, cout)
    y = jnp.maximum(y * scale + shift, 0.0).astype(jnp.bfloat16)
    return jnp.transpose(y, (0, 3, 1, 2))


if __name__ == "__main__":
    key = jax.random.PRNGKey(0)
    pkey, xkey = jax.random.split(key)

    # Small shapes consistent with the module (dim is the dilated/residual width).
    N, dim, H, W = 2, 256, 16, 16
    rates = 2                      # DilatedBlock(rates=2): padding=2, dilation=2 -> same size

    params = build_dilated_block_params(pkey, dim, use_bias=False)
    x = jax.random.normal(xkey, (N, dim, H, W), jnp.float32)     # NCHW like PyTorch

    out = jax.block_until_ready(dilated_block_forward(params, x, rates=rates))
    assert out.shape == (N, dim, H, W), out.shape
    out_f32 = out.astype(jnp.float32)
    assert bool(jnp.all(jnp.isfinite(out_f32)))

    ref = jax.block_until_ready(dilated_block_ref(params, x, rates=rates))
    ref_f32 = ref.astype(jnp.float32)
    max_err = float(jnp.max(jnp.abs(out_f32 - ref_f32)))
    assert bool(jnp.allclose(out_f32, ref_f32, atol=3e-2, rtol=3e-2)), max_err

    print("KERNEL_OK")
</pallas_src>

<mosaic_0001>
module attributes {stable_mosaic.version = 11 : i64} {
  func.func @_dilated_conv_bn_relu_kernel(%arg0: i32, %arg1: i32, %arg2: memref<1x20x20x256xbf16, #tpu.memory_space<vmem>>, %arg3: memref<9x256x256xbf16, #tpu.memory_space<vmem>>, %arg4: memref<2x256xf32, #tpu.memory_space<vmem>>, %arg5: memref<1x256x256xbf16, #tpu.memory_space<vmem>>, %arg6: memref<256x256xf32, #tpu.memory_space<vmem>>, %arg7: memref<320x256xbf16, #tpu.memory_space<vmem>>) attributes {dimension_semantics = [#tpu.dimension_semantics<parallel>, #tpu.dimension_semantics<parallel>], iteration_bounds = array<i64: 1, 2>, scalar_prefetch = 0 : i64, scratch_operands = 2 : i64, tpu.core_type = #tpu.core_type<tc>, window_params = [{transform_indices = @transform_0, window_bounds = array<i64: 1, 20, 20, 256>}, {transform_indices = @transform_1, window_bounds = array<i64: 9, 256, 256>}, {transform_indices = @transform_2, window_bounds = array<i64: 2, 256>}, {transform_indices = @transform_3, window_bounds = array<i64: 1, 256, 256>}]} {
    %c0 = arith.constant 0 : index
    %c0_0 = arith.constant 0 : index
    %c0_1 = arith.constant 0 : index
    %c0_2 = arith.constant 0 : index
    %0 = vector.load %arg2[%c0, %c0_0, %c0_1, %c0_2] : memref<1x20x20x256xbf16, #tpu.memory_space<vmem>>, vector<1x20x16x256xbf16>
    %1 = vector.shape_cast %0 : vector<1x20x16x256xbf16> to vector<20x16x256xbf16>
    %2 = vector.shape_cast %1 : vector<20x16x256xbf16> to vector<320x256xbf16>
    %c0_3 = arith.constant 0 : index
    %c0_4 = arith.constant 0 : index
    %3 = vector.load %arg7[%c0_3, %c0_4] : memref<320x256xbf16, #tpu.memory_space<vmem>>, vector<320x256xbf16>
    tpu.vector_store %arg7[%c0_3, %c0_4], %2 {strides = array<i32>} : memref<320x256xbf16, #tpu.memory_space<vmem>>, vector<320x256xbf16>,
    %c0_5 = arith.constant 0 : index
    %c0_6 = arith.constant 0 : index
    %4 = vector.load %arg7[%c0_5, %c0_6] : memref<320x256xbf16, #tpu.memory_space<vmem>>, vector<256x256xbf16>
    %c0_7 = arith.constant 0 : index
    %c0_8 = arith.constant 0 : index
    %c0_9 = arith.constant 0 : index
    %5 = vector.load %arg3[%c0_7, %c0_8, %c0_9] : memref<9x256x256xbf16, #tpu.memory_space<vmem>>, vector<1x256x256xbf16>
    %6 = vector.shape_cast %5 : vector<1x256x256xbf16> to vector<256x256xbf16>
    %cst = arith.constant dense<0.000000e+00> : vector<256x256xf32>
    %7 = tpu.matmul %4, %6, %cst {dimension_numbers = #tpu.dot_dimension_numbers<[1], [0], [0], [1], [0, 0, 1, 1], [], []>} : vector<256x256xbf16>, vector<256x256xbf16>, vector<256x256xf32> -> vector<256x256xf32>
    %c0_10 = arith.constant 0 : index
    %c0_11 = arith.constant 0 : index
    %8 = vector.load %arg6[%c0_10, %c0_11] : memref<256x256xf32, #tpu.memory_space<vmem>>, vector<256x256xf32>
    tpu.vector_store %arg6[%c0_10, %c0_11], %7 {strides = array<i32>} : memref<256x256xf32, #tpu.memory_space<vmem>>, vector<256x256xf32>,
    %c32 = arith.constant 32 : index
    %c0_12 = arith.constant 0 : index
    %9 = vector.load %arg7[%c32, %c0_12] : memref<320x256xbf16, #tpu.memory_space<vmem>>, vector<256x256xbf16>
    %c3 = arith.constant 3 : index
    %c0_13 = arith.constant 0 : index
    %c0_14 = arith.constant 0 : index
    %10 = vector.load %arg3[%c3, %c0_13, %c0_14] : memref<9x256x256xbf16, #tpu.memory_space<vmem>>, vector<1x256x256xbf16>
    %11 = vector.shape_cast %10 : vector<1x256x256xbf16> to vector<256x256xbf16>
    %cst_15 = arith.constant dense<0.000000e+00> : vector<256x256xf32>
    %12 = tpu.matmul %9, %11, %cst_15 {dimension_numbers = #tpu.dot_dimension_numbers<[1], [0], [0], [1], [0, 0, 1, 1], [], []>} : vector<256x256xbf16>, vector<256x256xbf16>, vector<256x256xf32> -> vector<256x256xf32>
    %c0_16 = arith.constant 0 : index
    %c0_17 = arith.constant 0 : index
    %13 = vector.load %arg6[%c0_16, %c0_17] : memref<256x256xf32, #tpu.memory_space<vmem>>, vector<256x256xf32>
    %14 = arith.addf %13, %12 : vector<256x256xf32>
    %c0_18 = arith.constant 0 : index
    %c0_19 = arith.constant 0 : index
    %15 = vector.load %arg6[%c0_18, %c0_19] : memref<256x256xf32, #tpu.memory_space<vmem>>, vector<256x256xf32>
    tpu.vector_store %arg6[%c0_18, %c0_19], %14 {strides = array<i32>} : memref<256x256xf32, #tpu.memory_space<vmem>>, vector<256x256xf32>,
    %c64 = arith.constant 64 : index
    %c0_20 = arith.constant 0 : index
    %16 = vector.load %arg7[%c64, %c0_20] : memref<320x256xbf16, #tpu.memory_space<vmem>>, vector<256x256xbf16>
    %c6 = arith.constant 6 : index
    %c0_21 = arith.constant 0 : index
    %c0_22 = arith.constant 0 : index
    %17 = vector.load %arg3[%c6, %c0_21, %c0_22] : memref<9x256x256xbf16, #tpu.memory_space<vmem>>, vector<1x256x256xbf16>
    %18 = vector.shape_cast %17 : vector<1x256x256xbf16> to vector<256x256xbf16>
    %cst_23 = arith.constant dense<0.000000e+00> : vector<256x256xf32>
    %19 = tpu.matmul %16, %18, %cst_23 {dimension_numbers = #tpu.dot_dimension_numbers<[1], [0], [0], [1], [0, 0, 1, 1], [], []>} : vector<256x256xbf16>, vector<256x256xbf16>, vector<256x256xf32> -> vector<256x256xf32>
    %c0_24 = arith.constant 0 : index
    %c0_25 = arith.constant 0 : index
    %20 = vector.load %arg6[%c0_24, %c0_25] : memref<256x256xf32, #tpu.memory_space<vmem>>, vector<256x256xf32>
    %21 = arith.addf %20, %19 : vector<256x256xf32>
    %c0_26 = arith.constant 0 : index
    %c0_27 = arith.constant 0 : index
    %22 = vector.load %arg6[%c0_26, %c0_27] : memref<256x256xf32, #tpu.memory_space<vmem>>, vector<256x256xf32>
    tpu.vector_store %arg6[%c0_26, %c0_27], %21 {strides = array<i32>} : memref<256x256xf32, #tpu.memory_space<vmem>>, vector<256x256xf32>,
    %c0_28 = arith.constant 0 : index
    %c0_29 = arith.constant 0 : index
    %c2 = arith.constant 2 : index
    %c0_30 = arith.constant 0 : index
    %23 = vector.load %arg2[%c0_28, %c0_29, %c2, %c0_30] : memref<1x20x20x256xbf16, #tpu.memory_space<vmem>>, vector<1x20x16x256xbf16>
    %24 = vector.shape_cast %23 : vector<1x20x16x256xbf16> to vector<20x16x256xbf16>
    %25 = vector.shape_cast %24 : vector<20x16x256xbf16> to vector<320x256xbf16>
    %c0_31 = arith.constant 0 : index
    %c0_32 = arith.constant 0 : index
    %26 = vector.load %arg7[%c0_31, %c0_32] : memref<320x256xbf16, #tpu.memory_space<vmem>>, vector<320x256xbf16>
    tpu.vector_store %arg7[%c0_31, %c0_32], %25 {strides = array<i32>} : memref<320x256xbf16, #tpu.memory_space<vmem>>, vector<320x256xbf16>,
    %c0_33 = arith.constant 0 : index
    %c0_34 = arith.constant 0 : index
    %27 = vector.load %arg7[%c0_33, %c0_34] : memref<320x256xbf16, #tpu.memory_space<vmem>>, vector<256x256xbf16>
    %c1 = arith.constant 1 : index
    %c0_35 = arith.constant 0 : index
    %c0_36 = arith.constant 0 : index
    %28 = vector.load %arg3[%c1, %c0_35, %c0_36] : memref<9x256x256xbf16, #tpu.memory_space<vmem>>, vector<1x256x256xbf16>
    %29 = vector.shape_cast %28 : vector<1x256x256xbf16> to vector<256x256xbf16>
    %cst_37 = arith.constant dense<0.000000e+00> : vector<256x256xf32>
    %30 = tpu.matmul %27, %29, %cst_37 {dimension_numbers = #tpu.dot_dimension_numbers<[1], [0], [0], [1], [0, 0, 1, 1], [], []>} : vector<256x256xbf16>, vector<256x256xbf16>, vector<256x256xf32> -> vector<256x256xf32>
    %c0_38 = arith.constant 0 : index
    %c0_39 = arith.constant 0 : index
    %31 = vector.load %arg6[%c0_38, %c0_39] : memref<256x256xf32, #tpu.memory_space<vmem>>, vector<256x256xf32>
    %32 = arith.addf %31, %30 : vector<256x256xf32>
    %c0_40 = arith.constant 0 : index
    %c0_41 = arith.constant 0 : index
    %33 = vector.load %arg6[%c0_40, %c0_41] : memref<256x256xf32, #tpu.memory_space<vmem>>, vector<256x256xf32>
    tpu.vector_store %arg6[%c0_40, %c0_41], %32 {strides = array<i32>} : memref<256x256xf32, #tpu.memory_space<vmem>>, vector<256x256xf32>,
    %c32_42 = arith.constant 32 : index
    %c0_43 = arith.constant 0 : index
    %34 = vector.load %arg7[%c32_42, %c0_43] : memref<320x256xbf16, #tpu.memory_space<vmem>>, vector<256x256xbf16>
    %c4 = arith.constant 4 : index
    %c0_44 = arith.constant 0 : index
    %c0_45 = arith.constant 0 : index
    %35 = vector.load %arg3[%c4, %c0_44, %c0_45] : memref<9x256x256xbf16, #tpu.memory_space<vmem>>, vector<1x256x256xbf16>
    %36 = vector.shape_cast %35 : vector<1x256x256xbf16> to vector<256x256xbf16>
    %cst_46 = arith.constant dense<0.000000e+00> : vector<256x256xf32>
    %37 = tpu.matmul %34, %36, %cst_46 {dimension_numbers = #tpu.dot_dimension_numbers<[1], [0], [0], [1], [0, 0, 1, 1], [], []>} : vector<256x256xbf16>, vector<256x256xbf16>, vector<256x256xf32> -> vector<256x256xf32>
    %c0_47 = arith.constant 0 : index
    %c0_48 = arith.constant 0 : index
    %38 = vector.load %arg6[%c0_47, %c0_48] : memref<256x256xf32, #tpu.memory_space<vmem>>, vector<256x256xf32>
    %39 = arith.addf %38, %37 : vector<256x256xf32>
    %c0_49 = arith.constant 0 : index
    %c0_50 = arith.constant 0 : index
    %40 = vector.load %arg6[%c0_49, %c0_50] : memref<256x256xf32, #tpu.memory_space<vmem>>, vector<256x256xf32>
    tpu.vector_store %arg6[%c0_49, %c0_50], %39 {strides = array<i32>} : memref<256x256xf32, #tpu.memory_space<vmem>>, vector<256x256xf32>,
    %c64_51 = arith.constant 64 : index
    %c0_52 = arith.constant 0 : index
    %41 = vector.load %arg7[%c64_51, %c0_52] : memref<320x256xbf16, #tpu.memory_space<vmem>>, vector<256x256xbf16>
    %c7 = arith.constant 7 : index
    %c0_53 = arith.constant 0 : index
    %c0_54 = arith.constant 0 : index
    %42 = vector.load %arg3[%c7, %c0_53, %c0_54] : memref<9x256x256xbf16, #tpu.memory_space<vmem>>, vector<1x256x256xbf16>
    %43 = vector.shape_cast %42 : vector<1x256x256xbf16> to vector<256x256xbf16>
    %cst_55 = arith.constant dense<0.000000e+00> : vector<256x256xf32>
    %44 = tpu.matmul %41, %43, %cst_55 {dimension_numbers = #tpu.dot_dimension_numbers<[1], [0], [0], [1], [0, 0, 1, 1], [], []>} : vector<256x256xbf16>, vector<256x256xbf16>, vector<256x256xf32> -> vector<256x256xf32>
    %c0_56 = arith.constant 0 : index
    %c0_57 = arith.constant 0 : index
    %45 = vector.load %arg6[%c0_56, %c0_57] : memref<256x256xf32, #tpu.memory_space<vmem>>, vector<256x256xf32>
    %46 = arith.addf %45, %44 : vector<256x256xf32>
    %c0_58 = arith.constant 0 : index
    %c0_59 = arith.constant 0 : index
    %47 = vector.load %arg6[%c0_58, %c0_59] : memref<256x256xf32, #tpu.memory_space<vmem>>, vector<256x256xf32>
    tpu.vector_store %arg6[%c0_58, %c0_59], %46 {strides = array<i32>} : memref<256x256xf32, #tpu.memory_space<vmem>>, vector<256x256xf32>,
    %c0_60 = arith.constant 0 : index
    %c0_61 = arith.constant 0 : index
    %c4_62 = arith.constant 4 : index
    %c0_63 = arith.constant 0 : index
    %48 = vector.load %arg2[%c0_60, %c0_61, %c4_62, %c0_63] : memref<1x20x20x256xbf16, #tpu.memory_space<vmem>>, vector<1x20x16x256xbf16>
    %49 = vector.shape_cast %48 : vector<1x20x16x256xbf16> to vector<20x16x256xbf16>
    %50 = vector.shape_cast %49 : vector<20x16x256xbf16> to vector<320x256xbf16>
    %c0_64 = arith.constant 0 : index
    %c0_65 = arith.constant 0 : index
    %51 = vector.load %arg7[%c0_64, %c0_65] : memref<320x256xbf16, #tpu.memory_space<vmem>>, vector<320x256xbf16>
    tpu.vector_store %arg7[%c0_64, %c0_65], %50 {strides = array<i32>} : memref<320x256xbf16, #tpu.memory_space<vmem>>, vector<320x256xbf16>,
    %c0_66 = arith.constant 0 : index
    %c0_67 = arith.constant 0 : index
    %52 = vector.load %arg7[%c0_66, %c0_67] : memref<320x256xbf16, #tpu.memory_space<vmem>>, vector<256x256xbf16>
    %c2_68 = arith.constant 2 : index
    %c0_69 = arith.constant 0 : index
    %c0_70 = arith.constant 0 : index
    %53 = vector.load %arg3[%c2_68, %c0_69, %c0_70] : memref<9x256x256xbf16, #tpu.memory_space<vmem>>, vector<1x256x256xbf16>
    %54 = vector.shape_cast %53 : vector<1x256x256xbf16> to vector<256x256xbf16>
    %cst_71 = arith.constant dense<0.000000e+00> : vector<256x256xf32>
    %55 = tpu.matmul %52, %54, %cst_71 {dimension_numbers = #tpu.dot_dimension_numbers<[1], [0], [0], [1], [0, 0, 1, 1], [], []>} : vector<256x256xbf16>, vector<256x256xbf16>, vector<256x256xf32> -> vector<256x256xf32>
    %c0_72 = arith.constant 0 : index
    %c0_73 = arith.constant 0 : index
    %56 = vector.load %arg6[%c0_72, %c0_73] : memref<256x256xf32, #tpu.memory_space<vmem>>, vector<256x256xf32>
    %57 = arith.addf %56, %55 : vector<256x256xf32>
    %c0_74 = arith.constant 0 : index
    %c0_75 = arith.constant 0 : index
    %58 = vector.load %arg6[%c0_74, %c0_75] : memref<256x256xf32, #tpu.memory_space<vmem>>, vector<256x256xf32>
    tpu.vector_store %arg6[%c0_74, %c0_75], %57 {strides = array<i32>} : memref<256x256xf32, #tpu.memory_space<vmem>>, vector<256x256xf32>,
    %c32_76 = arith.constant 32 : index
    %c0_77 = arith.constant 0 : index
    %59 = vector.load %arg7[%c32_76, %c0_77] : memref<320x256xbf16, #tpu.memory_space<vmem>>, vector<256x256xbf16>
    %c5 = arith.constant 5 : index
    %c0_78 = arith.constant 0 : index
    %c0_79 = arith.constant 0 : index
    %60 = vector.load %arg3[%c5, %c0_78, %c0_79] : memref<9x256x256xbf16, #tpu.memory_space<vmem>>, vector<1x256x256xbf16>
    %61 = vector.shape_cast %60 : vector<1x256x256xbf16> to vector<256x256xbf16>
    %cst_80 = arith.constant dense<0.000000e+00> : vector<256x256xf32>
    %62 = tpu.matmul %59, %61, %cst_80 {dimension_numbers = #tpu.dot_dimension_numbers<[1], [0], [0], [1], [0, 0, 1, 1], [], []>} : vector<256x256xbf16>, vector<256x256xbf16>, vector<256x256xf32> -> vector<256x256xf32>
    %c0_81 = arith.constant 0 : index
    %c0_82 = arith.constant 0 : index
    %63 = vector.load %arg6[%c0_81, %c0_82] : memref<256x256xf32, #tpu.memory_space<vmem>>, vector<256x256xf32>
    %64 = arith.addf %63, %62 : vector<256x256xf32>
    %c0_83 = arith.constant 0 : index
    %c0_84 = arith.constant 0 : index
    %65 = vector.load %arg6[%c0_83, %c0_84] : memref<256x256xf32, #tpu.memory_space<vmem>>, vector<256x256xf32>
    tpu.vector_store %arg6[%c0_83, %c0_84], %64 {strides = array<i32>} : memref<256x256xf32, #tpu.memory_space<vmem>>, vector<256x256xf32>,
    %c64_85 = arith.constant 64 : index
    %c0_86 = arith.constant 0 : index
    %66 = vector.load %arg7[%c64_85, %c0_86] : memref<320x256xbf16, #tpu.memory_space<vmem>>, vector<256x256xbf16>
    %c8 = arith.constant 8 : index
    %c0_87 = arith.constant 0 : index
    %c0_88 = arith.constant 0 : index
    %67 = vector.load %arg3[%c8, %c0_87, %c0_88] : memref<9x256x256xbf16, #tpu.memory_space<vmem>>, vector<1x256x256xbf16>
    %68 = vector.shape_cast %67 : vector<1x256x256xbf16> to vector<256x256xbf16>
    %cst_89 = arith.constant dense<0.000000e+00> : vector<256x256xf32>
    %69 = tpu.matmul %66, %68, %cst_89 {dimension_numbers = #tpu.dot_dimension_numbers<[1], [0], [0], [1], [0, 0, 1, 1], [], []>} : vector<256x256xbf16>, vector<256x256xbf16>, vector<256x256xf32> -> vector<256x256xf32>
    %c0_90 = arith.constant 0 : index
    %c0_91 = arith.constant 0 : index
    %70 = vector.load %arg6[%c0_90, %c0_91] : memref<256x256xf32, #tpu.memory_space<vmem>>, vector<256x256xf32>
    %71 = arith.addf %70, %69 : vector<256x256xf32>
    %c0_92 = arith.constant 0 : index
    %c0_93 = arith.constant 0 : index
    %72 = vector.load %arg6[%c0_92, %c0_93] : memref<256x256xf32, #tpu.memory_space<vmem>>, vector<256x256xf32>
    tpu.vector_store %arg6[%c0_92, %c0_93], %71 {strides = array<i32>} : memref<256x256xf32, #tpu.memory_space<vmem>>, vector<256x256xf32>,
    %c0_94 = arith.constant 0 : index
    %c0_95 = arith.constant 0 : index
    %73 = vector.load %arg4[%c0_94, %c0_95] : memref<2x256xf32, #tpu.memory_space<vmem>>, vector<2x256xf32>
    %c0_96 = arith.constant 0 : index
    %c0_97 = arith.constant 0 : index
    %74 = vector.load %arg6[%c0_96, %c0_97] : memref<256x256xf32, #tpu.memory_space<vmem>>, vector<256x256xf32>
    %75 = vector.extract_strided_slice %73 {offsets = [0, 0], sizes = [1, 256], strides = [1, 1]} : vector<2x256xf32> to vector<1x256xf32>
    %76 = vector.broadcast %75 : vector<1x256xf32> to vector<256x256xf32>
    %77 = arith.mulf %74, %76 : vector<256x256xf32>
    %78 = vector.extract_strided_slice %73 {offsets = [1, 0], sizes = [1, 256], strides = [1, 1]} : vector<2x256xf32> to vector<1x256xf32>
    %79 = vector.broadcast %78 : vector<1x256xf32> to vector<256x256xf32>
    %80 = arith.addf %77, %79 : vector<256x256xf32>
    %cst_98 = arith.constant 0.000000e+00 : f32
    %81 = vector.broadcast %cst_98 : f32 to vector<256x256xf32>
    %82 = arith.maximumf %80, %81 : vector<256x256xf32>
    %83 = arith.truncf %82 : vector<256x256xf32> to vector<256x256xbf16>
    %84 = vector.shape_cast %83 : vector<256x256xbf16> to vector<1x256x256xbf16>
    %c0_99 = arith.constant 0 : index
    %c0_100 = arith.constant 0 : index
    %c0_101 = arith.constant 0 : index
    %85 = vector.load %arg5[%c0_99, %c0_100, %c0_101] : memref<1x256x256xbf16, #tpu.memory_space<vmem>>, vector<1x256x256xbf16>
    tpu.vector_store %arg5[%c0_99, %c0_100, %c0_101], %84 {strides = array<i32>} : memref<1x256x256xbf16, #tpu.memory_space<vmem>>, vector<1x256x256xbf16>,
    return
  }
  func.func @transform_0(%arg0: i32, %arg1: i32) -> (i32, i32, i32, i32) {
    %c0_i32 = arith.constant 0 : i32
    %c0_i32_0 = arith.constant 0 : i32
    %c0_i32_1 = arith.constant 0 : i32
    %c0_i32_2 = arith.constant 0 : i32
    return %arg1, %c0_i32, %c0_i32_0, %c0_i32_1 : i32, i32, i32, i32
  }
  func.func @transform_1(%arg0: i32, %arg1: i32) -> (i32, i32, i32) {
    %c0_i32 = arith.constant 0 : i32
    %c0_i32_0 = arith.constant 0 : i32
    %c0_i32_1 = arith.constant 0 : i32
    return %c0_i32, %c0_i32_0, %arg0 : i32, i32, i32
  }
  func.func @transform_2(%arg0: i32, %arg1: i32) -> (i32, i32) {
    %c0_i32 = arith.constant 0 : i32
    %c0_i32_0 = arith.constant 0 : i32
    return %c0_i32, %arg0 : i32, i32
  }
  func.func @transform_3(%arg0: i32, %arg1: i32) -> (i32, i32, i32) {
    %c0_i32 = arith.constant 0 : i32
    %c0_i32_0 = arith.constant 0 : i32
    return %arg1, %c0_i32, %arg0 : i32, i32, i32
  }
}

</mosaic_0001>

<llo_original>
// kernel: dilated_block_forward.1
$region0: #{dilated_block_forward.1}
  #allocation0 [shape = 'u32[]', space=smem, size = 0x4, offset = 0x4, fixed_abs, tag = 'smem constant byte address 0x4 - core index']
  #allocation1 [shape = 'u32[144,128]{1,0:T(1,128)}', space=vmem, size = 0x12000, scoped, tag = 'internal scratch']
  #allocation2 [shape = 'f32[256,256]{1,0:T(8,128)}', space=vmem, size = 0x40000, scoped, tag = 'scratch operand']
  #allocation3 [shape = 'bf16[320,256]{1,0:T(8,128)(2,1)}', space=vmem, size = 0x28000, scoped, tag = 'scratch operand']
  %s0 = inlined_call_operand.vmem [shape: bf16[2,20,20,256], index: 0, kind: input, shape index: {}]
  %s1 = inlined_call_operand.vmem [shape: bf16[9,256,256], index: 1, kind: input, shape index: {}]
  %s2 = inlined_call_operand.vmem [shape: f32[2,256], index: 2, kind: input, shape index: {}]
  %s3 = inlined_call_operand.hbm [shape: bf16[2,256,256], index: 3, kind: output, shape index: {}]
  %s4 = sld [smem:[#allocation0]]
  $region45: #{dilated_block_forward.1} parent=0
    _
  %s6 = ssub.s32 1, %s4
  %s7 = scalar_select 0, %s6, %s4
  $region1: #{dilated_block_forward.1} parent=0
    #allocation4 [shape = 'u8[262144]{0}', space=vmem, size = 0x40000, scoped, tag = 'output window, operand 0']
    #allocation5 [shape = 's32[2]{0}', space=sflag, size = 0x8, scoped, tag = 'scoped memory for dilated_block_forward.1']
    %8 = vsyncpa [#allocation5], 0
    %s9 = scalar_lea.sflag [#allocation5], 1
    %10 = vsyncpa %s9, 0
    loop: start=0, step=1, limit=4
    $region2: #{dilated_block_forward.1} parent=1 // loop_pre_header
      _
    $region3: #{dilated_block_forward.1} parent=1 // loop_header
      %s12 = sphi 0, %s16
      %p13 = scmp.ge.s32.totalorder %s12, 4
      %s19 = sphi 0, %s31
      %s20 = sphi 0, %s27
      %s21 = sphi 0, %s19
      %s22 = sphi 0, %s20
      %s23 = sphi 0, %s21
      %s24 = sphi 0, %s22
      %s34 = sphi 0, %s36
      %s37 = sphi 0, %s34
      %s38 = sphi 0, %s37
      %s54 = sphi 0, %s38
      %s60 = sphi 0, %s62
      %s63 = sphi 0, %s60
      %s64 = sphi 0, %s63
      %s80 = sphi 0, %s64
      %s86 = sphi 0, %s88
      %s89 = sphi 0, %s86
      %s90 = sphi 0, %s89
      %s106 = sphi 0, %s90
      %s114 = sphi 0, %s116
      %s117 = sphi 0, %s114
      %s118 = sphi 0, %s117
      %s134 = sphi 0, %s118
    $region4: #{dilated_block_forward.1} parent=1 // loop_header_branch
      %15 = sbr.rel (%p13) target = $region8
    $region5: #{dilated_block_forward.1} parent=1 // loop_body
      %s17 = ssub.s32 %s12, 1
      %s18 = ssub.s32 %s12, 2
      %s25 = sadd.s32 1, %s20
      %p26 = scmp.ge.s32.totalorder %s25, 2
      %s27 = scalar_select %p26, 0, %s25
      %s28 = sadd.s32 1, %s19
      %s29 = scalar_select %p26, %s28, %s19
      %p30 = scmp.ge.s32.totalorder %s29, 1
      %s31 = scalar_select %p30, 0, %s29
      %s32 = ssub.s32 %s20, %s27
      %p33 = scmp.eq.s32.totalorder %s32, 0
      %s35 = sadd.s32 %s34, 1
      %s36 = scalar_select %p33, %s34, %s35
      %p39 = pneg %p33
      %p40 = scmp.eq.s32.totalorder %s12, 1
      %p41 = por %p39, %p40
      %p42 = scmp.ne.s32.totalorder %s34, %s37
      %p43 = scmp.eq.s32.totalorder %s12, 0
      %p44 = por %p42, %p43
      %p45 = scmp.ne.s32.totalorder %s34, %s37
      %p46 = scmp.eq.s32.totalorder %s17, 1
      %p47 = por %p45, %p46
      %p48 = scmp.ne.s32.totalorder %s37, %s38
      %p49 = scmp.eq.s32.totalorder %s17, 0
      %p50 = por %p48, %p49
      %p51 = scmp.ne.s32.totalorder %s37, %s38
      %p52 = scmp.eq.s32.totalorder %s18, 1
      %p53 = por %p51, %p52
      %p55 = scmp.ne.s32.totalorder %s38, %s54
      %p56 = scmp.eq.s32.totalorder %s18, 0
      %p57 = por %p55, %p56
      %s58 = ssub.s32 %s19, %s31
      %p59 = scmp.eq.s32.totalorder %s58, 0
      %s61 = sadd.s32 %s60, 1
      %s62 = scalar_select %p59, %s60, %s61
      %p65 = pneg %p59
      %p66 = scmp.eq.s32.totalorder %s12, 1
      %p67 = por %p65, %p66
      %p68 = scmp.ne.s32.totalorder %s60, %s63
      %p69 = scmp.eq.s32.totalorder %s12, 0
      %p70 = por %p68, %p69
      %p71 = scmp.ne.s32.totalorder %s60, %s63
      %p72 = scmp.eq.s32.totalorder %s17, 1
      %p73 = por %p71, %p72
      %p74 = scmp.ne.s32.totalorder %s63, %s64
      %p75 = scmp.eq.s32.totalorder %s17, 0
      %p76 = por %p74, %p75
      %p77 = scmp.ne.s32.totalorder %s63, %s64
      %p78 = scmp.eq.s32.totalorder %s18, 1
      %p79 = por %p77, %p78
      %p81 = scmp.ne.s32.totalorder %s64, %s80
      %p82 = scmp.eq.s32.totalorder %s18, 0
      %p83 = por %p81, %p82
      %s84 = ssub.s32 %s19, %s31
      %p85 = scmp.eq.s32.totalorder %s84, 0
      %s87 = sadd.s32 %s86, 1
      %s88 = scalar_select %p85, %s86, %s87
      %p91 = pneg %p85
      %p92 = scmp.eq.s32.totalorder %s12, 1
      %p93 = por %p91, %p92
      %p94 = scmp.ne.s32.totalorder %s86, %s89
      %p95 = scmp.eq.s32.totalorder %s12, 0
      %p96 = por %p94, %p95
      %p97 = scmp.ne.s32.totalorder %s86, %s89
      %p98 = scmp.eq.s32.totalorder %s17, 1
      %p99 = por %p97, %p98
      %p100 = scmp.ne.s32.totalorder %s89, %s90
      %p101 = scmp.eq.s32.totalorder %s17, 0
      %p102 = por %p100, %p101
      %p103 = scmp.ne.s32.totalorder %s89, %s90
      %p104 = scmp.eq.s32.totalorder %s18, 1
      %p105 = por %p103, %p104
      %p107 = scmp.ne.s32.totalorder %s90, %s106
      %p108 = scmp.eq.s32.totalorder %s18, 0
      %p109 = por %p107, %p108
      %s110 = ssub.s32 %s20, %s27
      %s111 = ssub.s32 %s19, %s31
      %s112 = sor.u32 %s110, %s111
      %p113 = scmp.eq.s32.totalorder %s112, 0
      %s115 = sadd.s32 %s114, 1
      %s116 = scalar_select %p113, %s114, %s115
      %p119 = pneg %p113
      %p120 = scmp.eq.s32.totalorder %s12, 1
      %p121 = por %p119, %p120
      %p122 = scmp.ne.s32.totalorder %s114, %s117
      %p123 = scmp.eq.s32.totalorder %s12, 0
      %p124 = por %p122, %p123
      %p125 = scmp.ne.s32.totalorder %s114, %s117
      %p126 = scmp.eq.s32.totalorder %s17, 1
      %p127 = por %p125, %p126
      %p128 = scmp.ne.s32.totalorder %s117, %s118
      %p129 = scmp.eq.s32.totalorder %s17, 0
      %p130 = por %p128, %p129
      %p131 = scmp.ne.s32.totalorder %s117, %s118
      %p132 = scmp.eq.s32.totalorder %s18, 1
      %p133 = por %p131, %p132
      %p135 = scmp.ne.s32.totalorder %s118, %s134
      %p136 = scmp.eq.s32.totalorder %s18, 0
      %p137 = por %p135, %p136
      %p138 = scmp.le.s32.totalorder 1, %s12
      %p139 = scmp.lt.s32.totalorder %s12, 3
      %p140 = pnand %p138, %p139
      %p141 = pneg %p140
      // Predicated region
      $region9: #{dilated_block_forward.1} parent=5 // pred_check
        _
      $region10: #{dilated_block_forward.1} parent=5 // pred_check_branch
        %143 = sbr.rel (%p140) target = $region12
      $region11: #{dilated_block_forward.1} parent=5 // pred_region
        %s144 = ssub.s32 %s12, 1
        // Predicated region
        $region13: #{dilated_block_forward.1} parent=11 // pred_check
          %p145 = pneg %p76
        $region14: #{dilated_block_forward.1} parent=11 // pred_check_branch
          %147 = sbr.rel (%p145) target = $region16
        $region15: #{dilated_block_forward.1} parent=11 // pred_region
          %s148 = smul.u32 2, %s21
          %p149 = scmp.lt.s32.totalorder %s148, 1
          %s150 = scalar_select %p149, %s148, 1
          %s151 = smul.addr %s150, 4
          %s152 = scalar_lea.vmem %s1, %s151
          %s153 = smul.u32 2, %s21
        $region16: #{dilated_block_forward.1} parent=11 // pred_fallthru
          _
        // Predicated region
        $region17: #{dilated_block_forward.1} parent=11 // pred_check
          %p154 = pneg %p102
        $region18: #{dilated_block_forward.1} parent=11 // pred_check_branch
          %156 = sbr.rel (%p154) target = $region20
        $region19: #{dilated_block_forward.1} parent=11 // pred_region
          %s157 = smul.u32 2, %s21
          %p158 = scmp.lt.s32.totalorder %s157, 1
          %s159 = scalar_select %p158, %s157, 1
          %s160 = smul.addr %s159, 2
          %s161 = scalar_lea.vmem %s2, %s160
          %s162 = smul.u32 2, %s21
        $region20: #{dilated_block_forward.1} parent=11 // pred_fallthru
          _
      $region12: #{dilated_block_forward.1} parent=5 // pred_fallthru
        _
      %p163 = scmp.lt.s32.totalorder %s12, 2
      // Predicated region
      $region21: #{dilated_block_forward.1} parent=5 // pred_check
        %p164 = pneg %p163
      $region22: #{dilated_block_forward.1} parent=5 // pred_check_branch
        %166 = sbr.rel (%p164) target = $region24
      $region23: #{dilated_block_forward.1} parent=5 // pred_region
        // Predicated region
        $region25: #{dilated_block_forward.1} parent=23 // pred_check
          %p167 = pneg %p44
        $region26: #{dilated_block_forward.1} parent=23 // pred_check_branch
          %169 = sbr.rel (%p167) target = $region28
        $region27: #{dilated_block_forward.1} parent=23 // pred_region
          %p170 = scmp.lt.s32.totalorder %s20, 1
          %s171 = scalar_select %p170, %s20, 1
          %s172 = smul.addr %s171, 120
          %s173 = smul.addr %s172, 4
          %s174 = scalar_lea.vmem %s0, %s173
        $region28: #{dilated_block_forward.1} parent=23 // pred_fallthru
          _
      $region24: #{dilated_block_forward.1} parent=5 // pred_fallthru
        _
      %p175 = scmp.le.s32.totalorder 1, %s12
      %p176 = scmp.lt.s32.totalorder %s12, 3
      %p177 = pnand %p175, %p176
      %p178 = pneg %p177
      // Predicated region
      $region29: #{dilated_block_forward.1} parent=5 // pred_check
        _
      $region30: #{dilated_block_forward.1} parent=5 // pred_check_branch
        %180 = sbr.rel (%p177) target = $region32
      $region31: #{dilated_block_forward.1} parent=5 // pred_region
        %s181 = ssub.s32 %s12, 1
        %p182 = scmp.lt.s32.totalorder %s22, 1
        %s183 = scalar_select %p182, %s22, 1
        %s184 = smul.addr %s183, 120
        %s185 = smul.addr %s184, 4
        %s186 = scalar_lea.vmem %s0, %s185
        %p187 = pneg %p50
        %p188 = pneg %p47
        %s189 = smul.u32 2, %s21
        %p190 = scmp.lt.s32.totalorder %s189, 1
        %s191 = scalar_select %p190, %s189, 1
        %s192 = smul.addr %s191, 4
        %s193 = scalar_lea.vmem %s1, %s192
        %p194 = pneg %p76
        %p195 = pneg %p73
        %s196 = smul.u32 2, %s21
        %p197 = scmp.lt.s32.totalorder %s196, 1
        %s198 = scalar_select %p197, %s196, 1
        %s199 = smul.addr %s198, 2
        %s200 = scalar_lea.vmem %s2, %s199
        %p201 = pneg %p102
        %p202 = pneg %p99
        %p203 = pneg %p130
        %p204 = pneg %p127
        %s205 = sand.u32 %s117, 1
        %s206 = scalar_lea.sflag [#allocation5], %s205
        %s207 = sand.u32 %s117, 1
        %s208 = smul.addr %s207, 256
        %s209 = scalar_lea.vmem [#allocation4], %s208
        %p210 = scmp.lt.s32.totalorder %s22, 1
        %s211 = scalar_select %p210, %s22, 1
        %s212 = smul.addr %s211, 120
        %s213 = smul.addr %s212, 4
        %s214 = scalar_lea.vmem %s0, %s213
        %s215 = smul.u32 2, %s21
        %p216 = scmp.lt.s32.totalorder %s215, 1
        %s217 = scalar_select %p216, %s215, 1
        %s218 = smul.addr %s217, 4
        %s219 = scalar_lea.vmem %s1, %s218
        %s220 = smul.u32 2, %s21
        %s221 = smul.u32 2, %s21
        %p222 = scmp.lt.s32.totalorder %s221, 1
        %s223 = scalar_select %p222, %s221, 1
        %s224 = smul.addr %s223, 2
        %s225 = scalar_lea.vmem %s2, %s224
        %s226 = smul.u32 2, %s21
        %s227 = smul.u32 2, %s21
        %v228 = vld [vmem:[%s214] sm:$0xff]
        %v229 = vld [vmem:[%s214 + $0x8] sm:$0xff]
        %v230 = vld [vmem:[%s214 + $0x18] sm:$0xff]
        %v231 = vld [vmem:[%s214 + $0x20] sm:$0xff]
        %v232 = vld [vmem:[%s214 + $0x30] sm:$0xff]
        %v233 = vld [vmem:[%s214 + $0x38] sm:$0xff]
        %v234 = vld [vmem:[%s214 + $0x48] sm:$0xff]
        %v235 = vld [vmem:[%s214 + $0x50] sm:$0xff]
        %v236 = vld [vmem:[%s214 + $0x60] sm:$0xff]
        %v237 = vld [vmem:[%s214 + $0x68] sm:$0xff]
        %v238 = vld [vmem:[%s214 + $0x78] sm:$0xff]
        %v239 = vld [vmem:[%s214 + $0x80] sm:$0xff]
        %v240 = vld [vmem:[%s214 + $0x90] sm:$0xff]
        %v241 = vld [vmem:[%s214 + $0x98] sm:$0xff]
        %v242 = vld [vmem:[%s214 + $0xa8] sm:$0xff]
        %v243 = vld [vmem:[%s214 + $0xb0] sm:$0xff]
        %v244 = vld [vmem:[%s214 + $0xc0] sm:$0xff]
        %v245 = vld [vmem:[%s214 + $0xc8] sm:$0xff]
        %v246 = vld [vmem:[%s214 + $0xd8] sm:$0xff]
        %v247 = vld [vmem:[%s214 + $0xe0] sm:$0xff]
        %v248 = vld [vmem:[%s214 + $0xf0] sm:$0xff]
        %v249 = vld [vmem:[%s214 + $0xf8] sm:$0xff]
        %v250 = vld [vmem:[%s214 + $0x108] sm:$0xff]
        %v251 = vld [vmem:[%s214 + $0x110] sm:$0xff]
        %v252 = vld [vmem:[%s214 + $0x120] sm:$0xff]
        %v253 = vld [vmem:[%s214 + $0x128] sm:$0xff]
        %v254 = vld [vmem:[%s214 + $0x138] sm:$0xff]
        %v255 = vld [vmem:[%s214 + $0x140] sm:$0xff]
        %v256 = vld [vmem:[%s214 + $0x150] sm:$0xff]
        %v257 = vld [vmem:[%s214 + $0x158] sm:$0xff]
        %v258 = vld [vmem:[%s214 + $0x168] sm:$0xff]
        %v259 = vld [vmem:[%s214 + $0x170] sm:$0xff]
        %v260 = vld [vmem:[%s214 + $0x180] sm:$0xff]
        %v261 = vld [vmem:[%s214 + $0x188] sm:$0xff]
        %v262 = vld [vmem:[%s214 + $0x198] sm:$0xff]
        %v263 = vld [vmem:[%s214 + $0x1a0] sm:$0xff]
        %v264 = vld [vmem:[%s214 + $0x1b0] sm:$0xff]
        %v265 = vld [vmem:[%s214 + $0x1b8] sm:$0xff]
        %v266 = vld [vmem:[%s214 + $0x1c8] sm:$0xff]
        %v267 = vld [vmem:[%s214 + $0x1d0] sm:$0xff]
        %268 = vst [vmem:[#allocation3] sm:$0xff] %v228
        %269 = vst [vmem:[#allocation3 + $0x8] sm:$0xff] %v229
        %270 = vst [vmem:[#allocation3 + $0x10] sm:$0xff] %v230
        %271 = vst [vmem:[#allocation3 + $0x18] sm:$0xff] %v231
        %272 = vst [vmem:[#allocation3 + $0x20] sm:$0xff] %v232
        %273 = vst [vmem:[#allocation3 + $0x28] sm:$0xff] %v233
        %274 = vst [vmem:[#allocation3 + $0x30] sm:$0xff] %v234
        %275 = vst [vmem:[#allocation3 + $0x38] sm:$0xff] %v235
        %276 = vst [vmem:[#allocation3 + $0x40] sm:$0xff] %v236
        %277 = vst [vmem:[#allocation3 + $0x48] sm:$0xff] %v237
        %278 = vst [vmem:[#allocation3 + $0x50] sm:$0xff] %v238
        %279 = vst [vmem:[#allocation3 + $0x58] sm:$0xff] %v239
        %280 = vst [vmem:[#allocation3 + $0x60] sm:$0xff] %v240
        %281 = vst [vmem:[#allocation3 + $0x68] sm:$0xff] %v241
        %282 = vst [vmem:[#allocation3 + $0x70] sm:$0xff] %v242
        %283 = vst [vmem:[#allocation3 + $0x78] sm:$0xff] %v243
        %284 = vst [vmem:[#allocation3 + $0x80] sm:$0xff] %v244
        %285 = vst [vmem:[#allocation3 + $0x88] sm:$0xff] %v245
        %286 = vst [vmem:[#allocation3 + $0x90] sm:$0xff] %v246
        %287 = vst [vmem:[#allocation3 + $0x98] sm:$0xff] %v247
        %288 = vst [vmem:[#allocation3 + $0xa0] sm:$0xff] %v248
        %289 = vst [vmem:[#allocation3 + $0xa8] sm:$0xff] %v249
        %290 = vst [vmem:[#allocation3 + $0xb0] sm:$0xff] %v250
        %291 = vst [vmem:[#allocation3 + $0xb8] sm:$0xff] %v251
        %292 = vst [vmem:[#allocation3 + $0xc0] sm:$0xff] %v252
        %293 = vst [vmem:[#allocation3 + $0xc8] sm:$0xff] %v253
        %294 = vst [vmem:[#allocation3 + $0xd0] sm:$0xff] %v254
        %295 = vst [vmem:[#allocation3 + $0xd8] sm:$0xff] %v255
        %296 = vst [vmem:[#allocation3 + $0xe0] sm:$0xff] %v256
        %297 = vst [vmem:[#allocation3 + $0xe8] sm:$0xff] %v257
        %298 = vst [vmem:[#allocation3 + $0xf0] sm:$0xff] %v258
        %299 = vst [vmem:[#allocation3 + $0xf8] sm:$0xff] %v259
        %300 = vst [vmem:[#allocation3 + $0x100] sm:$0xff] %v260
        %301 = vst [vmem:[#allocation3 + $0x108] sm:$0xff] %v261
        %302 = vst [vmem:[#allocation3 + $0x110] sm:$0xff] %v262
        %303 = vst [vmem:[#allocation3 + $0x118] sm:$0xff] %v263
        %304 = vst [vmem:[#allocation3 + $0x120] sm:$0xff] %v264
        %305 = vst [vmem:[#allocation3 + $0x128] sm:$0xff] %v265
        %306 = vst [vmem:[#allocation3 + $0x130] sm:$0xff] %v266
        %307 = vst [vmem:[#allocation3 + $0x138] sm:$0xff] %v267
        %v308 = vld [vmem:[#allocation3] sm:$0xff]
        %v309 = vld [vmem:[#allocation3 + $0x8] sm:$0xff]
        %v310 = vld [vmem:[#allocation3 + $0x10] sm:$0xff]
        %v311 = vld [vmem:[#allocation3 + $0x18] sm:$0xff]
        %v312 = vld [vmem:[#allocation3 + $0x20] sm:$0xff]
        %v313 = vld [vmem:[#allocation3 + $0x28] sm:$0xff]
        %v314 = vld [vmem:[#allocation3 + $0x30] sm:$0xff]
        %v315 = vld [vmem:[#allocation3 + $0x38] sm:$0xff]
        %v316 = vld [vmem:[#allocation3 + $0x40] sm:$0xff]
        %v317 = vld [vmem:[#allocation3 + $0x48] sm:$0xff]
        %v318 = vld [vmem:[#allocation3 + $0x50] sm:$0xff]
        %v319 = vld [vmem:[#allocation3 + $0x58] sm:$0xff]
        %v320 = vld [vmem:[#allocation3 + $0x60] sm:$0xff]
        %v321 = vld [vmem:[#allocation3 + $0x68] sm:$0xff]
        %v322 = vld [vmem:[#allocation3 + $0x70] sm:$0xff]
        %v323 = vld [vmem:[#allocation3 + $0x78] sm:$0xff]
        %v324 = vld [vmem:[#allocation3 + $0x80] sm:$0xff]
        %v325 = vld [vmem:[#allocation3 + $0x88] sm:$0xff]
        %v326 = vld [vmem:[#allocation3 + $0x90] sm:$0xff]
        %v327 = vld [vmem:[#allocation3 + $0x98] sm:$0xff]
        %v328 = vld [vmem:[#allocation3 + $0xa0] sm:$0xff]
        %v329 = vld [vmem:[#allocation3 + $0xa8] sm:$0xff]
        %v330 = vld [vmem:[#allocation3 + $0xb0] sm:$0xff]
        %v331 = vld [vmem:[#allocation3 + $0xb8] sm:$0xff]
        %v332 = vld [vmem:[#allocation3 + $0xc0] sm:$0xff]
        %v333 = vld [vmem:[#allocation3 + $0xc8] sm:$0xff]
        %v334 = vld [vmem:[#allocation3 + $0xd0] sm:$0xff]
        %v335 = vld [vmem:[#allocation3 + $0xd8] sm:$0xff]
        %v336 = vld [vmem:[#allocation3 + $0xe0] sm:$0xff]
        %v337 = vld [vmem:[#allocation3 + $0xe8] sm:$0xff]
        %v338 = vld [vmem:[#allocation3 + $0xf0] sm:$0xff]
        %v339 = vld [vmem:[#allocation3 + $0xf8] sm:$0xff]
        %v340 = vld [vmem:[%s219] sm:$0xff]
        %v341 = vld [vmem:[%s219 + $0x8] sm:$0xff]
        %v342 = vld [vmem:[%s219 + $0x10] sm:$0xff]
        %v343 = vld [vmem:[%s219 + $0x18] sm:$0xff]
        %v344 = vld [vmem:[%s219 + $0x20] sm:$0xff]
        %v345 = vld [vmem:[%s219 + $0x28] sm:$0xff]
        %v346 = vld [vmem:[%s219 + $0x30] sm:$0xff]
        %v347 = vld [vmem:[%s219 + $0x38] sm:$0xff]
        %v348 = vld [vmem:[%s219 + $0x40] sm:$0xff]
        %v349 = vld [vmem:[%s219 + $0x48] sm:$0xff]
        %v350 = vld [vmem:[%s219 + $0x50] sm:$0xff]
        %v351 = vld [vmem:[%s219 + $0x58] sm:$0xff]
        %v352 = vld [vmem:[%s219 + $0x60] sm:$0xff]
        %v353 = vld [vmem:[%s219 + $0x68] sm:$0xff]
        %v354 = vld [vmem:[%s219 + $0x70] sm:$0xff]
        %v355 = vld [vmem:[%s219 + $0x78] sm:$0xff]
        %v356 = vld [vmem:[%s219 + $0x80] sm:$0xff]
        %v357 = vld [vmem:[%s219 + $0x88] sm:$0xff]
        %v358 = vld [vmem:[%s219 + $0x90] sm:$0xff]
        %v359 = vld [vmem:[%s219 + $0x98] sm:$0xff]
        %v360 = vld [vmem:[%s219 + $0xa0] sm:$0xff]
        %v361 = vld [vmem:[%s219 + $0xa8] sm:$0xff]
        %v362 = vld [vmem:[%s219 + $0xb0] sm:$0xff]
        %v363 = vld [vmem:[%s219 + $0xb8] sm:$0xff]
        %v364 = vld [vmem:[%s219 + $0xc0] sm:$0xff]
        %v365 = vld [vmem:[%s219 + $0xc8] sm:$0xff]
        %v366 = vld [vmem:[%s219 + $0xd0] sm:$0xff]
        %v367 = vld [vmem:[%s219 + $0xd8] sm:$0xff]
        %v368 = vld [vmem:[%s219 + $0xe0] sm:$0xff]
        %v369 = vld [vmem:[%s219 + $0xe8] sm:$0xff]
        %v370 = vld [vmem:[%s219 + $0xf0] sm:$0xff]
        %v371 = vld [vmem:[%s219 + $0xf8] sm:$0xff]
        %v404 = vunpack.c.l.b16 %v308
        %v405 = vunpack.c.h.b16 %v308
        %v406 = vunpack.c.l.b16 %v309
        %v407 = vunpack.c.h.b16 %v309
        %v408 = vunpack.c.l.b16 %v310
        %v409 = vunpack.c.h.b16 %v310
        %v410 = vunpack.c.l.b16 %v311
        %v411 = vunpack.c.h.b16 %v311
        %v412 = vunpack.c.l.b16 %v312
        %v413 = vunpack.c.h.b16 %v312
        %v414 = vunpack.c.l.b16 %v313
        %v415 = vunpack.c.h.b16 %v313
        %v416 = vunpack.c.l.b16 %v314
        %v417 = vunpack.c.h.b16 %v314
        %v418 = vunpack.c.l.b16 %v315
        %v419 = vunpack.c.h.b16 %v315
        %v420 = vunpack.c.l.b16 %v316
        %v421 = vunpack.c.h.b16 %v316
        %v422 = vunpack.c.l.b16 %v317
        %v423 = vunpack.c.h.b16 %v317
        %v424 = vunpack.c.l.b16 %v318
        %v425 = vunpack.c.h.b16 %v318
        %v426 = vunpack.c.l.b16 %v319
        %v427 = vunpack.c.h.b16 %v319
        %v428 = vunpack.c.l.b16 %v320
        %v429 = vunpack.c.h.b16 %v320
        %v430 = vunpack.c.l.b16 %v321
        %v431 = vunpack.c.h.b16 %v321
        %v432 = vunpack.c.l.b16 %v322
        %v433 = vunpack.c.h.b16 %v322
        %v434 = vunpack.c.l.b16 %v323
        %v435 = vunpack.c.h.b16 %v323
        %v436 = vunpack.c.l.b16 %v324
        %v437 = vunpack.c.h.b16 %v324
        %v438 = vunpack.c.l.b16 %v325
        %v439 = vunpack.c.h.b16 %v325
        %v440 = vunpack.c.l.b16 %v326
        %v441 = vunpack.c.h.b16 %v326
        %v442 = vunpack.c.l.b16 %v327
        %v443 = vunpack.c.h.b16 %v327
        %v444 = vunpack.c.l.b16 %v328
        %v445 = vunpack.c.h.b16 %v328
        %v446 = vunpack.c.l.b16 %v329
        %v447 = vunpack.c.h.b16 %v329
        %v448 = vunpack.c.l.b16 %v330
        %v449 = vunpack.c.h.b16 %v330
        %v450 = vunpack.c.l.b16 %v331
        %v451 = vunpack.c.h.b16 %v331
        %v452 = vunpack.c.l.b16 %v332
        %v453 = vunpack.c.h.b16 %v332
        %v454 = vunpack.c.l.b16 %v333
        %v455 = vunpack.c.h.b16 %v333
        %v456 = vunpack.c.l.b16 %v334
        %v457 = vunpack.c.h.b16 %v334
        %v458 = vunpack.c.l.b16 %v335
        %v459 = vunpack.c.h.b16 %v335
        %v460 = vunpack.c.l.b16 %v336
        %v461 = vunpack.c.h.b16 %v336
        %v462 = vunpack.c.l.b16 %v337
        %v463 = vunpack.c.h.b16 %v337
        %v464 = vunpack.c.l.b16 %v338
        %v465 = vunpack.c.h.b16 %v338
        %v466 = vunpack.c.l.b16 %v339
        %v467 = vunpack.c.h.b16 %v339
        %v468 = vpack.c.b16 %v406, %v404
        %v469 = vpack.c.b16 %v407, %v405
        %v470 = vpack.c.b16 %v410, %v408
        %v471 = vpack.c.b16 %v411, %v409
        %v472 = vpack.c.b16 %v414, %v412
        %v473 = vpack.c.b16 %v415, %v413
        %v474 = vpack.c.b16 %v418, %v416
        %v475 = vpack.c.b16 %v419, %v417
        %v476 = vpack.c.b16 %v422, %v420
        %v477 = vpack.c.b16 %v423, %v421
        %v478 = vpack.c.b16 %v426, %v424
        %v479 = vpack.c.b16 %v427, %v425
        %v480 = vpack.c.b16 %v430, %v428
        %v481 = vpack.c.b16 %v431, %v429
        %v482 = vpack.c.b16 %v434, %v432
        %v483 = vpack.c.b16 %v435, %v433
        %v484 = vpack.c.b16 %v438, %v436
        %v485 = vpack.c.b16 %v439, %v437
        %v486 = vpack.c.b16 %v442, %v440
        %v487 = vpack.c.b16 %v443, %v441
        %v488 = vpack.c.b16 %v446, %v444
        %v489 = vpack.c.b16 %v447, %v445
        %v490 = vpack.c.b16 %v450, %v448
        %v491 = vpack.c.b16 %v451, %v449
        %v492 = vpack.c.b16 %v454, %v452
        %v493 = vpack.c.b16 %v455, %v453
        %v494 = vpack.c.b16 %v458, %v456
        %v495 = vpack.c.b16 %v459, %v457
        %v496 = vpack.c.b16 %v462, %v460
        %v497 = vpack.c.b16 %v463, %v461
        %v498 = vpack.c.b16 %v466, %v464
        %v499 = vpack.c.b16 %v467, %v465
        %v564 = vunpack.c.l.b16 %v340
        %v565 = vunpack.c.h.b16 %v340
        %v566 = vunpack.c.l.b16 %v341
        %v567 = vunpack.c.h.b16 %v341
        %v568 = vunpack.c.l.b16 %v342
        %v569 = vunpack.c.h.b16 %v342
        %v570 = vunpack.c.l.b16 %v343
        %v571 = vunpack.c.h.b16 %v343
        %v572 = vunpack.c.l.b16 %v344
        %v573 = vunpack.c.h.b16 %v344
        %v574 = vunpack.c.l.b16 %v345
        %v575 = vunpack.c.h.b16 %v345
        %v576 = vunpack.c.l.b16 %v346
        %v577 = vunpack.c.h.b16 %v346
        %v578 = vunpack.c.l.b16 %v347
        %v579 = vunpack.c.h.b16 %v347
        %v580 = vunpack.c.l.b16 %v348
        %v581 = vunpack.c.h.b16 %v348
        %v582 = vunpack.c.l.b16 %v349
        %v583 = vunpack.c.h.b16 %v349
        %v584 = vunpack.c.l.b16 %v350
        %v585 = vunpack.c.h.b16 %v350
        %v586 = vunpack.c.l.b16 %v351
        %v587 = vunpack.c.h.b16 %v351
        %v588 = vunpack.c.l.b16 %v352
        %v589 = vunpack.c.h.b16 %v352
        %v590 = vunpack.c.l.b16 %v353
        %v591 = vunpack.c.h.b16 %v353
        %v592 = vunpack.c.l.b16 %v354
        %v593 = vunpack.c.h.b16 %v354
        %v594 = vunpack.c.l.b16 %v355
        %v595 = vunpack.c.h.b16 %v355
        %v596 = vunpack.c.l.b16 %v356
        %v597 = vunpack.c.h.b16 %v356
        %v598 = vunpack.c.l.b16 %v357
        %v599 = vunpack.c.h.b16 %v357
        %v600 = vunpack.c.l.b16 %v358
        %v601 = vunpack.c.h.b16 %v358
        %v602 = vunpack.c.l.b16 %v359
        %v603 = vunpack.c.h.b16 %v359
        %v604 = vunpack.c.l.b16 %v360
        %v605 = vunpack.c.h.b16 %v360
        %v606 = vunpack.c.l.b16 %v361
        %v607 = vunpack.c.h.b16 %v361
        %v608 = vunpack.c.l.b16 %v362
        %v609 = vunpack.c.h.b16 %v362
        %v610 = vunpack.c.l.b16 %v363
        %v611 = vunpack.c.h.b16 %v363
        %v612 = vunpack.c.l.b16 %v364
        %v613 = vunpack.c.h.b16 %v364
        %v614 = vunpack.c.l.b16 %v365
        %v615 = vunpack.c.h.b16 %v365
        %v616 = vunpack.c.l.b16 %v366
        %v617 = vunpack.c.h.b16 %v366
        %v618 = vunpack.c.l.b16 %v367
        %v619 = vunpack.c.h.b16 %v367
        %v620 = vunpack.c.l.b16 %v368
        %v621 = vunpack.c.h.b16 %v368
        %v622 = vunpack.c.l.b16 %v369
        %v623 = vunpack.c.h.b16 %v369
        %v624 = vunpack.c.l.b16 %v370
        %v625 = vunpack.c.h.b16 %v370
        %v626 = vunpack.c.l.b16 %v371
        %v627 = vunpack.c.h.b16 %v371
        %v628 = vpack.c.b16 %v566, %v564
        %v629 = vpack.c.b16 %v567, %v565
        %v630 = vpack.c.b16 %v570, %v568
        %v631 = vpack.c.b16 %v571, %v569
        %v632 = vpack.c.b16 %v574, %v572
        %v633 = vpack.c.b16 %v575, %v573
        %v634 = vpack.c.b16 %v578, %v576
        %v635 = vpack.c.b16 %v579, %v577
        %v636 = vpack.c.b16 %v582, %v580
        %v637 = vpack.c.b16 %v583, %v581
        %v638 = vpack.c.b16 %v586, %v584
        %v639 = vpack.c.b16 %v587, %v585
        %v640 = vpack.c.b16 %v590, %v588
        %v641 = vpack.c.b16 %v591, %v589
        %v642 = vpack.c.b16 %v594, %v592
        %v643 = vpack.c.b16 %v595, %v593
        %v644 = vpack.c.b16 %v598, %v596
        %v645 = vpack.c.b16 %v599, %v597
        %v646 = vpack.c.b16 %v602, %v600
        %v647 = vpack.c.b16 %v603, %v601
        %v648 = vpack.c.b16 %v606, %v604
        %v649 = vpack.c.b16 %v607, %v605
        %v650 = vpack.c.b16 %v610, %v608
        %v651 = vpack.c.b16 %v611, %v609
        %v652 = vpack.c.b16 %v614, %v612
        %v653 = vpack.c.b16 %v615, %v613
        %v654 = vpack.c.b16 %v618, %v616
        %v655 = vpack.c.b16 %v619, %v617
        %v656 = vpack.c.b16 %v622, %v620
        %v657 = vpack.c.b16 %v623, %v621
        %v658 = vpack.c.b16 %v626, %v624
        %v659 = vpack.c.b16 %v627, %v625
        %692 = vmatprep.subr.bf16.mxu0 %v643
        %693 = vmatpush1.bf16.msra.mxu0 %v642
        %694 = vmatprep.subr.bf16.mxu0 %v641
        %695 = vmatpush1.bf16.msra.mxu0 %v640
        %696 = vmatprep.subr.bf16.mxu0 %v639
        %697 = vmatpush1.bf16.msra.mxu0 %v638
        %698 = vmatprep.subr.bf16.mxu0 %v637
        %699 = vmatpush1.bf16.msra.mxu0 %v636
        %700 = vmatprep.subr.bf16.mxu0 %v635
        %701 = vmatpush1.bf16.msra.mxu0 %v634
        %702 = vmatprep.subr.bf16.mxu0 %v633
        %703 = vmatpush1.bf16.msra.mxu0 %v632
        %704 = vmatprep.subr.bf16.mxu0 %v631
        %705 = vmatpush1.bf16.msra.mxu0 %v630
        %706 = vmatprep.subr.bf16.mxu0 %v629
        %707 = vmatpush1.bf16.msra.mxu0 %v628
        %708 = vmatprep.subr.bf16.mxu0 %v659
        %709 = vmatpush2.bf16.msra.mxu0 %v658
        %710 = vmatprep.subr.bf16.mxu0 %v657
        %711 = vmatpush2.bf16.msra.mxu0 %v656
        %712 = vmatprep.subr.bf16.mxu0 %v655
        %713 = vmatpush2.bf16.msra.mxu0 %v654
        %714 = vmatprep.subr.bf16.mxu0 %v653
        %715 = vmatpush2.bf16.msra.mxu0 %v652
        %716 = vmatprep.subr.bf16.mxu0 %v651
        %717 = vmatpush2.bf16.msra.mxu0 %v650
        %718 = vmatprep.subr.bf16.mxu0 %v649
        %719 = vmatpush2.bf16.msra.mxu0 %v648
        %720 = vmatprep.subr.bf16.mxu0 %v647
        %721 = vmatpush2.bf16.msra.mxu0 %v646
        %722 = vmatprep.subr.bf16.mxu0 %v645
        %723 = vmatpush2.bf16.msra.mxu0 %v644
        %724 = vmatprep.mubr.bf16.mxu0 %v469
        %725 = vmatmul.mubr.bf16.gmra.mxu0 %v468
        %v726 = vpop.f32.mrf.mxu0
        %v727 = vadd.f32 0.0, %v726
        %v728 = vpop.f32.mrf.mxu0
        %v729 = vadd.f32 0.0, %v728
        %v730 = vpop.f32.mrf.mxu0
        %v731 = vadd.f32 0.0, %v730
        %v732 = vpop.f32.mrf.mxu0
        %v733 = vadd.f32 0.0, %v732
        %734 = vmatprep.mubr.bf16.mxu0 %v471
        %735 = vmatmul.mubr.bf16.gmra.mxu0 %v470
        %v736 = vpop.f32.mrf.mxu0
        %v737 = vadd.f32 0.0, %v736
        %v738 = vpop.f32.mrf.mxu0
        %v739 = vadd.f32 0.0, %v738
        %v740 = vpop.f32.mrf.mxu0
        %v741 = vadd.f32 0.0, %v740
        %v742 = vpop.f32.mrf.mxu0
        %v743 = vadd.f32 0.0, %v742
        %744 = vmatprep.mubr.bf16.mxu0 %v473
        %745 = vmatmul.mubr.bf16.gmra.mxu0 %v472
        %v746 = vpop.f32.mrf.mxu0
        %v747 = vadd.f32 0.0, %v746
        %v748 = vpop.f32.mrf.mxu0
        %v749 = vadd.f32 0.0, %v748
        %v750 = vpop.f32.mrf.mxu0
        %v751 = vadd.f32 0.0, %v750
        %v752 = vpop.f32.mrf.mxu0
        %v753 = vadd.f32 0.0, %v752
        %754 = vmatprep.mubr.bf16.mxu0 %v475
        %755 = vmatmul.mubr.bf16.gmra.mxu0 %v474
        %v756 = vpop.f32.mrf.mxu0
        %v757 = vadd.f32 0.0, %v756
        %v758 = vpop.f32.mrf.mxu0
        %v759 = vadd.f32 0.0, %v758
        %v760 = vpop.f32.mrf.mxu0
        %v761 = vadd.f32 0.0, %v760
        %v762 = vpop.f32.mrf.mxu0
        %v763 = vadd.f32 0.0, %v762
        %764 = vmatprep.mubr.bf16.mxu0 %v477
        %765 = vmatmul.mubr.bf16.gmra.mxu0 %v476
        %v766 = vpop.f32.mrf.mxu0
        %v767 = vadd.f32 0.0, %v766
        %v768 = vpop.f32.mrf.mxu0
        %v769 = vadd.f32 0.0, %v768
        %v770 = vpop.f32.mrf.mxu0
        %v771 = vadd.f32 0.0, %v770
        %v772 = vpop.f32.mrf.mxu0
        %v773 = vadd.f32 0.0, %v772
        %774 = vmatprep.mubr.bf16.mxu0 %v479
        %775 = vmatmul.mubr.bf16.gmra.mxu0 %v478
        %v776 = vpop.f32.mrf.mxu0
        %v777 = vadd.f32 0.0, %v776
        %v778 = vpop.f32.mrf.mxu0
        %v779 = vadd.f32 0.0, %v778
        %v780 = vpop.f32.mrf.mxu0
        %v781 = vadd.f32 0.0, %v780
        %v782 = vpop.f32.mrf.mxu0
        %v783 = vadd.f32 0.0, %v782
        %784 = vmatprep.mubr.bf16.mxu0 %v481
        %785 = vmatmul.mubr.bf16.gmra.mxu0 %v480
        %v786 = vpop.f32.mrf.mxu0
        %v787 = vadd.f32 0.0, %v786
        %v788 = vpop.f32.mrf.mxu0
        %v789 = vadd.f32 0.0, %v788
        %v790 = vpop.f32.mrf.mxu0
        %v791 = vadd.f32 0.0, %v790
        %v792 = vpop.f32.mrf.mxu0
        %v793 = vadd.f32 0.0, %v792
        %794 = vmatprep.mubr.bf16.mxu0 %v483
        %795 = vmatmul.mubr.bf16.gmra.mxu0 %v482
        %v796 = vpop.f32.mrf.mxu0
        %v797 = vadd.f32 0.0, %v796
        %v798 = vpop.f32.mrf.mxu0
        %v799 = vadd.f32 0.0, %v798
        %v800 = vpop.f32.mrf.mxu0
        %v801 = vadd.f32 0.0, %v800
        %v802 = vpop.f32.mrf.mxu0
        %v803 = vadd.f32 0.0, %v802
        %804 = vmatprep.mubr.bf16.mxu0 %v485
        %805 = vmatmul.mubr.bf16.gmra.mxu0 %v484
        %v806 = vpop.f32.mrf.mxu0
        %v807 = vadd.f32 0.0, %v806
        %v808 = vpop.f32.mrf.mxu0
        %v809 = vadd.f32 0.0, %v808
        %v810 = vpop.f32.mrf.mxu0
        %v811 = vadd.f32 0.0, %v810
        %v812 = vpop.f32.mrf.mxu0
        %v813 = vadd.f32 0.0, %v812
        %814 = vmatprep.mubr.bf16.mxu0 %v487
        %815 = vmatmul.mubr.bf16.gmra.mxu0 %v486
        %v816 = vpop.f32.mrf.mxu0
        %v817 = vadd.f32 0.0, %v816
        %v818 = vpop.f32.mrf.mxu0
        %v819 = vadd.f32 0.0, %v818
        %v820 = vpop.f32.mrf.mxu0
        %v821 = vadd.f32 0.0, %v820
        %v822 = vpop.f32.mrf.mxu0
        %v823 = vadd.f32 0.0, %v822
        %824 = vmatprep.mubr.bf16.mxu0 %v489
        %825 = vmatmul.mubr.bf16.gmra.mxu0 %v488
        %v826 = vpop.f32.mrf.mxu0
        %v827 = vadd.f32 0.0, %v826
        %v828 = vpop.f32.mrf.mxu0
        %v829 = vadd.f32 0.0, %v828
        %v830 = vpop.f32.mrf.mxu0
        %v831 = vadd.f32 0.0, %v830
        %v832 = vpop.f32.mrf.mxu0
        %v833 = vadd.f32 0.0, %v832
        %834 = vmatprep.mubr.bf16.mxu0 %v491
        %835 = vmatmul.mubr.bf16.gmra.mxu0 %v490
        %v836 = vpop.f32.mrf.mxu0
        %v837 = vadd.f32 0.0, %v836
        %v838 = vpop.f32.mrf.mxu0
        %v839 = vadd.f32 0.0, %v838
        %v840 = vpop.f32.mrf.mxu0
        %v841 = vadd.f32 0.0, %v840
        %v842 = vpop.f32.mrf.mxu0
        %v843 = vadd.f32 0.0, %v842
        %844 = vmatprep.mubr.bf16.mxu0 %v493
        %845 = vmatmul.mubr.bf16.gmra.mxu0 %v492
        %v846 = vpop.f32.mrf.mxu0
        %v847 = vadd.f32 0.0, %v846
        %v848 = vpop.f32.mrf.mxu0
        %v849 = vadd.f32 0.0, %v848
        %v850 = vpop.f32.mrf.mxu0
        %v851 = vadd.f32 0.0, %v850
        %v852 = vpop.f32.mrf.mxu0
        %v853 = vadd.f32 0.0, %v852
        %854 = vmatprep.mubr.bf16.mxu0 %v495
        %855 = vmatmul.mubr.bf16.gmra.mxu0 %v494
        %v856 = vpop.f32.mrf.mxu0
        %v857 = vadd.f32 0.0, %v856
        %v858 = vpop.f32.mrf.mxu0
        %v859 = vadd.f32 0.0, %v858
        %v860 = vpop.f32.mrf.mxu0
        %v861 = vadd.f32 0.0, %v860
        %v862 = vpop.f32.mrf.mxu0
        %v863 = vadd.f32 0.0, %v862
        %864 = vmatprep.mubr.bf16.mxu0 %v497
        %865 = vmatmul.mubr.bf16.gmra.mxu0 %v496
        %v866 = vpop.f32.mrf.mxu0
        %v867 = vadd.f32 0.0, %v866
        %v868 = vpop.f32.mrf.mxu0
        %v869 = vadd.f32 0.0, %v868
        %v870 = vpop.f32.mrf.mxu0
        %v871 = vadd.f32 0.0, %v870
        %v872 = vpop.f32.mrf.mxu0
        %v873 = vadd.f32 0.0, %v872
        %874 = vmatprep.mubr.bf16.mxu0 %v499
        %875 = vmatmul.mubr.bf16.gmra.mxu0 %v498
        %v876 = vpop.f32.mrf.mxu0
        %v877 = vadd.f32 0.0, %v876
        %v878 = vpop.f32.mrf.mxu0
        %v879 = vadd.f32 0.0, %v878
        %v880 = vpop.f32.mrf.mxu0
        %v881 = vadd.f32 0.0, %v880
        %v882 = vpop.f32.mrf.mxu0
        %v883 = vadd.f32 0.0, %v882
        %884 = vdwg.mxu0
        %885 = vst [vmem:[#allocation2] sm:$0xff] %v727
        %886 = vst [vmem:[#allocation2 + $0x8] sm:$0xff] %v729
        %887 = vst [vmem:[#allocation2 + $0x10] sm:$0xff] %v731
        %888 = vst [vmem:[#allocation2 + $0x18] sm:$0xff] %v733
        %889 = vst [vmem:[#allocation2 + $0x20] sm:$0xff] %v737
        %890 = vst [vmem:[#allocation2 + $0x28] sm:$0xff] %v739
        %891 = vst [vmem:[#allocation2 + $0x30] sm:$0xff] %v741
        %892 = vst [vmem:[#allocation2 + $0x38] sm:$0xff] %v743
        %893 = vst [vmem:[#allocation2 + $0x40] sm:$0xff] %v747
        %894 = vst [vmem:[#allocation2 + $0x48] sm:$0xff] %v749
        %895 = vst [vmem:[#allocation2 + $0x50] sm:$0xff] %v751
        %896 = vst [vmem:[#allocation2 + $0x58] sm:$0xff] %v753
        %897 = vst [vmem:[#allocation2 + $0x60] sm:$0xff] %v757
        %898 = vst [vmem:[#allocation2 + $0x68] sm:$0xff] %v759
        %899 = vst [vmem:[#allocation2 + $0x70] sm:$0xff] %v761
        %900 = vst [vmem:[#allocation2 + $0x78] sm:$0xff] %v763
        %901 = vst [vmem:[#allocation2 + $0x80] sm:$0xff] %v767
        %902 = vst [vmem:[#allocation2 + $0x88] sm:$0xff] %v769
        %903 = vst [vmem:[#allocation2 + $0x90] sm:$0xff] %v771
        %904 = vst [vmem:[#allocation2 + $0x98] sm:$0xff] %v773
        %905 = vst [vmem:[#allocation2 + $0xa0] sm:$0xff] %v777
        %906 = vst [vmem:[#allocation2 + $0xa8] sm:$0xff] %v779
        %907 = vst [vmem:[#allocation2 + $0xb0] sm:$0xff] %v781
        %908 = vst [vmem:[#allocation2 + $0xb8] sm:$0xff] %v783
        %909 = vst [vmem:[#allocation2 + $0xc0] sm:$0xff] %v787
        %910 = vst [vmem:[#allocation2 + $0xc8] sm:$0xff] %v789
        %911 = vst [vmem:[#allocation2 + $0xd0] sm:$0xff] %v791
        %912 = vst [vmem:[#allocation2 + $0xd8] sm:$0xff] %v793
        %913 = vst [vmem:[#allocation2 + $0xe0] sm:$0xff] %v797
        %914 = vst [vmem:[#allocation2 + $0xe8] sm:$0xff] %v799
        %915 = vst [vmem:[#allocation2 + $0xf0] sm:$0xff] %v801
        %916 = vst [vmem:[#allocation2 + $0xf8] sm:$0xff] %v803
        %917 = vst [vmem:[#allocation2 + $0x100] sm:$0xff] %v807
        %918 = vst [vmem:[#allocation2 + $0x108] sm:$0xff] %v809
        %919 = vst [vmem:[#allocation2 + $0x110] sm:$0xff] %v811
        %920 = vst [vmem:[#allocation2 + $0x118] sm:$0xff] %v813
        %921 = vst [vmem:[#allocation2 + $0x120] sm:$0xff] %v817
        %922 = vst [vmem:[#allocation2 + $0x128] sm:$0xff] %v819
        %923 = vst [vmem:[#allocation2 + $0x130] sm:$0xff] %v821
        %924 = vst [vmem:[#allocation2 + $0x138] sm:$0xff] %v823
        %925 = vst [vmem:[#allocation2 + $0x140] sm:$0xff] %v827
        %926 = vst [vmem:[#allocation2 + $0x148] sm:$0xff] %v829
        %927 = vst [vmem:[#allocation2 + $0x150] sm:$0xff] %v831
        %928 = vst [vmem:[#allocation2 + $0x158] sm:$0xff] %v833
        %929 = vst [vmem:[#allocation2 + $0x160] sm:$0xff] %v837
        %930 = vst [vmem:[#allocation2 + $0x168] sm:$0xff] %v839
        %931 = vst [vmem:[#allocation2 + $0x170] sm:$0xff] %v841
        %932 = vst [vmem:[#allocation2 + $0x178] sm:$0xff] %v843
        %933 = vst [vmem:[#allocation2 + $0x180] sm:$0xff] %v847
        %934 = vst [vmem:[#allocation2 + $0x188] sm:$0xff] %v849
        %935 = vst [vmem:[#allocation2 + $0x190] sm:$0xff] %v851
        %936 = vst [vmem:[#allocation2 + $0x198] sm:$0xff] %v853
        %937 = vst [vmem:[#allocation2 + $0x1a0] sm:$0xff] %v857
        %938 = vst [vmem:[#allocation2 + $0x1a8] sm:$0xff] %v859
        %939 = vst [vmem:[#allocation2 + $0x1b0] sm:$0xff] %v861
        %940 = vst [vmem:[#allocation2 + $0x1b8] sm:$0xff] %v863
        %941 = vst [vmem:[#allocation2 + $0x1c0] sm:$0xff] %v867
        %942 = vst [vmem:[#allocation2 + $0x1c8] sm:$0xff] %v869
        %943 = vst [vmem:[#allocation2 + $0x1d0] sm:$0xff] %v871
        %944 = vst [vmem:[#allocation2 + $0x1d8] sm:$0xff] %v873
        %945 = vst [vmem:[#allocation2 + $0x1e0] sm:$0xff] %v877
        %946 = vst [vmem:[#allocation2 + $0x1e8] sm:$0xff] %v879
        %947 = vst [vmem:[#allocation2 + $0x1f0] sm:$0xff] %v881
        %948 = vst [vmem:[#allocation2 + $0x1f8] sm:$0xff] %v883
        %v949 = vld [vmem:[#allocation3 + $0x20] sm:$0xff]
        %v950 = vld [vmem:[#allocation3 + $0x28] sm:$0xff]
        %v951 = vld [vmem:[#allocation3 + $0x30] sm:$0xff]
        %v952 = vld [vmem:[#allocation3 + $0x38] sm:$0xff]
        %v953 = vld [vmem:[#allocation3 + $0x40] sm:$0xff]
        %v954 = vld [vmem:[#allocation3 + $0x48] sm:$0xff]
        %v955 = vld [vmem:[#allocation3 + $0x50] sm:$0xff]
        %v956 = vld [vmem:[#allocation3 + $0x58] sm:$0xff]
        %v957 = vld [vmem:[#allocation3 + $0x60] sm:$0xff]
        %v958 = vld [vmem:[#allocation3 + $0x68] sm:$0xff]
        %v959 = vld [vmem:[#allocation3 + $0x70] sm:$0xff]
        %v960 = vld [vmem:[#allocation3 + $0x78] sm:$0xff]
        %v961 = vld [vmem:[#allocation3 + $0x80] sm:$0xff]
        %v962 = vld [vmem:[#allocation3 + $0x88] sm:$0xff]
        %v963 = vld [vmem:[#allocation3 + $0x90] sm:$0xff]
        %v964 = vld [vmem:[#allocation3 + $0x98] sm:$0xff]
        %v965 = vld [vmem:[#allocation3 + $0xa0] sm:$0xff]
        %v966 = vld [vmem:[#allocation3 + $0xa8] sm:$0xff]
        %v967 = vld [vmem:[#allocation3 + $0xb0] sm:$0xff]
        %v968 = vld [vmem:[#allocation3 + $0xb8] sm:$0xff]
        %v969 = vld [vmem:[#allocation3 + $0xc0] sm:$0xff]
        %v970 = vld [vmem:[#allocation3 + $0xc8] sm:$0xff]
        %v971 = vld [vmem:[#allocation3 + $0xd0] sm:$0xff]
        %v972 = vld [vmem:[#allocation3 + $0xd8] sm:$0xff]
        %v973 = vld [vmem:[#allocation3 + $0xe0] sm:$0xff]
        %v974 = vld [vmem:[#allocation3 + $0xe8] sm:$0xff]
        %v975 = vld [vmem:[#allocation3 + $0xf0] sm:$0xff]
        %v976 = vld [vmem:[#allocation3 + $0xf8] sm:$0xff]
        %v977 = vld [vmem:[#allocation3 + $0x100] sm:$0xff]
        %v978 = vld [vmem:[#allocation3 + $0x108] sm:$0xff]
        %v979 = vld [vmem:[#allocation3 + $0x110] sm:$0xff]
        %v980 = vld [vmem:[#allocation3 + $0x118] sm:$0xff]
        %s981 = scalar_lea.vmem %s219, 768
        %v982 = vld [vmem:[%s981] sm:$0xff]
        %v983 = vld [vmem:[%s981 + $0x8] sm:$0xff]
        %v984 = vld [vmem:[%s981 + $0x10] sm:$0xff]
        %v985 = vld [vmem:[%s981 + $0x18] sm:$0xff]
        %v986 = vld [vmem:[%s981 + $0x20] sm:$0xff]
        %v987 = vld [vmem:[%s981 + $0x28] sm:$0xff]
        %v988 = vld [vmem:[%s981 + $0x30] sm:$0xff]
        %v989 = vld [vmem:[%s981 + $0x38] sm:$0xff]
        %v990 = vld [vmem:[%s981 + $0x40] sm:$0xff]
        %v991 = vld [vmem:[%s981 + $0x48] sm:$0xff]
        %v992 = vld [vmem:[%s981 + $0x50] sm:$0xff]
        %v993 = vld [vmem:[%s981 + $0x58] sm:$0xff]
        %v994 = vld [vmem:[%s981 + $0x60] sm:$0xff]
        %v995 = vld [vmem:[%s981 + $0x68] sm:$0xff]
        %v996 = vld [vmem:[%s981 + $0x70] sm:$0xff]
        %v997 = vld [vmem:[%s981 + $0x78] sm:$0xff]
        %v998 = vld [vmem:[%s981 + $0x80] sm:$0xff]
        %v999 = vld [vmem:[%s981 + $0x88] sm:$0xff]
        %v1000 = vld [vmem:[%s981 + $0x90] sm:$0xff]
        %v1001 = vld [vmem:[%s981 + $0x98] sm:$0xff]
        %v1002 = vld [vmem:[%s981 + $0xa0] sm:$0xff]
        %v1003 = vld [vmem:[%s981 + $0xa8] sm:$0xff]
        %v1004 = vld [vmem:[%s981 + $0xb0] sm:$0xff]
        %v1005 = vld [vmem:[%s981 + $0xb8] sm:$0xff]
        %v1006 = vld [vmem:[%s981 + $0xc0] sm:$0xff]
        %v1007 = vld [vmem:[%s981 + $0xc8] sm:$0xff]
        %v1008 = vld [vmem:[%s981 + $0xd0] sm:$0xff]
        %v1009 = vld [vmem:[%s981 + $0xd8] sm:$0xff]
        %v1010 = vld [vmem:[%s981 + $0xe0] sm:$0xff]
        %v1011 = vld [vmem:[%s981 + $0xe8] sm:$0xff]
        %v1012 = vld [vmem:[%s981 + $0xf0] sm:$0xff]
        %v1013 = vld [vmem:[%s981 + $0xf8] sm:$0xff]
        %v1046 = vunpack.c.l.b16 %v949
        %v1047 = vunpack.c.h.b16 %v949
        %v1048 = vunpack.c.l.b16 %v950
        %v1049 = vunpack.c.h.b16 %v950
        %v1050 = vunpack.c.l.b16 %v951
        %v1051 = vunpack.c.h.b16 %v951
        %v1052 = vunpack.c.l.b16 %v952
        %v1053 = vunpack.c.h.b16 %v952
        %v1054 = vunpack.c.l.b16 %v953
        %v1055 = vunpack.c.h.b16 %v953
        %v1056 = vunpack.c.l.b16 %v954
        %v1057 = vunpack.c.h.b16 %v954
        %v1058 = vunpack.c.l.b16 %v955
        %v1059 = vunpack.c.h.b16 %v955
        %v1060 = vunpack.c.l.b16 %v956
        %v1061 = vunpack.c.h.b16 %v956
        %v1062 = vunpack.c.l.b16 %v957
        %v1063 = vunpack.c.h.b16 %v957
        %v1064 = vunpack.c.l.b16 %v958
        %v1065 = vunpack.c.h.b16 %v958
        %v1066 = vunpack.c.l.b16 %v959
        %v1067 = vunpack.c.h.b16 %v959
        %v1068 = vunpack.c.l.b16 %v960
        %v1069 = vunpack.c.h.b16 %v960
        %v1070 = vunpack.c.l.b16 %v961
        %v1071 = vunpack.c.h.b16 %v961
        %v1072 = vunpack.c.l.b16 %v962
        %v1073 = vunpack.c.h.b16 %v962
        %v1074 = vunpack.c.l.b16 %v963
        %v1075 = vunpack.c.h.b16 %v963
        %v1076 = vunpack.c.l.b16 %v964
        %v1077 = vunpack.c.h.b16 %v964
        %v1078 = vunpack.c.l.b16 %v965
        %v1079 = vunpack.c.h.b16 %v965
        %v1080 = vunpack.c.l.b16 %v966
        %v1081 = vunpack.c.h.b16 %v966
        %v1082 = vunpack.c.l.b16 %v967
        %v1083 = vunpack.c.h.b16 %v967
        %v1084 = vunpack.c.l.b16 %v968
        %v1085 = vunpack.c.h.b16 %v968
        %v1086 = vunpack.c.l.b16 %v969
        %v1087 = vunpack.c.h.b16 %v969
        %v1088 = vunpack.c.l.b16 %v970
        %v1089 = vunpack.c.h.b16 %v970
        %v1090 = vunpack.c.l.b16 %v971
        %v1091 = vunpack.c.h.b16 %v971
        %v1092 = vunpack.c.l.b16 %v972
        %v1093 = vunpack.c.h.b16 %v972
        %v1094 = vunpack.c.l.b16 %v973
        %v1095 = vunpack.c.h.b16 %v973
        %v1096 = vunpack.c.l.b16 %v974
        %v1097 = vunpack.c.h.b16 %v974
        %v1098 = vunpack.c.l.b16 %v975
        %v1099 = vunpack.c.h.b16 %v975
        %v1100 = vunpack.c.l.b16 %v976
        %v1101 = vunpack.c.h.b16 %v976
        %v1102 = vunpack.c.l.b16 %v977
        %v1103 = vunpack.c.h.b16 %v977
        %v1104 = vunpack.c.l.b16 %v978
        %v1105 = vunpack.c.h.b16 %v978
        %v1106 = vunpack.c.l.b16 %v979
        %v1107 = vunpack.c.h.b16 %v979
        %v1108 = vunpack.c.l.b16 %v980
        %v1109 = vunpack.c.h.b16 %v980
        %v1110 = vpack.c.b16 %v1048, %v1046
        %v1111 = vpack.c.b16 %v1049, %v1047
        %v1112 = vpack.c.b16 %v1052, %v1050
        %v1113 = vpack.c.b16 %v1053, %v1051
        %v1114 = vpack.c.b16 %v1056, %v1054
        %v1115 = vpack.c.b16 %v1057, %v1055
        %v1116 = vpack.c.b16 %v1060, %v1058
        %v1117 = vpack.c.b16 %v1061, %v1059
        %v1118 = vpack.c.b16 %v1064, %v1062
        %v1119 = vpack.c.b16 %v1065, %v1063
        %v1120 = vpack.c.b16 %v1068, %v1066
        %v1121 = vpack.c.b16 %v1069, %v1067
        %v1122 = vpack.c.b16 %v1072, %v1070
        %v1123 = vpack.c.b16 %v1073, %v1071
        %v1124 = vpack.c.b16 %v1076, %v1074
        %v1125 = vpack.c.b16 %v1077, %v1075
        %v1126 = vpack.c.b16 %v1080, %v1078
        %v1127 = vpack.c.b16 %v1081, %v1079
        %v1128 = vpack.c.b16 %v1084, %v1082
        %v1129 = vpack.c.b16 %v1085, %v1083
        %v1130 = vpack.c.b16 %v1088, %v1086
        %v1131 = vpack.c.b16 %v1089, %v1087
        %v1132 = vpack.c.b16 %v1092, %v1090
        %v1133 = vpack.c.b16 %v1093, %v1091
        %v1134 = vpack.c.b16 %v1096, %v1094
        %v1135 = vpack.c.b16 %v1097, %v1095
        %v1136 = vpack.c.b16 %v1100, %v1098
        %v1137 = vpack.c.b16 %v1101, %v1099
        %v1138 = vpack.c.b16 %v1104, %v1102
        %v1139 = vpack.c.b16 %v1105, %v1103
        %v1140 = vpack.c.b16 %v1108, %v1106
        %v1141 = vpack.c.b16 %v1109, %v1107
        %v1206 = vunpack.c.l.b16 %v982
        %v1207 = vunpack.c.h.b16 %v982
        %v1208 = vunpack.c.l.b16 %v983
        %v1209 = vunpack.c.h.b16 %v983
        %v1210 = vunpack.c.l.b16 %v984
        %v1211 = vunpack.c.h.b16 %v984
        %v1212 = vunpack.c.l.b16 %v985
        %v1213 = vunpack.c.h.b16 %v985
        %v1214 = vunpack.c.l.b16 %v986
        %v1215 = vunpack.c.h.b16 %v986
        %v1216 = vunpack.c.l.b16 %v987
        %v1217 = vunpack.c.h.b16 %v987
        %v1218 = vunpack.c.l.b16 %v988
        %v1219 = vunpack.c.h.b16 %v988
        %v1220 = vunpack.c.l.b16 %v989
        %v1221 = vunpack.c.h.b16 %v989
        %v1222 = vunpack.c.l.b16 %v990
        %v1223 = vunpack.c.h.b16 %v990
        %v1224 = vunpack.c.l.b16 %v991
        %v1225 = vunpack.c.h.b16 %v991
        %v1226 = vunpack.c.l.b16 %v992
        %v1227 = vunpack.c.h.b16 %v992
        %v1228 = vunpack.c.l.b16 %v993
        %v1229 = vunpack.c.h.b16 %v993
        %v1230 = vunpack.c.l.b16 %v994
        %v1231 = vunpack.c.h.b16 %v994
        %v1232 = vunpack.c.l.b16 %v995
        %v1233 = vunpack.c.h.b16 %v995
        %v1234 = vunpack.c.l.b16 %v996
        %v1235 = vunpack.c.h.b16 %v996
        %v1236 = vunpack.c.l.b16 %v997
        %v1237 = vunpack.c.h.b16 %v997
        %v1238 = vunpack.c.l.b16 %v998
        %v1239 = vunpack.c.h.b16 %v998
        %v1240 = vunpack.c.l.b16 %v999
        %v1241 = vunpack.c.h.b16 %v999
        %v1242 = vunpack.c.l.b16 %v1000
        %v1243 = vunpack.c.h.b16 %v1000
        %v1244 = vunpack.c.l.b16 %v1001
        %v1245 = vunpack.c.h.b16 %v1001
        %v1246 = vunpack.c.l.b16 %v1002
        %v1247 = vunpack.c.h.b16 %v1002
        %v1248 = vunpack.c.l.b16 %v1003
        %v1249 = vunpack.c.h.b16 %v1003
        %v1250 = vunpack.c.l.b16 %v1004
        %v1251 = vunpack.c.h.b16 %v1004
        %v1252 = vunpack.c.l.b16 %v1005
        %v1253 = vunpack.c.h.b16 %v1005
        %v1254 = vunpack.c.l.b16 %v1006
        %v1255 = vunpack.c.h.b16 %v1006
        %v1256 = vunpack.c.l.b16 %v1007
        %v1257 = vunpack.c.h.b16 %v1007
        %v1258 = vunpack.c.l.b16 %v1008
        %v1259 = vunpack.c.h.b16 %v1008
        %v1260 = vunpack.c.l.b16 %v1009
        %v1261 = vunpack.c.h.b16 %v1009
        %v1262 = vunpack.c.l.b16 %v1010
        %v1263 = vunpack.c.h.b16 %v1010
        %v1264 = vunpack.c.l.b16 %v1011
        %v1265 = vunpack.c.h.b16 %v1011
        %v1266 = vunpack.c.l.b16 %v1012
        %v1267 = vunpack.c.h.b16 %v1012
        %v1268 = vunpack.c.l.b16 %v1013
        %v1269 = vunpack.c.h.b16 %v1013
        %v1270 = vpack.c.b16 %v1208, %v1206
        %v1271 = vpack.c.b16 %v1209, %v1207
        %v1272 = vpack.c.b16 %v1212, %v1210
        %v1273 = vpack.c.b16 %v1213, %v1211
        %v1274 = vpack.c.b16 %v1216, %v1214
        %v1275 = vpack.c.b16 %v1217, %v1215
        %v1276 = vpack.c.b16 %v1220, %v1218
        %v1277 = vpack.c.b16 %v1221, %v1219
        %v1278 = vpack.c.b16 %v1224, %v1222
        %v1279 = vpack.c.b16 %v1225, %v1223
        %v1280 = vpack.c.b16 %v1228, %v1226
        %v1281 = vpack.c.b16 %v1229, %v1227
        %v1282 = vpack.c.b16 %v1232, %v1230
        %v1283 = vpack.c.b16 %v1233, %v1231
        %v1284 = vpack.c.b16 %v1236, %v1234
        %v1285 = vpack.c.b16 %v1237, %v1235
        %v1286 = vpack.c.b16 %v1240, %v1238
        %v1287 = vpack.c.b16 %v1241, %v1239
        %v1288 = vpack.c.b16 %v1244, %v1242
        %v1289 = vpack.c.b16 %v1245, %v1243
        %v1290 = vpack.c.b16 %v1248, %v1246
        %v1291 = vpack.c.b16 %v1249, %v1247
        %v1292 = vpack.c.b16 %v1252, %v1250
        %v1293 = vpack.c.b16 %v1253, %v1251
        %v1294 = vpack.c.b16 %v1256, %v1254
        %v1295 = vpack.c.b16 %v1257, %v1255
        %v1296 = vpack.c.b16 %v1260, %v1258
        %v1297 = vpack.c.b16 %v1261, %v1259
        %v1298 = vpack.c.b16 %v1264, %v1262
        %v1299 = vpack.c.b16 %v1265, %v1263
        %v1300 = vpack.c.b16 %v1268, %v1266
        %v1301 = vpack.c.b16 %v1269, %v1267
        %1334 = vmatprep.subr.bf16.mxu0 %v1285
        %1335 = vmatpush1.bf16.msra.mxu0 %v1284
        %1336 = vmatprep.subr.bf16.mxu0 %v1283
        %1337 = vmatpush1.bf16.msra.mxu0 %v1282
        %1338 = vmatprep.subr.bf16.mxu0 %v1281
        %1339 = vmatpush1.bf16.msra.mxu0 %v1280
        %1340 = vmatprep.subr.bf16.mxu0 %v1279
        %1341 = vmatpush1.bf16.msra.mxu0 %v1278
        %1342 = vmatprep.subr.bf16.mxu0 %v1277
        %1343 = vmatpush1.bf16.msra.mxu0 %v1276
        %1344 = vmatprep.subr.bf16.mxu0 %v1275
        %1345 = vmatpush1.bf16.msra.mxu0 %v1274
        %1346 = vmatprep.subr.bf16.mxu0 %v1273
        %1347 = vmatpush1.bf16.msra.mxu0 %v1272
        %1348 = vmatprep.subr.bf16.mxu0 %v1271
        %1349 = vmatpush1.bf16.msra.mxu0 %v1270
        %1350 = vmatprep.subr.bf16.mxu0 %v1301
        %1351 = vmatpush2.bf16.msra.mxu0 %v1300
        %1352 = vmatprep.subr.bf16.mxu0 %v1299
        %1353 = vmatpush2.bf16.msra.mxu0 %v1298
        %1354 = vmatprep.subr.bf16.mxu0 %v1297
        %1355 = vmatpush2.bf16.msra.mxu0 %v1296
        %1356 = vmatprep.subr.bf16.mxu0 %v1295
        %1357 = vmatpush2.bf16.msra.mxu0 %v1294
        %1358 = vmatprep.subr.bf16.mxu0 %v1293
        %1359 = vmatpush2.bf16.msra.mxu0 %v1292
        %1360 = vmatprep.subr.bf16.mxu0 %v1291
        %1361 = vmatpush2.bf16.msra.mxu0 %v1290
        %1362 = vmatprep.subr.bf16.mxu0 %v1289
        %1363 = vmatpush2.bf16.msra.mxu0 %v1288
        %1364 = vmatprep.subr.bf16.mxu0 %v1287
        %1365 = vmatpush2.bf16.msra.mxu0 %v1286
        %1366 = vmatprep.mubr.bf16.mxu0 %v1111
        %1367 = vmatmul.mubr.bf16.gmra.mxu0 %v1110
        %v1368 = vpop.f32.mrf.mxu0
        %v1369 = vadd.f32 0.0, %v1368
        %v1370 = vpop.f32.mrf.mxu0
        %v1371 = vadd.f32 0.0, %v1370
        %v1372 = vpop.f32.mrf.mxu0
        %v1373 = vadd.f32 0.0, %v1372
        %v1374 = vpop.f32.mrf.mxu0
        %v1375 = vadd.f32 0.0, %v1374
        %1376 = vmatprep.mubr.bf16.mxu0 %v1113
        %1377 = vmatmul.mubr.bf16.gmra.mxu0 %v1112
        %v1378 = vpop.f32.mrf.mxu0
        %v1379 = vadd.f32 0.0, %v1378
        %v1380 = vpop.f32.mrf.mxu0
        %v1381 = vadd.f32 0.0, %v1380
        %v1382 = vpop.f32.mrf.mxu0
        %v1383 = vadd.f32 0.0, %v1382
        %v1384 = vpop.f32.mrf.mxu0
        %v1385 = vadd.f32 0.0, %v1384
        %1386 = vmatprep.mubr.bf16.mxu0 %v1115
        %1387 = vmatmul.mubr.bf16.gmra.mxu0 %v1114
        %v1388 = vpop.f32.mrf.mxu0
        %v1389 = vadd.f32 0.0, %v1388
        %v1390 = vpop.f32.mrf.mxu0
        %v1391 = vadd.f32 0.0, %v1390
        %v1392 = vpop.f32.mrf.mxu0
        %v1393 = vadd.f32 0.0, %v1392
        %v1394 = vpop.f32.mrf.mxu0
        %v1395 = vadd.f32 0.0, %v1394
        %1396 = vmatprep.mubr.bf16.mxu0 %v1117
        %1397 = vmatmul.mubr.bf16.gmra.mxu0 %v1116
        %v1398 = vpop.f32.mrf.mxu0
        %v1399 = vadd.f32 0.0, %v1398
        %v1400 = vpop.f32.mrf.mxu0
        %v1401 = vadd.f32 0.0, %v1400
        %v1402 = vpop.f32.mrf.mxu0
        %v1403 = vadd.f32 0.0, %v1402
        %v1404 = vpop.f32.mrf.mxu0
        %v1405 = vadd.f32 0.0, %v1404
        %1406 = vmatprep.mubr.bf16.mxu0 %v1119
        %1407 = vmatmul.mubr.bf16.gmra.mxu0 %v1118
        %v1408 = vpop.f32.mrf.mxu0
        %v1409 = vadd.f32 0.0, %v1408
        %v1410 = vpop.f32.mrf.mxu0
        %v1411 = vadd.f32 0.0, %v1410
        %v1412 = vpop.f32.mrf.mxu0
        %v1413 = vadd.f32 0.0, %v1412
        %v1414 = vpop.f32.mrf.mxu0
        %v1415 = vadd.f32 0.0, %v1414
        %1416 = vmatprep.mubr.bf16.mxu0 %v1121
        %1417 = vmatmul.mubr.bf16.gmra.mxu0 %v1120
        %v1418 = vpop.f32.mrf.mxu0
        %v1419 = vadd.f32 0.0, %v1418
        %v1420 = vpop.f32.mrf.mxu0
        %v1421 = vadd.f32 0.0, %v1420
        %v1422 = vpop.f32.mrf.mxu0
        %v1423 = vadd.f32 0.0, %v1422
        %v1424 = vpop.f32.mrf.mxu0
        %v1425 = vadd.f32 0.0, %v1424
        %1426 = vmatprep.mubr.bf16.mxu0 %v1123
        %1427 = vmatmul.mubr.bf16.gmra.mxu0 %v1122
        %v1428 = vpop.f32.mrf.mxu0
        %v1429 = vadd.f32 0.0, %v1428
        %v1430 = vpop.f32.mrf.mxu0
        %v1431 = vadd.f32 0.0, %v1430
        %v1432 = vpop.f32.mrf.mxu0
        %v1433 = vadd.f32 0.0, %v1432
        %v1434 = vpop.f32.mrf.mxu0
        %v1435 = vadd.f32 0.0, %v1434
        %1436 = vmatprep.mubr.bf16.mxu0 %v1125
        %1437 = vmatmul.mubr.bf16.gmra.mxu0 %v1124
        %v1438 = vpop.f32.mrf.mxu0
        %v1439 = vadd.f32 0.0, %v1438
        %v1440 = vpop.f32.mrf.mxu0
        %v1441 = vadd.f32 0.0, %v1440
        %v1442 = vpop.f32.mrf.mxu0
        %v1443 = vadd.f32 0.0, %v1442
        %v1444 = vpop.f32.mrf.mxu0
        %v1445 = vadd.f32 0.0, %v1444
        %1446 = vmatprep.mubr.bf16.mxu0 %v1127
        %1447 = vmatmul.mubr.bf16.gmra.mxu0 %v1126
        %v1448 = vpop.f32.mrf.mxu0
        %v1449 = vadd.f32 0.0, %v1448
        %v1450 = vpop.f32.mrf.mxu0
        %v1451 = vadd.f32 0.0, %v1450
        %v1452 = vpop.f32.mrf.mxu0
        %v1453 = vadd.f32 0.0, %v1452
        %v1454 = vpop.f32.mrf.mxu0
        %v1455 = vadd.f32 0.0, %v1454
        %1456 = vmatprep.mubr.bf16.mxu0 %v1129
        %1457 = vmatmul.mubr.bf16.gmra.mxu0 %v1128
        %v1458 = vpop.f32.mrf.mxu0
        %v1459 = vadd.f32 0.0, %v1458
        %v1460 = vpop.f32.mrf.mxu0
        %v1461 = vadd.f32 0.0, %v1460
        %v1462 = vpop.f32.mrf.mxu0
        %v1463 = vadd.f32 0.0, %v1462
        %v1464 = vpop.f32.mrf.mxu0
        %v1465 = vadd.f32 0.0, %v1464
        %1466 = vmatprep.mubr.bf16.mxu0 %v1131
        %1467 = vmatmul.mubr.bf16.gmra.mxu0 %v1130
        %v1468 = vpop.f32.mrf.mxu0
        %v1469 = vadd.f32 0.0, %v1468
        %v1470 = vpop.f32.mrf.mxu0
        %v1471 = vadd.f32 0.0, %v1470
        %v1472 = vpop.f32.mrf.mxu0
        %v1473 = vadd.f32 0.0, %v1472
        %v1474 = vpop.f32.mrf.mxu0
        %v1475 = vadd.f32 0.0, %v1474
        %1476 = vmatprep.mubr.bf16.mxu0 %v1133
        %1477 = vmatmul.mubr.bf16.gmra.mxu0 %v1132
        %v1478 = vpop.f32.mrf.mxu0
        %v1479 = vadd.f32 0.0, %v1478
        %v1480 = vpop.f32.mrf.mxu0
        %v1481 = vadd.f32 0.0, %v1480
        %v1482 = vpop.f32.mrf.mxu0
        %v1483 = vadd.f32 0.0, %v1482
        %v1484 = vpop.f32.mrf.mxu0
        %v1485 = vadd.f32 0.0, %v1484
        %1486 = vmatprep.mubr.bf16.mxu0 %v1135
        %1487 = vmatmul.mubr.bf16.gmra.mxu0 %v1134
        %v1488 = vpop.f32.mrf.mxu0
        %v1489 = vadd.f32 0.0, %v1488
        %v1490 = vpop.f32.mrf.mxu0
        %v1491 = vadd.f32 0.0, %v1490
        %v1492 = vpop.f32.mrf.mxu0
        %v1493 = vadd.f32 0.0, %v1492
        %v1494 = vpop.f32.mrf.mxu0
        %v1495 = vadd.f32 0.0, %v1494
        %1496 = vmatprep.mubr.bf16.mxu0 %v1137
        %1497 = vmatmul.mubr.bf16.gmra.mxu0 %v1136
        %v1498 = vpop.f32.mrf.mxu0
        %v1499 = vadd.f32 0.0, %v1498
        %v1500 = vpop.f32.mrf.mxu0
        %v1501 = vadd.f32 0.0, %v1500
        %v1502 = vpop.f32.mrf.mxu0
        %v1503 = vadd.f32 0.0, %v1502
        %v1504 = vpop.f32.mrf.mxu0
        %v1505 = vadd.f32 0.0, %v1504
        %1506 = vmatprep.mubr.bf16.mxu0 %v1139
        %1507 = vmatmul.mubr.bf16.gmra.mxu0 %v1138
        %v1508 = vpop.f32.mrf.mxu0
        %v1509 = vadd.f32 0.0, %v1508
        %v1510 = vpop.f32.mrf.mxu0
        %v1511 = vadd.f32 0.0, %v1510
        %v1512 = vpop.f32.mrf.mxu0
        %v1513 = vadd.f32 0.0, %v1512
        %v1514 = vpop.f32.mrf.mxu0
        %v1515 = vadd.f32 0.0, %v1514
        %1516 = vmatprep.mubr.bf16.mxu0 %v1141
        %1517 = vmatmul.mubr.bf16.gmra.mxu0 %v1140
        %v1518 = vpop.f32.mrf.mxu0
        %v1519 = vadd.f32 0.0, %v1518
        %v1520 = vpop.f32.mrf.mxu0
        %v1521 = vadd.f32 0.0, %v1520
        %v1522 = vpop.f32.mrf.mxu0
        %v1523 = vadd.f32 0.0, %v1522
        %v1524 = vpop.f32.mrf.mxu0
        %v1525 = vadd.f32 0.0, %v1524
        %1526 = vdwg.mxu0
        %v1527 = vld [vmem:[#allocation2] sm:$0xff]
        %v1528 = vld [vmem:[#allocation2 + $0x8] sm:$0xff]
        %v1529 = vld [vmem:[#allocation2 + $0x10] sm:$0xff]
        %v1530 = vld [vmem:[#allocation2 + $0x18] sm:$0xff]
        %v1531 = vld [vmem:[#allocation2 + $0x20] sm:$0xff]
        %v1532 = vld [vmem:[#allocation2 + $0x28] sm:$0xff]
        %v1533 = vld [vmem:[#allocation2 + $0x30] sm:$0xff]
        %v1534 = vld [vmem:[#allocation2 + $0x38] sm:$0xff]
        %v1535 = vld [vmem:[#allocation2 + $0x40] sm:$0xff]
        %v1536 = vld [vmem:[#allocation2 + $0x48] sm:$0xff]
        %v1537 = vld [vmem:[#allocation2 + $0x50] sm:$0xff]
        %v1538 = vld [vmem:[#allocation2 + $0x58] sm:$0xff]
        %v1539 = vld [vmem:[#allocation2 + $0x60] sm:$0xff]
        %v1540 = vld [vmem:[#allocation2 + $0x68] sm:$0xff]
        %v1541 = vld [vmem:[#allocation2 + $0x70] sm:$0xff]
        %v1542 = vld [vmem:[#allocation2 + $0x78] sm:$0xff]
        %v1543 = vld [vmem:[#allocation2 + $0x80] sm:$0xff]
        %v1544 = vld [vmem:[#allocation2 + $0x88] sm:$0xff]
        %v1545 = vld [vmem:[#allocation2 + $0x90] sm:$0xff]
        %v1546 = vld [vmem:[#allocation2 + $0x98] sm:$0xff]
        %v1547 = vld [vmem:[#allocation2 + $0xa0] sm:$0xff]
        %v1548 = vld [vmem:[#allocation2 + $0xa8] sm:$0xff]
        %v1549 = vld [vmem:[#allocation2 + $0xb0] sm:$0xff]
        %v1550 = vld [vmem:[#allocation2 + $0xb8] sm:$0xff]
        %v1551 = vld [vmem:[#allocation2 + $0xc0] sm:$0xff]
        %v1552 = vld [vmem:[#allocation2 + $0xc8] sm:$0xff]
        %v1553 = vld [vmem:[#allocation2 + $0xd0] sm:$0xff]
        %v1554 = vld [vmem:[#allocation2 + $0xd8] sm:$0xff]
        %v1555 = vld [vmem:[#allocation2 + $0xe0] sm:$0xff]
        %v1556 = vld [vmem:[#allocation2 + $0xe8] sm:$0xff]
        %v1557 = vld [vmem:[#allocation2 + $0xf0] sm:$0xff]
        %v1558 = vld [vmem:[#allocation2 + $0xf8] sm:$0xff]
        %v1559 = vld [vmem:[#allocation2 + $0x100] sm:$0xff]
        %v1560 = vld [vmem:[#allocation2 + $0x108] sm:$0xff]
        %v1561 = vld [vmem:[#allocation2 + $0x110] sm:$0xff]
        %v1562 = vld [vmem:[#allocation2 + $0x118] sm:$0xff]
        %v1563 = vld [vmem:[#allocation2 + $0x120] sm:$0xff]
        %v1564 = vld [vmem:[#allocation2 + $0x128] sm:$0xff]
        %v1565 = vld [vmem:[#allocation2 + $0x130] sm:$0xff]
        %v1566 = vld [vmem:[#allocation2 + $0x138] sm:$0xff]
        %v1567 = vld [vmem:[#allocation2 + $0x140] sm:$0xff]
        %v1568 = vld [vmem:[#allocation2 + $0x148] sm:$0xff]
        %v1569 = vld [vmem:[#allocation2 + $0x150] sm:$0xff]
        %v1570 = vld [vmem:[#allocation2 + $0x158] sm:$0xff]
        %v1571 = vld [vmem:[#allocation2 + $0x160] sm:$0xff]
        %v1572 = vld [vmem:[#allocation2 + $0x168] sm:$0xff]
        %v1573 = vld [vmem:[#allocation2 + $0x170] sm:$0xff]
        %v1574 = vld [vmem:[#allocation2 + $0x178] sm:$0xff]
        %v1575 = vld [vmem:[#allocation2 + $0x180] sm:$0xff]
        %v1576 = vld [vmem:[#allocation2 + $0x188] sm:$0xff]
        %v1577 = vld [vmem:[#allocation2 + $0x190] sm:$0xff]
        %v1578 = vld [vmem:[#allocation2 + $0x198] sm:$0xff]
        %v1579 = vld [vmem:[#allocation2 + $0x1a0] sm:$0xff]
        %v1580 = vld [vmem:[#allocation2 + $0x1a8] sm:$0xff]
        %v1581 = vld [vmem:[#allocation2 + $0x1b0] sm:$0xff]
        %v1582 = vld [vmem:[#allocation2 + $0x1b8] sm:$0xff]
        %v1583 = vld [vmem:[#allocation2 + $0x1c0] sm:$0xff]
        %v1584 = vld [vmem:[#allocation2 + $0x1c8] sm:$0xff]
        %v1585 = vld [vmem:[#allocation2 + $0x1d0] sm:$0xff]
        %v1586 = vld [vmem:[#allocation2 + $0x1d8] sm:$0xff]
        %v1587 = vld [vmem:[#allocation2 + $0x1e0] sm:$0xff]
        %v1588 = vld [vmem:[#allocation2 + $0x1e8] sm:$0xff]
        %v1589 = vld [vmem:[#allocation2 + $0x1f0] sm:$0xff]
        %v1590 = vld [vmem:[#allocation2 + $0x1f8] sm:$0xff]
        %v1591 = vadd.f32 %v1527, %v1369
        %v1592 = vadd.f32 %v1528, %v1371
        %v1593 = vadd.f32 %v1529, %v1373
        %v1594 = vadd.f32 %v1530, %v1375
        %v1595 = vadd.f32 %v1531, %v1379
        %v1596 = vadd.f32 %v1532, %v1381
        %v1597 = vadd.f32 %v1533, %v1383
        %v1598 = vadd.f32 %v1534, %v1385
        %v1599 = vadd.f32 %v1535, %v1389
        %v1600 = vadd.f32 %v1536, %v1391
        %v1601 = vadd.f32 %v1537, %v1393
        %v1602 = vadd.f32 %v1538, %v1395
        %v1603 = vadd.f32 %v1539, %v1399
        %v1604 = vadd.f32 %v1540, %v1401
        %v1605 = vadd.f32 %v1541, %v1403
        %v1606 = vadd.f32 %v1542, %v1405
        %v1607 = vadd.f32 %v1543, %v1409
        %v1608 = vadd.f32 %v1544, %v1411
        %v1609 = vadd.f32 %v1545, %v1413
        %v1610 = vadd.f32 %v1546, %v1415
        %v1611 = vadd.f32 %v1547, %v1419
        %v1612 = vadd.f32 %v1548, %v1421
        %v1613 = vadd.f32 %v1549, %v1423
        %v1614 = vadd.f32 %v1550, %v1425
        %v1615 = vadd.f32 %v1551, %v1429
        %v1616 = vadd.f32 %v1552, %v1431
        %v1617 = vadd.f32 %v1553, %v1433
        %v1618 = vadd.f32 %v1554, %v1435
        %v1619 = vadd.f32 %v1555, %v1439
        %v1620 = vadd.f32 %v1556, %v1441
        %v1621 = vadd.f32 %v1557, %v1443
        %v1622 = vadd.f32 %v1558, %v1445
        %v1623 = vadd.f32 %v1559, %v1449
        %v1624 = vadd.f32 %v1560, %v1451
        %v1625 = vadd.f32 %v1561, %v1453
        %v1626 = vadd.f32 %v1562, %v1455
        %v1627 = vadd.f32 %v1563, %v1459
        %v1628 = vadd.f32 %v1564, %v1461
        %v1629 = vadd.f32 %v1565, %v1463
        %v1630 = vadd.f32 %v1566, %v1465
        %v1631 = vadd.f32 %v1567, %v1469
        %v1632 = vadd.f32 %v1568, %v1471
        %v1633 = vadd.f32 %v1569, %v1473
        %v1634 = vadd.f32 %v1570, %v1475
        %v1635 = vadd.f32 %v1571, %v1479
        %v1636 = vadd.f32 %v1572, %v1481
        %v1637 = vadd.f32 %v1573, %v1483
        %v1638 = vadd.f32 %v1574, %v1485
        %v1639 = vadd.f32 %v1575, %v1489
        %v1640 = vadd.f32 %v1576, %v1491
        %v1641 = vadd.f32 %v1577, %v1493
        %v1642 = vadd.f32 %v1578, %v1495
        %v1643 = vadd.f32 %v1579, %v1499
        %v1644 = vadd.f32 %v1580, %v1501
        %v1645 = vadd.f32 %v1581, %v1503
        %v1646 = vadd.f32 %v1582, %v1505
        %v1647 = vadd.f32 %v1583, %v1509
        %v1648 = vadd.f32 %v1584, %v1511
        %v1649 = vadd.f32 %v1585, %v1513
        %v1650 = vadd.f32 %v1586, %v1515
        %v1651 = vadd.f32 %v1587, %v1519
        %v1652 = vadd.f32 %v1588, %v1521
        %v1653 = vadd.f32 %v1589, %v1523
        %v1654 = vadd.f32 %v1590, %v1525
        %1655 = vst [vmem:[#allocation2] sm:$0xff] %v1591
        %1656 = vst [vmem:[#allocation2 + $0x8] sm:$0xff] %v1592
        %1657 = vst [vmem:[#allocation2 + $0x10] sm:$0xff] %v1593
        %1658 = vst [vmem:[#allocation2 + $0x18] sm:$0xff] %v1594
        %1659 = vst [vmem:[#allocation2 + $0x20] sm:$0xff] %v1595
        %1660 = vst [vmem:[#allocation2 + $0x28] sm:$0xff] %v1596
        %1661 = vst [vmem:[#allocation2 + $0x30] sm:$0xff] %v1597
        %1662 = vst [vmem:[#allocation2 + $0x38] sm:$0xff] %v1598
        %1663 = vst [vmem:[#allocation2 + $0x40] sm:$0xff] %v1599
        %1664 = vst [vmem:[#allocation2 + $0x48] sm:$0xff] %v1600
        %1665 = vst [vmem:[#allocation2 + $0x50] sm:$0xff] %v1601
        %1666 = vst [vmem:[#allocation2 + $0x58] sm:$0xff] %v1602
        %1667 = vst [vmem:[#allocation2 + $0x60] sm:$0xff] %v1603
        %1668 = vst [vmem:[#allocation2 + $0x68] sm:$0xff] %v1604
        %1669 = vst [vmem:[#allocation2 + $0x70] sm:$0xff] %v1605
        %1670 = vst [vmem:[#allocation2 + $0x78] sm:$0xff] %v1606
        %1671 = vst [vmem:[#allocation2 + $0x80] sm:$0xff] %v1607
        %1672 = vst [vmem:[#allocation2 + $0x88] sm:$0xff] %v1608
        %1673 = vst [vmem:[#allocation2 + $0x90] sm:$0xff] %v1609
        %1674 = vst [vmem:[#allocation2 + $0x98] sm:$0xff] %v1610
        %1675 = vst [vmem:[#allocation2 + $0xa0] sm:$0xff] %v1611
        %1676 = vst [vmem:[#allocation2 + $0xa8] sm:$0xff] %v1612
        %1677 = vst [vmem:[#allocation2 + $0xb0] sm:$0xff] %v1613
        %1678 = vst [vmem:[#allocation2 + $0xb8] sm:$0xff] %v1614
        %1679 = vst [vmem:[#allocation2 + $0xc0] sm:$0xff] %v1615
        %1680 = vst [vmem:[#allocation2 + $0xc8] sm:$0xff] %v1616
        %1681 = vst [vmem:[#allocation2 + $0xd0] sm:$0xff] %v1617
        %1682 = vst [vmem:[#allocation2 + $0xd8] sm:$0xff] %v1618
        %1683 = vst [vmem:[#allocation2 + $0xe0] sm:$0xff] %v1619
        %1684 = vst [vmem:[#allocation2 + $0xe8] sm:$0xff] %v1620
        %1685 = vst [vmem:[#allocation2 + $0xf0] sm:$0xff] %v1621
        %1686 = vst [vmem:[#allocation2 + $0xf8] sm:$0xff] %v1622
        %1687 = vst [vmem:[#allocation2 + $0x100] sm:$0xff] %v1623
        %1688 = vst [vmem:[#allocation2 + $0x108] sm:$0xff] %v1624
        %1689 = vst [vmem:[#allocation2 + $0x110] sm:$0xff] %v1625
        %1690 = vst [vmem:[#allocation2 + $0x118] sm:$0xff] %v1626
        %1691 = vst [vmem:[#allocation2 + $0x120] sm:$0xff] %v1627
        %1692 = vst [vmem:[#allocation2 + $0x128] sm:$0xff] %v1628
        %1693 = vst [vmem:[#allocation2 + $0x130] sm:$0xff] %v1629
        %1694 = vst [vmem:[#allocation2 + $0x138] sm:$0xff] %v1630
        %1695 = vst [vmem:[#allocation2 + $0x140] sm:$0xff] %v1631
        %1696 = vst [vmem:[#allocation2 + $0x148] sm:$0xff] %v1632
        %1697 = vst [vmem:[#allocation2 + $0x150] sm:$0xff] %v1633
        %1698 = vst [vmem:[#allocation2 + $0x158] sm:$0xff] %v1634
        %1699 = vst [vmem:[#allocation2 + $0x160] sm:$0xff] %v1635
        %1700 = vst [vmem:[#allocation2 + $0x168] sm:$0xff] %v1636
        %1701 = vst [vmem:[#allocation2 + $0x170] sm:$0xff] %v1637
        %1702 = vst [vmem:[#allocation2 + $0x178] sm:$0xff] %v1638
        %1703 = vst [vmem:[#allocation2 + $0x180] sm:$0xff] %v1639
        %1704 = vst [vmem:[#allocation2 + $0x188] sm:$0xff] %v1640
        %1705 = vst [vmem:[#allocation2 + $0x190] sm:$0xff] %v1641
        %1706 = vst [vmem:[#allocation2 + $0x198] sm:$0xff] %v1642
        %1707 = vst [vmem:[#allocation2 + $0x1a0] sm:$0xff] %v1643
        %1708 = vst [vmem:[#allocation2 + $0x1a8] sm:$0xff] %v1644
        %1709 = vst [vmem:[#allocation2 + $0x1b0] sm:$0xff] %v1645
        %1710 = vst [vmem:[#allocation2 + $0x1b8] sm:$0xff] %v1646
        %1711 = vst [vmem:[#allocation2 + $0x1c0] sm:$0xff] %v1647
        %1712 = vst [vmem:[#allocation2 + $0x1c8] sm:$0xff] %v1648
        %1713 = vst [vmem:[#allocation2 + $0x1d0] sm:$0xff] %v1649
        %1714 = vst [vmem:[#allocation2 + $0x1d8] sm:$0xff] %v1650
        %1715 = vst [vmem:[#allocation2 + $0x1e0] sm:$0xff] %v1651
        %1716 = vst [vmem:[#allocation2 + $0x1e8] sm:$0xff] %v1652
        %1717 = vst [vmem:[#allocation2 + $0x1f0] sm:$0xff] %v1653
        %1718 = vst [vmem:[#allocation2 + $0x1f8] sm:$0xff] %v1654
        %v1719 = vld [vmem:[#allocation3 + $0x40] sm:$0xff]
        %v1720 = vld [vmem:[#allocation3 + $0x48] sm:$0xff]
        %v1721 = vld [vmem:[#allocation3 + $0x50] sm:$0xff]
        %v1722 = vld [vmem:[#allocation3 + $0x58] sm:$0xff]
        %v1723 = vld [vmem:[#allocation3 + $0x60] sm:$0xff]
        %v1724 = vld [vmem:[#allocation3 + $0x68] sm:$0xff]
        %v1725 = vld [vmem:[#allocation3 + $0x70] sm:$0xff]
        %v1726 = vld [vmem:[#allocation3 + $0x78] sm:$0xff]
        %v1727 = vld [vmem:[#allocation3 + $0x80] sm:$0xff]
        %v1728 = vld [vmem:[#allocation3 + $0x88] sm:$0xff]
        %v1729 = vld [vmem:[#allocation3 + $0x90] sm:$0xff]
        %v1730 = vld [vmem:[#allocation3 + $0x98] sm:$0xff]
        %v1731 = vld [vmem:[#allocation3 + $0xa0] sm:$0xff]
        %v1732 = vld [vmem:[#allocation3 + $0xa8] sm:$0xff]
        %v1733 = vld [vmem:[#allocation3 + $0xb0] sm:$0xff]
        %v1734 = vld [vmem:[#allocation3 + $0xb8] sm:$0xff]
        %v1735 = vld [vmem:[#allocation3 + $0xc0] sm:$0xff]
        %v1736 = vld [vmem:[#allocation3 + $0xc8] sm:$0xff]
        %v1737 = vld [vmem:[#allocation3 + $0xd0] sm:$0xff]
        %v1738 = vld [vmem:[#allocation3 + $0xd8] sm:$0xff]
        %v1739 = vld [vmem:[#allocation3 + $0xe0] sm:$0xff]
        %v1740 = vld [vmem:[#allocation3 + $0xe8] sm:$0xff]
        %v1741 = vld [vmem:[#allocation3 + $0xf0] sm:$0xff]
        %v1742 = vld [vmem:[#allocation3 + $0xf8] sm:$0xff]
        %v1743 = vld [vmem:[#allocation3 + $0x100] sm:$0xff]
        %v1744 = vld [vmem:[#allocation3 + $0x108] sm:$0xff]
        %v1745 = vld [vmem:[#allocation3 + $0x110] sm:$0xff]
        %v1746 = vld [vmem:[#allocation3 + $0x118] sm:$0xff]
        %v1747 = vld [vmem:[#allocation3 + $0x120] sm:$0xff]
        %v1748 = vld [vmem:[#allocation3 + $0x128] sm:$0xff]
        %v1749 = vld [vmem:[#allocation3 + $0x130] sm:$0xff]
        %v1750 = vld [vmem:[#allocation3 + $0x138] sm:$0xff]
        %s1751 = scalar_lea.vmem %s219, 1536
        %v1752 = vld [vmem:[%s1751] sm:$0xff]
        %v1753 = vld [vmem:[%s1751 + $0x8] sm:$0xff]
        %v1754 = vld [vmem:[%s1751 + $0x10] sm:$0xff]
        %v1755 = vld [vmem:[%s1751 + $0x18] sm:$0xff]
        %v1756 = vld [vmem:[%s1751 + $0x20] sm:$0xff]
        %v1757 = vld [vmem:[%s1751 + $0x28] sm:$0xff]
        %v1758 = vld [vmem:[%s1751 + $0x30] sm:$0xff]
        %v1759 = vld [vmem:[%s1751 + $0x38] sm:$0xff]
        %v1760 = vld [vmem:[%s1751 + $0x40] sm:$0xff]
        %v1761 = vld [vmem:[%s1751 + $0x48] sm:$0xff]
        %v1762 = vld [vmem:[%s1751 + $0x50] sm:$0xff]
        %v1763 = vld [vmem:[%s1751 + $0x58] sm:$0xff]
        %v1764 = vld [vmem:[%s1751 + $0x60] sm:$0xff]
        %v1765 = vld [vmem:[%s1751 + $0x68] sm:$0xff]
        %v1766 = vld [vmem:[%s1751 + $0x70] sm:$0xff]
        %v1767 = vld [vmem:[%s1751 + $0x78] sm:$0xff]
        %v1768 = vld [vmem:[%s1751 + $0x80] sm:$0xff]
        %v1769 = vld [vmem:[%s1751 + $0x88] sm:$0xff]
        %v1770 = vld [vmem:[%s1751 + $0x90] sm:$0xff]
        %v1771 = vld [vmem:[%s1751 + $0x98] sm:$0xff]
        %v1772 = vld [vmem:[%s1751 + $0xa0] sm:$0xff]
        %v1773 = vld [vmem:[%s1751 + $0xa8] sm:$0xff]
        %v1774 = vld [vmem:[%s1751 + $0xb0] sm:$0xff]
        %v1775 = vld [vmem:[%s1751 + $0xb8] sm:$0xff]
        %v1776 = vld [vmem:[%s1751 + $0xc0] sm:$0xff]
        %v1777 = vld [vmem:[%s1751 + $0xc8] sm:$0xff]
        %v1778 = vld [vmem:[%s1751 + $0xd0] sm:$0xff]
        %v1779 = vld [vmem:[%s1751 + $0xd8] sm:$0xff]
        %v1780 = vld [vmem:[%s1751 + $0xe0] sm:$0xff]
        %v1781 = vld [vmem:[%s1751 + $0xe8] sm:$0xff]
        %v1782 = vld [vmem:[%s1751 + $0xf0] sm:$0xff]
        %v1783 = vld [vmem:[%s1751 + $0xf8] sm:$0xff]
        %v1816 = vunpack.c.l.b16 %v1719
        %v1817 = vunpack.c.h.b16 %v1719
        %v1818 = vunpack.c.l.b16 %v1720
        %v1819 = vunpack.c.h.b16 %v1720
        %v1820 = vunpack.c.l.b16 %v1721
        %v1821 = vunpack.c.h.b16 %v1721
        %v1822 = vunpack.c.l.b16 %v1722
        %v1823 = vunpack.c.h.b16 %v1722
        %v1824 = vunpack.c.l.b16 %v1723
        %v1825 = vunpack.c.h.b16 %v1723
        %v1826 = vunpack.c.l.b16 %v1724
        %v1827 = vunpack.c.h.b16 %v1724
        %v1828 = vunpack.c.l.b16 %v1725
        %v1829 = vunpack.c.h.b16 %v1725
        %v1830 = vunpack.c.l.b16 %v1726
        %v1831 = vunpack.c.h.b16 %v1726
        %v1832 = vunpack.c.l.b16 %v1727
        %v1833 = vunpack.c.h.b16 %v1727
        %v1834 = vunpack.c.l.b16 %v1728
        %v1835 = vunpack.c.h.b16 %v1728
        %v1836 = vunpack.c.l.b16 %v1729
        %v1837 = vunpack.c.h.b16 %v1729
        %v1838 = vunpack.c.l.b16 %v1730
        %v1839 = vunpack.c.h.b16 %v1730
        %v1840 = vunpack.c.l.b16 %v1731
        %v1841 = vunpack.c.h.b16 %v1731
        %v1842 = vunpack.c.l.b16 %v1732
        %v1843 = vunpack.c.h.b16 %v1732
        %v1844 = vunpack.c.l.b16 %v1733
        %v1845 = vunpack.c.h.b16 %v1733
        %v1846 = vunpack.c.l.b16 %v1734
        %v1847 = vunpack.c.h.b16 %v1734
        %v1848 = vunpack.c.l.b16 %v1735
        %v1849 = vunpack.c.h.b16 %v1735
        %v1850 = vunpack.c.l.b16 %v1736
        %v1851 = vunpack.c.h.b16 %v1736
        %v1852 = vunpack.c.l.b16 %v1737
        %v1853 = vunpack.c.h.b16 %v1737
        %v1854 = vunpack.c.l.b16 %v1738
        %v1855 = vunpack.c.h.b16 %v1738
        %v1856 = vunpack.c.l.b16 %v1739
        %v1857 = vunpack.c.h.b16 %v1739
        %v1858 = vunpack.c.l.b16 %v1740
        %v1859 = vunpack.c.h.b16 %v1740
        %v1860 = vunpack.c.l.b16 %v1741
        %v1861 = vunpack.c.h.b16 %v1741
        %v1862 = vunpack.c.l.b16 %v1742
        %v1863 = vunpack.c.h.b16 %v1742
        %v1864 = vunpack.c.l.b16 %v1743
        %v1865 = vunpack.c.h.b16 %v1743
        %v1866 = vunpack.c.l.b16 %v1744
        %v1867 = vunpack.c.h.b16 %v1744
        %v1868 = vunpack.c.l.b16 %v1745
        %v1869 = vunpack.c.h.b16 %v1745
        %v1870 = vunpack.c.l.b16 %v1746
        %v1871 = vunpack.c.h.b16 %v1746
        %v1872 = vunpack.c.l.b16 %v1747
        %v1873 = vunpack.c.h.b16 %v1747
        %v1874 = vunpack.c.l.b16 %v1748
        %v1875 = vunpack.c.h.b16 %v1748
        %v1876 = vunpack.c.l.b16 %v1749
        %v1877 = vunpack.c.h.b16 %v1749
        %v1878 = vunpack.c.l.b16 %v1750
        %v1879 = vunpack.c.h.b16 %v1750
        %v1880 = vpack.c.b16 %v1818, %v1816
        %v1881 = vpack.c.b16 %v1819, %v1817
        %v1882 = vpack.c.b16 %v1822, %v1820
        %v1883 = vpack.c.b16 %v1823, %v1821
        %v1884 = vpack.c.b16 %v1826, %v1824
        %v1885 = vpack.c.b16 %v1827, %v1825
        %v1886 = vpack.c.b16 %v1830, %v1828
        %v1887 = vpack.c.b16 %v1831, %v1829
        %v1888 = vpack.c.b16 %v1834, %v1832
        %v1889 = vpack.c.b16 %v1835, %v1833
        %v1890 = vpack.c.b16 %v1838, %v1836
        %v1891 = vpack.c.b16 %v1839, %v1837
        %v1892 = vpack.c.b16 %v1842, %v1840
        %v1893 = vpack.c.b16 %v1843, %v1841
        %v1894 = vpack.c.b16 %v1846, %v1844
        %v1895 = vpack.c.b16 %v1847, %v1845
        %v1896 = vpack.c.b16 %v1850, %v1848
        %v1897 = vpack.c.b16 %v1851, %v1849
        %v1898 = vpack.c.b16 %v1854, %v1852
        %v1899 = vpack.c.b16 %v1855, %v1853
        %v1900 = vpack.c.b16 %v1858, %v1856
        %v1901 = vpack.c.b16 %v1859, %v1857
        %v1902 = vpack.c.b16 %v1862, %v1860
        %v1903 = vpack.c.b16 %v1863, %v1861
        %v1904 = vpack.c.b16 %v1866, %v1864
        %v1905 = vpack.c.b16 %v1867, %v1865
        %v1906 = vpack.c.b16 %v1870, %v1868
        %v1907 = vpack.c.b16 %v1871, %v1869
        %v1908 = vpack.c.b16 %v1874, %v1872
        %v1909 = vpack.c.b16 %v1875, %v1873
        %v1910 = vpack.c.b16 %v1878, %v1876
        %v1911 = vpack.c.b16 %v1879, %v1877
        %v1976 = vunpack.c.l.b16 %v1752
        %v1977 = vunpack.c.h.b16 %v1752
        %v1978 = vunpack.c.l.b16 %v1753
        %v1979 = vunpack.c.h.b16 %v1753
        %v1980 = vunpack.c.l.b16 %v1754
        %v1981 = vunpack.c.h.b16 %v1754
        %v1982 = vunpack.c.l.b16 %v1755
        %v1983 = vunpack.c.h.b16 %v1755
        %v1984 = vunpack.c.l.b16 %v1756
        %v1985 = vunpack.c.h.b16 %v1756
        %v1986 = vunpack.c.l.b16 %v1757
        %v1987 = vunpack.c.h.b16 %v1757
        %v1988 = vunpack.c.l.b16 %v1758
        %v1989 = vunpack.c.h.b16 %v1758
        %v1990 = vunpack.c.l.b16 %v1759
        %v1991 = vunpack.c.h.b16 %v1759
        %v1992 = vunpack.c.l.b16 %v1760
        %v1993 = vunpack.c.h.b16 %v1760
        %v1994 = vunpack.c.l.b16 %v1761
        %v1995 = vunpack.c.h.b16 %v1761
        %v1996 = vunpack.c.l.b16 %v1762
        %v1997 = vunpack.c.h.b16 %v1762
        %v1998 = vunpack.c.l.b16 %v1763
        %v1999 = vunpack.c.h.b16 %v1763
        %v2000 = vunpack.c.l.b16 %v1764
        %v2001 = vunpack.c.h.b16 %v1764
        %v2002 = vunpack.c.l.b16 %v1765
        %v2003 = vunpack.c.h.b16 %v1765
        %v2004 = vunpack.c.l.b16 %v1766
        %v2005 = vunpack.c.h.b16 %v1766
        %v2006 = vunpack.c.l.b16 %v1767
        %v2007 = vunpack.c.h.b16 %v1767
        %v2008 = vunpack.c.l.b16 %v1768
        %v2009 = vunpack.c.h.b16 %v1768
        %v2010 = vunpack.c.l.b16 %v1769
        %v2011 = vunpack.c.h.b16 %v1769
        %v2012 = vunpack.c.l.b16 %v1770
        %v2013 = vunpack.c.h.b16 %v1770
        %v2014 = vunpack.c.l.b16 %v1771
        %v2015 = vunpack.c.h.b16 %v1771
        %v2016 = vunpack.c.l.b16 %v1772
        %v2017 = vunpack.c.h.b16 %v1772
        %v2018 = vunpack.c.l.b16 %v1773
        %v2019 = vunpack.c.h.b16 %v1773
        %v2020 = vunpack.c.l.b16 %v1774
        %v2021 = vunpack.c.h.b16 %v1774
        %v2022 = vunpack.c.l.b16 %v1775
        %v2023 = vunpack.c.h.b16 %v1775
        %v2024 = vunpack.c.l.b16 %v1776
        %v2025 = vunpack.c.h.b16 %v1776
        %v2026 = vunpack.c.l.b16 %v1777
        %v2027 = vunpack.c.h.b16 %v1777
        %v2028 = vunpack.c.l.b16 %v1778
        %v2029 = vunpack.c.h.b16 %v1778
        %v2030 = vunpack.c.l.b16 %v1779
        %v2031 = vunpack.c.h.b16 %v1779
        %v2032 = vunpack.c.l.b16 %v1780
        %v2033 = vunpack.c.h.b16 %v1780
        %v2034 = vunpack.c.l.b16 %v1781
        %v2035 = vunpack.c.h.b16 %v1781
        %v2036 = vunpack.c.l.b16 %v1782
        %v2037 = vunpack.c.h.b16 %v1782
        %v2038 = vunpack.c.l.b16 %v1783
        %v2039 = vunpack.c.h.b16 %v1783
        %v2040 = vpack.c.b16 %v1978, %v1976
        %v2041 = vpack.c.b16 %v1979, %v1977
        %v2042 = vpack.c.b16 %v1982, %v1980
        %v2043 = vpack.c.b16 %v1983, %v1981
        %v2044 = vpack.c.b16 %v1986, %v1984
        %v2045 = vpack.c.b16 %v1987, %v1985
        %v2046 = vpack.c.b16 %v1990, %v1988
        %v2047 = vpack.c.b16 %v1991, %v1989
        %v2048 = vpack.c.b16 %v1994, %v1992
        %v2049 = vpack.c.b16 %v1995, %v1993
        %v2050 = vpack.c.b16 %v1998, %v1996
        %v2051 = vpack.c.b16 %v1999, %v1997
        %v2052 = vpack.c.b16 %v2002, %v2000
        %v2053 = vpack.c.b16 %v2003, %v2001
        %v2054 = vpack.c.b16 %v2006, %v2004
        %v2055 = vpack.c.b16 %v2007, %v2005
        %v2056 = vpack.c.b16 %v2010, %v2008
        %v2057 = vpack.c.b16 %v2011, %v2009
        %v2058 = vpack.c.b16 %v2014, %v2012
        %v2059 = vpack.c.b16 %v2015, %v2013
        %v2060 = vpack.c.b16 %v2018, %v2016
        %v2061 = vpack.c.b16 %v2019, %v2017
        %v2062 = vpack.c.b16 %v2022, %v2020
        %v2063 = vpack.c.b16 %v2023, %v2021
        %v2064 = vpack.c.b16 %v2026, %v2024
        %v2065 = vpack.c.b16 %v2027, %v2025
        %v2066 = vpack.c.b16 %v2030, %v2028
        %v2067 = vpack.c.b16 %v2031, %v2029
        %v2068 = vpack.c.b16 %v2034, %v2032
        %v2069 = vpack.c.b16 %v2035, %v2033
        %v2070 = vpack.c.b16 %v2038, %v2036
        %v2071 = vpack.c.b16 %v2039, %v2037
        %2104 = vmatprep.subr.bf16.mxu0 %v2055
        %2105 = vmatpush1.bf16.msra.mxu0 %v2054
        %2106 = vmatprep.subr.bf16.mxu0 %v2053
        %2107 = vmatpush1.bf16.msra.mxu0 %v2052
        %2108 = vmatprep.subr.bf16.mxu0 %v2051
        %2109 = vmatpush1.bf16.msra.mxu0 %v2050
        %2110 = vmatprep.subr.bf16.mxu0 %v2049
        %2111 = vmatpush1.bf16.msra.mxu0 %v2048
        %2112 = vmatprep.subr.bf16.mxu0 %v2047
        %2113 = vmatpush1.bf16.msra.mxu0 %v2046
        %2114 = vmatprep.subr.bf16.mxu0 %v2045
        %2115 = vmatpush1.bf16.msra.mxu0 %v2044
        %2116 = vmatprep.subr.bf16.mxu0 %v2043
        %2117 = vmatpush1.bf16.msra.mxu0 %v2042
        %2118 = vmatprep.subr.bf16.mxu0 %v2041
        %2119 = vmatpush1.bf16.msra.mxu0 %v2040
        %2120 = vmatprep.subr.bf16.mxu0 %v2071
        %2121 = vmatpush2.bf16.msra.mxu0 %v2070
        %2122 = vmatprep.subr.bf16.mxu0 %v2069
        %2123 = vmatpush2.bf16.msra.mxu0 %v2068
        %2124 = vmatprep.subr.bf16.mxu0 %v2067
        %2125 = vmatpush2.bf16.msra.mxu0 %v2066
        %2126 = vmatprep.subr.bf16.mxu0 %v2065
        %2127 = vmatpush2.bf16.msra.mxu0 %v2064
        %2128 = vmatprep.subr.bf16.mxu0 %v2063
        %2129 = vmatpush2.bf16.msra.mxu0 %v2062
        %2130 = vmatprep.subr.bf16.mxu0 %v2061
        %2131 = vmatpush2.bf16.msra.mxu0 %v2060
        %2132 = vmatprep.subr.bf16.mxu0 %v2059
        %2133 = vmatpush2.bf16.msra.mxu0 %v2058
        %2134 = vmatprep.subr.bf16.mxu0 %v2057
        %2135 = vmatpush2.bf16.msra.mxu0 %v2056
        %2136 = vmatprep.mubr.bf16.mxu0 %v1881
        %2137 = vmatmul.mubr.bf16.gmra.mxu0 %v1880
        %v2138 = vpop.f32.mrf.mxu0
        %v2139 = vadd.f32 0.0, %v2138
        %v2140 = vpop.f32.mrf.mxu0
        %v2141 = vadd.f32 0.0, %v2140
        %v2142 = vpop.f32.mrf.mxu0
        %v2143 = vadd.f32 0.0, %v2142
        %v2144 = vpop.f32.mrf.mxu0
        %v2145 = vadd.f32 0.0, %v2144
        %2146 = vmatprep.mubr.bf16.mxu0 %v1883
        %2147 = vmatmul.mubr.bf16.gmra.mxu0 %v1882
        %v2148 = vpop.f32.mrf.mxu0
        %v2149 = vadd.f32 0.0, %v2148
        %v2150 = vpop.f32.mrf.mxu0
        %v2151 = vadd.f32 0.0, %v2150
        %v2152 = vpop.f32.mrf.mxu0
        %v2153 = vadd.f32 0.0, %v2152
        %v2154 = vpop.f32.mrf.mxu0
        %v2155 = vadd.f32 0.0, %v2154
        %2156 = vmatprep.mubr.bf16.mxu0 %v1885
        %2157 = vmatmul.mubr.bf16.gmra.mxu0 %v1884
        %v2158 = vpop.f32.mrf.mxu0
        %v2159 = vadd.f32 0.0, %v2158
        %v2160 = vpop.f32.mrf.mxu0
        %v2161 = vadd.f32 0.0, %v2160
        %v2162 = vpop.f32.mrf.mxu0
        %v2163 = vadd.f32 0.0, %v2162
        %v2164 = vpop.f32.mrf.mxu0
        %v2165 = vadd.f32 0.0, %v2164
        %2166 = vmatprep.mubr.bf16.mxu0 %v1887
        %2167 = vmatmul.mubr.bf16.gmra.mxu0 %v1886
        %v2168 = vpop.f32.mrf.mxu0
        %v2169 = vadd.f32 0.0, %v2168
        %v2170 = vpop.f32.mrf.mxu0
        %v2171 = vadd.f32 0.0, %v2170
        %v2172 = vpop.f32.mrf.mxu0
        %v2173 = vadd.f32 0.0, %v2172
        %v2174 = vpop.f32.mrf.mxu0
        %v2175 = vadd.f32 0.0, %v2174
        %2176 = vmatprep.mubr.bf16.mxu0 %v1889
        %2177 = vmatmul.mubr.bf16.gmra.mxu0 %v1888
        %v2178 = vpop.f32.mrf.mxu0
        %v2179 = vadd.f32 0.0, %v2178
        %v2180 = vpop.f32.mrf.mxu0
        %v2181 = vadd.f32 0.0, %v2180
        %v2182 = vpop.f32.mrf.mxu0
        %v2183 = vadd.f32 0.0, %v2182
        %v2184 = vpop.f32.mrf.mxu0
        %v2185 = vadd.f32 0.0, %v2184
        %2186 = vmatprep.mubr.bf16.mxu0 %v1891
        %2187 = vmatmul.mubr.bf16.gmra.mxu0 %v1890
        %v2188 = vpop.f32.mrf.mxu0
        %v2189 = vadd.f32 0.0, %v2188
        %v2190 = vpop.f32.mrf.mxu0
        %v2191 = vadd.f32 0.0, %v2190
        %v2192 = vpop.f32.mrf.mxu0
        %v2193 = vadd.f32 0.0, %v2192
        %v2194 = vpop.f32.mrf.mxu0
        %v2195 = vadd.f32 0.0, %v2194
        %2196 = vmatprep.mubr.bf16.mxu0 %v1893
        %2197 = vmatmul.mubr.bf16.gmra.mxu0 %v1892
        %v2198 = vpop.f32.mrf.mxu0
        %v2199 = vadd.f32 0.0, %v2198
        %v2200 = vpop.f32.mrf.mxu0
        %v2201 = vadd.f32 0.0, %v2200
        %v2202 = vpop.f32.mrf.mxu0
        %v2203 = vadd.f32 0.0, %v2202
        %v2204 = vpop.f32.mrf.mxu0
        %v2205 = vadd.f32 0.0, %v2204
        %2206 = vmatprep.mubr.bf16.mxu0 %v1895
        %2207 = vmatmul.mubr.bf16.gmra.mxu0 %v1894
        %v2208 = vpop.f32.mrf.mxu0
        %v2209 = vadd.f32 0.0, %v2208
        %v2210 = vpop.f32.mrf.mxu0
        %v2211 = vadd.f32 0.0, %v2210
        %v2212 = vpop.f32.mrf.mxu0
        %v2213 = vadd.f32 0.0, %v2212
        %v2214 = vpop.f32.mrf.mxu0
        %v2215 = vadd.f32 0.0, %v2214
        %2216 = vmatprep.mubr.bf16.mxu0 %v1897
        %2217 = vmatmul.mubr.bf16.gmra.mxu0 %v1896
        %v2218 = vpop.f32.mrf.mxu0
        %v2219 = vadd.f32 0.0, %v2218
        %v2220 = vpop.f32.mrf.mxu0
        %v2221 = vadd.f32 0.0, %v2220
        %v2222 = vpop.f32.mrf.mxu0
        %v2223 = vadd.f32 0.0, %v2222
        %v2224 = vpop.f32.mrf.mxu0
        %v2225 = vadd.f32 0.0, %v2224
        %2226 = vmatprep.mubr.bf16.mxu0 %v1899
        %2227 = vmatmul.mubr.bf16.gmra.mxu0 %v1898
        %v2228 = vpop.f32.mrf.mxu0
        %v2229 = vadd.f32 0.0, %v2228
        %v2230 = vpop.f32.mrf.mxu0
        %v2231 = vadd.f32 0.0, %v2230
        %v2232 = vpop.f32.mrf.mxu0
        %v2233 = vadd.f32 0.0, %v2232
        %v2234 = vpop.f32.mrf.mxu0
        %v2235 = vadd.f32 0.0, %v2234
        %2236 = vmatprep.mubr.bf16.mxu0 %v1901
        %2237 = vmatmul.mubr.bf16.gmra.mxu0 %v1900
        %v2238 = vpop.f32.mrf.mxu0
        %v2239 = vadd.f32 0.0, %v2238
        %v2240 = vpop.f32.mrf.mxu0
        %v2241 = vadd.f32 0.0, %v2240
        %v2242 = vpop.f32.mrf.mxu0
        %v2243 = vadd.f32 0.0, %v2242
        %v2244 = vpop.f32.mrf.mxu0
        %v2245 = vadd.f32 0.0, %v2244
        %2246 = vmatprep.mubr.bf16.mxu0 %v1903
        %2247 = vmatmul.mubr.bf16.gmra.mxu0 %v1902
        %v2248 = vpop.f32.mrf.mxu0
        %v2249 = vadd.f32 0.0, %v2248
        %v2250 = vpop.f32.mrf.mxu0
        %v2251 = vadd.f32 0.0, %v2250
        %v2252 = vpop.f32.mrf.mxu0
        %v2253 = vadd.f32 0.0, %v2252
        %v2254 = vpop.f32.mrf.mxu0
        %v2255 = vadd.f32 0.0, %v2254
        %2256 = vmatprep.mubr.bf16.mxu0 %v1905
        %2257 = vmatmul.mubr.bf16.gmra.mxu0 %v1904
        %v2258 = vpop.f32.mrf.mxu0
        %v2259 = vadd.f32 0.0, %v2258
        %v2260 = vpop.f32.mrf.mxu0
        %v2261 = vadd.f32 0.0, %v2260
        %v2262 = vpop.f32.mrf.mxu0
        %v2263 = vadd.f32 0.0, %v2262
        %v2264 = vpop.f32.mrf.mxu0
        %v2265 = vadd.f32 0.0, %v2264
        %2266 = vmatprep.mubr.bf16.mxu0 %v1907
        %2267 = vmatmul.mubr.bf16.gmra.mxu0 %v1906
        %v2268 = vpop.f32.mrf.mxu0
        %v2269 = vadd.f32 0.0, %v2268
        %v2270 = vpop.f32.mrf.mxu0
        %v2271 = vadd.f32 0.0, %v2270
        %v2272 = vpop.f32.mrf.mxu0
        %v2273 = vadd.f32 0.0, %v2272
        %v2274 = vpop.f32.mrf.mxu0
        %v2275 = vadd.f32 0.0, %v2274
        %2276 = vmatprep.mubr.bf16.mxu0 %v1909
        %2277 = vmatmul.mubr.bf16.gmra.mxu0 %v1908
        %v2278 = vpop.f32.mrf.mxu0
        %v2279 = vadd.f32 0.0, %v2278
        %v2280 = vpop.f32.mrf.mxu0
        %v2281 = vadd.f32 0.0, %v2280
        %v2282 = vpop.f32.mrf.mxu0
        %v2283 = vadd.f32 0.0, %v2282
        %v2284 = vpop.f32.mrf.mxu0
        %v2285 = vadd.f32 0.0, %v2284
        %2286 = vmatprep.mubr.bf16.mxu0 %v1911
        %2287 = vmatmul.mubr.bf16.gmra.mxu0 %v1910
        %v2288 = vpop.f32.mrf.mxu0
        %v2289 = vadd.f32 0.0, %v2288
        %v2290 = vpop.f32.mrf.mxu0
        %v2291 = vadd.f32 0.0, %v2290
        %v2292 = vpop.f32.mrf.mxu0
        %v2293 = vadd.f32 0.0, %v2292
        %v2294 = vpop.f32.mrf.mxu0
        %v2295 = vadd.f32 0.0, %v2294
        %2296 = vdwg.mxu0
        %v2297 = vld [vmem:[#allocation2] sm:$0xff]
        %v2298 = vld [vmem:[#allocation2 + $0x8] sm:$0xff]
        %v2299 = vld [vmem:[#allocation2 + $0x10] sm:$0xff]
        %v2300 = vld [vmem:[#allocation2 + $0x18] sm:$0xff]
        %v2301 = vld [vmem:[#allocation2 + $0x20] sm:$0xff]
        %v2302 = vld [vmem:[#allocation2 + $0x28] sm:$0xff]
        %v2303 = vld [vmem:[#allocation2 + $0x30] sm:$0xff]
        %v2304 = vld [vmem:[#allocation2 + $0x38] sm:$0xff]
        %v2305 = vld [vmem:[#allocation2 + $0x40] sm:$0xff]
        %v2306 = vld [vmem:[#allocation2 + $0x48] sm:$0xff]
        %v2307 = vld [vmem:[#allocation2 + $0x50] sm:$0xff]
        %v2308 = vld [vmem:[#allocation2 + $0x58] sm:$0xff]
        %v2309 = vld [vmem:[#allocation2 + $0x60] sm:$0xff]
        %v2310 = vld [vmem:[#allocation2 + $0x68] sm:$0xff]
        %v2311 = vld [vmem:[#allocation2 + $0x70] sm:$0xff]
        %v2312 = vld [vmem:[#allocation2 + $0x78] sm:$0xff]
        %v2313 = vld [vmem:[#allocation2 + $0x80] sm:$0xff]
        %v2314 = vld [vmem:[#allocation2 + $0x88] sm:$0xff]
        %v2315 = vld [vmem:[#allocation2 + $0x90] sm:$0xff]
        %v2316 = vld [vmem:[#allocation2 + $0x98] sm:$0xff]
        %v2317 = vld [vmem:[#allocation2 + $0xa0] sm:$0xff]
        %v2318 = vld [vmem:[#allocation2 + $0xa8] sm:$0xff]
        %v2319 = vld [vmem:[#allocation2 + $0xb0] sm:$0xff]
        %v2320 = vld [vmem:[#allocation2 + $0xb8] sm:$0xff]
        %v2321 = vld [vmem:[#allocation2 + $0xc0] sm:$0xff]
        %v2322 = vld [vmem:[#allocation2 + $0xc8] sm:$0xff]
        %v2323 = vld [vmem:[#allocation2 + $0xd0] sm:$0xff]
        %v2324 = vld [vmem:[#allocation2 + $0xd8] sm:$0xff]
        %v2325 = vld [vmem:[#allocation2 + $0xe0] sm:$0xff]
        %v2326 = vld [vmem:[#allocation2 + $0xe8] sm:$0xff]
        %v2327 = vld [vmem:[#allocation2 + $0xf0] sm:$0xff]
        %v2328 = vld [vmem:[#allocation2 + $0xf8] sm:$0xff]
        %v2329 = vld [vmem:[#allocation2 + $0x100] sm:$0xff]
        %v2330 = vld [vmem:[#allocation2 + $0x108] sm:$0xff]
        %v2331 = vld [vmem:[#allocation2 + $0x110] sm:$0xff]
        %v2332 = vld [vmem:[#allocation2 + $0x118] sm:$0xff]
        %v2333 = vld [vmem:[#allocation2 + $0x120] sm:$0xff]
        %v2334 = vld [vmem:[#allocation2 + $0x128] sm:$0xff]
        %v2335 = vld [vmem:[#allocation2 + $0x130] sm:$0xff]
        %v2336 = vld [vmem:[#allocation2 + $0x138] sm:$0xff]
        %v2337 = vld [vmem:[#allocation2 + $0x140] sm:$0xff]
        %v2338 = vld [vmem:[#allocation2 + $0x148] sm:$0xff]
        %v2339 = vld [vmem:[#allocation2 + $0x150] sm:$0xff]
        %v2340 = vld [vmem:[#allocation2 + $0x158] sm:$0xff]
        %v2341 = vld [vmem:[#allocation2 + $0x160] sm:$0xff]
        %v2342 = vld [vmem:[#allocation2 + $0x168] sm:$0xff]
        %v2343 = vld [vmem:[#allocation2 + $0x170] sm:$0xff]
        %v2344 = vld [vmem:[#allocation2 + $0x178] sm:$0xff]
        %v2345 = vld [vmem:[#allocation2 + $0x180] sm:$0xff]
        %v2346 = vld [vmem:[#allocation2 + $0x188] sm:$0xff]
        %v2347 = vld [vmem:[#allocation2 + $0x190] sm:$0xff]
        %v2348 = vld [vmem:[#allocation2 + $0x198] sm:$0xff]
        %v2349 = vld [vmem:[#allocation2 + $0x1a0] sm:$0xff]
        %v2350 = vld [vmem:[#allocation2 + $0x1a8] sm:$0xff]
        %v2351 = vld [vmem:[#allocation2 + $0x1b0] sm:$0xff]
        %v2352 = vld [vmem:[#allocation2 + $0x1b8] sm:$0xff]
        %v2353 = vld [vmem:[#allocation2 + $0x1c0] sm:$0xff]
        %v2354 = vld [vmem:[#allocation2 + $0x1c8] sm:$0xff]
        %v2355 = vld [vmem:[#allocation2 + $0x1d0] sm:$0xff]
        %v2356 = vld [vmem:[#allocation2 + $0x1d8] sm:$0xff]
        %v2357 = vld [vmem:[#allocation2 + $0x1e0] sm:$0xff]
        %v2358 = vld [vmem:[#allocation2 + $0x1e8] sm:$0xff]
        %v2359 = vld [vmem:[#allocation2 + $0x1f0] sm:$0xff]
        %v2360 = vld [vmem:[#allocation2 + $0x1f8] sm:$0xff]
        %v2361 = vadd.f32 %v2297, %v2139
        %v2362 = vadd.f32 %v2298, %v2141
        %v2363 = vadd.f32 %v2299, %v2143
        %v2364 = vadd.f32 %v2300, %v2145
        %v2365 = vadd.f32 %v2301, %v2149
        %v2366 = vadd.f32 %v2302, %v2151
        %v2367 = vadd.f32 %v2303, %v2153
        %v2368 = vadd.f32 %v2304, %v2155
        %v2369 = vadd.f32 %v2305, %v2159
        %v2370 = vadd.f32 %v2306, %v2161
        %v2371 = vadd.f32 %v2307, %v2163
        %v2372 = vadd.f32 %v2308, %v2165
        %v2373 = vadd.f32 %v2309, %v2169
        %v2374 = vadd.f32 %v2310, %v2171
        %v2375 = vadd.f32 %v2311, %v2173
        %v2376 = vadd.f32 %v2312, %v2175
        %v2377 = vadd.f32 %v2313, %v2179
        %v2378 = vadd.f32 %v2314, %v2181
        %v2379 = vadd.f32 %v2315, %v2183
        %v2380 = vadd.f32 %v2316, %v2185
        %v2381 = vadd.f32 %v2317, %v2189
        %v2382 = vadd.f32 %v2318, %v2191
        %v2383 = vadd.f32 %v2319, %v2193
        %v2384 = vadd.f32 %v2320, %v2195
        %v2385 = vadd.f32 %v2321, %v2199
        %v2386 = vadd.f32 %v2322, %v2201
        %v2387 = vadd.f32 %v2323, %v2203
        %v2388 = vadd.f32 %v2324, %v2205
        %v2389 = vadd.f32 %v2325, %v2209
        %v2390 = vadd.f32 %v2326, %v2211
        %v2391 = vadd.f32 %v2327, %v2213
        %v2392 = vadd.f32 %v2328, %v2215
        %v2393 = vadd.f32 %v2329, %v2219
        %v2394 = vadd.f32 %v2330, %v2221
        %v2395 = vadd.f32 %v2331, %v2223
        %v2396 = vadd.f32 %v2332, %v2225
        %v2397 = vadd.f32 %v2333, %v2229
        %v2398 = vadd.f32 %v2334, %v2231
        %v2399 = vadd.f32 %v2335, %v2233
        %v2400 = vadd.f32 %v2336, %v2235
        %v2401 = vadd.f32 %v2337, %v2239
        %v2402 = vadd.f32 %v2338, %v2241
        %v2403 = vadd.f32 %v2339, %v2243
        %v2404 = vadd.f32 %v2340, %v2245
        %v2405 = vadd.f32 %v2341, %v2249
        %v2406 = vadd.f32 %v2342, %v2251
        %v2407 = vadd.f32 %v2343, %v2253
        %v2408 = vadd.f32 %v2344, %v2255
        %v2409 = vadd.f32 %v2345, %v2259
        %v2410 = vadd.f32 %v2346, %v2261
        %v2411 = vadd.f32 %v2347, %v2263
        %v2412 = vadd.f32 %v2348, %v2265
        %v2413 = vadd.f32 %v2349, %v2269
        %v2414 = vadd.f32 %v2350, %v2271
        %v2415 = vadd.f32 %v2351, %v2273
        %v2416 = vadd.f32 %v2352, %v2275
        %v2417 = vadd.f32 %v2353, %v2279
        %v2418 = vadd.f32 %v2354, %v2281
        %v2419 = vadd.f32 %v2355, %v2283
        %v2420 = vadd.f32 %v2356, %v2285
        %v2421 = vadd.f32 %v2357, %v2289
        %v2422 = vadd.f32 %v2358, %v2291
        %v2423 = vadd.f32 %v2359, %v2293
        %v2424 = vadd.f32 %v2360, %v2295
        %2425 = vst [vmem:[#allocation2] sm:$0xff] %v2361
        %2426 = vst [vmem:[#allocation2 + $0x8] sm:$0xff] %v2362
        %2427 = vst [vmem:[#allocation2 + $0x10] sm:$0xff] %v2363
        %2428 = vst [vmem:[#allocation2 + $0x18] sm:$0xff] %v2364
        %2429 = vst [vmem:[#allocation2 + $0x20] sm:$0xff] %v2365
        %2430 = vst [vmem:[#allocation2 + $0x28] sm:$0xff] %v2366
        %2431 = vst [vmem:[#allocation2 + $0x30] sm:$0xff] %v2367
        %2432 = vst [vmem:[#allocation2 + $0x38] sm:$0xff] %v2368
        %2433 = vst [vmem:[#allocation2 + $0x40] sm:$0xff] %v2369
        %2434 = vst [vmem:[#allocation2 + $0x48] sm:$0xff] %v2370
        %2435 = vst [vmem:[#allocation2 + $0x50] sm:$0xff] %v2371
        %2436 = vst [vmem:[#allocation2 + $0x58] sm:$0xff] %v2372
        %2437 = vst [vmem:[#allocation2 + $0x60] sm:$0xff] %v2373
        %2438 = vst [vmem:[#allocation2 + $0x68] sm:$0xff] %v2374
        %2439 = vst [vmem:[#allocation2 + $0x70] sm:$0xff] %v2375
        %2440 = vst [vmem:[#allocation2 + $0x78] sm:$0xff] %v2376
        %2441 = vst [vmem:[#allocation2 + $0x80] sm:$0xff] %v2377
        %2442 = vst [vmem:[#allocation2 + $0x88] sm:$0xff] %v2378
        %2443 = vst [vmem:[#allocation2 + $0x90] sm:$0xff] %v2379
        %2444 = vst [vmem:[#allocation2 + $0x98] sm:$0xff] %v2380
        %2445 = vst [vmem:[#allocation2 + $0xa0] sm:$0xff] %v2381
        %2446 = vst [vmem:[#allocation2 + $0xa8] sm:$0xff] %v2382
        %2447 = vst [vmem:[#allocation2 + $0xb0] sm:$0xff] %v2383
        %2448 = vst [vmem:[#allocation2 + $0xb8] sm:$0xff] %v2384
        %2449 = vst [vmem:[#allocation2 + $0xc0] sm:$0xff] %v2385
        %2450 = vst [vmem:[#allocation2 + $0xc8] sm:$0xff] %v2386
        %2451 = vst [vmem:[#allocation2 + $0xd0] sm:$0xff] %v2387
        %2452 = vst [vmem:[#allocation2 + $0xd8] sm:$0xff] %v2388
        %2453 = vst [vmem:[#allocation2 + $0xe0] sm:$0xff] %v2389
        %2454 = vst [vmem:[#allocation2 + $0xe8] sm:$0xff] %v2390
        %2455 = vst [vmem:[#allocation2 + $0xf0] sm:$0xff] %v2391
        %2456 = vst [vmem:[#allocation2 + $0xf8] sm:$0xff] %v2392
        %2457 = vst [vmem:[#allocation2 + $0x100] sm:$0xff] %v2393
        %2458 = vst [vmem:[#allocation2 + $0x108] sm:$0xff] %v2394
        %2459 = vst [vmem:[#allocation2 + $0x110] sm:$0xff] %v2395
        %2460 = vst [vmem:[#allocation2 + $0x118] sm:$0xff] %v2396
        %2461 = vst [vmem:[#allocation2 + $0x120] sm:$0xff] %v2397
        %2462 = vst [vmem:[#allocation2 + $0x128] sm:$0xff] %v2398
        %2463 = vst [vmem:[#allocation2 + $0x130] sm:$0xff] %v2399
        %2464 = vst [vmem:[#allocation2 + $0x138] sm:$0xff] %v2400
        %2465 = vst [vmem:[#allocation2 + $0x140] sm:$0xff] %v2401
        %2466 = vst [vmem:[#allocation2 + $0x148] sm:$0xff] %v2402
        %2467 = vst [vmem:[#allocation2 + $0x150] sm:$0xff] %v2403
        %2468 = vst [vmem:[#allocation2 + $0x158] sm:$0xff] %v2404
        %2469 = vst [vmem:[#allocation2 + $0x160] sm:$0xff] %v2405
        %2470 = vst [vmem:[#allocation2 + $0x168] sm:$0xff] %v2406
        %2471 = vst [vmem:[#allocation2 + $0x170] sm:$0xff] %v2407
        %2472 = vst [vmem:[#allocation2 + $0x178] sm:$0xff] %v2408
        %2473 = vst [vmem:[#allocation2 + $0x180] sm:$0xff] %v2409
        %2474 = vst [vmem:[#allocation2 + $0x188] sm:$0xff] %v2410
        %2475 = vst [vmem:[#allocation2 + $0x190] sm:$0xff] %v2411
        %2476 = vst [vmem:[#allocation2 + $0x198] sm:$0xff] %v2412
        %2477 = vst [vmem:[#allocation2 + $0x1a0] sm:$0xff] %v2413
        %2478 = vst [vmem:[#allocation2 + $0x1a8] sm:$0xff] %v2414
        %2479 = vst [vmem:[#allocation2 + $0x1b0] sm:$0xff] %v2415
        %2480 = vst [vmem:[#allocation2 + $0x1b8] sm:$0xff] %v2416
        %2481 = vst [vmem:[#allocation2 + $0x1c0] sm:$0xff] %v2417
        %2482 = vst [vmem:[#allocation2 + $0x1c8] sm:$0xff] %v2418
        %2483 = vst [vmem:[#allocation2 + $0x1d0] sm:$0xff] %v2419
        %2484 = vst [vmem:[#allocation2 + $0x1d8] sm:$0xff] %v2420
        %2485 = vst [vmem:[#allocation2 + $0x1e0] sm:$0xff] %v2421
        %2486 = vst [vmem:[#allocation2 + $0x1e8] sm:$0xff] %v2422
        %2487 = vst [vmem:[#allocation2 + $0x1f0] sm:$0xff] %v2423
        %2488 = vst [vmem:[#allocation2 + $0x1f8] sm:$0xff] %v2424
        %v2489 = vld [vmem:[%s214] sm:$0xee]
        %v2490 = vld [vmem:[%s214 + $0x8] sm:$0xff]
        %v2491 = vld [vmem:[%s214 + $0x10] sm:$0x11]
        %v2492 = vld [vmem:[%s214 + $0x18] sm:$0xee]
        %v2493 = vld [vmem:[%s214 + $0x20] sm:$0xff]
        %v2494 = vld [vmem:[%s214 + $0x28] sm:$0x11]
        %v2495 = vld [vmem:[%s214 + $0x30] sm:$0xee]
        %v2496 = vld [vmem:[%s214 + $0x38] sm:$0xff]
        %v2497 = vld [vmem:[%s214 + $0x40] sm:$0x11]
        %v2498 = vld [vmem:[%s214 + $0x48] sm:$0xee]
        %v2499 = vld [vmem:[%s214 + $0x50] sm:$0xff]
        %v2500 = vld [vmem:[%s214 + $0x58] sm:$0x11]
        %v2501 = vld [vmem:[%s214 + $0x60] sm:$0xee]
        %v2502 = vld [vmem:[%s214 + $0x68] sm:$0xff]
        %v2503 = vld [vmem:[%s214 + $0x70] sm:$0x11]
        %v2504 = vld [vmem:[%s214 + $0x78] sm:$0xee]
        %v2505 = vld [vmem:[%s214 + $0x80] sm:$0xff]
        %v2506 = vld [vmem:[%s214 + $0x88] sm:$0x11]
        %v2507 = vld [vmem:[%s214 + $0x90] sm:$0xee]
        %v2508 = vld [vmem:[%s214 + $0x98] sm:$0xff]
        %v2509 = vld [vmem:[%s214 + $0xa0] sm:$0x11]
        %v2510 = vld [vmem:[%s214 + $0xa8] sm:$0xee]
        %v2511 = vld [vmem:[%s214 + $0xb0] sm:$0xff]
        %v2512 = vld [vmem:[%s214 + $0xb8] sm:$0x11]
        %v2513 = vld [vmem:[%s214 + $0xc0] sm:$0xee]
        %v2514 = vld [vmem:[%s214 + $0xc8] sm:$0xff]
        %v2515 = vld [vmem:[%s214 + $0xd0] sm:$0x11]
        %v2516 = vld [vmem:[%s214 + $0xd8] sm:$0xee]
        %v2517 = vld [vmem:[%s214 + $0xe0] sm:$0xff]
        %v2518 = vld [vmem:[%s214 + $0xe8] sm:$0x11]
        %v2519 = vld [vmem:[%s214 + $0xf0] sm:$0xee]
        %v2520 = vld [vmem:[%s214 + $0xf8] sm:$0xff]
        %v2521 = vld [vmem:[%s214 + $0x100] sm:$0x11]
        %v2522 = vld [vmem:[%s214 + $0x108] sm:$0xee]
        %v2523 = vld [vmem:[%s214 + $0x110] sm:$0xff]
        %v2524 = vld [vmem:[%s214 + $0x118] sm:$0x11]
        %v2525 = vld [vmem:[%s214 + $0x120] sm:$0xee]
        %v2526 = vld [vmem:[%s214 + $0x128] sm:$0xff]
        %v2527 = vld [vmem:[%s214 + $0x130] sm:$0x11]
        %v2528 = vld [vmem:[%s214 + $0x138] sm:$0xee]
        %v2529 = vld [vmem:[%s214 + $0x140] sm:$0xff]
        %v2530 = vld [vmem:[%s214 + $0x148] sm:$0x11]
        %v2531 = vld [vmem:[%s214 + $0x150] sm:$0xee]
        %v2532 = vld [vmem:[%s214 + $0x158] sm:$0xff]
        %v2533 = vld [vmem:[%s214 + $0x160] sm:$0x11]
        %v2534 = vld [vmem:[%s214 + $0x168] sm:$0xee]
        %v2535 = vld [vmem:[%s214 + $0x170] sm:$0xff]
        %v2536 = vld [vmem:[%s214 + $0x178] sm:$0x11]
        %v2537 = vld [vmem:[%s214 + $0x180] sm:$0xee]
        %v2538 = vld [vmem:[%s214 + $0x188] sm:$0xff]
        %v2539 = vld [vmem:[%s214 + $0x190] sm:$0x11]
        %v2540 = vld [vmem:[%s214 + $0x198] sm:$0xee]
        %v2541 = vld [vmem:[%s214 + $0x1a0] sm:$0xff]
        %v2542 = vld [vmem:[%s214 + $0x1a8] sm:$0x11]
        %v2543 = vld [vmem:[%s214 + $0x1b0] sm:$0xee]
        %v2544 = vld [vmem:[%s214 + $0x1b8] sm:$0xff]
        %v2545 = vld [vmem:[%s214 + $0x1c0] sm:$0x11]
        %v2546 = vld [vmem:[%s214 + $0x1c8] sm:$0xee]
        %v2547 = vld [vmem:[%s214 + $0x1d0] sm:$0xff]
        %v2548 = vld [vmem:[%s214 + $0x1d8] sm:$0x11]
        %vm2609 = vcmask 1042432
        %vm2610 = vcmask 1046532
        %vm2611 = vmor %vm2609, %vm2610
        %v2612 = vrot.slane %v2489, 5
        %v2613 = vrot.slane %v2612, 4
        %v2614 = vrot.slane %v2490, 5
        %v2615 = vsel %vm2611, %v2613, %v2614
        %v2616 = vrot.slane %v2614, 4
        %v2617 = vrot.slane %v2491, 5
        %v2618 = vsel %vm2611, %v2616, %v2617
        %v2619 = vrot.slane %v2492, 5
        %v2620 = vrot.slane %v2619, 4
        %v2621 = vrot.slane %v2493, 5
        %v2622 = vsel %vm2611, %v2620, %v2621
        %v2623 = vrot.slane %v2621, 4
        %v2624 = vrot.slane %v2494, 5
        %v2625 = vsel %vm2611, %v2623, %v2624
        %v2626 = vrot.slane %v2495, 5
        %v2627 = vrot.slane %v2626, 4
        %v2628 = vrot.slane %v2496, 5
        %v2629 = vsel %vm2611, %v2627, %v2628
        %v2630 = vrot.slane %v2628, 4
        %v2631 = vrot.slane %v2497, 5
        %v2632 = vsel %vm2611, %v2630, %v2631
        %v2633 = vrot.slane %v2498, 5
        %v2634 = vrot.slane %v2633, 4
        %v2635 = vrot.slane %v2499, 5
        %v2636 = vsel %vm2611, %v2634, %v2635
        %v2637 = vrot.slane %v2635, 4
        %v2638 = vrot.slane %v2500, 5
        %v2639 = vsel %vm2611, %v2637, %v2638
        %v2640 = vrot.slane %v2501, 5
        %v2641 = vrot.slane %v2640, 4
        %v2642 = vrot.slane %v2502, 5
        %v2643 = vsel %vm2611, %v2641, %v2642
        %v2644 = vrot.slane %v2642, 4
        %v2645 = vrot.slane %v2503, 5
        %v2646 = vsel %vm2611, %v2644, %v2645
        %v2647 = vrot.slane %v2504, 5
        %v2648 = vrot.slane %v2647, 4
        %v2649 = vrot.slane %v2505, 5
        %v2650 = vsel %vm2611, %v2648, %v2649
        %v2651 = vrot.slane %v2649, 4
        %v2652 = vrot.slane %v2506, 5
        %v2653 = vsel %vm2611, %v2651, %v2652
        %v2654 = vrot.slane %v2507, 5
        %v2655 = vrot.slane %v2654, 4
        %v2656 = vrot.slane %v2508, 5
        %v2657 = vsel %vm2611, %v2655, %v2656
        %v2658 = vrot.slane %v2656, 4
        %v2659 = vrot.slane %v2509, 5
        %v2660 = vsel %vm2611, %v2658, %v2659
        %v2661 = vrot.slane %v2510, 5
        %v2662 = vrot.slane %v2661, 4
        %v2663 = vrot.slane %v2511, 5
        %v2664 = vsel %vm2611, %v2662, %v2663
        %v2665 = vrot.slane %v2663, 4
        %v2666 = vrot.slane %v2512, 5
        %v2667 = vsel %vm2611, %v2665, %v2666
        %v2668 = vrot.slane %v2513, 5
        %v2669 = vrot.slane %v2668, 4
        %v2670 = vrot.slane %v2514, 5
        %v2671 = vsel %vm2611, %v2669, %v2670
        %v2672 = vrot.slane %v2670, 4
        %v2673 = vrot.slane %v2515, 5
        %v2674 = vsel %vm2611, %v2672, %v2673
        %v2675 = vrot.slane %v2516, 5
        %v2676 = vrot.slane %v2675, 4
        %v2677 = vrot.slane %v2517, 5
        %v2678 = vsel %vm2611, %v2676, %v2677
        %v2679 = vrot.slane %v2677, 4
        %v2680 = vrot.slane %v2518, 5
        %v2681 = vsel %vm2611, %v2679, %v2680
        %v2682 = vrot.slane %v2519, 5
        %v2683 = vrot.slane %v2682, 4
        %v2684 = vrot.slane %v2520, 5
        %v2685 = vsel %vm2611, %v2683, %v2684
        %v2686 = vrot.slane %v2684, 4
        %v2687 = vrot.slane %v2521, 5
        %v2688 = vsel %vm2611, %v2686, %v2687
        %v2689 = vrot.slane %v2522, 5
        %v2690 = vrot.slane %v2689, 4
        %v2691 = vrot.slane %v2523, 5
        %v2692 = vsel %vm2611, %v2690, %v2691
        %v2693 = vrot.slane %v2691, 4
        %v2694 = vrot.slane %v2524, 5
        %v2695 = vsel %vm2611, %v2693, %v2694
        %v2696 = vrot.slane %v2525, 5
        %v2697 = vrot.slane %v2696, 4
        %v2698 = vrot.slane %v2526, 5
        %v2699 = vsel %vm2611, %v2697, %v2698
        %v2700 = vrot.slane %v2698, 4
        %v2701 = vrot.slane %v2527, 5
        %v2702 = vsel %vm2611, %v2700, %v2701
        %v2703 = vrot.slane %v2528, 5
        %v2704 = vrot.slane %v2703, 4
        %v2705 = vrot.slane %v2529, 5
        %v2706 = vsel %vm2611, %v2704, %v2705
        %v2707 = vrot.slane %v2705, 4
        %v2708 = vrot.slane %v2530, 5
        %v2709 = vsel %vm2611, %v2707, %v2708
        %v2710 = vrot.slane %v2531, 5
        %v2711 = vrot.slane %v2710, 4
        %v2712 = vrot.slane %v2532, 5
        %v2713 = vsel %vm2611, %v2711, %v2712
        %v2714 = vrot.slane %v2712, 4
        %v2715 = vrot.slane %v2533, 5
        %v2716 = vsel %vm2611, %v2714, %v2715
        %v2717 = vrot.slane %v2534, 5
        %v2718 = vrot.slane %v2717, 4
        %v2719 = vrot.slane %v2535, 5
        %v2720 = vsel %vm2611, %v2718, %v2719
        %v2721 = vrot.slane %v2719, 4
        %v2722 = vrot.slane %v2536, 5
        %v2723 = vsel %vm2611, %v2721, %v2722
        %v2724 = vrot.slane %v2537, 5
        %v2725 = vrot.slane %v2724, 4
        %v2726 = vrot.slane %v2538, 5
        %v2727 = vsel %vm2611, %v2725, %v2726
        %v2728 = vrot.slane %v2726, 4
        %v2729 = vrot.slane %v2539, 5
        %v2730 = vsel %vm2611, %v2728, %v2729
        %v2731 = vrot.slane %v2540, 5
        %v2732 = vrot.slane %v2731, 4
        %v2733 = vrot.slane %v2541, 5
        %v2734 = vsel %vm2611, %v2732, %v2733
        %v2735 = vrot.slane %v2733, 4
        %v2736 = vrot.slane %v2542, 5
        %v2737 = vsel %vm2611, %v2735, %v2736
        %v2738 = vrot.slane %v2543, 5
        %v2739 = vrot.slane %v2738, 4
        %v2740 = vrot.slane %v2544, 5
        %v2741 = vsel %vm2611, %v2739, %v2740
        %v2742 = vrot.slane %v2740, 4
        %v2743 = vrot.slane %v2545, 5
        %v2744 = vsel %vm2611, %v2742, %v2743
        %v2745 = vrot.slane %v2546, 5
        %v2746 = vrot.slane %v2745, 4
        %v2747 = vrot.slane %v2547, 5
        %v2748 = vsel %vm2611, %v2746, %v2747
        %v2749 = vrot.slane %v2747, 4
        %v2750 = vrot.slane %v2548, 5
        %v2751 = vsel %vm2611, %v2749, %v2750
        %2792 = vst [vmem:[#allocation3] sm:$0xff] %v2615
        %2793 = vst [vmem:[#allocation3 + $0x8] sm:$0xff] %v2618
        %2794 = vst [vmem:[#allocation3 + $0x10] sm:$0xff] %v2622
        %2795 = vst [vmem:[#allocation3 + $0x18] sm:$0xff] %v2625
        %2796 = vst [vmem:[#allocation3 + $0x20] sm:$0xff] %v2629
        %2797 = vst [vmem:[#allocation3 + $0x28] sm:$0xff] %v2632
        %2798 = vst [vmem:[#allocation3 + $0x30] sm:$0xff] %v2636
        %2799 = vst [vmem:[#allocation3 + $0x38] sm:$0xff] %v2639
        %2800 = vst [vmem:[#allocation3 + $0x40] sm:$0xff] %v2643
        %2801 = vst [vmem:[#allocation3 + $0x48] sm:$0xff] %v2646
        %2802 = vst [vmem:[#allocation3 + $0x50] sm:$0xff] %v2650
        %2803 = vst [vmem:[#allocation3 + $0x58] sm:$0xff] %v2653
        %2804 = vst [vmem:[#allocation3 + $0x60] sm:$0xff] %v2657
        %2805 = vst [vmem:[#allocation3 + $0x68] sm:$0xff] %v2660
        %2806 = vst [vmem:[#allocation3 + $0x70] sm:$0xff] %v2664
        %2807 = vst [vmem:[#allocation3 + $0x78] sm:$0xff] %v2667
        %2808 = vst [vmem:[#allocation3 + $0x80] sm:$0xff] %v2671
        %2809 = vst [vmem:[#allocation3 + $0x88] sm:$0xff] %v2674
        %2810 = vst [vmem:[#allocation3 + $0x90] sm:$0xff] %v2678
        %2811 = vst [vmem:[#allocation3 + $0x98] sm:$0xff] %v2681
        %2812 = vst [vmem:[#allocation3 + $0xa0] sm:$0xff] %v2685
        %2813 = vst [vmem:[#allocation3 + $0xa8] sm:$0xff] %v2688
        %2814 = vst [vmem:[#allocation3 + $0xb0] sm:$0xff] %v2692
        %2815 = vst [vmem:[#allocation3 + $0xb8] sm:$0xff] %v2695
        %2816 = vst [vmem:[#allocation3 + $0xc0] sm:$0xff] %v2699
        %2817 = vst [vmem:[#allocation3 + $0xc8] sm:$0xff] %v2702
        %2818 = vst [vmem:[#allocation3 + $0xd0] sm:$0xff] %v2706
        %2819 = vst [vmem:[#allocation3 + $0xd8] sm:$0xff] %v2709
        %2820 = vst [vmem:[#allocation3 + $0xe0] sm:$0xff] %v2713
        %2821 = vst [vmem:[#allocation3 + $0xe8] sm:$0xff] %v2716
        %2822 = vst [vmem:[#allocation3 + $0xf0] sm:$0xff] %v2720
        %2823 = vst [vmem:[#allocation3 + $0xf8] sm:$0xff] %v2723
        %2824 = vst [vmem:[#allocation3 + $0x100] sm:$0xff] %v2727
        %2825 = vst [vmem:[#allocation3 + $0x108] sm:$0xff] %v2730
        %2826 = vst [vmem:[#allocation3 + $0x110] sm:$0xff] %v2734
        %2827 = vst [vmem:[#allocation3 + $0x118] sm:$0xff] %v2737
        %2828 = vst [vmem:[#allocation3 + $0x120] sm:$0xff] %v2741
        %2829 = vst [vmem:[#allocation3 + $0x128] sm:$0xff] %v2744
        %2830 = vst [vmem:[#allocation3 + $0x130] sm:$0xff] %v2748
        %2831 = vst [vmem:[#allocation3 + $0x138] sm:$0xff] %v2751
        %v2832 = vld [vmem:[#allocation3] sm:$0xff]
        %v2833 = vld [vmem:[#allocation3 + $0x8] sm:$0xff]
        %v2834 = vld [vmem:[#allocation3 + $0x10] sm:$0xff]
        %v2835 = vld [vmem:[#allocation3 + $0x18] sm:$0xff]
        %v2836 = vld [vmem:[#allocation3 + $0x20] sm:$0xff]
        %v2837 = vld [vmem:[#allocation3 + $0x28] sm:$0xff]
        %v2838 = vld [vmem:[#allocation3 + $0x30] sm:$0xff]
        %v2839 = vld [vmem:[#allocation3 + $0x38] sm:$0xff]
        %v2840 = vld [vmem:[#allocation3 + $0x40] sm:$0xff]
        %v2841 = vld [vmem:[#allocation3 + $0x48] sm:$0xff]
        %v2842 = vld [vmem:[#allocation3 + $0x50] sm:$0xff]
        %v2843 = vld [vmem:[#allocation3 + $0x58] sm:$0xff]
        %v2844 = vld [vmem:[#allocation3 + $0x60] sm:$0xff]
        %v2845 = vld [vmem:[#allocation3 + $0x68] sm:$0xff]
        %v2846 = vld [vmem:[#allocation3 + $0x70] sm:$0xff]
        %v2847 = vld [vmem:[#allocation3 + $0x78] sm:$0xff]
        %v2848 = vld [vmem:[#allocation3 + $0x80] sm:$0xff]
        %v2849 = vld [vmem:[#allocation3 + $0x88] sm:$0xff]
        %v2850 = vld [vmem:[#allocation3 + $0x90] sm:$0xff]
        %v2851 = vld [vmem:[#allocation3 + $0x98] sm:$0xff]
        %v2852 = vld [vmem:[#allocation3 + $0xa0] sm:$0xff]
        %v2853 = vld [vmem:[#allocation3 + $0xa8] sm:$0xff]
        %v2854 = vld [vmem:[#allocation3 + $0xb0] sm:$0xff]
        %v2855 = vld [vmem:[#allocation3 + $0xb8] sm:$0xff]
        %v2856 = vld [vmem:[#allocation3 + $0xc0] sm:$0xff]
        %v2857 = vld [vmem:[#allocation3 + $0xc8] sm:$0xff]
        %v2858 = vld [vmem:[#allocation3 + $0xd0] sm:$0xff]
        %v2859 = vld [vmem:[#allocation3 + $0xd8] sm:$0xff]
        %v2860 = vld [vmem:[#allocation3 + $0xe0] sm:$0xff]
        %v2861 = vld [vmem:[#allocation3 + $0xe8] sm:$0xff]
        %v2862 = vld [vmem:[#allocation3 + $0xf0] sm:$0xff]
        %v2863 = vld [vmem:[#allocation3 + $0xf8] sm:$0xff]
        %s2864 = scalar_lea.vmem %s219, 256
        %v2865 = vld [vmem:[%s2864] sm:$0xff]
        %v2866 = vld [vmem:[%s2864 + $0x8] sm:$0xff]
        %v2867 = vld [vmem:[%s2864 + $0x10] sm:$0xff]
        %v2868 = vld [vmem:[%s2864 + $0x18] sm:$0xff]
        %v2869 = vld [vmem:[%s2864 + $0x20] sm:$0xff]
        %v2870 = vld [vmem:[%s2864 + $0x28] sm:$0xff]
        %v2871 = vld [vmem:[%s2864 + $0x30] sm:$0xff]
        %v2872 = vld [vmem:[%s2864 + $0x38] sm:$0xff]
        %v2873 = vld [vmem:[%s2864 + $0x40] sm:$0xff]
        %v2874 = vld [vmem:[%s2864 + $0x48] sm:$0xff]
        %v2875 = vld [vmem:[%s2864 + $0x50] sm:$0xff]
        %v2876 = vld [vmem:[%s2864 + $0x58] sm:$0xff]
        %v2877 = vld [vmem:[%s2864 + $0x60] sm:$0xff]
        %v2878 = vld [vmem:[%s2864 + $0x68] sm:$0xff]
        %v2879 = vld [vmem:[%s2864 + $0x70] sm:$0xff]
        %v2880 = vld [vmem:[%s2864 + $0x78] sm:$0xff]
        %v2881 = vld [vmem:[%s2864 + $0x80] sm:$0xff]
        %v2882 = vld [vmem:[%s2864 + $0x88] sm:$0xff]
        %v2883 = vld [vmem:[%s2864 + $0x90] sm:$0xff]
        %v2884 = vld [vmem:[%s2864 + $0x98] sm:$0xff]
        %v2885 = vld [vmem:[%s2864 + $0xa0] sm:$0xff]
        %v2886 = vld [vmem:[%s2864 + $0xa8] sm:$0xff]
        %v2887 = vld [vmem:[%s2864 + $0xb0] sm:$0xff]
        %v2888 = vld [vmem:[%s2864 + $0xb8] sm:$0xff]
        %v2889 = vld [vmem:[%s2864 + $0xc0] sm:$0xff]
        %v2890 = vld [vmem:[%s2864 + $0xc8] sm:$0xff]
        %v2891 = vld [vmem:[%s2864 + $0xd0] sm:$0xff]
        %v2892 = vld [vmem:[%s2864 + $0xd8] sm:$0xff]
        %v2893 = vld [vmem:[%s2864 + $0xe0] sm:$0xff]
        %v2894 = vld [vmem:[%s2864 + $0xe8] sm:$0xff]
        %v2895 = vld [vmem:[%s2864 + $0xf0] sm:$0xff]
        %v2896 = vld [vmem:[%s2864 + $0xf8] sm:$0xff]
        %v2929 = vunpack.c.l.b16 %v2832
        %v2930 = vunpack.c.h.b16 %v2832
        %v2931 = vunpack.c.l.b16 %v2833
        %v2932 = vunpack.c.h.b16 %v2833
        %v2933 = vunpack.c.l.b16 %v2834
        %v2934 = vunpack.c.h.b16 %v2834
        %v2935 = vunpack.c.l.b16 %v2835
        %v2936 = vunpack.c.h.b16 %v2835
        %v2937 = vunpack.c.l.b16 %v2836
        %v2938 = vunpack.c.h.b16 %v2836
        %v2939 = vunpack.c.l.b16 %v2837
        %v2940 = vunpack.c.h.b16 %v2837
        %v2941 = vunpack.c.l.b16 %v2838
        %v2942 = vunpack.c.h.b16 %v2838
        %v2943 = vunpack.c.l.b16 %v2839
        %v2944 = vunpack.c.h.b16 %v2839
        %v2945 = vunpack.c.l.b16 %v2840
        %v2946 = vunpack.c.h.b16 %v2840
        %v2947 = vunpack.c.l.b16 %v2841
        %v2948 = vunpack.c.h.b16 %v2841
        %v2949 = vunpack.c.l.b16 %v2842
        %v2950 = vunpack.c.h.b16 %v2842
        %v2951 = vunpack.c.l.b16 %v2843
        %v2952 = vunpack.c.h.b16 %v2843
        %v2953 = vunpack.c.l.b16 %v2844
        %v2954 = vunpack.c.h.b16 %v2844
        %v2955 = vunpack.c.l.b16 %v2845
        %v2956 = vunpack.c.h.b16 %v2845
        %v2957 = vunpack.c.l.b16 %v2846
        %v2958 = vunpack.c.h.b16 %v2846
        %v2959 = vunpack.c.l.b16 %v2847
        %v2960 = vunpack.c.h.b16 %v2847
        %v2961 = vunpack.c.l.b16 %v2848
        %v2962 = vunpack.c.h.b16 %v2848
        %v2963 = vunpack.c.l.b16 %v2849
        %v2964 = vunpack.c.h.b16 %v2849
        %v2965 = vunpack.c.l.b16 %v2850
        %v2966 = vunpack.c.h.b16 %v2850
        %v2967 = vunpack.c.l.b16 %v2851
        %v2968 = vunpack.c.h.b16 %v2851
        %v2969 = vunpack.c.l.b16 %v2852
        %v2970 = vunpack.c.h.b16 %v2852
        %v2971 = vunpack.c.l.b16 %v2853
        %v2972 = vunpack.c.h.b16 %v2853
        %v2973 = vunpack.c.l.b16 %v2854
        %v2974 = vunpack.c.h.b16 %v2854
        %v2975 = vunpack.c.l.b16 %v2855
        %v2976 = vunpack.c.h.b16 %v2855
        %v2977 = vunpack.c.l.b16 %v2856
        %v2978 = vunpack.c.h.b16 %v2856
        %v2979 = vunpack.c.l.b16 %v2857
        %v2980 = vunpack.c.h.b16 %v2857
        %v2981 = vunpack.c.l.b16 %v2858
        %v2982 = vunpack.c.h.b16 %v2858
        %v2983 = vunpack.c.l.b16 %v2859
        %v2984 = vunpack.c.h.b16 %v2859
        %v2985 = vunpack.c.l.b16 %v2860
        %v2986 = vunpack.c.h.b16 %v2860
        %v2987 = vunpack.c.l.b16 %v2861
        %v2988 = vunpack.c.h.b16 %v2861
        %v2989 = vunpack.c.l.b16 %v2862
        %v2990 = vunpack.c.h.b16 %v2862
        %v2991 = vunpack.c.l.b16 %v2863
        %v2992 = vunpack.c.h.b16 %v2863
        %v2993 = vpack.c.b16 %v2931, %v2929
        %v2994 = vpack.c.b16 %v2932, %v2930
        %v2995 = vpack.c.b16 %v2935, %v2933
        %v2996 = vpack.c.b16 %v2936, %v2934
        %v2997 = vpack.c.b16 %v2939, %v2937
        %v2998 = vpack.c.b16 %v2940, %v2938
        %v2999 = vpack.c.b16 %v2943, %v2941
        %v3000 = vpack.c.b16 %v2944, %v2942
        %v3001 = vpack.c.b16 %v2947, %v2945
        %v3002 = vpack.c.b16 %v2948, %v2946
        %v3003 = vpack.c.b16 %v2951, %v2949
        %v3004 = vpack.c.b16 %v2952, %v2950
        %v3005 = vpack.c.b16 %v2955, %v2953
        %v3006 = vpack.c.b16 %v2956, %v2954
        %v3007 = vpack.c.b16 %v2959, %v2957
        %v3008 = vpack.c.b16 %v2960, %v2958
        %v3009 = vpack.c.b16 %v2963, %v2961
        %v3010 = vpack.c.b16 %v2964, %v2962
        %v3011 = vpack.c.b16 %v2967, %v2965
        %v3012 = vpack.c.b16 %v2968, %v2966
        %v3013 = vpack.c.b16 %v2971, %v2969
        %v3014 = vpack.c.b16 %v2972, %v2970
        %v3015 = vpack.c.b16 %v2975, %v2973
        %v3016 = vpack.c.b16 %v2976, %v2974
        %v3017 = vpack.c.b16 %v2979, %v2977
        %v3018 = vpack.c.b16 %v2980, %v2978
        %v3019 = vpack.c.b16 %v2983, %v2981
        %v3020 = vpack.c.b16 %v2984, %v2982
        %v3021 = vpack.c.b16 %v2987, %v2985
        %v3022 = vpack.c.b16 %v2988, %v2986
        %v3023 = vpack.c.b16 %v2991, %v2989
        %v3024 = vpack.c.b16 %v2992, %v2990
        %v3089 = vunpack.c.l.b16 %v2865
        %v3090 = vunpack.c.h.b16 %v2865
        %v3091 = vunpack.c.l.b16 %v2866
        %v3092 = vunpack.c.h.b16 %v2866
        %v3093 = vunpack.c.l.b16 %v2867
        %v3094 = vunpack.c.h.b16 %v2867
        %v3095 = vunpack.c.l.b16 %v2868
        %v3096 = vunpack.c.h.b16 %v2868
        %v3097 = vunpack.c.l.b16 %v2869
        %v3098 = vunpack.c.h.b16 %v2869
        %v3099 = vunpack.c.l.b16 %v2870
        %v3100 = vunpack.c.h.b16 %v2870
        %v3101 = vunpack.c.l.b16 %v2871
        %v3102 = vunpack.c.h.b16 %v2871
        %v3103 = vunpack.c.l.b16 %v2872
        %v3104 = vunpack.c.h.b16 %v2872
        %v3105 = vunpack.c.l.b16 %v2873
        %v3106 = vunpack.c.h.b16 %v2873
        %v3107 = vunpack.c.l.b16 %v2874
        %v3108 = vunpack.c.h.b16 %v2874
        %v3109 = vunpack.c.l.b16 %v2875
        %v3110 = vunpack.c.h.b16 %v2875
        %v3111 = vunpack.c.l.b16 %v2876
        %v3112 = vunpack.c.h.b16 %v2876
        %v3113 = vunpack.c.l.b16 %v2877
        %v3114 = vunpack.c.h.b16 %v2877
        %v3115 = vunpack.c.l.b16 %v2878
        %v3116 = vunpack.c.h.b16 %v2878
        %v3117 = vunpack.c.l.b16 %v2879
        %v3118 = vunpack.c.h.b16 %v2879
        %v3119 = vunpack.c.l.b16 %v2880
        %v3120 = vunpack.c.h.b16 %v2880
        %v3121 = vunpack.c.l.b16 %v2881
        %v3122 = vunpack.c.h.b16 %v2881
        %v3123 = vunpack.c.l.b16 %v2882
        %v3124 = vunpack.c.h.b16 %v2882
        %v3125 = vunpack.c.l.b16 %v2883
        %v3126 = vunpack.c.h.b16 %v2883
        %v3127 = vunpack.c.l.b16 %v2884
        %v3128 = vunpack.c.h.b16 %v2884
        %v3129 = vunpack.c.l.b16 %v2885
        %v3130 = vunpack.c.h.b16 %v2885
        %v3131 = vunpack.c.l.b16 %v2886
        %v3132 = vunpack.c.h.b16 %v2886
        %v3133 = vunpack.c.l.b16 %v2887
        %v3134 = vunpack.c.h.b16 %v2887
        %v3135 = vunpack.c.l.b16 %v2888
        %v3136 = vunpack.c.h.b16 %v2888
        %v3137 = vunpack.c.l.b16 %v2889
        %v3138 = vunpack.c.h.b16 %v2889
        %v3139 = vunpack.c.l.b16 %v2890
        %v3140 = vunpack.c.h.b16 %v2890
        %v3141 = vunpack.c.l.b16 %v2891
        %v3142 = vunpack.c.h.b16 %v2891
        %v3143 = vunpack.c.l.b16 %v2892
        %v3144 = vunpack.c.h.b16 %v2892
        %v3145 = vunpack.c.l.b16 %v2893
        %v3146 = vunpack.c.h.b16 %v2893
        %v3147 = vunpack.c.l.b16 %v2894
        %v3148 = vunpack.c.h.b16 %v2894
        %v3149 = vunpack.c.l.b16 %v2895
        %v3150 = vunpack.c.h.b16 %v2895
        %v3151 = vunpack.c.l.b16 %v2896
        %v3152 = vunpack.c.h.b16 %v2896
        %v3153 = vpack.c.b16 %v3091, %v3089
        %v3154 = vpack.c.b16 %v3092, %v3090
        %v3155 = vpack.c.b16 %v3095, %v3093
        %v3156 = vpack.c.b16 %v3096, %v3094
        %v3157 = vpack.c.b16 %v3099, %v3097
        %v3158 = vpack.c.b16 %v3100, %v3098
        %v3159 = vpack.c.b16 %v3103, %v3101
        %v3160 = vpack.c.b16 %v3104, %v3102
        %v3161 = vpack.c.b16 %v3107, %v3105
        %v3162 = vpack.c.b16 %v3108, %v3106
        %v3163 = vpack.c.b16 %v3111, %v3109
        %v3164 = vpack.c.b16 %v3112, %v3110
        %v3165 = vpack.c.b16 %v3115, %v3113
        %v3166 = vpack.c.b16 %v3116, %v3114
        %v3167 = vpack.c.b16 %v3119, %v3117
        %v3168 = vpack.c.b16 %v3120, %v3118
        %v3169 = vpack.c.b16 %v3123, %v3121
        %v3170 = vpack.c.b16 %v3124, %v3122
        %v3171 = vpack.c.b16 %v3127, %v3125
        %v3172 = vpack.c.b16 %v3128, %v3126
        %v3173 = vpack.c.b16 %v3131, %v3129
        %v3174 = vpack.c.b16 %v3132, %v3130
        %v3175 = vpack.c.b16 %v3135, %v3133
        %v3176 = vpack.c.b16 %v3136, %v3134
        %v3177 = vpack.c.b16 %v3139, %v3137
        %v3178 = vpack.c.b16 %v3140, %v3138
        %v3179 = vpack.c.b16 %v3143, %v3141
        %v3180 = vpack.c.b16 %v3144, %v3142
        %v3181 = vpack.c.b16 %v3147, %v3145
        %v3182 = vpack.c.b16 %v3148, %v3146
        %v3183 = vpack.c.b16 %v3151, %v3149
        %v3184 = vpack.c.b16 %v3152, %v3150
        %3217 = vmatprep.subr.bf16.mxu0 %v3168
        %3218 = vmatpush1.bf16.msra.mxu0 %v3167
        %3219 = vmatprep.subr.bf16.mxu0 %v3166
        %3220 = vmatpush1.bf16.msra.mxu0 %v3165
        %3221 = vmatprep.subr.bf16.mxu0 %v3164
        %3222 = vmatpush1.bf16.msra.mxu0 %v3163
        %3223 = vmatprep.subr.bf16.mxu0 %v3162
        %3224 = vmatpush1.bf16.msra.mxu0 %v3161
        %3225 = vmatprep.subr.bf16.mxu0 %v3160
        %3226 = vmatpush1.bf16.msra.mxu0 %v3159
        %3227 = vmatprep.subr.bf16.mxu0 %v3158
        %3228 = vmatpush1.bf16.msra.mxu0 %v3157
        %3229 = vmatprep.subr.bf16.mxu0 %v3156
        %3230 = vmatpush1.bf16.msra.mxu0 %v3155
        %3231 = vmatprep.subr.bf16.mxu0 %v3154
        %3232 = vmatpush1.bf16.msra.mxu0 %v3153
        %3233 = vmatprep.subr.bf16.mxu0 %v3184
        %3234 = vmatpush2.bf16.msra.mxu0 %v3183
        %3235 = vmatprep.subr.bf16.mxu0 %v3182
        %3236 = vmatpush2.bf16.msra.mxu0 %v3181
        %3237 = vmatprep.subr.bf16.mxu0 %v3180
        %3238 = vmatpush2.bf16.msra.mxu0 %v3179
        %3239 = vmatprep.subr.bf16.mxu0 %v3178
        %3240 = vmatpush2.bf16.msra.mxu0 %v3177
        %3241 = vmatprep.subr.bf16.mxu0 %v3176
        %3242 = vmatpush2.bf16.msra.mxu0 %v3175
        %3243 = vmatprep.subr.bf16.mxu0 %v3174
        %3244 = vmatpush2.bf16.msra.mxu0 %v3173
        %3245 = vmatprep.subr.bf16.mxu0 %v3172
        %3246 = vmatpush2.bf16.msra.mxu0 %v3171
        %3247 = vmatprep.subr.bf16.mxu0 %v3170
        %3248 = vmatpush2.bf16.msra.mxu0 %v3169
        %3249 = vmatprep.mubr.bf16.mxu0 %v2994
        %3250 = vmatmul.mubr.bf16.gmra.mxu0 %v2993
        %v3251 = vpop.f32.mrf.mxu0
        %v3252 = vadd.f32 0.0, %v3251
        %v3253 = vpop.f32.mrf.mxu0
        %v3254 = vadd.f32 0.0, %v3253
        %v3255 = vpop.f32.mrf.mxu0
        %v3256 = vadd.f32 0.0, %v3255
        %v3257 = vpop.f32.mrf.mxu0
        %v3258 = vadd.f32 0.0, %v3257
        %3259 = vmatprep.mubr.bf16.mxu0 %v2996
        %3260 = vmatmul.mubr.bf16.gmra.mxu0 %v2995
        %v3261 = vpop.f32.mrf.mxu0
        %v3262 = vadd.f32 0.0, %v3261
        %v3263 = vpop.f32.mrf.mxu0
        %v3264 = vadd.f32 0.0, %v3263
        %v3265 = vpop.f32.mrf.mxu0
        %v3266 = vadd.f32 0.0, %v3265
        %v3267 = vpop.f32.mrf.mxu0
        %v3268 = vadd.f32 0.0, %v3267
        %3269 = vmatprep.mubr.bf16.mxu0 %v2998
        %3270 = vmatmul.mubr.bf16.gmra.mxu0 %v2997
        %v3271 = vpop.f32.mrf.mxu0
        %v3272 = vadd.f32 0.0, %v3271
        %v3273 = vpop.f32.mrf.mxu0
        %v3274 = vadd.f32 0.0, %v3273
        %v3275 = vpop.f32.mrf.mxu0
        %v3276 = vadd.f32 0.0, %v3275
        %v3277 = vpop.f32.mrf.mxu0
        %v3278 = vadd.f32 0.0, %v3277
        %3279 = vmatprep.mubr.bf16.mxu0 %v3000
        %3280 = vmatmul.mubr.bf16.gmra.mxu0 %v2999
        %v3281 = vpop.f32.mrf.mxu0
        %v3282 = vadd.f32 0.0, %v3281
        %v3283 = vpop.f32.mrf.mxu0
        %v3284 = vadd.f32 0.0, %v3283
        %v3285 = vpop.f32.mrf.mxu0
        %v3286 = vadd.f32 0.0, %v3285
        %v3287 = vpop.f32.mrf.mxu0
        %v3288 = vadd.f32 0.0, %v3287
        %3289 = vmatprep.mubr.bf16.mxu0 %v3002
        %3290 = vmatmul.mubr.bf16.gmra.mxu0 %v3001
        %v3291 = vpop.f32.mrf.mxu0
        %v3292 = vadd.f32 0.0, %v3291
        %v3293 = vpop.f32.mrf.mxu0
        %v3294 = vadd.f32 0.0, %v3293
        %v3295 = vpop.f32.mrf.mxu0
        %v3296 = vadd.f32 0.0, %v3295
        %v3297 = vpop.f32.mrf.mxu0
        %v3298 = vadd.f32 0.0, %v3297
        %3299 = vmatprep.mubr.bf16.mxu0 %v3004
        %3300 = vmatmul.mubr.bf16.gmra.mxu0 %v3003
        %v3301 = vpop.f32.mrf.mxu0
        %v3302 = vadd.f32 0.0, %v3301
        %v3303 = vpop.f32.mrf.mxu0
        %v3304 = vadd.f32 0.0, %v3303
        %v3305 = vpop.f32.mrf.mxu0
        %v3306 = vadd.f32 0.0, %v3305
        %v3307 = vpop.f32.mrf.mxu0
        %v3308 = vadd.f32 0.0, %v3307
        %3309 = vmatprep.mubr.bf16.mxu0 %v3006
        %3310 = vmatmul.mubr.bf16.gmra.mxu0 %v3005
        %v3311 = vpop.f32.mrf.mxu0
        %v3312 = vadd.f32 0.0, %v3311
        %v3313 = vpop.f32.mrf.mxu0
        %v3314 = vadd.f32 0.0, %v3313
        %v3315 = vpop.f32.mrf.mxu0
        %v3316 = vadd.f32 0.0, %v3315
        %v3317 = vpop.f32.mrf.mxu0
        %v3318 = vadd.f32 0.0, %v3317
        %3319 = vmatprep.mubr.bf16.mxu0 %v3008
        %3320 = vmatmul.mubr.bf16.gmra.mxu0 %v3007
        %v3321 = vpop.f32.mrf.mxu0
        %v3322 = vadd.f32 0.0, %v3321
        %v3323 = vpop.f32.mrf.mxu0
        %v3324 = vadd.f32 0.0, %v3323
        %v3325 = vpop.f32.mrf.mxu0
        %v3326 = vadd.f32 0.0, %v3325
        %v3327 = vpop.f32.mrf.mxu0
        %v3328 = vadd.f32 0.0, %v3327
        %3329 = vmatprep.mubr.bf16.mxu0 %v3010
        %3330 = vmatmul.mubr.bf16.gmra.mxu0 %v3009
        %v3331 = vpop.f32.mrf.mxu0
        %v3332 = vadd.f32 0.0, %v3331
        %v3333 = vpop.f32.mrf.mxu0
        %v3334 = vadd.f32 0.0, %v3333
        %v3335 = vpop.f32.mrf.mxu0
        %v3336 = vadd.f32 0.0, %v3335
        %v3337 = vpop.f32.mrf.mxu0
        %v3338 = vadd.f32 0.0, %v3337
        %3339 = vmatprep.mubr.bf16.mxu0 %v3012
        %3340 = vmatmul.mubr.bf16.gmra.mxu0 %v3011
        %v3341 = vpop.f32.mrf.mxu0
        %v3342 = vadd.f32 0.0, %v3341
        %v3343 = vpop.f32.mrf.mxu0
        %v3344 = vadd.f32 0.0, %v3343
        %v3345 = vpop.f32.mrf.mxu0
        %v3346 = vadd.f32 0.0, %v3345
        %v3347 = vpop.f32.mrf.mxu0
        %v3348 = vadd.f32 0.0, %v3347
        %3349 = vmatprep.mubr.bf16.mxu0 %v3014
        %3350 = vmatmul.mubr.bf16.gmra.mxu0 %v3013
        %v3351 = vpop.f32.mrf.mxu0
        %v3352 = vadd.f32 0.0, %v3351
        %v3353 = vpop.f32.mrf.mxu0
        %v3354 = vadd.f32 0.0, %v3353
        %v3355 = vpop.f32.mrf.mxu0
        %v3356 = vadd.f32 0.0, %v3355
        %v3357 = vpop.f32.mrf.mxu0
        %v3358 = vadd.f32 0.0, %v3357
        %3359 = vmatprep.mubr.bf16.mxu0 %v3016
        %3360 = vmatmul.mubr.bf16.gmra.mxu0 %v3015
        %v3361 = vpop.f32.mrf.mxu0
        %v3362 = vadd.f32 0.0, %v3361
        %v3363 = vpop.f32.mrf.mxu0
        %v3364 = vadd.f32 0.0, %v3363
        %v3365 = vpop.f32.mrf.mxu0
        %v3366 = vadd.f32 0.0, %v3365
        %v3367 = vpop.f32.mrf.mxu0
        %v3368 = vadd.f32 0.0, %v3367
        %3369 = vmatprep.mubr.bf16.mxu0 %v3018
        %3370 = vmatmul.mubr.bf16.gmra.mxu0 %v3017
        %v3371 = vpop.f32.mrf.mxu0
        %v3372 = vadd.f32 0.0, %v3371
        %v3373 = vpop.f32.mrf.mxu0
        %v3374 = vadd.f32 0.0, %v3373
        %v3375 = vpop.f32.mrf.mxu0
        %v3376 = vadd.f32 0.0, %v3375
        %v3377 = vpop.f32.mrf.mxu0
        %v3378 = vadd.f32 0.0, %v3377
        %3379 = vmatprep.mubr.bf16.mxu0 %v3020
        %3380 = vmatmul.mubr.bf16.gmra.mxu0 %v3019
        %v3381 = vpop.f32.mrf.mxu0
        %v3382 = vadd.f32 0.0, %v3381
        %v3383 = vpop.f32.mrf.mxu0
        %v3384 = vadd.f32 0.0, %v3383
        %v3385 = vpop.f32.mrf.mxu0
        %v3386 = vadd.f32 0.0, %v3385
        %v3387 = vpop.f32.mrf.mxu0
        %v3388 = vadd.f32 0.0, %v3387
        %3389 = vmatprep.mubr.bf16.mxu0 %v3022
        %3390 = vmatmul.mubr.bf16.gmra.mxu0 %v3021
        %v3391 = vpop.f32.mrf.mxu0
        %v3392 = vadd.f32 0.0, %v3391
        %v3393 = vpop.f32.mrf.mxu0
        %v3394 = vadd.f32 0.0, %v3393
        %v3395 = vpop.f32.mrf.mxu0
        %v3396 = vadd.f32 0.0, %v3395
        %v3397 = vpop.f32.mrf.mxu0
        %v3398 = vadd.f32 0.0, %v3397
        %3399 = vmatprep.mubr.bf16.mxu0 %v3024
        %3400 = vmatmul.mubr.bf16.gmra.mxu0 %v3023
        %v3401 = vpop.f32.mrf.mxu0
        %v3402 = vadd.f32 0.0, %v3401
        %v3403 = vpop.f32.mrf.mxu0
        %v3404 = vadd.f32 0.0, %v3403
        %v3405 = vpop.f32.mrf.mxu0
        %v3406 = vadd.f32 0.0, %v3405
        %v3407 = vpop.f32.mrf.mxu0
        %v3408 = vadd.f32 0.0, %v3407
        %3409 = vdwg.mxu0
        %v3410 = vld [vmem:[#allocation2] sm:$0xff]
        %v3411 = vld [vmem:[#allocation2 + $0x8] sm:$0xff]
        %v3412 = vld [vmem:[#allocation2 + $0x10] sm:$0xff]
        %v3413 = vld [vmem:[#allocation2 + $0x18] sm:$0xff]
        %v3414 = vld [vmem:[#allocation2 + $0x20] sm:$0xff]
        %v3415 = vld [vmem:[#allocation2 + $0x28] sm:$0xff]
        %v3416 = vld [vmem:[#allocation2 + $0x30] sm:$0xff]
        %v3417 = vld [vmem:[#allocation2 + $0x38] sm:$0xff]
        %v3418 = vld [vmem:[#allocation2 + $0x40] sm:$0xff]
        %v3419 = vld [vmem:[#allocation2 + $0x48] sm:$0xff]
        %v3420 = vld [vmem:[#allocation2 + $0x50] sm:$0xff]
        %v3421 = vld [vmem:[#allocation2 + $0x58] sm:$0xff]
        %v3422 = vld [vmem:[#allocation2 + $0x60] sm:$0xff]
        %v3423 = vld [vmem:[#allocation2 + $0x68] sm:$0xff]
        %v3424 = vld [vmem:[#allocation2 + $0x70] sm:$0xff]
        %v3425 = vld [vmem:[#allocation2 + $0x78] sm:$0xff]
        %v3426 = vld [vmem:[#allocation2 + $0x80] sm:$0xff]
        %v3427 = vld [vmem:[#allocation2 + $0x88] sm:$0xff]
        %v3428 = vld [vmem:[#allocation2 + $0x90] sm:$0xff]
        %v3429 = vld [vmem:[#allocation2 + $0x98] sm:$0xff]
        %v3430 = vld [vmem:[#allocation2 + $0xa0] sm:$0xff]
        %v3431 = vld [vmem:[#allocation2 + $0xa8] sm:$0xff]
        %v3432 = vld [vmem:[#allocation2 + $0xb0] sm:$0xff]
        %v3433 = vld [vmem:[#allocation2 + $0xb8] sm:$0xff]
        %v3434 = vld [vmem:[#allocation2 + $0xc0] sm:$0xff]
        %v3435 = vld [vmem:[#allocation2 + $0xc8] sm:$0xff]
        %v3436 = vld [vmem:[#allocation2 + $0xd0] sm:$0xff]
        %v3437 = vld [vmem:[#allocation2 + $0xd8] sm:$0xff]
        %v3438 = vld [vmem:[#allocation2 + $0xe0] sm:$0xff]
        %v3439 = vld [vmem:[#allocation2 + $0xe8] sm:$0xff]
        %v3440 = vld [vmem:[#allocation2 + $0xf0] sm:$0xff]
        %v3441 = vld [vmem:[#allocation2 + $0xf8] sm:$0xff]
        %v3442 = vld [vmem:[#allocation2 + $0x100] sm:$0xff]
        %v3443 = vld [vmem:[#allocation2 + $0x108] sm:$0xff]
        %v3444 = vld [vmem:[#allocation2 + $0x110] sm:$0xff]
        %v3445 = vld [vmem:[#allocation2 + $0x118] sm:$0xff]
        %v3446 = vld [vmem:[#allocation2 + $0x120] sm:$0xff]
        %v3447 = vld [vmem:[#allocation2 + $0x128] sm:$0xff]
        %v3448 = vld [vmem:[#allocation2 + $0x130] sm:$0xff]
        %v3449 = vld [vmem:[#allocation2 + $0x138] sm:$0xff]
        %v3450 = vld [vmem:[#allocation2 + $0x140] sm:$0xff]
        %v3451 = vld [vmem:[#allocation2 + $0x148] sm:$0xff]
        %v3452 = vld [vmem:[#allocation2 + $0x150] sm:$0xff]
        %v3453 = vld [vmem:[#allocation2 + $0x158] sm:$0xff]
        %v3454 = vld [vmem:[#allocation2 + $0x160] sm:$0xff]
        %v3455 = vld [vmem:[#allocation2 + $0x168] sm:$0xff]
        %v3456 = vld [vmem:[#allocation2 + $0x170] sm:$0xff]
        %v3457 = vld [vmem:[#allocation2 + $0x178] sm:$0xff]
        %v3458 = vld [vmem:[#allocation2 + $0x180] sm:$0xff]
        %v3459 = vld [vmem:[#allocation2 + $0x188] sm:$0xff]
        %v3460 = vld [vmem:[#allocation2 + $0x190] sm:$0xff]
        %v3461 = vld [vmem:[#allocation2 + $0x198] sm:$0xff]
        %v3462 = vld [vmem:[#allocation2 + $0x1a0] sm:$0xff]
        %v3463 = vld [vmem:[#allocation2 + $0x1a8] sm:$0xff]
        %v3464 = vld [vmem:[#allocation2 + $0x1b0] sm:$0xff]
        %v3465 = vld [vmem:[#allocation2 + $0x1b8] sm:$0xff]
        %v3466 = vld [vmem:[#allocation2 + $0x1c0] sm:$0xff]
        %v3467 = vld [vmem:[#allocation2 + $0x1c8] sm:$0xff]
        %v3468 = vld [vmem:[#allocation2 + $0x1d0] sm:$0xff]
        %v3469 = vld [vmem:[#allocation2 + $0x1d8] sm:$0xff]
        %v3470 = vld [vmem:[#allocation2 + $0x1e0] sm:$0xff]
        %v3471 = vld [vmem:[#allocation2 + $0x1e8] sm:$0xff]
        %v3472 = vld [vmem:[#allocation2 + $0x1f0] sm:$0xff]
        %v3473 = vld [vmem:[#allocation2 + $0x1f8] sm:$0xff]
        %v3474 = vadd.f32 %v3410, %v3252
        %v3475 = vadd.f32 %v3411, %v3254
        %v3476 = vadd.f32 %v3412, %v3256
        %v3477 = vadd.f32 %v3413, %v3258
        %v3478 = vadd.f32 %v3414, %v3262
        %v3479 = vadd.f32 %v3415, %v3264
        %v3480 = vadd.f32 %v3416, %v3266
        %v3481 = vadd.f32 %v3417, %v3268
        %v3482 = vadd.f32 %v3418, %v3272
        %v3483 = vadd.f32 %v3419, %v3274
        %v3484 = vadd.f32 %v3420, %v3276
        %v3485 = vadd.f32 %v3421, %v3278
        %v3486 = vadd.f32 %v3422, %v3282
        %v3487 = vadd.f32 %v3423, %v3284
        %v3488 = vadd.f32 %v3424, %v3286
        %v3489 = vadd.f32 %v3425, %v3288
        %v3490 = vadd.f32 %v3426, %v3292
        %v3491 = vadd.f32 %v3427, %v3294
        %v3492 = vadd.f32 %v3428, %v3296
        %v3493 = vadd.f32 %v3429, %v3298
        %v3494 = vadd.f32 %v3430, %v3302
        %v3495 = vadd.f32 %v3431, %v3304
        %v3496 = vadd.f32 %v3432, %v3306
        %v3497 = vadd.f32 %v3433, %v3308
        %v3498 = vadd.f32 %v3434, %v3312
        %v3499 = vadd.f32 %v3435, %v3314
        %v3500 = vadd.f32 %v3436, %v3316
        %v3501 = vadd.f32 %v3437, %v3318
        %v3502 = vadd.f32 %v3438, %v3322
        %v3503 = vadd.f32 %v3439, %v3324
        %v3504 = vadd.f32 %v3440, %v3326
        %v3505 = vadd.f32 %v3441, %v3328
        %v3506 = vadd.f32 %v3442, %v3332
        %v3507 = vadd.f32 %v3443, %v3334
        %v3508 = vadd.f32 %v3444, %v3336
        %v3509 = vadd.f32 %v3445, %v3338
        %v3510 = vadd.f32 %v3446, %v3342
        %v3511 = vadd.f32 %v3447, %v3344
        %v3512 = vadd.f32 %v3448, %v3346
        %v3513 = vadd.f32 %v3449, %v3348
        %v3514 = vadd.f32 %v3450, %v3352
        %v3515 = vadd.f32 %v3451, %v3354
        %v3516 = vadd.f32 %v3452, %v3356
        %v3517 = vadd.f32 %v3453, %v3358
        %v3518 = vadd.f32 %v3454, %v3362
        %v3519 = vadd.f32 %v3455, %v3364
        %v3520 = vadd.f32 %v3456, %v3366
        %v3521 = vadd.f32 %v3457, %v3368
        %v3522 = vadd.f32 %v3458, %v3372
        %v3523 = vadd.f32 %v3459, %v3374
        %v3524 = vadd.f32 %v3460, %v3376
        %v3525 = vadd.f32 %v3461, %v3378
        %v3526 = vadd.f32 %v3462, %v3382
        %v3527 = vadd.f32 %v3463, %v3384
        %v3528 = vadd.f32 %v3464, %v3386
        %v3529 = vadd.f32 %v3465, %v3388
        %v3530 = vadd.f32 %v3466, %v3392
        %v3531 = vadd.f32 %v3467, %v3394
        %v3532 = vadd.f32 %v3468, %v3396
        %v3533 = vadd.f32 %v3469, %v3398
        %v3534 = vadd.f32 %v3470, %v3402
        %v3535 = vadd.f32 %v3471, %v3404
        %v3536 = vadd.f32 %v3472, %v3406
        %v3537 = vadd.f32 %v3473, %v3408
        %3538 = vst [vmem:[#allocation2] sm:$0xff] %v3474
        %3539 = vst [vmem:[#allocation2 + $0x8] sm:$0xff] %v3475
        %3540 = vst [vmem:[#allocation2 + $0x10] sm:$0xff] %v3476
        %3541 = vst [vmem:[#allocation2 + $0x18] sm:$0xff] %v3477
        %3542 = vst [vmem:[#allocation2 + $0x20] sm:$0xff] %v3478
        %3543 = vst [vmem:[#allocation2 + $0x28] sm:$0xff] %v3479
        %3544 = vst [vmem:[#allocation2 + $0x30] sm:$0xff] %v3480
        %3545 = vst [vmem:[#allocation2 + $0x38] sm:$0xff] %v3481
        %3546 = vst [vmem:[#allocation2 + $0x40] sm:$0xff] %v3482
        %3547 = vst [vmem:[#allocation2 + $0x48] sm:$0xff] %v3483
        %3548 = vst [vmem:[#allocation2 + $0x50] sm:$0xff] %v3484
        %3549 = vst [vmem:[#allocation2 + $0x58] sm:$0xff] %v3485
        %3550 = vst [vmem:[#allocation2 + $0x60] sm:$0xff] %v3486
        %3551 = vst [vmem:[#allocation2 + $0x68] sm:$0xff] %v3487
        %3552 = vst [vmem:[#allocation2 + $0x70] sm:$0xff] %v3488
        %3553 = vst [vmem:[#allocation2 + $0x78] sm:$0xff] %v3489
        %3554 = vst [vmem:[#allocation2 + $0x80] sm:$0xff] %v3490
        %3555 = vst [vmem:[#allocation2 + $0x88] sm:$0xff] %v3491
        %3556 = vst [vmem:[#allocation2 + $0x90] sm:$0xff] %v3492
        %3557 = vst [vmem:[#allocation2 + $0x98] sm:$0xff] %v3493
        %3558 = vst [vmem:[#allocation2 + $0xa0] sm:$0xff] %v3494
        %3559 = vst [vmem:[#allocation2 + $0xa8] sm:$0xff] %v3495
        %3560 = vst [vmem:[#allocation2 + $0xb0] sm:$0xff] %v3496
        %3561 = vst [vmem:[#allocation2 + $0xb8] sm:$0xff] %v3497
        %3562 = vst [vmem:[#allocation2 + $0xc0] sm:$0xff] %v3498
        %3563 = vst [vmem:[#allocation2 + $0xc8] sm:$0xff] %v3499
        %3564 = vst [vmem:[#allocation2 + $0xd0] sm:$0xff] %v3500
        %3565 = vst [vmem:[#allocation2 + $0xd8] sm:$0xff] %v3501
        %3566 = vst [vmem:[#allocation2 + $0xe0] sm:$0xff] %v3502
        %3567 = vst [vmem:[#allocation2 + $0xe8] sm:$0xff] %v3503
        %3568 = vst [vmem:[#allocation2 + $0xf0] sm:$0xff] %v3504
        %3569 = vst [vmem:[#allocation2 + $0xf8] sm:$0xff] %v3505
        %3570 = vst [vmem:[#allocation2 + $0x100] sm:$0xff] %v3506
        %3571 = vst [vmem:[#allocation2 + $0x108] sm:$0xff] %v3507
        %3572 = vst [vmem:[#allocation2 + $0x110] sm:$0xff] %v3508
        %3573 = vst [vmem:[#allocation2 + $0x118] sm:$0xff] %v3509
        %3574 = vst [vmem:[#allocation2 + $0x120] sm:$0xff] %v3510
        %3575 = vst [vmem:[#allocation2 + $0x128] sm:$0xff] %v3511
        %3576 = vst [vmem:[#allocation2 + $0x130] sm:$0xff] %v3512
        %3577 = vst [vmem:[#allocation2 + $0x138] sm:$0xff] %v3513
        %3578 = vst [vmem:[#allocation2 + $0x140] sm:$0xff] %v3514
        %3579 = vst [vmem:[#allocation2 + $0x148] sm:$0xff] %v3515
        %3580 = vst [vmem:[#allocation2 + $0x150] sm:$0xff] %v3516
        %3581 = vst [vmem:[#allocation2 + $0x158] sm:$0xff] %v3517
        %3582 = vst [vmem:[#allocation2 + $0x160] sm:$0xff] %v3518
        %3583 = vst [vmem:[#allocation2 + $0x168] sm:$0xff] %v3519
        %3584 = vst [vmem:[#allocation2 + $0x170] sm:$0xff] %v3520
        %3585 = vst [vmem:[#allocation2 + $0x178] sm:$0xff] %v3521
        %3586 = vst [vmem:[#allocation2 + $0x180] sm:$0xff] %v3522
        %3587 = vst [vmem:[#allocation2 + $0x188] sm:$0xff] %v3523
        %3588 = vst [vmem:[#allocation2 + $0x190] sm:$0xff] %v3524
        %3589 = vst [vmem:[#allocation2 + $0x198] sm:$0xff] %v3525
        %3590 = vst [vmem:[#allocation2 + $0x1a0] sm:$0xff] %v3526
        %3591 = vst [vmem:[#allocation2 + $0x1a8] sm:$0xff] %v3527
        %3592 = vst [vmem:[#allocation2 + $0x1b0] sm:$0xff] %v3528
        %3593 = vst [vmem:[#allocation2 + $0x1b8] sm:$0xff] %v3529
        %3594 = vst [vmem:[#allocation2 + $0x1c0] sm:$0xff] %v3530
        %3595 = vst [vmem:[#allocation2 + $0x1c8] sm:$0xff] %v3531
        %3596 = vst [vmem:[#allocation2 + $0x1d0] sm:$0xff] %v3532
        %3597 = vst [vmem:[#allocation2 + $0x1d8] sm:$0xff] %v3533
        %3598 = vst [vmem:[#allocation2 + $0x1e0] sm:$0xff] %v3534
        %3599 = vst [vmem:[#allocation2 + $0x1e8] sm:$0xff] %v3535
        %3600 = vst [vmem:[#allocation2 + $0x1f0] sm:$0xff] %v3536
        %3601 = vst [vmem:[#allocation2 + $0x1f8] sm:$0xff] %v3537
        %v3602 = vld [vmem:[#allocation3 + $0x20] sm:$0xff]
        %v3603 = vld [vmem:[#allocation3 + $0x28] sm:$0xff]
        %v3604 = vld [vmem:[#allocation3 + $0x30] sm:$0xff]
        %v3605 = vld [vmem:[#allocation3 + $0x38] sm:$0xff]
        %v3606 = vld [vmem:[#allocation3 + $0x40] sm:$0xff]
        %v3607 = vld [vmem:[#allocation3 + $0x48] sm:$0xff]
        %v3608 = vld [vmem:[#allocation3 + $0x50] sm:$0xff]
        %v3609 = vld [vmem:[#allocation3 + $0x58] sm:$0xff]
        %v3610 = vld [vmem:[#allocation3 + $0x60] sm:$0xff]
        %v3611 = vld [vmem:[#allocation3 + $0x68] sm:$0xff]
        %v3612 = vld [vmem:[#allocation3 + $0x70] sm:$0xff]
        %v3613 = vld [vmem:[#allocation3 + $0x78] sm:$0xff]
        %v3614 = vld [vmem:[#allocation3 + $0x80] sm:$0xff]
        %v3615 = vld [vmem:[#allocation3 + $0x88] sm:$0xff]
        %v3616 = vld [vmem:[#allocation3 + $0x90] sm:$0xff]
        %v3617 = vld [vmem:[#allocation3 + $0x98] sm:$0xff]
        %v3618 = vld [vmem:[#allocation3 + $0xa0] sm:$0xff]
        %v3619 = vld [vmem:[#allocation3 + $0xa8] sm:$0xff]
        %v3620 = vld [vmem:[#allocation3 + $0xb0] sm:$0xff]
        %v3621 = vld [vmem:[#allocation3 + $0xb8] sm:$0xff]
        %v3622 = vld [vmem:[#allocation3 + $0xc0] sm:$0xff]
        %v3623 = vld [vmem:[#allocation3 + $0xc8] sm:$0xff]
        %v3624 = vld [vmem:[#allocation3 + $0xd0] sm:$0xff]
        %v3625 = vld [vmem:[#allocation3 + $0xd8] sm:$0xff]
        %v3626 = vld [vmem:[#allocation3 + $0xe0] sm:$0xff]
        %v3627 = vld [vmem:[#allocation3 + $0xe8] sm:$0xff]
        %v3628 = vld [vmem:[#allocation3 + $0xf0] sm:$0xff]
        %v3629 = vld [vmem:[#allocation3 + $0xf8] sm:$0xff]
        %v3630 = vld [vmem:[#allocation3 + $0x100] sm:$0xff]
        %v3631 = vld [vmem:[#allocation3 + $0x108] sm:$0xff]
        %v3632 = vld [vmem:[#allocation3 + $0x110] sm:$0xff]
        %v3633 = vld [vmem:[#allocation3 + $0x118] sm:$0xff]
        %s3634 = scalar_lea.vmem %s219, 1024
        %v3635 = vld [vmem:[%s3634] sm:$0xff]
        %v3636 = vld [vmem:[%s3634 + $0x8] sm:$0xff]
        %v3637 = vld [vmem:[%s3634 + $0x10] sm:$0xff]
        %v3638 = vld [vmem:[%s3634 + $0x18] sm:$0xff]
        %v3639 = vld [vmem:[%s3634 + $0x20] sm:$0xff]
        %v3640 = vld [vmem:[%s3634 + $0x28] sm:$0xff]
        %v3641 = vld [vmem:[%s3634 + $0x30] sm:$0xff]
        %v3642 = vld [vmem:[%s3634 + $0x38] sm:$0xff]
        %v3643 = vld [vmem:[%s3634 + $0x40] sm:$0xff]
        %v3644 = vld [vmem:[%s3634 + $0x48] sm:$0xff]
        %v3645 = vld [vmem:[%s3634 + $0x50] sm:$0xff]
        %v3646 = vld [vmem:[%s3634 + $0x58] sm:$0xff]
        %v3647 = vld [vmem:[%s3634 + $0x60] sm:$0xff]
        %v3648 = vld [vmem:[%s3634 + $0x68] sm:$0xff]
        %v3649 = vld [vmem:[%s3634 + $0x70] sm:$0xff]
        %v3650 = vld [vmem:[%s3634 + $0x78] sm:$0xff]
        %v3651 = vld [vmem:[%s3634 + $0x80] sm:$0xff]
        %v3652 = vld [vmem:[%s3634 + $0x88] sm:$0xff]
        %v3653 = vld [vmem:[%s3634 + $0x90] sm:$0xff]
        %v3654 = vld [vmem:[%s3634 + $0x98] sm:$0xff]
        %v3655 = vld [vmem:[%s3634 + $0xa0] sm:$0xff]
        %v3656 = vld [vmem:[%s3634 + $0xa8] sm:$0xff]
        %v3657 = vld [vmem:[%s3634 + $0xb0] sm:$0xff]
        %v3658 = vld [vmem:[%s3634 + $0xb8] sm:$0xff]
        %v3659 = vld [vmem:[%s3634 + $0xc0] sm:$0xff]
        %v3660 = vld [vmem:[%s3634 + $0xc8] sm:$0xff]
        %v3661 = vld [vmem:[%s3634 + $0xd0] sm:$0xff]
        %v3662 = vld [vmem:[%s3634 + $0xd8] sm:$0xff]
        %v3663 = vld [vmem:[%s3634 + $0xe0] sm:$0xff]
        %v3664 = vld [vmem:[%s3634 + $0xe8] sm:$0xff]
        %v3665 = vld [vmem:[%s3634 + $0xf0] sm:$0xff]
        %v3666 = vld [vmem:[%s3634 + $0xf8] sm:$0xff]
        %v3699 = vunpack.c.l.b16 %v3602
        %v3700 = vunpack.c.h.b16 %v3602
        %v3701 = vunpack.c.l.b16 %v3603
        %v3702 = vunpack.c.h.b16 %v3603
        %v3703 = vunpack.c.l.b16 %v3604
        %v3704 = vunpack.c.h.b16 %v3604
        %v3705 = vunpack.c.l.b16 %v3605
        %v3706 = vunpack.c.h.b16 %v3605
        %v3707 = vunpack.c.l.b16 %v3606
        %v3708 = vunpack.c.h.b16 %v3606
        %v3709 = vunpack.c.l.b16 %v3607
        %v3710 = vunpack.c.h.b16 %v3607
        %v3711 = vunpack.c.l.b16 %v3608
        %v3712 = vunpack.c.h.b16 %v3608
        %v3713 = vunpack.c.l.b16 %v3609
        %v3714 = vunpack.c.h.b16 %v3609
        %v3715 = vunpack.c.l.b16 %v3610
        %v3716 = vunpack.c.h.b16 %v3610
        %v3717 = vunpack.c.l.b16 %v3611
        %v3718 = vunpack.c.h.b16 %v3611
        %v3719 = vunpack.c.l.b16 %v3612
        %v3720 = vunpack.c.h.b16 %v3612
        %v3721 = vunpack.c.l.b16 %v3613
        %v3722 = vunpack.c.h.b16 %v3613
        %v3723 = vunpack.c.l.b16 %v3614
        %v3724 = vunpack.c.h.b16 %v3614
        %v3725 = vunpack.c.l.b16 %v3615
        %v3726 = vunpack.c.h.b16 %v3615
        %v3727 = vunpack.c.l.b16 %v3616
        %v3728 = vunpack.c.h.b16 %v3616
        %v3729 = vunpack.c.l.b16 %v3617
        %v3730 = vunpack.c.h.b16 %v3617
        %v3731 = vunpack.c.l.b16 %v3618
        %v3732 = vunpack.c.h.b16 %v3618
        %v3733 = vunpack.c.l.b16 %v3619
        %v3734 = vunpack.c.h.b16 %v3619
        %v3735 = vunpack.c.l.b16 %v3620
        %v3736 = vunpack.c.h.b16 %v3620
        %v3737 = vunpack.c.l.b16 %v3621
        %v3738 = vunpack.c.h.b16 %v3621
        %v3739 = vunpack.c.l.b16 %v3622
        %v3740 = vunpack.c.h.b16 %v3622
        %v3741 = vunpack.c.l.b16 %v3623
        %v3742 = vunpack.c.h.b16 %v3623
        %v3743 = vunpack.c.l.b16 %v3624
        %v3744 = vunpack.c.h.b16 %v3624
        %v3745 = vunpack.c.l.b16 %v3625
        %v3746 = vunpack.c.h.b16 %v3625
        %v3747 = vunpack.c.l.b16 %v3626
        %v3748 = vunpack.c.h.b16 %v3626
        %v3749 = vunpack.c.l.b16 %v3627
        %v3750 = vunpack.c.h.b16 %v3627
        %v3751 = vunpack.c.l.b16 %v3628
        %v3752 = vunpack.c.h.b16 %v3628
        %v3753 = vunpack.c.l.b16 %v3629
        %v3754 = vunpack.c.h.b16 %v3629
        %v3755 = vunpack.c.l.b16 %v3630
        %v3756 = vunpack.c.h.b16 %v3630
        %v3757 = vunpack.c.l.b16 %v3631
        %v3758 = vunpack.c.h.b16 %v3631
        %v3759 = vunpack.c.l.b16 %v3632
        %v3760 = vunpack.c.h.b16 %v3632
        %v3761 = vunpack.c.l.b16 %v3633
        %v3762 = vunpack.c.h.b16 %v3633
        %v3763 = vpack.c.b16 %v3701, %v3699
        %v3764 = vpack.c.b16 %v3702, %v3700
        %v3765 = vpack.c.b16 %v3705, %v3703
        %v3766 = vpack.c.b16 %v3706, %v3704
        %v3767 = vpack.c.b16 %v3709, %v3707
        %v3768 = vpack.c.b16 %v3710, %v3708
        %v3769 = vpack.c.b16 %v3713, %v3711
        %v3770 = vpack.c.b16 %v3714, %v3712
        %v3771 = vpack.c.b16 %v3717, %v3715
        %v3772 = vpack.c.b16 %v3718, %v3716
        %v3773 = vpack.c.b16 %v3721, %v3719
        %v3774 = vpack.c.b16 %v3722, %v3720
        %v3775 = vpack.c.b16 %v3725, %v3723
        %v3776 = vpack.c.b16 %v3726, %v3724
        %v3777 = vpack.c.b16 %v3729, %v3727
        %v3778 = vpack.c.b16 %v3730, %v3728
        %v3779 = vpack.c.b16 %v3733, %v3731
        %v3780 = vpack.c.b16 %v3734, %v3732
        %v3781 = vpack.c.b16 %v3737, %v3735
        %v3782 = vpack.c.b16 %v3738, %v3736
        %v3783 = vpack.c.b16 %v3741, %v3739
        %v3784 = vpack.c.b16 %v3742, %v3740
        %v3785 = vpack.c.b16 %v3745, %v3743
        %v3786 = vpack.c.b16 %v3746, %v3744
        %v3787 = vpack.c.b16 %v3749, %v3747
        %v3788 = vpack.c.b16 %v3750, %v3748
        %v3789 = vpack.c.b16 %v3753, %v3751
        %v3790 = vpack.c.b16 %v3754, %v3752
        %v3791 = vpack.c.b16 %v3757, %v3755
        %v3792 = vpack.c.b16 %v3758, %v3756
        %v3793 = vpack.c.b16 %v3761, %v3759
        %v3794 = vpack.c.b16 %v3762, %v3760
        %v3859 = vunpack.c.l.b16 %v3635
        %v3860 = vunpack.c.h.b16 %v3635
        %v3861 = vunpack.c.l.b16 %v3636
        %v3862 = vunpack.c.h.b16 %v3636
        %v3863 = vunpack.c.l.b16 %v3637
        %v3864 = vunpack.c.h.b16 %v3637
        %v3865 = vunpack.c.l.b16 %v3638
        %v3866 = vunpack.c.h.b16 %v3638
        %v3867 = vunpack.c.l.b16 %v3639
        %v3868 = vunpack.c.h.b16 %v3639
        %v3869 = vunpack.c.l.b16 %v3640
        %v3870 = vunpack.c.h.b16 %v3640
        %v3871 = vunpack.c.l.b16 %v3641
        %v3872 = vunpack.c.h.b16 %v3641
        %v3873 = vunpack.c.l.b16 %v3642
        %v3874 = vunpack.c.h.b16 %v3642
        %v3875 = vunpack.c.l.b16 %v3643
        %v3876 = vunpack.c.h.b16 %v3643
        %v3877 = vunpack.c.l.b16 %v3644
        %v3878 = vunpack.c.h.b16 %v3644
        %v3879 = vunpack.c.l.b16 %v3645
        %v3880 = vunpack.c.h.b16 %v3645
        %v3881 = vunpack.c.l.b16 %v3646
        %v3882 = vunpack.c.h.b16 %v3646
        %v3883 = vunpack.c.l.b16 %v3647
        %v3884 = vunpack.c.h.b16 %v3647
        %v3885 = vunpack.c.l.b16 %v3648
        %v3886 = vunpack.c.h.b16 %v3648
        %v3887 = vunpack.c.l.b16 %v3649
        %v3888 = vunpack.c.h.b16 %v3649
        %v3889 = vunpack.c.l.b16 %v3650
        %v3890 = vunpack.c.h.b16 %v3650
        %v3891 = vunpack.c.l.b16 %v3651
        %v3892 = vunpack.c.h.b16 %v3651
        %v3893 = vunpack.c.l.b16 %v3652
        %v3894 = vunpack.c.h.b16 %v3652
        %v3895 = vunpack.c.l.b16 %v3653
        %v3896 = vunpack.c.h.b16 %v3653
        %v3897 = vunpack.c.l.b16 %v3654
        %v3898 = vunpack.c.h.b16 %v3654
        %v3899 = vunpack.c.l.b16 %v3655
        %v3900 = vunpack.c.h.b16 %v3655
        %v3901 = vunpack.c.l.b16 %v3656
        %v3902 = vunpack.c.h.b16 %v3656
        %v3903 = vunpack.c.l.b16 %v3657
        %v3904 = vunpack.c.h.b16 %v3657
        %v3905 = vunpack.c.l.b16 %v3658
        %v3906 = vunpack.c.h.b16 %v3658
        %v3907 = vunpack.c.l.b16 %v3659
        %v3908 = vunpack.c.h.b16 %v3659
        %v3909 = vunpack.c.l.b16 %v3660
        %v3910 = vunpack.c.h.b16 %v3660
        %v3911 = vunpack.c.l.b16 %v3661
        %v3912 = vunpack.c.h.b16 %v3661
        %v3913 = vunpack.c.l.b16 %v3662
        %v3914 = vunpack.c.h.b16 %v3662
        %v3915 = vunpack.c.l.b16 %v3663
        %v3916 = vunpack.c.h.b16 %v3663
        %v3917 = vunpack.c.l.b16 %v3664
        %v3918 = vunpack.c.h.b16 %v3664
        %v3919 = vunpack.c.l.b16 %v3665
        %v3920 = vunpack.c.h.b16 %v3665
        %v3921 = vunpack.c.l.b16 %v3666
        %v3922 = vunpack.c.h.b16 %v3666
        %v3923 = vpack.c.b16 %v3861, %v3859
        %v3924 = vpack.c.b16 %v3862, %v3860
        %v3925 = vpack.c.b16 %v3865, %v3863
        %v3926 = vpack.c.b16 %v3866, %v3864
        %v3927 = vpack.c.b16 %v3869, %v3867
        %v3928 = vpack.c.b16 %v3870, %v3868
        %v3929 = vpack.c.b16 %v3873, %v3871
        %v3930 = vpack.c.b16 %v3874, %v3872
        %v3931 = vpack.c.b16 %v3877, %v3875
        %v3932 = vpack.c.b16 %v3878, %v3876
        %v3933 = vpack.c.b16 %v3881, %v3879
        %v3934 = vpack.c.b16 %v3882, %v3880
        %v3935 = vpack.c.b16 %v3885, %v3883
        %v3936 = vpack.c.b16 %v3886, %v3884
        %v3937 = vpack.c.b16 %v3889, %v3887
        %v3938 = vpack.c.b16 %v3890, %v3888
        %v3939 = vpack.c.b16 %v3893, %v3891
        %v3940 = vpack.c.b16 %v3894, %v3892
        %v3941 = vpack.c.b16 %v3897, %v3895
        %v3942 = vpack.c.b16 %v3898, %v3896
        %v3943 = vpack.c.b16 %v3901, %v3899
        %v3944 = vpack.c.b16 %v3902, %v3900
        %v3945 = vpack.c.b16 %v3905, %v3903
        %v3946 = vpack.c.b16 %v3906, %v3904
        %v3947 = vpack.c.b16 %v3909, %v3907
        %v3948 = vpack.c.b16 %v3910, %v3908
        %v3949 = vpack.c.b16 %v3913, %v3911
        %v3950 = vpack.c.b16 %v3914, %v3912
        %v3951 = vpack.c.b16 %v3917, %v3915
        %v3952 = vpack.c.b16 %v3918, %v3916
        %v3953 = vpack.c.b16 %v3921, %v3919
        %v3954 = vpack.c.b16 %v3922, %v3920
        %3987 = vmatprep.subr.bf16.mxu0 %v3938
        %3988 = vmatpush1.bf16.msra.mxu0 %v3937
        %3989 = vmatprep.subr.bf16.mxu0 %v3936
        %3990 = vmatpush1.bf16.msra.mxu0 %v3935
        %3991 = vmatprep.subr.bf16.mxu0 %v3934
        %3992 = vmatpush1.bf16.msra.mxu0 %v3933
        %3993 = vmatprep.subr.bf16.mxu0 %v3932
        %3994 = vmatpush1.bf16.msra.mxu0 %v3931
        %3995 = vmatprep.subr.bf16.mxu0 %v3930
        %3996 = vmatpush1.bf16.msra.mxu0 %v3929
        %3997 = vmatprep.subr.bf16.mxu0 %v3928
        %3998 = vmatpush1.bf16.msra.mxu0 %v3927
        %3999 = vmatprep.subr.bf16.mxu0 %v3926
        %4000 = vmatpush1.bf16.msra.mxu0 %v3925
        %4001 = vmatprep.subr.bf16.mxu0 %v3924
        %4002 = vmatpush1.bf16.msra.mxu0 %v3923
        %4003 = vmatprep.subr.bf16.mxu0 %v3954
        %4004 = vmatpush2.bf16.msra.mxu0 %v3953
        %4005 = vmatprep.subr.bf16.mxu0 %v3952
        %4006 = vmatpush2.bf16.msra.mxu0 %v3951
        %4007 = vmatprep.subr.bf16.mxu0 %v3950
        %4008 = vmatpush2.bf16.msra.mxu0 %v3949
        %4009 = vmatprep.subr.bf16.mxu0 %v3948
        %4010 = vmatpush2.bf16.msra.mxu0 %v3947
        %4011 = vmatprep.subr.bf16.mxu0 %v3946
        %4012 = vmatpush2.bf16.msra.mxu0 %v3945
        %4013 = vmatprep.subr.bf16.mxu0 %v3944
        %4014 = vmatpush2.bf16.msra.mxu0 %v3943
        %4015 = vmatprep.subr.bf16.mxu0 %v3942
        %4016 = vmatpush2.bf16.msra.mxu0 %v3941
        %4017 = vmatprep.subr.bf16.mxu0 %v3940
        %4018 = vmatpush2.bf16.msra.mxu0 %v3939
        %4019 = vmatprep.mubr.bf16.mxu0 %v3764
        %4020 = vmatmul.mubr.bf16.gmra.mxu0 %v3763
        %v4021 = vpop.f32.mrf.mxu0
        %v4022 = vadd.f32 0.0, %v4021
        %v4023 = vpop.f32.mrf.mxu0
        %v4024 = vadd.f32 0.0, %v4023
        %v4025 = vpop.f32.mrf.mxu0
        %v4026 = vadd.f32 0.0, %v4025
        %v4027 = vpop.f32.mrf.mxu0
        %v4028 = vadd.f32 0.0, %v4027
        %4029 = vmatprep.mubr.bf16.mxu0 %v3766
        %4030 = vmatmul.mubr.bf16.gmra.mxu0 %v3765
        %v4031 = vpop.f32.mrf.mxu0
        %v4032 = vadd.f32 0.0, %v4031
        %v4033 = vpop.f32.mrf.mxu0
        %v4034 = vadd.f32 0.0, %v4033
        %v4035 = vpop.f32.mrf.mxu0
        %v4036 = vadd.f32 0.0, %v4035
        %v4037 = vpop.f32.mrf.mxu0
        %v4038 = vadd.f32 0.0, %v4037
        %4039 = vmatprep.mubr.bf16.mxu0 %v3768
        %4040 = vmatmul.mubr.bf16.gmra.mxu0 %v3767
        %v4041 = vpop.f32.mrf.mxu0
        %v4042 = vadd.f32 0.0, %v4041
        %v4043 = vpop.f32.mrf.mxu0
        %v4044 = vadd.f32 0.0, %v4043
        %v4045 = vpop.f32.mrf.mxu0
        %v4046 = vadd.f32 0.0, %v4045
        %v4047 = vpop.f32.mrf.mxu0
        %v4048 = vadd.f32 0.0, %v4047
        %4049 = vmatprep.mubr.bf16.mxu0 %v3770
        %4050 = vmatmul.mubr.bf16.gmra.mxu0 %v3769
        %v4051 = vpop.f32.mrf.mxu0
        %v4052 = vadd.f32 0.0, %v4051
        %v4053 = vpop.f32.mrf.mxu0
        %v4054 = vadd.f32 0.0, %v4053
        %v4055 = vpop.f32.mrf.mxu0
        %v4056 = vadd.f32 0.0, %v4055
        %v4057 = vpop.f32.mrf.mxu0
        %v4058 = vadd.f32 0.0, %v4057
        %4059 = vmatprep.mubr.bf16.mxu0 %v3772
        %4060 = vmatmul.mubr.bf16.gmra.mxu0 %v3771
        %v4061 = vpop.f32.mrf.mxu0
        %v4062 = vadd.f32 0.0, %v4061
        %v4063 = vpop.f32.mrf.mxu0
        %v4064 = vadd.f32 0.0, %v4063
        %v4065 = vpop.f32.mrf.mxu0
        %v4066 = vadd.f32 0.0, %v4065
        %v4067 = vpop.f32.mrf.mxu0
        %v4068 = vadd.f32 0.0, %v4067
        %4069 = vmatprep.mubr.bf16.mxu0 %v3774
        %4070 = vmatmul.mubr.bf16.gmra.mxu0 %v3773
        %v4071 = vpop.f32.mrf.mxu0
        %v4072 = vadd.f32 0.0, %v4071
        %v4073 = vpop.f32.mrf.mxu0
        %v4074 = vadd.f32 0.0, %v4073
        %v4075 = vpop.f32.mrf.mxu0
        %v4076 = vadd.f32 0.0, %v4075
        %v4077 = vpop.f32.mrf.mxu0
        %v4078 = vadd.f32 0.0, %v4077
        %4079 = vmatprep.mubr.bf16.mxu0 %v3776
        %4080 = vmatmul.mubr.bf16.gmra.mxu0 %v3775
        %v4081 = vpop.f32.mrf.mxu0
        %v4082 = vadd.f32 0.0, %v4081
        %v4083 = vpop.f32.mrf.mxu0
        %v4084 = vadd.f32 0.0, %v4083
        %v4085 = vpop.f32.mrf.mxu0
        %v4086 = vadd.f32 0.0, %v4085
        %v4087 = vpop.f32.mrf.mxu0
        %v4088 = vadd.f32 0.0, %v4087
        %4089 = vmatprep.mubr.bf16.mxu0 %v3778
        %4090 = vmatmul.mubr.bf16.gmra.mxu0 %v3777
        %v4091 = vpop.f32.mrf.mxu0
        %v4092 = vadd.f32 0.0, %v4091
        %v4093 = vpop.f32.mrf.mxu0
        %v4094 = vadd.f32 0.0, %v4093
        %v4095 = vpop.f32.mrf.mxu0
        %v4096 = vadd.f32 0.0, %v4095
        %v4097 = vpop.f32.mrf.mxu0
        %v4098 = vadd.f32 0.0, %v4097
        %4099 = vmatprep.mubr.bf16.mxu0 %v3780
        %4100 = vmatmul.mubr.bf16.gmra.mxu0 %v3779
        %v4101 = vpop.f32.mrf.mxu0
        %v4102 = vadd.f32 0.0, %v4101
        %v4103 = vpop.f32.mrf.mxu0
        %v4104 = vadd.f32 0.0, %v4103
        %v4105 = vpop.f32.mrf.mxu0
        %v4106 = vadd.f32 0.0, %v4105
        %v4107 = vpop.f32.mrf.mxu0
        %v4108 = vadd.f32 0.0, %v4107
        %4109 = vmatprep.mubr.bf16.mxu0 %v3782
        %4110 = vmatmul.mubr.bf16.gmra.mxu0 %v3781
        %v4111 = vpop.f32.mrf.mxu0
        %v4112 = vadd.f32 0.0, %v4111
        %v4113 = vpop.f32.mrf.mxu0
        %v4114 = vadd.f32 0.0, %v4113
        %v4115 = vpop.f32.mrf.mxu0
        %v4116 = vadd.f32 0.0, %v4115
        %v4117 = vpop.f32.mrf.mxu0
        %v4118 = vadd.f32 0.0, %v4117
        %4119 = vmatprep.mubr.bf16.mxu0 %v3784
        %4120 = vmatmul.mubr.bf16.gmra.mxu0 %v3783
        %v4121 = vpop.f32.mrf.mxu0
        %v4122 = vadd.f32 0.0, %v4121
        %v4123 = vpop.f32.mrf.mxu0
        %v4124 = vadd.f32 0.0, %v4123
        %v4125 = vpop.f32.mrf.mxu0
        %v4126 = vadd.f32 0.0, %v4125
        %v4127 = vpop.f32.mrf.mxu0
        %v4128 = vadd.f32 0.0, %v4127
        %4129 = vmatprep.mubr.bf16.mxu0 %v3786
        %4130 = vmatmul.mubr.bf16.gmra.mxu0 %v3785
        %v4131 = vpop.f32.mrf.mxu0
        %v4132 = vadd.f32 0.0, %v4131
        %v4133 = vpop.f32.mrf.mxu0
        %v4134 = vadd.f32 0.0, %v4133
        %v4135 = vpop.f32.mrf.mxu0
        %v4136 = vadd.f32 0.0, %v4135
        %v4137 = vpop.f32.mrf.mxu0
        %v4138 = vadd.f32 0.0, %v4137
        %4139 = vmatprep.mubr.bf16.mxu0 %v3788
        %4140 = vmatmul.mubr.bf16.gmra.mxu0 %v3787
        %v4141 = vpop.f32.mrf.mxu0
        %v4142 = vadd.f32 0.0, %v4141
        %v4143 = vpop.f32.mrf.mxu0
        %v4144 = vadd.f32 0.0, %v4143
        %v4145 = vpop.f32.mrf.mxu0
        %v4146 = vadd.f32 0.0, %v4145
        %v4147 = vpop.f32.mrf.mxu0
        %v4148 = vadd.f32 0.0, %v4147
        %4149 = vmatprep.mubr.bf16.mxu0 %v3790
        %4150 = vmatmul.mubr.bf16.gmra.mxu0 %v3789
        %v4151 = vpop.f32.mrf.mxu0
        %v4152 = vadd.f32 0.0, %v4151
        %v4153 = vpop.f32.mrf.mxu0
        %v4154 = vadd.f32 0.0, %v4153
        %v4155 = vpop.f32.mrf.mxu0
        %v4156 = vadd.f32 0.0, %v4155
        %v4157 = vpop.f32.mrf.mxu0
        %v4158 = vadd.f32 0.0, %v4157
        %4159 = vmatprep.mubr.bf16.mxu0 %v3792
        %4160 = vmatmul.mubr.bf16.gmra.mxu0 %v3791
        %v4161 = vpop.f32.mrf.mxu0
        %v4162 = vadd.f32 0.0, %v4161
        %v4163 = vpop.f32.mrf.mxu0
        %v4164 = vadd.f32 0.0, %v4163
        %v4165 = vpop.f32.mrf.mxu0
        %v4166 = vadd.f32 0.0, %v4165
        %v4167 = vpop.f32.mrf.mxu0
        %v4168 = vadd.f32 0.0, %v4167
        %4169 = vmatprep.mubr.bf16.mxu0 %v3794
        %4170 = vmatmul.mubr.bf16.gmra.mxu0 %v3793
        %v4171 = vpop.f32.mrf.mxu0
        %v4172 = vadd.f32 0.0, %v4171
        %v4173 = vpop.f32.mrf.mxu0
        %v4174 = vadd.f32 0.0, %v4173
        %v4175 = vpop.f32.mrf.mxu0
        %v4176 = vadd.f32 0.0, %v4175
        %v4177 = vpop.f32.mrf.mxu0
        %v4178 = vadd.f32 0.0, %v4177
        %4179 = vdwg.mxu0
        %v4180 = vld [vmem:[#allocation2] sm:$0xff]
        %v4181 = vld [vmem:[#allocation2 + $0x8] sm:$0xff]
        %v4182 = vld [vmem:[#allocation2 + $0x10] sm:$0xff]
        %v4183 = vld [vmem:[#allocation2 + $0x18] sm:$0xff]
        %v4184 = vld [vmem:[#allocation2 + $0x20] sm:$0xff]
        %v4185 = vld [vmem:[#allocation2 + $0x28] sm:$0xff]
        %v4186 = vld [vmem:[#allocation2 + $0x30] sm:$0xff]
        %v4187 = vld [vmem:[#allocation2 + $0x38] sm:$0xff]
        %v4188 = vld [vmem:[#allocation2 + $0x40] sm:$0xff]
        %v4189 = vld [vmem:[#allocation2 + $0x48] sm:$0xff]
        %v4190 = vld [vmem:[#allocation2 + $0x50] sm:$0xff]
        %v4191 = vld [vmem:[#allocation2 + $0x58] sm:$0xff]
        %v4192 = vld [vmem:[#allocation2 + $0x60] sm:$0xff]
        %v4193 = vld [vmem:[#allocation2 + $0x68] sm:$0xff]
        %v4194 = vld [vmem:[#allocation2 + $0x70] sm:$0xff]
        %v4195 = vld [vmem:[#allocation2 + $0x78] sm:$0xff]
        %v4196 = vld [vmem:[#allocation2 + $0x80] sm:$0xff]
        %v4197 = vld [vmem:[#allocation2 + $0x88] sm:$0xff]
        %v4198 = vld [vmem:[#allocation2 + $0x90] sm:$0xff]
        %v4199 = vld [vmem:[#allocation2 + $0x98] sm:$0xff]
        %v4200 = vld [vmem:[#allocation2 + $0xa0] sm:$0xff]
        %v4201 = vld [vmem:[#allocation2 + $0xa8] sm:$0xff]
        %v4202 = vld [vmem:[#allocation2 + $0xb0] sm:$0xff]
        %v4203 = vld [vmem:[#allocation2 + $0xb8] sm:$0xff]
        %v4204 = vld [vmem:[#allocation2 + $0xc0] sm:$0xff]
        %v4205 = vld [vmem:[#allocation2 + $0xc8] sm:$0xff]
        %v4206 = vld [vmem:[#allocation2 + $0xd0] sm:$0xff]
        %v4207 = vld [vmem:[#allocation2 + $0xd8] sm:$0xff]
        %v4208 = vld [vmem:[#allocation2 + $0xe0] sm:$0xff]
        %v4209 = vld [vmem:[#allocation2 + $0xe8] sm:$0xff]
        %v4210 = vld [vmem:[#allocation2 + $0xf0] sm:$0xff]
        %v4211 = vld [vmem:[#allocation2 + $0xf8] sm:$0xff]
        %v4212 = vld [vmem:[#allocation2 + $0x100] sm:$0xff]
        %v4213 = vld [vmem:[#allocation2 + $0x108] sm:$0xff]
        %v4214 = vld [vmem:[#allocation2 + $0x110] sm:$0xff]
        %v4215 = vld [vmem:[#allocation2 + $0x118] sm:$0xff]
        %v4216 = vld [vmem:[#allocation2 + $0x120] sm:$0xff]
        %v4217 = vld [vmem:[#allocation2 + $0x128] sm:$0xff]
        %v4218 = vld [vmem:[#allocation2 + $0x130] sm:$0xff]
        %v4219 = vld [vmem:[#allocation2 + $0x138] sm:$0xff]
        %v4220 = vld [vmem:[#allocation2 + $0x140] sm:$0xff]
        %v4221 = vld [vmem:[#allocation2 + $0x148] sm:$0xff]
        %v4222 = vld [vmem:[#allocation2 + $0x150] sm:$0xff]
        %v4223 = vld [vmem:[#allocation2 + $0x158] sm:$0xff]
        %v4224 = vld [vmem:[#allocation2 + $0x160] sm:$0xff]
        %v4225 = vld [vmem:[#allocation2 + $0x168] sm:$0xff]
        %v4226 = vld [vmem:[#allocation2 + $0x170] sm:$0xff]
        %v4227 = vld [vmem:[#allocation2 + $0x178] sm:$0xff]
        %v4228 = vld [vmem:[#allocation2 + $0x180] sm:$0xff]
        %v4229 = vld [vmem:[#allocation2 + $0x188] sm:$0xff]
        %v4230 = vld [vmem:[#allocation2 + $0x190] sm:$0xff]
        %v4231 = vld [vmem:[#allocation2 + $0x198] sm:$0xff]
        %v4232 = vld [vmem:[#allocation2 + $0x1a0] sm:$0xff]
        %v4233 = vld [vmem:[#allocation2 + $0x1a8] sm:$0xff]
        %v4234 = vld [vmem:[#allocation2 + $0x1b0] sm:$0xff]
        %v4235 = vld [vmem:[#allocation2 + $0x1b8] sm:$0xff]
        %v4236 = vld [vmem:[#allocation2 + $0x1c0] sm:$0xff]
        %v4237 = vld [vmem:[#allocation2 + $0x1c8] sm:$0xff]
        %v4238 = vld [vmem:[#allocation2 + $0x1d0] sm:$0xff]
        %v4239 = vld [vmem:[#allocation2 + $0x1d8] sm:$0xff]
        %v4240 = vld [vmem:[#allocation2 + $0x1e0] sm:$0xff]
        %v4241 = vld [vmem:[#allocation2 + $0x1e8] sm:$0xff]
        %v4242 = vld [vmem:[#allocation2 + $0x1f0] sm:$0xff]
        %v4243 = vld [vmem:[#allocation2 + $0x1f8] sm:$0xff]
        %v4244 = vadd.f32 %v4180, %v4022
        %v4245 = vadd.f32 %v4181, %v4024
        %v4246 = vadd.f32 %v4182, %v4026
        %v4247 = vadd.f32 %v4183, %v4028
        %v4248 = vadd.f32 %v4184, %v4032
        %v4249 = vadd.f32 %v4185, %v4034
        %v4250 = vadd.f32 %v4186, %v4036
        %v4251 = vadd.f32 %v4187, %v4038
        %v4252 = vadd.f32 %v4188, %v4042
        %v4253 = vadd.f32 %v4189, %v4044
        %v4254 = vadd.f32 %v4190, %v4046
        %v4255 = vadd.f32 %v4191, %v4048
        %v4256 = vadd.f32 %v4192, %v4052
        %v4257 = vadd.f32 %v4193, %v4054
        %v4258 = vadd.f32 %v4194, %v4056
        %v4259 = vadd.f32 %v4195, %v4058
        %v4260 = vadd.f32 %v4196, %v4062
        %v4261 = vadd.f32 %v4197, %v4064
        %v4262 = vadd.f32 %v4198, %v4066
        %v4263 = vadd.f32 %v4199, %v4068
        %v4264 = vadd.f32 %v4200, %v4072
        %v4265 = vadd.f32 %v4201, %v4074
        %v4266 = vadd.f32 %v4202, %v4076
        %v4267 = vadd.f32 %v4203, %v4078
        %v4268 = vadd.f32 %v4204, %v4082
        %v4269 = vadd.f32 %v4205, %v4084
        %v4270 = vadd.f32 %v4206, %v4086
        %v4271 = vadd.f32 %v4207, %v4088
        %v4272 = vadd.f32 %v4208, %v4092
        %v4273 = vadd.f32 %v4209, %v4094
        %v4274 = vadd.f32 %v4210, %v4096
        %v4275 = vadd.f32 %v4211, %v4098
        %v4276 = vadd.f32 %v4212, %v4102
        %v4277 = vadd.f32 %v4213, %v4104
        %v4278 = vadd.f32 %v4214, %v4106
        %v4279 = vadd.f32 %v4215, %v4108
        %v4280 = vadd.f32 %v4216, %v4112
        %v4281 = vadd.f32 %v4217, %v4114
        %v4282 = vadd.f32 %v4218, %v4116
        %v4283 = vadd.f32 %v4219, %v4118
        %v4284 = vadd.f32 %v4220, %v4122
        %v4285 = vadd.f32 %v4221, %v4124
        %v4286 = vadd.f32 %v4222, %v4126
        %v4287 = vadd.f32 %v4223, %v4128
        %v4288 = vadd.f32 %v4224, %v4132
        %v4289 = vadd.f32 %v4225, %v4134
        %v4290 = vadd.f32 %v4226, %v4136
        %v4291 = vadd.f32 %v4227, %v4138
        %v4292 = vadd.f32 %v4228, %v4142
        %v4293 = vadd.f32 %v4229, %v4144
        %v4294 = vadd.f32 %v4230, %v4146
        %v4295 = vadd.f32 %v4231, %v4148
        %v4296 = vadd.f32 %v4232, %v4152
        %v4297 = vadd.f32 %v4233, %v4154
        %v4298 = vadd.f32 %v4234, %v4156
        %v4299 = vadd.f32 %v4235, %v4158
        %v4300 = vadd.f32 %v4236, %v4162
        %v4301 = vadd.f32 %v4237, %v4164
        %v4302 = vadd.f32 %v4238, %v4166
        %v4303 = vadd.f32 %v4239, %v4168
        %v4304 = vadd.f32 %v4240, %v4172
        %v4305 = vadd.f32 %v4241, %v4174
        %v4306 = vadd.f32 %v4242, %v4176
        %v4307 = vadd.f32 %v4243, %v4178
        %4308 = vst [vmem:[#allocation2] sm:$0xff] %v4244
        %4309 = vst [vmem:[#allocation2 + $0x8] sm:$0xff] %v4245
        %4310 = vst [vmem:[#allocation2 + $0x10] sm:$0xff] %v4246
        %4311 = vst [vmem:[#allocation2 + $0x18] sm:$0xff] %v4247
        %4312 = vst [vmem:[#allocation2 + $0x20] sm:$0xff] %v4248
        %4313 = vst [vmem:[#allocation2 + $0x28] sm:$0xff] %v4249
        %4314 = vst [vmem:[#allocation2 + $0x30] sm:$0xff] %v4250
        %4315 = vst [vmem:[#allocation2 + $0x38] sm:$0xff] %v4251
        %4316 = vst [vmem:[#allocation2 + $0x40] sm:$0xff] %v4252
        %4317 = vst [vmem:[#allocation2 + $0x48] sm:$0xff] %v4253
        %4318 = vst [vmem:[#allocation2 + $0x50] sm:$0xff] %v4254
        %4319 = vst [vmem:[#allocation2 + $0x58] sm:$0xff] %v4255
        %4320 = vst [vmem:[#allocation2 + $0x60] sm:$0xff] %v4256
        %4321 = vst [vmem:[#allocation2 + $0x68] sm:$0xff] %v4257
        %4322 = vst [vmem:[#allocation2 + $0x70] sm:$0xff] %v4258
        %4323 = vst [vmem:[#allocation2 + $0x78] sm:$0xff] %v4259
        %4324 = vst [vmem:[#allocation2 + $0x80] sm:$0xff] %v4260
        %4325 = vst [vmem:[#allocation2 + $0x88] sm:$0xff] %v4261
        %4326 = vst [vmem:[#allocation2 + $0x90] sm:$0xff] %v4262
        %4327 = vst [vmem:[#allocation2 + $0x98] sm:$0xff] %v4263
        %4328 = vst [vmem:[#allocation2 + $0xa0] sm:$0xff] %v4264
        %4329 = vst [vmem:[#allocation2 + $0xa8] sm:$0xff] %v4265
        %4330 = vst [vmem:[#allocation2 + $0xb0] sm:$0xff] %v4266
        %4331 = vst [vmem:[#allocation2 + $0xb8] sm:$0xff] %v4267
        %4332 = vst [vmem:[#allocation2 + $0xc0] sm:$0xff] %v4268
        %4333 = vst [vmem:[#allocation2 + $0xc8] sm:$0xff] %v4269
        %4334 = vst [vmem:[#allocation2 + $0xd0] sm:$0xff] %v4270
        %4335 = vst [vmem:[#allocation2 + $0xd8] sm:$0xff] %v4271
        %4336 = vst [vmem:[#allocation2 + $0xe0] sm:$0xff] %v4272
        %4337 = vst [vmem:[#allocation2 + $0xe8] sm:$0xff] %v4273
        %4338 = vst [vmem:[#allocation2 + $0xf0] sm:$0xff] %v4274
        %4339 = vst [vmem:[#allocation2 + $0xf8] sm:$0xff] %v4275
        %4340 = vst [vmem:[#allocation2 + $0x100] sm:$0xff] %v4276
        %4341 = vst [vmem:[#allocation2 + $0x108] sm:$0xff] %v4277
        %4342 = vst [vmem:[#allocation2 + $0x110] sm:$0xff] %v4278
        %4343 = vst [vmem:[#allocation2 + $0x118] sm:$0xff] %v4279
        %4344 = vst [vmem:[#allocation2 + $0x120] sm:$0xff] %v4280
        %4345 = vst [vmem:[#allocation2 + $0x128] sm:$0xff] %v4281
        %4346 = vst [vmem:[#allocation2 + $0x130] sm:$0xff] %v4282
        %4347 = vst [vmem:[#allocation2 + $0x138] sm:$0xff] %v4283
        %4348 = vst [vmem:[#allocation2 + $0x140] sm:$0xff] %v4284
        %4349 = vst [vmem:[#allocation2 + $0x148] sm:$0xff] %v4285
        %4350 = vst [vmem:[#allocation2 + $0x150] sm:$0xff] %v4286
        %4351 = vst [vmem:[#allocation2 + $0x158] sm:$0xff] %v4287
        %4352 = vst [vmem:[#allocation2 + $0x160] sm:$0xff] %v4288
        %4353 = vst [vmem:[#allocation2 + $0x168] sm:$0xff] %v4289
        %4354 = vst [vmem:[#allocation2 + $0x170] sm:$0xff] %v4290
        %4355 = vst [vmem:[#allocation2 + $0x178] sm:$0xff] %v4291
        %4356 = vst [vmem:[#allocation2 + $0x180] sm:$0xff] %v4292
        %4357 = vst [vmem:[#allocation2 + $0x188] sm:$0xff] %v4293
        %4358 = vst [vmem:[#allocation2 + $0x190] sm:$0xff] %v4294
        %4359 = vst [vmem:[#allocation2 + $0x198] sm:$0xff] %v4295
        %4360 = vst [vmem:[#allocation2 + $0x1a0] sm:$0xff] %v4296
        %4361 = vst [vmem:[#allocation2 + $0x1a8] sm:$0xff] %v4297
        %4362 = vst [vmem:[#allocation2 + $0x1b0] sm:$0xff] %v4298
        %4363 = vst [vmem:[#allocation2 + $0x1b8] sm:$0xff] %v4299
        %4364 = vst [vmem:[#allocation2 + $0x1c0] sm:$0xff] %v4300
        %4365 = vst [vmem:[#allocation2 + $0x1c8] sm:$0xff] %v4301
        %4366 = vst [vmem:[#allocation2 + $0x1d0] sm:$0xff] %v4302
        %4367 = vst [vmem:[#allocation2 + $0x1d8] sm:$0xff] %v4303
        %4368 = vst [vmem:[#allocation2 + $0x1e0] sm:$0xff] %v4304
        %4369 = vst [vmem:[#allocation2 + $0x1e8] sm:$0xff] %v4305
        %4370 = vst [vmem:[#allocation2 + $0x1f0] sm:$0xff] %v4306
        %4371 = vst [vmem:[#allocation2 + $0x1f8] sm:$0xff] %v4307
        %v4372 = vld [vmem:[#allocation3 + $0x40] sm:$0xff]
        %v4373 = vld [vmem:[#allocation3 + $0x48] sm:$0xff]
        %v4374 = vld [vmem:[#allocation3 + $0x50] sm:$0xff]
        %v4375 = vld [vmem:[#allocation3 + $0x58] sm:$0xff]
        %v4376 = vld [vmem:[#allocation3 + $0x60] sm:$0xff]
        %v4377 = vld [vmem:[#allocation3 + $0x68] sm:$0xff]
        %v4378 = vld [vmem:[#allocation3 + $0x70] sm:$0xff]
        %v4379 = vld [vmem:[#allocation3 + $0x78] sm:$0xff]
        %v4380 = vld [vmem:[#allocation3 + $0x80] sm:$0xff]
        %v4381 = vld [vmem:[#allocation3 + $0x88] sm:$0xff]
        %v4382 = vld [vmem:[#allocation3 + $0x90] sm:$0xff]
        %v4383 = vld [vmem:[#allocation3 + $0x98] sm:$0xff]
        %v4384 = vld [vmem:[#allocation3 + $0xa0] sm:$0xff]
        %v4385 = vld [vmem:[#allocation3 + $0xa8] sm:$0xff]
        %v4386 = vld [vmem:[#allocation3 + $0xb0] sm:$0xff]
        %v4387 = vld [vmem:[#allocation3 + $0xb8] sm:$0xff]
        %v4388 = vld [vmem:[#allocation3 + $0xc0] sm:$0xff]
        %v4389 = vld [vmem:[#allocation3 + $0xc8] sm:$0xff]
        %v4390 = vld [vmem:[#allocation3 + $0xd0] sm:$0xff]
        %v4391 = vld [vmem:[#allocation3 + $0xd8] sm:$0xff]
        %v4392 = vld [vmem:[#allocation3 + $0xe0] sm:$0xff]
        %v4393 = vld [vmem:[#allocation3 + $0xe8] sm:$0xff]
        %v4394 = vld [vmem:[#allocation3 + $0xf0] sm:$0xff]
        %v4395 = vld [vmem:[#allocation3 + $0xf8] sm:$0xff]
        %v4396 = vld [vmem:[#allocation3 + $0x100] sm:$0xff]
        %v4397 = vld [vmem:[#allocation3 + $0x108] sm:$0xff]
        %v4398 = vld [vmem:[#allocation3 + $0x110] sm:$0xff]
        %v4399 = vld [vmem:[#allocation3 + $0x118] sm:$0xff]
        %v4400 = vld [vmem:[#allocation3 + $0x120] sm:$0xff]
        %v4401 = vld [vmem:[#allocation3 + $0x128] sm:$0xff]
        %v4402 = vld [vmem:[#allocation3 + $0x130] sm:$0xff]
        %v4403 = vld [vmem:[#allocation3 + $0x138] sm:$0xff]
        %s4404 = scalar_lea.vmem %s219, 1792
        %v4405 = vld [vmem:[%s4404] sm:$0xff]
        %v4406 = vld [vmem:[%s4404 + $0x8] sm:$0xff]
        %v4407 = vld [vmem:[%s4404 + $0x10] sm:$0xff]
        %v4408 = vld [vmem:[%s4404 + $0x18] sm:$0xff]
        %v4409 = vld [vmem:[%s4404 + $0x20] sm:$0xff]
        %v4410 = vld [vmem:[%s4404 + $0x28] sm:$0xff]
        %v4411 = vld [vmem:[%s4404 + $0x30] sm:$0xff]
        %v4412 = vld [vmem:[%s4404 + $0x38] sm:$0xff]
        %v4413 = vld [vmem:[%s4404 + $0x40] sm:$0xff]
        %v4414 = vld [vmem:[%s4404 + $0x48] sm:$0xff]
        %v4415 = vld [vmem:[%s4404 + $0x50] sm:$0xff]
        %v4416 = vld [vmem:[%s4404 + $0x58] sm:$0xff]
        %v4417 = vld [vmem:[%s4404 + $0x60] sm:$0xff]
        %v4418 = vld [vmem:[%s4404 + $0x68] sm:$0xff]
        %v4419 = vld [vmem:[%s4404 + $0x70] sm:$0xff]
        %v4420 = vld [vmem:[%s4404 + $0x78] sm:$0xff]
        %v4421 = vld [vmem:[%s4404 + $0x80] sm:$0xff]
        %v4422 = vld [vmem:[%s4404 + $0x88] sm:$0xff]
        %v4423 = vld [vmem:[%s4404 + $0x90] sm:$0xff]
        %v4424 = vld [vmem:[%s4404 + $0x98] sm:$0xff]
        %v4425 = vld [vmem:[%s4404 + $0xa0] sm:$0xff]
        %v4426 = vld [vmem:[%s4404 + $0xa8] sm:$0xff]
        %v4427 = vld [vmem:[%s4404 + $0xb0] sm:$0xff]
        %v4428 = vld [vmem:[%s4404 + $0xb8] sm:$0xff]
        %v4429 = vld [vmem:[%s4404 + $0xc0] sm:$0xff]
        %v4430 = vld [vmem:[%s4404 + $0xc8] sm:$0xff]
        %v4431 = vld [vmem:[%s4404 + $0xd0] sm:$0xff]
        %v4432 = vld [vmem:[%s4404 + $0xd8] sm:$0xff]
        %v4433 = vld [vmem:[%s4404 + $0xe0] sm:$0xff]
        %v4434 = vld [vmem:[%s4404 + $0xe8] sm:$0xff]
        %v4435 = vld [vmem:[%s4404 + $0xf0] sm:$0xff]
        %v4436 = vld [vmem:[%s4404 + $0xf8] sm:$0xff]
        %v4469 = vunpack.c.l.b16 %v4372
        %v4470 = vunpack.c.h.b16 %v4372
        %v4471 = vunpack.c.l.b16 %v4373
        %v4472 = vunpack.c.h.b16 %v4373
        %v4473 = vunpack.c.l.b16 %v4374
        %v4474 = vunpack.c.h.b16 %v4374
        %v4475 = vunpack.c.l.b16 %v4375
        %v4476 = vunpack.c.h.b16 %v4375
        %v4477 = vunpack.c.l.b16 %v4376
        %v4478 = vunpack.c.h.b16 %v4376
        %v4479 = vunpack.c.l.b16 %v4377
        %v4480 = vunpack.c.h.b16 %v4377
        %v4481 = vunpack.c.l.b16 %v4378
        %v4482 = vunpack.c.h.b16 %v4378
        %v4483 = vunpack.c.l.b16 %v4379
        %v4484 = vunpack.c.h.b16 %v4379
        %v4485 = vunpack.c.l.b16 %v4380
        %v4486 = vunpack.c.h.b16 %v4380
        %v4487 = vunpack.c.l.b16 %v4381
        %v4488 = vunpack.c.h.b16 %v4381
        %v4489 = vunpack.c.l.b16 %v4382
        %v4490 = vunpack.c.h.b16 %v4382
        %v4491 = vunpack.c.l.b16 %v4383
        %v4492 = vunpack.c.h.b16 %v4383
        %v4493 = vunpack.c.l.b16 %v4384
        %v4494 = vunpack.c.h.b16 %v4384
        %v4495 = vunpack.c.l.b16 %v4385
        %v4496 = vunpack.c.h.b16 %v4385
        %v4497 = vunpack.c.l.b16 %v4386
        %v4498 = vunpack.c.h.b16 %v4386
        %v4499 = vunpack.c.l.b16 %v4387
        %v4500 = vunpack.c.h.b16 %v4387
        %v4501 = vunpack.c.l.b16 %v4388
        %v4502 = vunpack.c.h.b16 %v4388
        %v4503 = vunpack.c.l.b16 %v4389
        %v4504 = vunpack.c.h.b16 %v4389
        %v4505 = vunpack.c.l.b16 %v4390
        %v4506 = vunpack.c.h.b16 %v4390
        %v4507 = vunpack.c.l.b16 %v4391
        %v4508 = vunpack.c.h.b16 %v4391
        %v4509 = vunpack.c.l.b16 %v4392
        %v4510 = vunpack.c.h.b16 %v4392
        %v4511 = vunpack.c.l.b16 %v4393
        %v4512 = vunpack.c.h.b16 %v4393
        %v4513 = vunpack.c.l.b16 %v4394
        %v4514 = vunpack.c.h.b16 %v4394
        %v4515 = vunpack.c.l.b16 %v4395
        %v4516 = vunpack.c.h.b16 %v4395
        %v4517 = vunpack.c.l.b16 %v4396
        %v4518 = vunpack.c.h.b16 %v4396
        %v4519 = vunpack.c.l.b16 %v4397
        %v4520 = vunpack.c.h.b16 %v4397
        %v4521 = vunpack.c.l.b16 %v4398
        %v4522 = vunpack.c.h.b16 %v4398
        %v4523 = vunpack.c.l.b16 %v4399
        %v4524 = vunpack.c.h.b16 %v4399
        %v4525 = vunpack.c.l.b16 %v4400
        %v4526 = vunpack.c.h.b16 %v4400
        %v4527 = vunpack.c.l.b16 %v4401
        %v4528 = vunpack.c.h.b16 %v4401
        %v4529 = vunpack.c.l.b16 %v4402
        %v4530 = vunpack.c.h.b16 %v4402
        %v4531 = vunpack.c.l.b16 %v4403
        %v4532 = vunpack.c.h.b16 %v4403
        %v4533 = vpack.c.b16 %v4471, %v4469
        %v4534 = vpack.c.b16 %v4472, %v4470
        %v4535 = vpack.c.b16 %v4475, %v4473
        %v4536 = vpack.c.b16 %v4476, %v4474
        %v4537 = vpack.c.b16 %v4479, %v4477
        %v4538 = vpack.c.b16 %v4480, %v4478
        %v4539 = vpack.c.b16 %v4483, %v4481
        %v4540 = vpack.c.b16 %v4484, %v4482
        %v4541 = vpack.c.b16 %v4487, %v4485
        %v4542 = vpack.c.b16 %v4488, %v4486
        %v4543 = vpack.c.b16 %v4491, %v4489
        %v4544 = vpack.c.b16 %v4492, %v4490
        %v4545 = vpack.c.b16 %v4495, %v4493
        %v4546 = vpack.c.b16 %v4496, %v4494
        %v4547 = vpack.c.b16 %v4499, %v4497
        %v4548 = vpack.c.b16 %v4500, %v4498
        %v4549 = vpack.c.b16 %v4503, %v4501
        %v4550 = vpack.c.b16 %v4504, %v4502
        %v4551 = vpack.c.b16 %v4507, %v4505
        %v4552 = vpack.c.b16 %v4508, %v4506
        %v4553 = vpack.c.b16 %v4511, %v4509
        %v4554 = vpack.c.b16 %v4512, %v4510
        %v4555 = vpack.c.b16 %v4515, %v4513
        %v4556 = vpack.c.b16 %v4516, %v4514
        %v4557 = vpack.c.b16 %v4519, %v4517
        %v4558 = vpack.c.b16 %v4520, %v4518
        %v4559 = vpack.c.b16 %v4523, %v4521
        %v4560 = vpack.c.b16 %v4524, %v4522
        %v4561 = vpack.c.b16 %v4527, %v4525
        %v4562 = vpack.c.b16 %v4528, %v4526
        %v4563 = vpack.c.b16 %v4531, %v4529
        %v4564 = vpack.c.b16 %v4532, %v4530
        %v4629 = vunpack.c.l.b16 %v4405
        %v4630 = vunpack.c.h.b16 %v4405
        %v4631 = vunpack.c.l.b16 %v4406
        %v4632 = vunpack.c.h.b16 %v4406
        %v4633 = vunpack.c.l.b16 %v4407
        %v4634 = vunpack.c.h.b16 %v4407
        %v4635 = vunpack.c.l.b16 %v4408
        %v4636 = vunpack.c.h.b16 %v4408
        %v4637 = vunpack.c.l.b16 %v4409
        %v4638 = vunpack.c.h.b16 %v4409
        %v4639 = vunpack.c.l.b16 %v4410
        %v4640 = vunpack.c.h.b16 %v4410
        %v4641 = vunpack.c.l.b16 %v4411
        %v4642 = vunpack.c.h.b16 %v4411
        %v4643 = vunpack.c.l.b16 %v4412
        %v4644 = vunpack.c.h.b16 %v4412
        %v4645 = vunpack.c.l.b16 %v4413
        %v4646 = vunpack.c.h.b16 %v4413
        %v4647 = vunpack.c.l.b16 %v4414
        %v4648 = vunpack.c.h.b16 %v4414
        %v4649 = vunpack.c.l.b16 %v4415
        %v4650 = vunpack.c.h.b16 %v4415
        %v4651 = vunpack.c.l.b16 %v4416
        %v4652 = vunpack.c.h.b16 %v4416
        %v4653 = vunpack.c.l.b16 %v4417
        %v4654 = vunpack.c.h.b16 %v4417
        %v4655 = vunpack.c.l.b16 %v4418
        %v4656 = vunpack.c.h.b16 %v4418
        %v4657 = vunpack.c.l.b16 %v4419
        %v4658 = vunpack.c.h.b16 %v4419
        %v4659 = vunpack.c.l.b16 %v4420
        %v4660 = vunpack.c.h.b16 %v4420
        %v4661 = vunpack.c.l.b16 %v4421
        %v4662 = vunpack.c.h.b16 %v4421
        %v4663 = vunpack.c.l.b16 %v4422
        %v4664 = vunpack.c.h.b16 %v4422
        %v4665 = vunpack.c.l.b16 %v4423
        %v4666 = vunpack.c.h.b16 %v4423
        %v4667 = vunpack.c.l.b16 %v4424
        %v4668 = vunpack.c.h.b16 %v4424
        %v4669 = vunpack.c.l.b16 %v4425
        %v4670 = vunpack.c.h.b16 %v4425
        %v4671 = vunpack.c.l.b16 %v4426
        %v4672 = vunpack.c.h.b16 %v4426
        %v4673 = vunpack.c.l.b16 %v4427
        %v4674 = vunpack.c.h.b16 %v4427
        %v4675 = vunpack.c.l.b16 %v4428
        %v4676 = vunpack.c.h.b16 %v4428
        %v4677 = vunpack.c.l.b16 %v4429
        %v4678 = vunpack.c.h.b16 %v4429
        %v4679 = vunpack.c.l.b16 %v4430
        %v4680 = vunpack.c.h.b16 %v4430
        %v4681 = vunpack.c.l.b16 %v4431
        %v4682 = vunpack.c.h.b16 %v4431
        %v4683 = vunpack.c.l.b16 %v4432
        %v4684 = vunpack.c.h.b16 %v4432
        %v4685 = vunpack.c.l.b16 %v4433
        %v4686 = vunpack.c.h.b16 %v4433
        %v4687 = vunpack.c.l.b16 %v4434
        %v4688 = vunpack.c.h.b16 %v4434
        %v4689 = vunpack.c.l.b16 %v4435
        %v4690 = vunpack.c.h.b16 %v4435
        %v4691 = vunpack.c.l.b16 %v4436
        %v4692 = vunpack.c.h.b16 %v4436
        %v4693 = vpack.c.b16 %v4631, %v4629
        %v4694 = vpack.c.b16 %v4632, %v4630
        %v4695 = vpack.c.b16 %v4635, %v4633
        %v4696 = vpack.c.b16 %v4636, %v4634
        %v4697 = vpack.c.b16 %v4639, %v4637
        %v4698 = vpack.c.b16 %v4640, %v4638
        %v4699 = vpack.c.b16 %v4643, %v4641
        %v4700 = vpack.c.b16 %v4644, %v4642
        %v4701 = vpack.c.b16 %v4647, %v4645
        %v4702 = vpack.c.b16 %v4648, %v4646
        %v4703 = vpack.c.b16 %v4651, %v4649
        %v4704 = vpack.c.b16 %v4652, %v4650
        %v4705 = vpack.c.b16 %v4655, %v4653
        %v4706 = vpack.c.b16 %v4656, %v4654
        %v4707 = vpack.c.b16 %v4659, %v4657
        %v4708 = vpack.c.b16 %v4660, %v4658
        %v4709 = vpack.c.b16 %v4663, %v4661
        %v4710 = vpack.c.b16 %v4664, %v4662
        %v4711 = vpack.c.b16 %v4667, %v4665
        %v4712 = vpack.c.b16 %v4668, %v4666
        %v4713 = vpack.c.b16 %v4671, %v4669
        %v4714 = vpack.c.b16 %v4672, %v4670
        %v4715 = vpack.c.b16 %v4675, %v4673
        %v4716 = vpack.c.b16 %v4676, %v4674
        %v4717 = vpack.c.b16 %v4679, %v4677
        %v4718 = vpack.c.b16 %v4680, %v4678
        %v4719 = vpack.c.b16 %v4683, %v4681
        %v4720 = vpack.c.b16 %v4684, %v4682
        %v4721 = vpack.c.b16 %v4687, %v4685
        %v4722 = vpack.c.b16 %v4688, %v4686
        %v4723 = vpack.c.b16 %v4691, %v4689
        %v4724 = vpack.c.b16 %v4692, %v4690
        %4757 = vmatprep.subr.bf16.mxu0 %v4708
        %4758 = vmatpush1.bf16.msra.mxu0 %v4707
        %4759 = vmatprep.subr.bf16.mxu0 %v4706
        %4760 = vmatpush1.bf16.msra.mxu0 %v4705
        %4761 = vmatprep.subr.bf16.mxu0 %v4704
        %4762 = vmatpush1.bf16.msra.mxu0 %v4703
        %4763 = vmatprep.subr.bf16.mxu0 %v4702
        %4764 = vmatpush1.bf16.msra.mxu0 %v4701
        %4765 = vmatprep.subr.bf16.mxu0 %v4700
        %4766 = vmatpush1.bf16.msra.mxu0 %v4699
        %4767 = vmatprep.subr.bf16.mxu0 %v4698
        %4768 = vmatpush1.bf16.msra.mxu0 %v4697
        %4769 = vmatprep.subr.bf16.mxu0 %v4696
        %4770 = vmatpush1.bf16.msra.mxu0 %v4695
        %4771 = vmatprep.subr.bf16.mxu0 %v4694
        %4772 = vmatpush1.bf16.msra.mxu0 %v4693
        %4773 = vmatprep.subr.bf16.mxu0 %v4724
        %4774 = vmatpush2.bf16.msra.mxu0 %v4723
        %4775 = vmatprep.subr.bf16.mxu0 %v4722
        %4776 = vmatpush2.bf16.msra.mxu0 %v4721
        %4777 = vmatprep.subr.bf16.mxu0 %v4720
        %4778 = vmatpush2.bf16.msra.mxu0 %v4719
        %4779 = vmatprep.subr.bf16.mxu0 %v4718
        %4780 = vmatpush2.bf16.msra.mxu0 %v4717
        %4781 = vmatprep.subr.bf16.mxu0 %v4716
        %4782 = vmatpush2.bf16.msra.mxu0 %v4715
        %4783 = vmatprep.subr.bf16.mxu0 %v4714
        %4784 = vmatpush2.bf16.msra.mxu0 %v4713
        %4785 = vmatprep.subr.bf16.mxu0 %v4712
        %4786 = vmatpush2.bf16.msra.mxu0 %v4711
        %4787 = vmatprep.subr.bf16.mxu0 %v4710
        %4788 = vmatpush2.bf16.msra.mxu0 %v4709
        %4789 = vmatprep.mubr.bf16.mxu0 %v4534
        %4790 = vmatmul.mubr.bf16.gmra.mxu0 %v4533
        %v4791 = vpop.f32.mrf.mxu0
        %v4792 = vadd.f32 0.0, %v4791
        %v4793 = vpop.f32.mrf.mxu0
        %v4794 = vadd.f32 0.0, %v4793
        %v4795 = vpop.f32.mrf.mxu0
        %v4796 = vadd.f32 0.0, %v4795
        %v4797 = vpop.f32.mrf.mxu0
        %v4798 = vadd.f32 0.0, %v4797
        %4799 = vmatprep.mubr.bf16.mxu0 %v4536
        %4800 = vmatmul.mubr.bf16.gmra.mxu0 %v4535
        %v4801 = vpop.f32.mrf.mxu0
        %v4802 = vadd.f32 0.0, %v4801
        %v4803 = vpop.f32.mrf.mxu0
        %v4804 = vadd.f32 0.0, %v4803
        %v4805 = vpop.f32.mrf.mxu0
        %v4806 = vadd.f32 0.0, %v4805
        %v4807 = vpop.f32.mrf.mxu0
        %v4808 = vadd.f32 0.0, %v4807
        %4809 = vmatprep.mubr.bf16.mxu0 %v4538
        %4810 = vmatmul.mubr.bf16.gmra.mxu0 %v4537
        %v4811 = vpop.f32.mrf.mxu0
        %v4812 = vadd.f32 0.0, %v4811
        %v4813 = vpop.f32.mrf.mxu0
        %v4814 = vadd.f32 0.0, %v4813
        %v4815 = vpop.f32.mrf.mxu0
        %v4816 = vadd.f32 0.0, %v4815
        %v4817 = vpop.f32.mrf.mxu0
        %v4818 = vadd.f32 0.0, %v4817
        %4819 = vmatprep.mubr.bf16.mxu0 %v4540
        %4820 = vmatmul.mubr.bf16.gmra.mxu0 %v4539
        %v4821 = vpop.f32.mrf.mxu0
        %v4822 = vadd.f32 0.0, %v4821
        %v4823 = vpop.f32.mrf.mxu0
        %v4824 = vadd.f32 0.0, %v4823
        %v4825 = vpop.f32.mrf.mxu0
        %v4826 = vadd.f32 0.0, %v4825
        %v4827 = vpop.f32.mrf.mxu0
        %v4828 = vadd.f32 0.0, %v4827
        %4829 = vmatprep.mubr.bf16.mxu0 %v4542
        %4830 = vmatmul.mubr.bf16.gmra.mxu0 %v4541
        %v4831 = vpop.f32.mrf.mxu0
        %v4832 = vadd.f32 0.0, %v4831
        %v4833 = vpop.f32.mrf.mxu0
        %v4834 = vadd.f32 0.0, %v4833
        %v4835 = vpop.f32.mrf.mxu0
        %v4836 = vadd.f32 0.0, %v4835
        %v4837 = vpop.f32.mrf.mxu0
        %v4838 = vadd.f32 0.0, %v4837
        %4839 = vmatprep.mubr.bf16.mxu0 %v4544
        %4840 = vmatmul.mubr.bf16.gmra.mxu0 %v4543
        %v4841 = vpop.f32.mrf.mxu0
        %v4842 = vadd.f32 0.0, %v4841
        %v4843 = vpop.f32.mrf.mxu0
        %v4844 = vadd.f32 0.0, %v4843
        %v4845 = vpop.f32.mrf.mxu0
        %v4846 = vadd.f32 0.0, %v4845
        %v4847 = vpop.f32.mrf.mxu0
        %v4848 = vadd.f32 0.0, %v4847
        %4849 = vmatprep.mubr.bf16.mxu0 %v4546
        %4850 = vmatmul.mubr.bf16.gmra.mxu0 %v4545
        %v4851 = vpop.f32.mrf.mxu0
        %v4852 = vadd.f32 0.0, %v4851
        %v4853 = vpop.f32.mrf.mxu0
        %v4854 = vadd.f32 0.0, %v4853
        %v4855 = vpop.f32.mrf.mxu0
        %v4856 = vadd.f32 0.0, %v4855
        %v4857 = vpop.f32.mrf.mxu0
        %v4858 = vadd.f32 0.0, %v4857
        %4859 = vmatprep.mubr.bf16.mxu0 %v4548
        %4860 = vmatmul.mubr.bf16.gmra.mxu0 %v4547
        %v4861 = vpop.f32.mrf.mxu0
        %v4862 = vadd.f32 0.0, %v4861
        %v4863 = vpop.f32.mrf.mxu0
        %v4864 = vadd.f32 0.0, %v4863
        %v4865 = vpop.f32.mrf.mxu0
        %v4866 = vadd.f32 0.0, %v4865
        %v4867 = vpop.f32.mrf.mxu0
        %v4868 = vadd.f32 0.0, %v4867
        %4869 = vmatprep.mubr.bf16.mxu0 %v4550
        %4870 = vmatmul.mubr.bf16.gmra.mxu0 %v4549
        %v4871 = vpop.f32.mrf.mxu0
        %v4872 = vadd.f32 0.0, %v4871
        %v4873 = vpop.f32.mrf.mxu0
        %v4874 = vadd.f32 0.0, %v4873
        %v4875 = vpop.f32.mrf.mxu0
        %v4876 = vadd.f32 0.0, %v4875
        %v4877 = vpop.f32.mrf.mxu0
        %v4878 = vadd.f32 0.0, %v4877
        %4879 = vmatprep.mubr.bf16.mxu0 %v4552
        %4880 = vmatmul.mubr.bf16.gmra.mxu0 %v4551
        %v4881 = vpop.f32.mrf.mxu0
        %v4882 = vadd.f32 0.0, %v4881
        %v4883 = vpop.f32.mrf.mxu0
        %v4884 = vadd.f32 0.0, %v4883
        %v4885 = vpop.f32.mrf.mxu0
        %v4886 = vadd.f32 0.0, %v4885
        %v4887 = vpop.f32.mrf.mxu0
        %v4888 = vadd.f32 0.0, %v4887
        %4889 = vmatprep.mubr.bf16.mxu0 %v4554
        %4890 = vmatmul.mubr.bf16.gmra.mxu0 %v4553
        %v4891 = vpop.f32.mrf.mxu0
        %v4892 = vadd.f32 0.0, %v4891
        %v4893 = vpop.f32.mrf.mxu0
        %v4894 = vadd.f32 0.0, %v4893
        %v4895 = vpop.f32.mrf.mxu0
        %v4896 = vadd.f32 0.0, %v4895
        %v4897 = vpop.f32.mrf.mxu0
        %v4898 = vadd.f32 0.0, %v4897
        %4899 = vmatprep.mubr.bf16.mxu0 %v4556
        %4900 = vmatmul.mubr.bf16.gmra.mxu0 %v4555
        %v4901 = vpop.f32.mrf.mxu0
        %v4902 = vadd.f32 0.0, %v4901
        %v4903 = vpop.f32.mrf.mxu0
        %v4904 = vadd.f32 0.0, %v4903
        %v4905 = vpop.f32.mrf.mxu0
        %v4906 = vadd.f32 0.0, %v4905
        %v4907 = vpop.f32.mrf.mxu0
        %v4908 = vadd.f32 0.0, %v4907
        %4909 = vmatprep.mubr.bf16.mxu0 %v4558
        %4910 = vmatmul.mubr.bf16.gmra.mxu0 %v4557
        %v4911 = vpop.f32.mrf.mxu0
        %v4912 = vadd.f32 0.0, %v4911
        %v4913 = vpop.f32.mrf.mxu0
        %v4914 = vadd.f32 0.0, %v4913
        %v4915 = vpop.f32.mrf.mxu0
        %v4916 = vadd.f32 0.0, %v4915
        %v4917 = vpop.f32.mrf.mxu0
        %v4918 = vadd.f32 0.0, %v4917
        %4919 = vmatprep.mubr.bf16.mxu0 %v4560
        %4920 = vmatmul.mubr.bf16.gmra.mxu0 %v4559
        %v4921 = vpop.f32.mrf.mxu0
        %v4922 = vadd.f32 0.0, %v4921
        %v4923 = vpop.f32.mrf.mxu0
        %v4924 = vadd.f32 0.0, %v4923
        %v4925 = vpop.f32.mrf.mxu0
        %v4926 = vadd.f32 0.0, %v4925
        %v4927 = vpop.f32.mrf.mxu0
        %v4928 = vadd.f32 0.0, %v4927
        %4929 = vmatprep.mubr.bf16.mxu0 %v4562
        %4930 = vmatmul.mubr.bf16.gmra.mxu0 %v4561
        %v4931 = vpop.f32.mrf.mxu0
        %v4932 = vadd.f32 0.0, %v4931
        %v4933 = vpop.f32.mrf.mxu0
        %v4934 = vadd.f32 0.0, %v4933
        %v4935 = vpop.f32.mrf.mxu0
        %v4936 = vadd.f32 0.0, %v4935
        %v4937 = vpop.f32.mrf.mxu0
        %v4938 = vadd.f32 0.0, %v4937
        %4939 = vmatprep.mubr.bf16.mxu0 %v4564
        %4940 = vmatmul.mubr.bf16.gmra.mxu0 %v4563
        %v4941 = vpop.f32.mrf.mxu0
        %v4942 = vadd.f32 0.0, %v4941
        %v4943 = vpop.f32.mrf.mxu0
        %v4944 = vadd.f32 0.0, %v4943
        %v4945 = vpop.f32.mrf.mxu0
        %v4946 = vadd.f32 0.0, %v4945
        %v4947 = vpop.f32.mrf.mxu0
        %v4948 = vadd.f32 0.0, %v4947
        %4949 = vdwg.mxu0
        %v4950 = vld [vmem:[#allocation2] sm:$0xff]
        %v4951 = vld [vmem:[#allocation2 + $0x8] sm:$0xff]
        %v4952 = vld [vmem:[#allocation2 + $0x10] sm:$0xff]
        %v4953 = vld [vmem:[#allocation2 + $0x18] sm:$0xff]
        %v4954 = vld [vmem:[#allocation2 + $0x20] sm:$0xff]
        %v4955 = vld [vmem:[#allocation2 + $0x28] sm:$0xff]
        %v4956 = vld [vmem:[#allocation2 + $0x30] sm:$0xff]
        %v4957 = vld [vmem:[#allocation2 + $0x38] sm:$0xff]
        %v4958 = vld [vmem:[#allocation2 + $0x40] sm:$0xff]
        %v4959 = vld [vmem:[#allocation2 + $0x48] sm:$0xff]
        %v4960 = vld [vmem:[#allocation2 + $0x50] sm:$0xff]
        %v4961 = vld [vmem:[#allocation2 + $0x58] sm:$0xff]
        %v4962 = vld [vmem:[#allocation2 + $0x60] sm:$0xff]
        %v4963 = vld [vmem:[#allocation2 + $0x68] sm:$0xff]
        %v4964 = vld [vmem:[#allocation2 + $0x70] sm:$0xff]
        %v4965 = vld [vmem:[#allocation2 + $0x78] sm:$0xff]
        %v4966 = vld [vmem:[#allocation2 + $0x80] sm:$0xff]
        %v4967 = vld [vmem:[#allocation2 + $0x88] sm:$0xff]
        %v4968 = vld [vmem:[#allocation2 + $0x90] sm:$0xff]
        %v4969 = vld [vmem:[#allocation2 + $0x98] sm:$0xff]
        %v4970 = vld [vmem:[#allocation2 + $0xa0] sm:$0xff]
        %v4971 = vld [vmem:[#allocation2 + $0xa8] sm:$0xff]
        %v4972 = vld [vmem:[#allocation2 + $0xb0] sm:$0xff]
        %v4973 = vld [vmem:[#allocation2 + $0xb8] sm:$0xff]
        %v4974 = vld [vmem:[#allocation2 + $0xc0] sm:$0xff]
        %v4975 = vld [vmem:[#allocation2 + $0xc8] sm:$0xff]
        %v4976 = vld [vmem:[#allocation2 + $0xd0] sm:$0xff]
        %v4977 = vld [vmem:[#allocation2 + $0xd8] sm:$0xff]
        %v4978 = vld [vmem:[#allocation2 + $0xe0] sm:$0xff]
        %v4979 = vld [vmem:[#allocation2 + $0xe8] sm:$0xff]
        %v4980 = vld [vmem:[#allocation2 + $0xf0] sm:$0xff]
        %v4981 = vld [vmem:[#allocation2 + $0xf8] sm:$0xff]
        %v4982 = vld [vmem:[#allocation2 + $0x100] sm:$0xff]
        %v4983 = vld [vmem:[#allocation2 + $0x108] sm:$0xff]
        %v4984 = vld [vmem:[#allocation2 + $0x110] sm:$0xff]
        %v4985 = vld [vmem:[#allocation2 + $0x118] sm:$0xff]
        %v4986 = vld [vmem:[#allocation2 + $0x120] sm:$0xff]
        %v4987 = vld [vmem:[#allocation2 + $0x128] sm:$0xff]
        %v4988 = vld [vmem:[#allocation2 + $0x130] sm:$0xff]
        %v4989 = vld [vmem:[#allocation2 + $0x138] sm:$0xff]
        %v4990 = vld [vmem:[#allocation2 + $0x140] sm:$0xff]
        %v4991 = vld [vmem:[#allocation2 + $0x148] sm:$0xff]
        %v4992 = vld [vmem:[#allocation2 + $0x150] sm:$0xff]
        %v4993 = vld [vmem:[#allocation2 + $0x158] sm:$0xff]
        %v4994 = vld [vmem:[#allocation2 + $0x160] sm:$0xff]
        %v4995 = vld [vmem:[#allocation2 + $0x168] sm:$0xff]
        %v4996 = vld [vmem:[#allocation2 + $0x170] sm:$0xff]
        %v4997 = vld [vmem:[#allocation2 + $0x178] sm:$0xff]
        %v4998 = vld [vmem:[#allocation2 + $0x180] sm:$0xff]
        %v4999 = vld [vmem:[#allocation2 + $0x188] sm:$0xff]
        %v5000 = vld [vmem:[#allocation2 + $0x190] sm:$0xff]
        %v5001 = vld [vmem:[#allocation2 + $0x198] sm:$0xff]
        %v5002 = vld [vmem:[#allocation2 + $0x1a0] sm:$0xff]
        %v5003 = vld [vmem:[#allocation2 + $0x1a8] sm:$0xff]
        %v5004 = vld [vmem:[#allocation2 + $0x1b0] sm:$0xff]
        %v5005 = vld [vmem:[#allocation2 + $0x1b8] sm:$0xff]
        %v5006 = vld [vmem:[#allocation2 + $0x1c0] sm:$0xff]
        %v5007 = vld [vmem:[#allocation2 + $0x1c8] sm:$0xff]
        %v5008 = vld [vmem:[#allocation2 + $0x1d0] sm:$0xff]
        %v5009 = vld [vmem:[#allocation2 + $0x1d8] sm:$0xff]
        %v5010 = vld [vmem:[#allocation2 + $0x1e0] sm:$0xff]
        %v5011 = vld [vmem:[#allocation2 + $0x1e8] sm:$0xff]
        %v5012 = vld [vmem:[#allocation2 + $0x1f0] sm:$0xff]
        %v5013 = vld [vmem:[#allocation2 + $0x1f8] sm:$0xff]
        %v5014 = vadd.f32 %v4950, %v4792
        %v5015 = vadd.f32 %v4951, %v4794
        %v5016 = vadd.f32 %v4952, %v4796
        %v5017 = vadd.f32 %v4953, %v4798
        %v5018 = vadd.f32 %v4954, %v4802
        %v5019 = vadd.f32 %v4955, %v4804
        %v5020 = vadd.f32 %v4956, %v4806
        %v5021 = vadd.f32 %v4957, %v4808
        %v5022 = vadd.f32 %v4958, %v4812
        %v5023 = vadd.f32 %v4959, %v4814
        %v5024 = vadd.f32 %v4960, %v4816
        %v5025 = vadd.f32 %v4961, %v4818
        %v5026 = vadd.f32 %v4962, %v4822
        %v5027 = vadd.f32 %v4963, %v4824
        %v5028 = vadd.f32 %v4964, %v4826
        %v5029 = vadd.f32 %v4965, %v4828
        %v5030 = vadd.f32 %v4966, %v4832
        %v5031 = vadd.f32 %v4967, %v4834
        %v5032 = vadd.f32 %v4968, %v4836
        %v5033 = vadd.f32 %v4969, %v4838
        %v5034 = vadd.f32 %v4970, %v4842
        %v5035 = vadd.f32 %v4971, %v4844
        %v5036 = vadd.f32 %v4972, %v4846
        %v5037 = vadd.f32 %v4973, %v4848
        %v5038 = vadd.f32 %v4974, %v4852
        %v5039 = vadd.f32 %v4975, %v4854
        %v5040 = vadd.f32 %v4976, %v4856
        %v5041 = vadd.f32 %v4977, %v4858
        %v5042 = vadd.f32 %v4978, %v4862
        %v5043 = vadd.f32 %v4979, %v4864
        %v5044 = vadd.f32 %v4980, %v4866
        %v5045 = vadd.f32 %v4981, %v4868
        %v5046 = vadd.f32 %v4982, %v4872
        %v5047 = vadd.f32 %v4983, %v4874
        %v5048 = vadd.f32 %v4984, %v4876
        %v5049 = vadd.f32 %v4985, %v4878
        %v5050 = vadd.f32 %v4986, %v4882
        %v5051 = vadd.f32 %v4987, %v4884
        %v5052 = vadd.f32 %v4988, %v4886
        %v5053 = vadd.f32 %v4989, %v4888
        %v5054 = vadd.f32 %v4990, %v4892
        %v5055 = vadd.f32 %v4991, %v4894
        %v5056 = vadd.f32 %v4992, %v4896
        %v5057 = vadd.f32 %v4993, %v4898
        %v5058 = vadd.f32 %v4994, %v4902
        %v5059 = vadd.f32 %v4995, %v4904
        %v5060 = vadd.f32 %v4996, %v4906
        %v5061 = vadd.f32 %v4997, %v4908
        %v5062 = vadd.f32 %v4998, %v4912
        %v5063 = vadd.f32 %v4999, %v4914
        %v5064 = vadd.f32 %v5000, %v4916
        %v5065 = vadd.f32 %v5001, %v4918
        %v5066 = vadd.f32 %v5002, %v4922
        %v5067 = vadd.f32 %v5003, %v4924
        %v5068 = vadd.f32 %v5004, %v4926
        %v5069 = vadd.f32 %v5005, %v4928
        %v5070 = vadd.f32 %v5006, %v4932
        %v5071 = vadd.f32 %v5007, %v4934
        %v5072 = vadd.f32 %v5008, %v4936
        %v5073 = vadd.f32 %v5009, %v4938
        %v5074 = vadd.f32 %v5010, %v4942
        %v5075 = vadd.f32 %v5011, %v4944
        %v5076 = vadd.f32 %v5012, %v4946
        %v5077 = vadd.f32 %v5013, %v4948
        %5078 = vst [vmem:[#allocation2] sm:$0xff] %v5014
        %5079 = vst [vmem:[#allocation2 + $0x8] sm:$0xff] %v5015
        %5080 = vst [vmem:[#allocation2 + $0x10] sm:$0xff] %v5016
        %5081 = vst [vmem:[#allocation2 + $0x18] sm:$0xff] %v5017
        %5082 = vst [vmem:[#allocation2 + $0x20] sm:$0xff] %v5018
        %5083 = vst [vmem:[#allocation2 + $0x28] sm:$0xff] %v5019
        %5084 = vst [vmem:[#allocation2 + $0x30] sm:$0xff] %v5020
        %5085 = vst [vmem:[#allocation2 + $0x38] sm:$0xff] %v5021
        %5086 = vst [vmem:[#allocation2 + $0x40] sm:$0xff] %v5022
        %5087 = vst [vmem:[#allocation2 + $0x48] sm:$0xff] %v5023
        %5088 = vst [vmem:[#allocation2 + $0x50] sm:$0xff] %v5024
        %5089 = vst [vmem:[#allocation2 + $0x58] sm:$0xff] %v5025
        %5090 = vst [vmem:[#allocation2 + $0x60] sm:$0xff] %v5026
        %5091 = vst [vmem:[#allocation2 + $0x68] sm:$0xff] %v5027
        %5092 = vst [vmem:[#allocation2 + $0x70] sm:$0xff] %v5028
        %5093 = vst [vmem:[#allocation2 + $0x78] sm:$0xff] %v5029
        %5094 = vst [vmem:[#allocation2 + $0x80] sm:$0xff] %v5030
        %5095 = vst [vmem:[#allocation2 + $0x88] sm:$0xff] %v5031
        %5096 = vst [vmem:[#allocation2 + $0x90] sm:$0xff] %v5032
        %5097 = vst [vmem:[#allocation2 + $0x98] sm:$0xff] %v5033
        %5098 = vst [vmem:[#allocation2 + $0xa0] sm:$0xff] %v5034
        %5099 = vst [vmem:[#allocation2 + $0xa8] sm:$0xff] %v5035
        %5100 = vst [vmem:[#allocation2 + $0xb0] sm:$0xff] %v5036
        %5101 = vst [vmem:[#allocation2 + $0xb8] sm:$0xff] %v5037
        %5102 = vst [vmem:[#allocation2 + $0xc0] sm:$0xff] %v5038
        %5103 = vst [vmem:[#allocation2 + $0xc8] sm:$0xff] %v5039
        %5104 = vst [vmem:[#allocation2 + $0xd0] sm:$0xff] %v5040
        %5105 = vst [vmem:[#allocation2 + $0xd8] sm:$0xff] %v5041
        %5106 = vst [vmem:[#allocation2 + $0xe0] sm:$0xff] %v5042
        %5107 = vst [vmem:[#allocation2 + $0xe8] sm:$0xff] %v5043
        %5108 = vst [vmem:[#allocation2 + $0xf0] sm:$0xff] %v5044
        %5109 = vst [vmem:[#allocation2 + $0xf8] sm:$0xff] %v5045
        %5110 = vst [vmem:[#allocation2 + $0x100] sm:$0xff] %v5046
        %5111 = vst [vmem:[#allocation2 + $0x108] sm:$0xff] %v5047
        %5112 = vst [vmem:[#allocation2 + $0x110] sm:$0xff] %v5048
        %5113 = vst [vmem:[#allocation2 + $0x118] sm:$0xff] %v5049
        %5114 = vst [vmem:[#allocation2 + $0x120] sm:$0xff] %v5050
        %5115 = vst [vmem:[#allocation2 + $0x128] sm:$0xff] %v5051
        %5116 = vst [vmem:[#allocation2 + $0x130] sm:$0xff] %v5052
        %5117 = vst [vmem:[#allocation2 + $0x138] sm:$0xff] %v5053
        %5118 = vst [vmem:[#allocation2 + $0x140] sm:$0xff] %v5054
        %5119 = vst [vmem:[#allocation2 + $0x148] sm:$0xff] %v5055
        %5120 = vst [vmem:[#allocation2 + $0x150] sm:$0xff] %v5056
        %5121 = vst [vmem:[#allocation2 + $0x158] sm:$0xff] %v5057
        %5122 = vst [vmem:[#allocation2 + $0x160] sm:$0xff] %v5058
        %5123 = vst [vmem:[#allocation2 + $0x168] sm:$0xff] %v5059
        %5124 = vst [vmem:[#allocation2 + $0x170] sm:$0xff] %v5060
        %5125 = vst [vmem:[#allocation2 + $0x178] sm:$0xff] %v5061
        %5126 = vst [vmem:[#allocation2 + $0x180] sm:$0xff] %v5062
        %5127 = vst [vmem:[#allocation2 + $0x188] sm:$0xff] %v5063
        %5128 = vst [vmem:[#allocation2 + $0x190] sm:$0xff] %v5064
        %5129 = vst [vmem:[#allocation2 + $0x198] sm:$0xff] %v5065
        %5130 = vst [vmem:[#allocation2 + $0x1a0] sm:$0xff] %v5066
        %5131 = vst [vmem:[#allocation2 + $0x1a8] sm:$0xff] %v5067
        %5132 = vst [vmem:[#allocation2 + $0x1b0] sm:$0xff] %v5068
        %5133 = vst [vmem:[#allocation2 + $0x1b8] sm:$0xff] %v5069
        %5134 = vst [vmem:[#allocation2 + $0x1c0] sm:$0xff] %v5070
        %5135 = vst [vmem:[#allocation2 + $0x1c8] sm:$0xff] %v5071
        %5136 = vst [vmem:[#allocation2 + $0x1d0] sm:$0xff] %v5072
        %5137 = vst [vmem:[#allocation2 + $0x1d8] sm:$0xff] %v5073
        %5138 = vst [vmem:[#allocation2 + $0x1e0] sm:$0xff] %v5074
        %5139 = vst [vmem:[#allocation2 + $0x1e8] sm:$0xff] %v5075
        %5140 = vst [vmem:[#allocation2 + $0x1f0] sm:$0xff] %v5076
        %5141 = vst [vmem:[#allocation2 + $0x1f8] sm:$0xff] %v5077
        %v5142 = vld [vmem:[%s214] sm:$0xcc]
        %v5143 = vld [vmem:[%s214 + $0x8] sm:$0xff]
        %v5144 = vld [vmem:[%s214 + $0x10] sm:$0x33]
        %v5145 = vld [vmem:[%s214 + $0x18] sm:$0xcc]
        %v5146 = vld [vmem:[%s214 + $0x20] sm:$0xff]
        %v5147 = vld [vmem:[%s214 + $0x28] sm:$0x33]
        %v5148 = vld [vmem:[%s214 + $0x30] sm:$0xcc]
        %v5149 = vld [vmem:[%s214 + $0x38] sm:$0xff]
        %v5150 = vld [vmem:[%s214 + $0x40] sm:$0x33]
        %v5151 = vld [vmem:[%s214 + $0x48] sm:$0xcc]
        %v5152 = vld [vmem:[%s214 + $0x50] sm:$0xff]
        %v5153 = vld [vmem:[%s214 + $0x58] sm:$0x33]
        %v5154 = vld [vmem:[%s214 + $0x60] sm:$0xcc]
        %v5155 = vld [vmem:[%s214 + $0x68] sm:$0xff]
        %v5156 = vld [vmem:[%s214 + $0x70] sm:$0x33]
        %v5157 = vld [vmem:[%s214 + $0x78] sm:$0xcc]
        %v5158 = vld [vmem:[%s214 + $0x80] sm:$0xff]
        %v5159 = vld [vmem:[%s214 + $0x88] sm:$0x33]
        %v5160 = vld [vmem:[%s214 + $0x90] sm:$0xcc]
        %v5161 = vld [vmem:[%s214 + $0x98] sm:$0xff]
        %v5162 = vld [vmem:[%s214 + $0xa0] sm:$0x33]
        %v5163 = vld [vmem:[%s214 + $0xa8] sm:$0xcc]
        %v5164 = vld [vmem:[%s214 + $0xb0] sm:$0xff]
        %v5165 = vld [vmem:[%s214 + $0xb8] sm:$0x33]
        %v5166 = vld [vmem:[%s214 + $0xc0] sm:$0xcc]
        %v5167 = vld [vmem:[%s214 + $0xc8] sm:$0xff]
        %v5168 = vld [vmem:[%s214 + $0xd0] sm:$0x33]
        %v5169 = vld [vmem:[%s214 + $0xd8] sm:$0xcc]
        %v5170 = vld [vmem:[%s214 + $0xe0] sm:$0xff]
        %v5171 = vld [vmem:[%s214 + $0xe8] sm:$0x33]
        %v5172 = vld [vmem:[%s214 + $0xf0] sm:$0xcc]
        %v5173 = vld [vmem:[%s214 + $0xf8] sm:$0xff]
        %v5174 = vld [vmem:[%s214 + $0x100] sm:$0x33]
        %v5175 = vld [vmem:[%s214 + $0x108] sm:$0xcc]
        %v5176 = vld [vmem:[%s214 + $0x110] sm:$0xff]
        %v5177 = vld [vmem:[%s214 + $0x118] sm:$0x33]
        %v5178 = vld [vmem:[%s214 + $0x120] sm:$0xcc]
        %v5179 = vld [vmem:[%s214 + $0x128] sm:$0xff]
        %v5180 = vld [vmem:[%s214 + $0x130] sm:$0x33]
        %v5181 = vld [vmem:[%s214 + $0x138] sm:$0xcc]
        %v5182 = vld [vmem:[%s214 + $0x140] sm:$0xff]
        %v5183 = vld [vmem:[%s214 + $0x148] sm:$0x33]
        %v5184 = vld [vmem:[%s214 + $0x150] sm:$0xcc]
        %v5185 = vld [vmem:[%s214 + $0x158] sm:$0xff]
        %v5186 = vld [vmem:[%s214 + $0x160] sm:$0x33]
        %v5187 = vld [vmem:[%s214 + $0x168] sm:$0xcc]
        %v5188 = vld [vmem:[%s214 + $0x170] sm:$0xff]
        %v5189 = vld [vmem:[%s214 + $0x178] sm:$0x33]
        %v5190 = vld [vmem:[%s214 + $0x180] sm:$0xcc]
        %v5191 = vld [vmem:[%s214 + $0x188] sm:$0xff]
        %v5192 = vld [vmem:[%s214 + $0x190] sm:$0x33]
        %v5193 = vld [vmem:[%s214 + $0x198] sm:$0xcc]
        %v5194 = vld [vmem:[%s214 + $0x1a0] sm:$0xff]
        %v5195 = vld [vmem:[%s214 + $0x1a8] sm:$0x33]
        %v5196 = vld [vmem:[%s214 + $0x1b0] sm:$0xcc]
        %v5197 = vld [vmem:[%s214 + $0x1b8] sm:$0xff]
        %v5198 = vld [vmem:[%s214 + $0x1c0] sm:$0x33]
        %v5199 = vld [vmem:[%s214 + $0x1c8] sm:$0xcc]
        %v5200 = vld [vmem:[%s214 + $0x1d0] sm:$0xff]
        %v5201 = vld [vmem:[%s214 + $0x1d8] sm:$0x33]
        %vm5262 = vcmask 1041408
        %vm5263 = vcmask 1045508
        %vm5264 = vmor %vm5262, %vm5263
        %v5265 = vrot.slane %v5142, 6
        %v5266 = vrot.slane %v5265, 4
        %v5267 = vrot.slane %v5143, 6
        %v5268 = vsel %vm5264, %v5266, %v5267
        %v5269 = vrot.slane %v5267, 4
        %v5270 = vrot.slane %v5144, 6
        %v5271 = vsel %vm5264, %v5269, %v5270
        %v5272 = vrot.slane %v5145, 6
        %v5273 = vrot.slane %v5272, 4
        %v5274 = vrot.slane %v5146, 6
        %v5275 = vsel %vm5264, %v5273, %v5274
        %v5276 = vrot.slane %v5274, 4
        %v5277 = vrot.slane %v5147, 6
        %v5278 = vsel %vm5264, %v5276, %v5277
        %v5279 = vrot.slane %v5148, 6
        %v5280 = vrot.slane %v5279, 4
        %v5281 = vrot.slane %v5149, 6
        %v5282 = vsel %vm5264, %v5280, %v5281
        %v5283 = vrot.slane %v5281, 4
        %v5284 = vrot.slane %v5150, 6
        %v5285 = vsel %vm5264, %v5283, %v5284
        %v5286 = vrot.slane %v5151, 6
        %v5287 = vrot.slane %v5286, 4
        %v5288 = vrot.slane %v5152, 6
        %v5289 = vsel %vm5264, %v5287, %v5288
        %v5290 = vrot.slane %v5288, 4
        %v5291 = vrot.slane %v5153, 6
        %v5292 = vsel %vm5264, %v5290, %v5291
        %v5293 = vrot.slane %v5154, 6
        %v5294 = vrot.slane %v5293, 4
        %v5295 = vrot.slane %v5155, 6
        %v5296 = vsel %vm5264, %v5294, %v5295
        %v5297 = vrot.slane %v5295, 4
        %v5298 = vrot.slane %v5156, 6
        %v5299 = vsel %vm5264, %v5297, %v5298
        %v5300 = vrot.slane %v5157, 6
        %v5301 = vrot.slane %v5300, 4
        %v5302 = vrot.slane %v5158, 6
        %v5303 = vsel %vm5264, %v5301, %v5302
        %v5304 = vrot.slane %v5302, 4
        %v5305 = vrot.slane %v5159, 6
        %v5306 = vsel %vm5264, %v5304, %v5305
        %v5307 = vrot.slane %v5160, 6
        %v5308 = vrot.slane %v5307, 4
        %v5309 = vrot.slane %v5161, 6
        %v5310 = vsel %vm5264, %v5308, %v5309
        %v5311 = vrot.slane %v5309, 4
        %v5312 = vrot.slane %v5162, 6
        %v5313 = vsel %vm5264, %v5311, %v5312
        %v5314 = vrot.slane %v5163, 6
        %v5315 = vrot.slane %v5314, 4
        %v5316 = vrot.slane %v5164, 6
        %v5317 = vsel %vm5264, %v5315, %v5316
        %v5318 = vrot.slane %v5316, 4
        %v5319 = vrot.slane %v5165, 6
        %v5320 = vsel %vm5264, %v5318, %v5319
        %v5321 = vrot.slane %v5166, 6
        %v5322 = vrot.slane %v5321, 4
        %v5323 = vrot.slane %v5167, 6
        %v5324 = vsel %vm5264, %v5322, %v5323
        %v5325 = vrot.slane %v5323, 4
        %v5326 = vrot.slane %v5168, 6
        %v5327 = vsel %vm5264, %v5325, %v5326
        %v5328 = vrot.slane %v5169, 6
        %v5329 = vrot.slane %v5328, 4
        %v5330 = vrot.slane %v5170, 6
        %v5331 = vsel %vm5264, %v5329, %v5330
        %v5332 = vrot.slane %v5330, 4
        %v5333 = vrot.slane %v5171, 6
        %v5334 = vsel %vm5264, %v5332, %v5333
        %v5335 = vrot.slane %v5172, 6
        %v5336 = vrot.slane %v5335, 4
        %v5337 = vrot.slane %v5173, 6
        %v5338 = vsel %vm5264, %v5336, %v5337
        %v5339 = vrot.slane %v5337, 4
        %v5340 = vrot.slane %v5174, 6
        %v5341 = vsel %vm5264, %v5339, %v5340
        %v5342 = vrot.slane %v5175, 6
        %v5343 = vrot.slane %v5342, 4
        %v5344 = vrot.slane %v5176, 6
        %v5345 = vsel %vm5264, %v5343, %v5344
        %v5346 = vrot.slane %v5344, 4
        %v5347 = vrot.slane %v5177, 6
        %v5348 = vsel %vm5264, %v5346, %v5347
        %v5349 = vrot.slane %v5178, 6
        %v5350 = vrot.slane %v5349, 4
        %v5351 = vrot.slane %v5179, 6
        %v5352 = vsel %vm5264, %v5350, %v5351
        %v5353 = vrot.slane %v5351, 4
        %v5354 = vrot.slane %v5180, 6
        %v5355 = vsel %vm5264, %v5353, %v5354
        %v5356 = vrot.slane %v5181, 6
        %v5357 = vrot.slane %v5356, 4
        %v5358 = vrot.slane %v5182, 6
        %v5359 = vsel %vm5264, %v5357, %v5358
        %v5360 = vrot.slane %v5358, 4
        %v5361 = vrot.slane %v5183, 6
        %v5362 = vsel %vm5264, %v5360, %v5361
        %v5363 = vrot.slane %v5184, 6
        %v5364 = vrot.slane %v5363, 4
        %v5365 = vrot.slane %v5185, 6
        %v5366 = vsel %vm5264, %v5364, %v5365
        %v5367 = vrot.slane %v5365, 4
        %v5368 = vrot.slane %v5186, 6
        %v5369 = vsel %vm5264, %v5367, %v5368
        %v5370 = vrot.slane %v5187, 6
        %v5371 = vrot.slane %v5370, 4
        %v5372 = vrot.slane %v5188, 6
        %v5373 = vsel %vm5264, %v5371, %v5372
        %v5374 = vrot.slane %v5372, 4
        %v5375 = vrot.slane %v5189, 6
        %v5376 = vsel %vm5264, %v5374, %v5375
        %v5377 = vrot.slane %v5190, 6
        %v5378 = vrot.slane %v5377, 4
        %v5379 = vrot.slane %v5191, 6
        %v5380 = vsel %vm5264, %v5378, %v5379
        %v5381 = vrot.slane %v5379, 4
        %v5382 = vrot.slane %v5192, 6
        %v5383 = vsel %vm5264, %v5381, %v5382
        %v5384 = vrot.slane %v5193, 6
        %v5385 = vrot.slane %v5384, 4
        %v5386 = vrot.slane %v5194, 6
        %v5387 = vsel %vm5264, %v5385, %v5386
        %v5388 = vrot.slane %v5386, 4
        %v5389 = vrot.slane %v5195, 6
        %v5390 = vsel %vm5264, %v5388, %v5389
        %v5391 = vrot.slane %v5196, 6
        %v5392 = vrot.slane %v5391, 4
        %v5393 = vrot.slane %v5197, 6
        %v5394 = vsel %vm5264, %v5392, %v5393
        %v5395 = vrot.slane %v5393, 4
        %v5396 = vrot.slane %v5198, 6
        %v5397 = vsel %vm5264, %v5395, %v5396
        %v5398 = vrot.slane %v5199, 6
        %v5399 = vrot.slane %v5398, 4
        %v5400 = vrot.slane %v5200, 6
        %v5401 = vsel %vm5264, %v5399, %v5400
        %v5402 = vrot.slane %v5400, 4
        %v5403 = vrot.slane %v5201, 6
        %v5404 = vsel %vm5264, %v5402, %v5403
        %5445 = vst [vmem:[#allocation3] sm:$0xff] %v5268
        %5446 = vst [vmem:[#allocation3 + $0x8] sm:$0xff] %v5271
        %5447 = vst [vmem:[#allocation3 + $0x10] sm:$0xff] %v5275
        %5448 = vst [vmem:[#allocation3 + $0x18] sm:$0xff] %v5278
        %5449 = vst [vmem:[#allocation3 + $0x20] sm:$0xff] %v5282
        %5450 = vst [vmem:[#allocation3 + $0x28] sm:$0xff] %v5285
        %5451 = vst [vmem:[#allocation3 + $0x30] sm:$0xff] %v5289
        %5452 = vst [vmem:[#allocation3 + $0x38] sm:$0xff] %v5292
        %5453 = vst [vmem:[#allocation3 + $0x40] sm:$0xff] %v5296
        %5454 = vst [vmem:[#allocation3 + $0x48] sm:$0xff] %v5299
        %5455 = vst [vmem:[#allocation3 + $0x50] sm:$0xff] %v5303
        %5456 = vst [vmem:[#allocation3 + $0x58] sm:$0xff] %v5306
        %5457 = vst [vmem:[#allocation3 + $0x60] sm:$0xff] %v5310
        %5458 = vst [vmem:[#allocation3 + $0x68] sm:$0xff] %v5313
        %5459 = vst [vmem:[#allocation3 + $0x70] sm:$0xff] %v5317
        %5460 = vst [vmem:[#allocation3 + $0x78] sm:$0xff] %v5320
        %5461 = vst [vmem:[#allocation3 + $0x80] sm:$0xff] %v5324
        %5462 = vst [vmem:[#allocation3 + $0x88] sm:$0xff] %v5327
        %5463 = vst [vmem:[#allocation3 + $0x90] sm:$0xff] %v5331
        %5464 = vst [vmem:[#allocation3 + $0x98] sm:$0xff] %v5334
        %5465 = vst [vmem:[#allocation3 + $0xa0] sm:$0xff] %v5338
        %5466 = vst [vmem:[#allocation3 + $0xa8] sm:$0xff] %v5341
        %5467 = vst [vmem:[#allocation3 + $0xb0] sm:$0xff] %v5345
        %5468 = vst [vmem:[#allocation3 + $0xb8] sm:$0xff] %v5348
        %5469 = vst [vmem:[#allocation3 + $0xc0] sm:$0xff] %v5352
        %5470 = vst [vmem:[#allocation3 + $0xc8] sm:$0xff] %v5355
        %5471 = vst [vmem:[#allocation3 + $0xd0] sm:$0xff] %v5359
        %5472 = vst [vmem:[#allocation3 + $0xd8] sm:$0xff] %v5362
        %5473 = vst [vmem:[#allocation3 + $0xe0] sm:$0xff] %v5366
        %5474 = vst [vmem:[#allocation3 + $0xe8] sm:$0xff] %v5369
        %5475 = vst [vmem:[#allocation3 + $0xf0] sm:$0xff] %v5373
        %5476 = vst [vmem:[#allocation3 + $0xf8] sm:$0xff] %v5376
        %5477 = vst [vmem:[#allocation3 + $0x100] sm:$0xff] %v5380
        %5478 = vst [vmem:[#allocation3 + $0x108] sm:$0xff] %v5383
        %5479 = vst [vmem:[#allocation3 + $0x110] sm:$0xff] %v5387
        %5480 = vst [vmem:[#allocation3 + $0x118] sm:$0xff] %v5390
        %5481 = vst [vmem:[#allocation3 + $0x120] sm:$0xff] %v5394
        %5482 = vst [vmem:[#allocation3 + $0x128] sm:$0xff] %v5397
        %5483 = vst [vmem:[#allocation3 + $0x130] sm:$0xff] %v5401
        %5484 = vst [vmem:[#allocation3 + $0x138] sm:$0xff] %v5404
        %v5485 = vld [vmem:[#allocation3] sm:$0xff]
        %v5486 = vld [vmem:[#allocation3 + $0x8] sm:$0xff]
        %v5487 = vld [vmem:[#allocation3 + $0x10] sm:$0xff]
        %v5488 = vld [vmem:[#allocation3 + $0x18] sm:$0xff]
        %v5489 = vld [vmem:[#allocation3 + $0x20] sm:$0xff]
        %v5490 = vld [vmem:[#allocation3 + $0x28] sm:$0xff]
        %v5491 = vld [vmem:[#allocation3 + $0x30] sm:$0xff]
        %v5492 = vld [vmem:[#allocation3 + $0x38] sm:$0xff]
        %v5493 = vld [vmem:[#allocation3 + $0x40] sm:$0xff]
        %v5494 = vld [vmem:[#allocation3 + $0x48] sm:$0xff]
        %v5495 = vld [vmem:[#allocation3 + $0x50] sm:$0xff]
        %v5496 = vld [vmem:[#allocation3 + $0x58] sm:$0xff]
        %v5497 = vld [vmem:[#allocation3 + $0x60] sm:$0xff]
        %v5498 = vld [vmem:[#allocation3 + $0x68] sm:$0xff]
        %v5499 = vld [vmem:[#allocation3 + $0x70] sm:$0xff]
        %v5500 = vld [vmem:[#allocation3 + $0x78] sm:$0xff]
        %v5501 = vld [vmem:[#allocation3 + $0x80] sm:$0xff]
        %v5502 = vld [vmem:[#allocation3 + $0x88] sm:$0xff]
        %v5503 = vld [vmem:[#allocation3 + $0x90] sm:$0xff]
        %v5504 = vld [vmem:[#allocation3 + $0x98] sm:$0xff]
        %v5505 = vld [vmem:[#allocation3 + $0xa0] sm:$0xff]
        %v5506 = vld [vmem:[#allocation3 + $0xa8] sm:$0xff]
        %v5507 = vld [vmem:[#allocation3 + $0xb0] sm:$0xff]
        %v5508 = vld [vmem:[#allocation3 + $0xb8] sm:$0xff]
        %v5509 = vld [vmem:[#allocation3 + $0xc0] sm:$0xff]
        %v5510 = vld [vmem:[#allocation3 + $0xc8] sm:$0xff]
        %v5511 = vld [vmem:[#allocation3 + $0xd0] sm:$0xff]
        %v5512 = vld [vmem:[#allocation3 + $0xd8] sm:$0xff]
        %v5513 = vld [vmem:[#allocation3 + $0xe0] sm:$0xff]
        %v5514 = vld [vmem:[#allocation3 + $0xe8] sm:$0xff]
        %v5515 = vld [vmem:[#allocation3 + $0xf0] sm:$0xff]
        %v5516 = vld [vmem:[#allocation3 + $0xf8] sm:$0xff]
        %s5517 = scalar_lea.vmem %s219, 512
        %v5518 = vld [vmem:[%s5517] sm:$0xff]
        %v5519 = vld [vmem:[%s5517 + $0x8] sm:$0xff]
        %v5520 = vld [vmem:[%s5517 + $0x10] sm:$0xff]
        %v5521 = vld [vmem:[%s5517 + $0x18] sm:$0xff]
        %v5522 = vld [vmem:[%s5517 + $0x20] sm:$0xff]
        %v5523 = vld [vmem:[%s5517 + $0x28] sm:$0xff]
        %v5524 = vld [vmem:[%s5517 + $0x30] sm:$0xff]
        %v5525 = vld [vmem:[%s5517 + $0x38] sm:$0xff]
        %v5526 = vld [vmem:[%s5517 + $0x40] sm:$0xff]
        %v5527 = vld [vmem:[%s5517 + $0x48] sm:$0xff]
        %v5528 = vld [vmem:[%s5517 + $0x50] sm:$0xff]
        %v5529 = vld [vmem:[%s5517 + $0x58] sm:$0xff]
        %v5530 = vld [vmem:[%s5517 + $0x60] sm:$0xff]
        %v5531 = vld [vmem:[%s5517 + $0x68] sm:$0xff]
        %v5532 = vld [vmem:[%s5517 + $0x70] sm:$0xff]
        %v5533 = vld [vmem:[%s5517 + $0x78] sm:$0xff]
        %v5534 = vld [vmem:[%s5517 + $0x80] sm:$0xff]
        %v5535 = vld [vmem:[%s5517 + $0x88] sm:$0xff]
        %v5536 = vld [vmem:[%s5517 + $0x90] sm:$0xff]
        %v5537 = vld [vmem:[%s5517 + $0x98] sm:$0xff]
        %v5538 = vld [vmem:[%s5517 + $0xa0] sm:$0xff]
        %v5539 = vld [vmem:[%s5517 + $0xa8] sm:$0xff]
        %v5540 = vld [vmem:[%s5517 + $0xb0] sm:$0xff]
        %v5541 = vld [vmem:[%s5517 + $0xb8] sm:$0xff]
        %v5542 = vld [vmem:[%s5517 + $0xc0] sm:$0xff]
        %v5543 = vld [vmem:[%s5517 + $0xc8] sm:$0xff]
        %v5544 = vld [vmem:[%s5517 + $0xd0] sm:$0xff]
        %v5545 = vld [vmem:[%s5517 + $0xd8] sm:$0xff]
        %v5546 = vld [vmem:[%s5517 + $0xe0] sm:$0xff]
        %v5547 = vld [vmem:[%s5517 + $0xe8] sm:$0xff]
        %v5548 = vld [vmem:[%s5517 + $0xf0] sm:$0xff]
        %v5549 = vld [vmem:[%s5517 + $0xf8] sm:$0xff]
        %v5582 = vunpack.c.l.b16 %v5485
        %v5583 = vunpack.c.h.b16 %v5485
        %v5584 = vunpack.c.l.b16 %v5486
        %v5585 = vunpack.c.h.b16 %v5486
        %v5586 = vunpack.c.l.b16 %v5487
        %v5587 = vunpack.c.h.b16 %v5487
        %v5588 = vunpack.c.l.b16 %v5488
        %v5589 = vunpack.c.h.b16 %v5488
        %v5590 = vunpack.c.l.b16 %v5489
        %v5591 = vunpack.c.h.b16 %v5489
        %v5592 = vunpack.c.l.b16 %v5490
        %v5593 = vunpack.c.h.b16 %v5490
        %v5594 = vunpack.c.l.b16 %v5491
        %v5595 = vunpack.c.h.b16 %v5491
        %v5596 = vunpack.c.l.b16 %v5492
        %v5597 = vunpack.c.h.b16 %v5492
        %v5598 = vunpack.c.l.b16 %v5493
        %v5599 = vunpack.c.h.b16 %v5493
        %v5600 = vunpack.c.l.b16 %v5494
        %v5601 = vunpack.c.h.b16 %v5494
        %v5602 = vunpack.c.l.b16 %v5495
        %v5603 = vunpack.c.h.b16 %v5495
        %v5604 = vunpack.c.l.b16 %v5496
        %v5605 = vunpack.c.h.b16 %v5496
        %v5606 = vunpack.c.l.b16 %v5497
        %v5607 = vunpack.c.h.b16 %v5497
        %v5608 = vunpack.c.l.b16 %v5498
        %v5609 = vunpack.c.h.b16 %v5498
        %v5610 = vunpack.c.l.b16 %v5499
        %v5611 = vunpack.c.h.b16 %v5499
        %v5612 = vunpack.c.l.b16 %v5500
        %v5613 = vunpack.c.h.b16 %v5500
        %v5614 = vunpack.c.l.b16 %v5501
        %v5615 = vunpack.c.h.b16 %v5501
        %v5616 = vunpack.c.l.b16 %v5502
        %v5617 = vunpack.c.h.b16 %v5502
        %v5618 = vunpack.c.l.b16 %v5503
        %v5619 = vunpack.c.h.b16 %v5503
        %v5620 = vunpack.c.l.b16 %v5504
        %v5621 = vunpack.c.h.b16 %v5504
        %v5622 = vunpack.c.l.b16 %v5505
        %v5623 = vunpack.c.h.b16 %v5505
        %v5624 = vunpack.c.l.b16 %v5506
        %v5625 = vunpack.c.h.b16 %v5506
        %v5626 = vunpack.c.l.b16 %v5507
        %v5627 = vunpack.c.h.b16 %v5507
        %v5628 = vunpack.c.l.b16 %v5508
        %v5629 = vunpack.c.h.b16 %v5508
        %v5630 = vunpack.c.l.b16 %v5509
        %v5631 = vunpack.c.h.b16 %v5509
        %v5632 = vunpack.c.l.b16 %v5510
        %v5633 = vunpack.c.h.b16 %v5510
        %v5634 = vunpack.c.l.b16 %v5511
        %v5635 = vunpack.c.h.b16 %v5511
        %v5636 = vunpack.c.l.b16 %v5512
        %v5637 = vunpack.c.h.b16 %v5512
        %v5638 = vunpack.c.l.b16 %v5513
        %v5639 = vunpack.c.h.b16 %v5513
        %v5640 = vunpack.c.l.b16 %v5514
        %v5641 = vunpack.c.h.b16 %v5514
        %v5642 = vunpack.c.l.b16 %v5515
        %v5643 = vunpack.c.h.b16 %v5515
        %v5644 = vunpack.c.l.b16 %v5516
        %v5645 = vunpack.c.h.b16 %v5516
        %v5646 = vpack.c.b16 %v5584, %v5582
        %v5647 = vpack.c.b16 %v5585, %v5583
        %v5648 = vpack.c.b16 %v5588, %v5586
        %v5649 = vpack.c.b16 %v5589, %v5587
        %v5650 = vpack.c.b16 %v5592, %v5590
        %v5651 = vpack.c.b16 %v5593, %v5591
        %v5652 = vpack.c.b16 %v5596, %v5594
        %v5653 = vpack.c.b16 %v5597, %v5595
        %v5654 = vpack.c.b16 %v5600, %v5598
        %v5655 = vpack.c.b16 %v5601, %v5599
        %v5656 = vpack.c.b16 %v5604, %v5602
        %v5657 = vpack.c.b16 %v5605, %v5603
        %v5658 = vpack.c.b16 %v5608, %v5606
        %v5659 = vpack.c.b16 %v5609, %v5607
        %v5660 = vpack.c.b16 %v5612, %v5610
        %v5661 = vpack.c.b16 %v5613, %v5611
        %v5662 = vpack.c.b16 %v5616, %v5614
        %v5663 = vpack.c.b16 %v5617, %v5615
        %v5664 = vpack.c.b16 %v5620, %v5618
        %v5665 = vpack.c.b16 %v5621, %v5619
        %v5666 = vpack.c.b16 %v5624, %v5622
        %v5667 = vpack.c.b16 %v5625, %v5623
        %v5668 = vpack.c.b16 %v5628, %v5626
        %v5669 = vpack.c.b16 %v5629, %v5627
        %v5670 = vpack.c.b16 %v5632, %v5630
        %v5671 = vpack.c.b16 %v5633, %v5631
        %v5672 = vpack.c.b16 %v5636, %v5634
        %v5673 = vpack.c.b16 %v5637, %v5635
        %v5674 = vpack.c.b16 %v5640, %v5638
        %v5675 = vpack.c.b16 %v5641, %v5639
        %v5676 = vpack.c.b16 %v5644, %v5642
        %v5677 = vpack.c.b16 %v5645, %v5643
        %v5742 = vunpack.c.l.b16 %v5518
        %v5743 = vunpack.c.h.b16 %v5518
        %v5744 = vunpack.c.l.b16 %v5519
        %v5745 = vunpack.c.h.b16 %v5519
        %v5746 = vunpack.c.l.b16 %v5520
        %v5747 = vunpack.c.h.b16 %v5520
        %v5748 = vunpack.c.l.b16 %v5521
        %v5749 = vunpack.c.h.b16 %v5521
        %v5750 = vunpack.c.l.b16 %v5522
        %v5751 = vunpack.c.h.b16 %v5522
        %v5752 = vunpack.c.l.b16 %v5523
        %v5753 = vunpack.c.h.b16 %v5523
        %v5754 = vunpack.c.l.b16 %v5524
        %v5755 = vunpack.c.h.b16 %v5524
        %v5756 = vunpack.c.l.b16 %v5525
        %v5757 = vunpack.c.h.b16 %v5525
        %v5758 = vunpack.c.l.b16 %v5526
        %v5759 = vunpack.c.h.b16 %v5526
        %v5760 = vunpack.c.l.b16 %v5527
        %v5761 = vunpack.c.h.b16 %v5527
        %v5762 = vunpack.c.l.b16 %v5528
        %v5763 = vunpack.c.h.b16 %v5528
        %v5764 = vunpack.c.l.b16 %v5529
        %v5765 = vunpack.c.h.b16 %v5529
        %v5766 = vunpack.c.l.b16 %v5530
        %v5767 = vunpack.c.h.b16 %v5530
        %v5768 = vunpack.c.l.b16 %v5531
        %v5769 = vunpack.c.h.b16 %v5531
        %v5770 = vunpack.c.l.b16 %v5532
        %v5771 = vunpack.c.h.b16 %v5532
        %v5772 = vunpack.c.l.b16 %v5533
        %v5773 = vunpack.c.h.b16 %v5533
        %v5774 = vunpack.c.l.b16 %v5534
        %v5775 = vunpack.c.h.b16 %v5534
        %v5776 = vunpack.c.l.b16 %v5535
        %v5777 = vunpack.c.h.b16 %v5535
        %v5778 = vunpack.c.l.b16 %v5536
        %v5779 = vunpack.c.h.b16 %v5536
        %v5780 = vunpack.c.l.b16 %v5537
        %v5781 = vunpack.c.h.b16 %v5537
        %v5782 = vunpack.c.l.b16 %v5538
        %v5783 = vunpack.c.h.b16 %v5538
        %v5784 = vunpack.c.l.b16 %v5539
        %v5785 = vunpack.c.h.b16 %v5539
        %v5786 = vunpack.c.l.b16 %v5540
        %v5787 = vunpack.c.h.b16 %v5540
        %v5788 = vunpack.c.l.b16 %v5541
        %v5789 = vunpack.c.h.b16 %v5541
        %v5790 = vunpack.c.l.b16 %v5542
        %v5791 = vunpack.c.h.b16 %v5542
        %v5792 = vunpack.c.l.b16 %v5543
        %v5793 = vunpack.c.h.b16 %v5543
        %v5794 = vunpack.c.l.b16 %v5544
        %v5795 = vunpack.c.h.b16 %v5544
        %v5796 = vunpack.c.l.b16 %v5545
        %v5797 = vunpack.c.h.b16 %v5545
        %v5798 = vunpack.c.l.b16 %v5546
        %v5799 = vunpack.c.h.b16 %v5546
        %v5800 = vunpack.c.l.b16 %v5547
        %v5801 = vunpack.c.h.b16 %v5547
        %v5802 = vunpack.c.l.b16 %v5548
        %v5803 = vunpack.c.h.b16 %v5548
        %v5804 = vunpack.c.l.b16 %v5549
        %v5805 = vunpack.c.h.b16 %v5549
        %v5806 = vpack.c.b16 %v5744, %v5742
        %v5807 = vpack.c.b16 %v5745, %v5743
        %v5808 = vpack.c.b16 %v5748, %v5746
        %v5809 = vpack.c.b16 %v5749, %v5747
        %v5810 = vpack.c.b16 %v5752, %v5750
        %v5811 = vpack.c.b16 %v5753, %v5751
        %v5812 = vpack.c.b16 %v5756, %v5754
        %v5813 = vpack.c.b16 %v5757, %v5755
        %v5814 = vpack.c.b16 %v5760, %v5758
        %v5815 = vpack.c.b16 %v5761, %v5759
        %v5816 = vpack.c.b16 %v5764, %v5762
        %v5817 = vpack.c.b16 %v5765, %v5763
        %v5818 = vpack.c.b16 %v5768, %v5766
        %v5819 = vpack.c.b16 %v5769, %v5767
        %v5820 = vpack.c.b16 %v5772, %v5770
        %v5821 = vpack.c.b16 %v5773, %v5771
        %v5822 = vpack.c.b16 %v5776, %v5774
        %v5823 = vpack.c.b16 %v5777, %v5775
        %v5824 = vpack.c.b16 %v5780, %v5778
        %v5825 = vpack.c.b16 %v5781, %v5779
        %v5826 = vpack.c.b16 %v5784, %v5782
        %v5827 = vpack.c.b16 %v5785, %v5783
        %v5828 = vpack.c.b16 %v5788, %v5786
        %v5829 = vpack.c.b16 %v5789, %v5787
        %v5830 = vpack.c.b16 %v5792, %v5790
        %v5831 = vpack.c.b16 %v5793, %v5791
        %v5832 = vpack.c.b16 %v5796, %v5794
        %v5833 = vpack.c.b16 %v5797, %v5795
        %v5834 = vpack.c.b16 %v5800, %v5798
        %v5835 = vpack.c.b16 %v5801, %v5799
        %v5836 = vpack.c.b16 %v5804, %v5802
        %v5837 = vpack.c.b16 %v5805, %v5803
        %5870 = vmatprep.subr.bf16.mxu0 %v5821
        %5871 = vmatpush1.bf16.msra.mxu0 %v5820
        %5872 = vmatprep.subr.bf16.mxu0 %v5819
        %5873 = vmatpush1.bf16.msra.mxu0 %v5818
        %5874 = vmatprep.subr.bf16.mxu0 %v5817
        %5875 = vmatpush1.bf16.msra.mxu0 %v5816
        %5876 = vmatprep.subr.bf16.mxu0 %v5815
        %5877 = vmatpush1.bf16.msra.mxu0 %v5814
        %5878 = vmatprep.subr.bf16.mxu0 %v5813
        %5879 = vmatpush1.bf16.msra.mxu0 %v5812
        %5880 = vmatprep.subr.bf16.mxu0 %v5811
        %5881 = vmatpush1.bf16.msra.mxu0 %v5810
        %5882 = vmatprep.subr.bf16.mxu0 %v5809
        %5883 = vmatpush1.bf16.msra.mxu0 %v5808
        %5884 = vmatprep.subr.bf16.mxu0 %v5807
        %5885 = vmatpush1.bf16.msra.mxu0 %v5806
        %5886 = vmatprep.subr.bf16.mxu0 %v5837
        %5887 = vmatpush2.bf16.msra.mxu0 %v5836
        %5888 = vmatprep.subr.bf16.mxu0 %v5835
        %5889 = vmatpush2.bf16.msra.mxu0 %v5834
        %5890 = vmatprep.subr.bf16.mxu0 %v5833
        %5891 = vmatpush2.bf16.msra.mxu0 %v5832
        %5892 = vmatprep.subr.bf16.mxu0 %v5831
        %5893 = vmatpush2.bf16.msra.mxu0 %v5830
        %5894 = vmatprep.subr.bf16.mxu0 %v5829
        %5895 = vmatpush2.bf16.msra.mxu0 %v5828
        %5896 = vmatprep.subr.bf16.mxu0 %v5827
        %5897 = vmatpush2.bf16.msra.mxu0 %v5826
        %5898 = vmatprep.subr.bf16.mxu0 %v5825
        %5899 = vmatpush2.bf16.msra.mxu0 %v5824
        %5900 = vmatprep.subr.bf16.mxu0 %v5823
        %5901 = vmatpush2.bf16.msra.mxu0 %v5822
        %5902 = vmatprep.mubr.bf16.mxu0 %v5647
        %5903 = vmatmul.mubr.bf16.gmra.mxu0 %v5646
        %v5904 = vpop.f32.mrf.mxu0
        %v5905 = vadd.f32 0.0, %v5904
        %v5906 = vpop.f32.mrf.mxu0
        %v5907 = vadd.f32 0.0, %v5906
        %v5908 = vpop.f32.mrf.mxu0
        %v5909 = vadd.f32 0.0, %v5908
        %v5910 = vpop.f32.mrf.mxu0
        %v5911 = vadd.f32 0.0, %v5910
        %5912 = vmatprep.mubr.bf16.mxu0 %v5649
        %5913 = vmatmul.mubr.bf16.gmra.mxu0 %v5648
        %v5914 = vpop.f32.mrf.mxu0
        %v5915 = vadd.f32 0.0, %v5914
        %v5916 = vpop.f32.mrf.mxu0
        %v5917 = vadd.f32 0.0, %v5916
        %v5918 = vpop.f32.mrf.mxu0
        %v5919 = vadd.f32 0.0, %v5918
        %v5920 = vpop.f32.mrf.mxu0
        %v5921 = vadd.f32 0.0, %v5920
        %5922 = vmatprep.mubr.bf16.mxu0 %v5651
        %5923 = vmatmul.mubr.bf16.gmra.mxu0 %v5650
        %v5924 = vpop.f32.mrf.mxu0
        %v5925 = vadd.f32 0.0, %v5924
        %v5926 = vpop.f32.mrf.mxu0
        %v5927 = vadd.f32 0.0, %v5926
        %v5928 = vpop.f32.mrf.mxu0
        %v5929 = vadd.f32 0.0, %v5928
        %v5930 = vpop.f32.mrf.mxu0
        %v5931 = vadd.f32 0.0, %v5930
        %5932 = vmatprep.mubr.bf16.mxu0 %v5653
        %5933 = vmatmul.mubr.bf16.gmra.mxu0 %v5652
        %v5934 = vpop.f32.mrf.mxu0
        %v5935 = vadd.f32 0.0, %v5934
        %v5936 = vpop.f32.mrf.mxu0
        %v5937 = vadd.f32 0.0, %v5936
        %v5938 = vpop.f32.mrf.mxu0
        %v5939 = vadd.f32 0.0, %v5938
        %v5940 = vpop.f32.mrf.mxu0
        %v5941 = vadd.f32 0.0, %v5940
        %5942 = vmatprep.mubr.bf16.mxu0 %v5655
        %5943 = vmatmul.mubr.bf16.gmra.mxu0 %v5654
        %v5944 = vpop.f32.mrf.mxu0
        %v5945 = vadd.f32 0.0, %v5944
        %v5946 = vpop.f32.mrf.mxu0
        %v5947 = vadd.f32 0.0, %v5946
        %v5948 = vpop.f32.mrf.mxu0
        %v5949 = vadd.f32 0.0, %v5948
        %v5950 = vpop.f32.mrf.mxu0
        %v5951 = vadd.f32 0.0, %v5950
        %5952 = vmatprep.mubr.bf16.mxu0 %v5657
        %5953 = vmatmul.mubr.bf16.gmra.mxu0 %v5656
        %v5954 = vpop.f32.mrf.mxu0
        %v5955 = vadd.f32 0.0, %v5954
        %v5956 = vpop.f32.mrf.mxu0
        %v5957 = vadd.f32 0.0, %v5956
        %v5958 = vpop.f32.mrf.mxu0
        %v5959 = vadd.f32 0.0, %v5958
        %v5960 = vpop.f32.mrf.mxu0
        %v5961 = vadd.f32 0.0, %v5960
        %5962 = vmatprep.mubr.bf16.mxu0 %v5659
        %5963 = vmatmul.mubr.bf16.gmra.mxu0 %v5658
        %v5964 = vpop.f32.mrf.mxu0
        %v5965 = vadd.f32 0.0, %v5964
        %v5966 = vpop.f32.mrf.mxu0
        %v5967 = vadd.f32 0.0, %v5966
        %v5968 = vpop.f32.mrf.mxu0
        %v5969 = vadd.f32 0.0, %v5968
        %v5970 = vpop.f32.mrf.mxu0
        %v5971 = vadd.f32 0.0, %v5970
        %5972 = vmatprep.mubr.bf16.mxu0 %v5661
        %5973 = vmatmul.mubr.bf16.gmra.mxu0 %v5660
        %v5974 = vpop.f32.mrf.mxu0
        %v5975 = vadd.f32 0.0, %v5974
        %v5976 = vpop.f32.mrf.mxu0
        %v5977 = vadd.f32 0.0, %v5976
        %v5978 = vpop.f32.mrf.mxu0
        %v5979 = vadd.f32 0.0, %v5978
        %v5980 = vpop.f32.mrf.mxu0
        %v5981 = vadd.f32 0.0, %v5980
        %5982 = vmatprep.mubr.bf16.mxu0 %v5663
        %5983 = vmatmul.mubr.bf16.gmra.mxu0 %v5662
        %v5984 = vpop.f32.mrf.mxu0
        %v5985 = vadd.f32 0.0, %v5984
        %v5986 = vpop.f32.mrf.mxu0
        %v5987 = vadd.f32 0.0, %v5986
        %v5988 = vpop.f32.mrf.mxu0
        %v5989 = vadd.f32 0.0, %v5988
        %v5990 = vpop.f32.mrf.mxu0
        %v5991 = vadd.f32 0.0, %v5990
        %5992 = vmatprep.mubr.bf16.mxu0 %v5665
        %5993 = vmatmul.mubr.bf16.gmra.mxu0 %v5664
        %v5994 = vpop.f32.mrf.mxu0
        %v5995 = vadd.f32 0.0, %v5994
        %v5996 = vpop.f32.mrf.mxu0
        %v5997 = vadd.f32 0.0, %v5996
        %v5998 = vpop.f32.mrf.mxu0
        %v5999 = vadd.f32 0.0, %v5998
        %v6000 = vpop.f32.mrf.mxu0
        %v6001 = vadd.f32 0.0, %v6000
        %6002 = vmatprep.mubr.bf16.mxu0 %v5667
        %6003 = vmatmul.mubr.bf16.gmra.mxu0 %v5666
        %v6004 = vpop.f32.mrf.mxu0
        %v6005 = vadd.f32 0.0, %v6004
        %v6006 = vpop.f32.mrf.mxu0
        %v6007 = vadd.f32 0.0, %v6006
        %v6008 = vpop.f32.mrf.mxu0
        %v6009 = vadd.f32 0.0, %v6008
        %v6010 = vpop.f32.mrf.mxu0
        %v6011 = vadd.f32 0.0, %v6010
        %6012 = vmatprep.mubr.bf16.mxu0 %v5669
        %6013 = vmatmul.mubr.bf16.gmra.mxu0 %v5668
        %v6014 = vpop.f32.mrf.mxu0
        %v6015 = vadd.f32 0.0, %v6014
        %v6016 = vpop.f32.mrf.mxu0
        %v6017 = vadd.f32 0.0, %v6016
        %v6018 = vpop.f32.mrf.mxu0
        %v6019 = vadd.f32 0.0, %v6018
        %v6020 = vpop.f32.mrf.mxu0
        %v6021 = vadd.f32 0.0, %v6020
        %6022 = vmatprep.mubr.bf16.mxu0 %v5671
        %6023 = vmatmul.mubr.bf16.gmra.mxu0 %v5670
        %v6024 = vpop.f32.mrf.mxu0
        %v6025 = vadd.f32 0.0, %v6024
        %v6026 = vpop.f32.mrf.mxu0
        %v6027 = vadd.f32 0.0, %v6026
        %v6028 = vpop.f32.mrf.mxu0
        %v6029 = vadd.f32 0.0, %v6028
        %v6030 = vpop.f32.mrf.mxu0
        %v6031 = vadd.f32 0.0, %v6030
        %6032 = vmatprep.mubr.bf16.mxu0 %v5673
        %6033 = vmatmul.mubr.bf16.gmra.mxu0 %v5672
        %v6034 = vpop.f32.mrf.mxu0
        %v6035 = vadd.f32 0.0, %v6034
        %v6036 = vpop.f32.mrf.mxu0
        %v6037 = vadd.f32 0.0, %v6036
        %v6038 = vpop.f32.mrf.mxu0
        %v6039 = vadd.f32 0.0, %v6038
        %v6040 = vpop.f32.mrf.mxu0
        %v6041 = vadd.f32 0.0, %v6040
        %6042 = vmatprep.mubr.bf16.mxu0 %v5675
        %6043 = vmatmul.mubr.bf16.gmra.mxu0 %v5674
        %v6044 = vpop.f32.mrf.mxu0
        %v6045 = vadd.f32 0.0, %v6044
        %v6046 = vpop.f32.mrf.mxu0
        %v6047 = vadd.f32 0.0, %v6046
        %v6048 = vpop.f32.mrf.mxu0
        %v6049 = vadd.f32 0.0, %v6048
        %v6050 = vpop.f32.mrf.mxu0
        %v6051 = vadd.f32 0.0, %v6050
        %6052 = vmatprep.mubr.bf16.mxu0 %v5677
        %6053 = vmatmul.mubr.bf16.gmra.mxu0 %v5676
        %v6054 = vpop.f32.mrf.mxu0
        %v6055 = vadd.f32 0.0, %v6054
        %v6056 = vpop.f32.mrf.mxu0
        %v6057 = vadd.f32 0.0, %v6056
        %v6058 = vpop.f32.mrf.mxu0
        %v6059 = vadd.f32 0.0, %v6058
        %v6060 = vpop.f32.mrf.mxu0
        %v6061 = vadd.f32 0.0, %v6060
        %6062 = vdwg.mxu0
        %v6063 = vld [vmem:[#allocation2] sm:$0xff]
        %v6064 = vld [vmem:[#allocation2 + $0x8] sm:$0xff]
        %v6065 = vld [vmem:[#allocation2 + $0x10] sm:$0xff]
        %v6066 = vld [vmem:[#allocation2 + $0x18] sm:$0xff]
        %v6067 = vld [vmem:[#allocation2 + $0x20] sm:$0xff]
        %v6068 = vld [vmem:[#allocation2 + $0x28] sm:$0xff]
        %v6069 = vld [vmem:[#allocation2 + $0x30] sm:$0xff]
        %v6070 = vld [vmem:[#allocation2 + $0x38] sm:$0xff]
        %v6071 = vld [vmem:[#allocation2 + $0x40] sm:$0xff]
        %v6072 = vld [vmem:[#allocation2 + $0x48] sm:$0xff]
        %v6073 = vld [vmem:[#allocation2 + $0x50] sm:$0xff]
        %v6074 = vld [vmem:[#allocation2 + $0x58] sm:$0xff]
        %v6075 = vld [vmem:[#allocation2 + $0x60] sm:$0xff]
        %v6076 = vld [vmem:[#allocation2 + $0x68] sm:$0xff]
        %v6077 = vld [vmem:[#allocation2 + $0x70] sm:$0xff]
        %v6078 = vld [vmem:[#allocation2 + $0x78] sm:$0xff]
        %v6079 = vld [vmem:[#allocation2 + $0x80] sm:$0xff]
        %v6080 = vld [vmem:[#allocation2 + $0x88] sm:$0xff]
        %v6081 = vld [vmem:[#allocation2 + $0x90] sm:$0xff]
        %v6082 = vld [vmem:[#allocation2 + $0x98] sm:$0xff]
        %v6083 = vld [vmem:[#allocation2 + $0xa0] sm:$0xff]
        %v6084 = vld [vmem:[#allocation2 + $0xa8] sm:$0xff]
        %v6085 = vld [vmem:[#allocation2 + $0xb0] sm:$0xff]
        %v6086 = vld [vmem:[#allocation2 + $0xb8] sm:$0xff]
        %v6087 = vld [vmem:[#allocation2 + $0xc0] sm:$0xff]
        %v6088 = vld [vmem:[#allocation2 + $0xc8] sm:$0xff]
        %v6089 = vld [vmem:[#allocation2 + $0xd0] sm:$0xff]
        %v6090 = vld [vmem:[#allocation2 + $0xd8] sm:$0xff]
        %v6091 = vld [vmem:[#allocation2 + $0xe0] sm:$0xff]
        %v6092 = vld [vmem:[#allocation2 + $0xe8] sm:$0xff]
        %v6093 = vld [vmem:[#allocation2 + $0xf0] sm:$0xff]
        %v6094 = vld [vmem:[#allocation2 + $0xf8] sm:$0xff]
        %v6095 = vld [vmem:[#allocation2 + $0x100] sm:$0xff]
        %v6096 = vld [vmem:[#allocation2 + $0x108] sm:$0xff]
        %v6097 = vld [vmem:[#allocation2 + $0x110] sm:$0xff]
        %v6098 = vld [vmem:[#allocation2 + $0x118] sm:$0xff]
        %v6099 = vld [vmem:[#allocation2 + $0x120] sm:$0xff]
        %v6100 = vld [vmem:[#allocation2 + $0x128] sm:$0xff]
        %v6101 = vld [vmem:[#allocation2 + $0x130] sm:$0xff]
        %v6102 = vld [vmem:[#allocation2 + $0x138] sm:$0xff]
        %v6103 = vld [vmem:[#allocation2 + $0x140] sm:$0xff]
        %v6104 = vld [vmem:[#allocation2 + $0x148] sm:$0xff]
        %v6105 = vld [vmem:[#allocation2 + $0x150] sm:$0xff]
        %v6106 = vld [vmem:[#allocation2 + $0x158] sm:$0xff]
        %v6107 = vld [vmem:[#allocation2 + $0x160] sm:$0xff]
        %v6108 = vld [vmem:[#allocation2 + $0x168] sm:$0xff]
        %v6109 = vld [vmem:[#allocation2 + $0x170] sm:$0xff]
        %v6110 = vld [vmem:[#allocation2 + $0x178] sm:$0xff]
        %v6111 = vld [vmem:[#allocation2 + $0x180] sm:$0xff]
        %v6112 = vld [vmem:[#allocation2 + $0x188] sm:$0xff]
        %v6113 = vld [vmem:[#allocation2 + $0x190] sm:$0xff]
        %v6114 = vld [vmem:[#allocation2 + $0x198] sm:$0xff]
        %v6115 = vld [vmem:[#allocation2 + $0x1a0] sm:$0xff]
        %v6116 = vld [vmem:[#allocation2 + $0x1a8] sm:$0xff]
        %v6117 = vld [vmem:[#allocation2 + $0x1b0] sm:$0xff]
        %v6118 = vld [vmem:[#allocation2 + $0x1b8] sm:$0xff]
        %v6119 = vld [vmem:[#allocation2 + $0x1c0] sm:$0xff]
        %v6120 = vld [vmem:[#allocation2 + $0x1c8] sm:$0xff]
        %v6121 = vld [vmem:[#allocation2 + $0x1d0] sm:$0xff]
        %v6122 = vld [vmem:[#allocation2 + $0x1d8] sm:$0xff]
        %v6123 = vld [vmem:[#allocation2 + $0x1e0] sm:$0xff]
        %v6124 = vld [vmem:[#allocation2 + $0x1e8] sm:$0xff]
        %v6125 = vld [vmem:[#allocation2 + $0x1f0] sm:$0xff]
        %v6126 = vld [vmem:[#allocation2 + $0x1f8] sm:$0xff]
        %v6127 = vadd.f32 %v6063, %v5905
        %v6128 = vadd.f32 %v6064, %v5907
        %v6129 = vadd.f32 %v6065, %v5909
        %v6130 = vadd.f32 %v6066, %v5911
        %v6131 = vadd.f32 %v6067, %v5915
        %v6132 = vadd.f32 %v6068, %v5917
        %v6133 = vadd.f32 %v6069, %v5919
        %v6134 = vadd.f32 %v6070, %v5921
        %v6135 = vadd.f32 %v6071, %v5925
        %v6136 = vadd.f32 %v6072, %v5927
        %v6137 = vadd.f32 %v6073, %v5929
        %v6138 = vadd.f32 %v6074, %v5931
        %v6139 = vadd.f32 %v6075, %v5935
        %v6140 = vadd.f32 %v6076, %v5937
        %v6141 = vadd.f32 %v6077, %v5939
        %v6142 = vadd.f32 %v6078, %v5941
        %v6143 = vadd.f32 %v6079, %v5945
        %v6144 = vadd.f32 %v6080, %v5947
        %v6145 = vadd.f32 %v6081, %v5949
        %v6146 = vadd.f32 %v6082, %v5951
        %v6147 = vadd.f32 %v6083, %v5955
        %v6148 = vadd.f32 %v6084, %v5957
        %v6149 = vadd.f32 %v6085, %v5959
        %v6150 = vadd.f32 %v6086, %v5961
        %v6151 = vadd.f32 %v6087, %v5965
        %v6152 = vadd.f32 %v6088, %v5967
        %v6153 = vadd.f32 %v6089, %v5969
        %v6154 = vadd.f32 %v6090, %v5971
        %v6155 = vadd.f32 %v6091, %v5975
        %v6156 = vadd.f32 %v6092, %v5977
        %v6157 = vadd.f32 %v6093, %v5979
        %v6158 = vadd.f32 %v6094, %v5981
        %v6159 = vadd.f32 %v6095, %v5985
        %v6160 = vadd.f32 %v6096, %v5987
        %v6161 = vadd.f32 %v6097, %v5989
        %v6162 = vadd.f32 %v6098, %v5991
        %v6163 = vadd.f32 %v6099, %v5995
        %v6164 = vadd.f32 %v6100, %v5997
        %v6165 = vadd.f32 %v6101, %v5999
        %v6166 = vadd.f32 %v6102, %v6001
        %v6167 = vadd.f32 %v6103, %v6005
        %v6168 = vadd.f32 %v6104, %v6007
        %v6169 = vadd.f32 %v6105, %v6009
        %v6170 = vadd.f32 %v6106, %v6011
        %v6171 = vadd.f32 %v6107, %v6015
        %v6172 = vadd.f32 %v6108, %v6017
        %v6173 = vadd.f32 %v6109, %v6019
        %v6174 = vadd.f32 %v6110, %v6021
        %v6175 = vadd.f32 %v6111, %v6025
        %v6176 = vadd.f32 %v6112, %v6027
        %v6177 = vadd.f32 %v6113, %v6029
        %v6178 = vadd.f32 %v6114, %v6031
        %v6179 = vadd.f32 %v6115, %v6035
        %v6180 = vadd.f32 %v6116, %v6037
        %v6181 = vadd.f32 %v6117, %v6039
        %v6182 = vadd.f32 %v6118, %v6041
        %v6183 = vadd.f32 %v6119, %v6045
        %v6184 = vadd.f32 %v6120, %v6047
        %v6185 = vadd.f32 %v6121, %v6049
        %v6186 = vadd.f32 %v6122, %v6051
        %v6187 = vadd.f32 %v6123, %v6055
        %v6188 = vadd.f32 %v6124, %v6057
        %v6189 = vadd.f32 %v6125, %v6059
        %v6190 = vadd.f32 %v6126, %v6061
        %6191 = vst [vmem:[#allocation2] sm:$0xff] %v6127
        %6192 = vst [vmem:[#allocation2 + $0x8] sm:$0xff] %v6128
        %6193 = vst [vmem:[#allocation2 + $0x10] sm:$0xff] %v6129
        %6194 = vst [vmem:[#allocation2 + $0x18] sm:$0xff] %v6130
        %6195 = vst [vmem:[#allocation2 + $0x20] sm:$0xff] %v6131
        %6196 = vst [vmem:[#allocation2 + $0x28] sm:$0xff] %v6132
        %6197 = vst [vmem:[#allocation2 + $0x30] sm:$0xff] %v6133
        %6198 = vst [vmem:[#allocation2 + $0x38] sm:$0xff] %v6134
        %6199 = vst [vmem:[#allocation2 + $0x40] sm:$0xff] %v6135
        %6200 = vst [vmem:[#allocation2 + $0x48] sm:$0xff] %v6136
        %6201 = vst [vmem:[#allocation2 + $0x50] sm:$0xff] %v6137
        %6202 = vst [vmem:[#allocation2 + $0x58] sm:$0xff] %v6138
        %6203 = vst [vmem:[#allocation2 + $0x60] sm:$0xff] %v6139
        %6204 = vst [vmem:[#allocation2 + $0x68] sm:$0xff] %v6140
        %6205 = vst [vmem:[#allocation2 + $0x70] sm:$0xff] %v6141
        %6206 = vst [vmem:[#allocation2 + $0x78] sm:$0xff] %v6142
        %6207 = vst [vmem:[#allocation2 + $0x80] sm:$0xff] %v6143
        %6208 = vst [vmem:[#allocation2 + $0x88] sm:$0xff] %v6144
        %6209 = vst [vmem:[#allocation2 + $0x90] sm:$0xff] %v6145
        %6210 = vst [vmem:[#allocation2 + $0x98] sm:$0xff] %v6146
        %6211 = vst [vmem:[#allocation2 + $0xa0] sm:$0xff] %v6147
        %6212 = vst [vmem:[#allocation2 + $0xa8] sm:$0xff] %v6148
        %6213 = vst [vmem:[#allocation2 + $0xb0] sm:$0xff] %v6149
        %6214 = vst [vmem:[#allocation2 + $0xb8] sm:$0xff] %v6150
        %6215 = vst [vmem:[#allocation2 + $0xc0] sm:$0xff] %v6151
        %6216 = vst [vmem:[#allocation2 + $0xc8] sm:$0xff] %v6152
        %6217 = vst [vmem:[#allocation2 + $0xd0] sm:$0xff] %v6153
        %6218 = vst [vmem:[#allocation2 + $0xd8] sm:$0xff] %v6154
        %6219 = vst [vmem:[#allocation2 + $0xe0] sm:$0xff] %v6155
        %6220 = vst [vmem:[#allocation2 + $0xe8] sm:$0xff] %v6156
        %6221 = vst [vmem:[#allocation2 + $0xf0] sm:$0xff] %v6157
        %6222 = vst [vmem:[#allocation2 + $0xf8] sm:$0xff] %v6158
        %6223 = vst [vmem:[#allocation2 + $0x100] sm:$0xff] %v6159
        %6224 = vst [vmem:[#allocation2 + $0x108] sm:$0xff] %v6160
        %6225 = vst [vmem:[#allocation2 + $0x110] sm:$0xff] %v6161
        %6226 = vst [vmem:[#allocation2 + $0x118] sm:$0xff] %v6162
        %6227 = vst [vmem:[#allocation2 + $0x120] sm:$0xff] %v6163
        %6228 = vst [vmem:[#allocation2 + $0x128] sm:$0xff] %v6164
        %6229 = vst [vmem:[#allocation2 + $0x130] sm:$0xff] %v6165
        %6230 = vst [vmem:[#allocation2 + $0x138] sm:$0xff] %v6166
        %6231 = vst [vmem:[#allocation2 + $0x140] sm:$0xff] %v6167
        %6232 = vst [vmem:[#allocation2 + $0x148] sm:$0xff] %v6168
        %6233 = vst [vmem:[#allocation2 + $0x150] sm:$0xff] %v6169
        %6234 = vst [vmem:[#allocation2 + $0x158] sm:$0xff] %v6170
        %6235 = vst [vmem:[#allocation2 + $0x160] sm:$0xff] %v6171
        %6236 = vst [vmem:[#allocation2 + $0x168] sm:$0xff] %v6172
        %6237 = vst [vmem:[#allocation2 + $0x170] sm:$0xff] %v6173
        %6238 = vst [vmem:[#allocation2 + $0x178] sm:$0xff] %v6174
        %6239 = vst [vmem:[#allocation2 + $0x180] sm:$0xff] %v6175
        %6240 = vst [vmem:[#allocation2 + $0x188] sm:$0xff] %v6176
        %6241 = vst [vmem:[#allocation2 + $0x190] sm:$0xff] %v6177
        %6242 = vst [vmem:[#allocation2 + $0x198] sm:$0xff] %v6178
        %6243 = vst [vmem:[#allocation2 + $0x1a0] sm:$0xff] %v6179
        %6244 = vst [vmem:[#allocation2 + $0x1a8] sm:$0xff] %v6180
        %6245 = vst [vmem:[#allocation2 + $0x1b0] sm:$0xff] %v6181
        %6246 = vst [vmem:[#allocation2 + $0x1b8] sm:$0xff] %v6182
        %6247 = vst [vmem:[#allocation2 + $0x1c0] sm:$0xff] %v6183
        %6248 = vst [vmem:[#allocation2 + $0x1c8] sm:$0xff] %v6184
        %6249 = vst [vmem:[#allocation2 + $0x1d0] sm:$0xff] %v6185
        %6250 = vst [vmem:[#allocation2 + $0x1d8] sm:$0xff] %v6186
        %6251 = vst [vmem:[#allocation2 + $0x1e0] sm:$0xff] %v6187
        %6252 = vst [vmem:[#allocation2 + $0x1e8] sm:$0xff] %v6188
        %6253 = vst [vmem:[#allocation2 + $0x1f0] sm:$0xff] %v6189
        %6254 = vst [vmem:[#allocation2 + $0x1f8] sm:$0xff] %v6190
        %v6255 = vld [vmem:[#allocation3 + $0x20] sm:$0xff]
        %v6256 = vld [vmem:[#allocation3 + $0x28] sm:$0xff]
        %v6257 = vld [vmem:[#allocation3 + $0x30] sm:$0xff]
        %v6258 = vld [vmem:[#allocation3 + $0x38] sm:$0xff]
        %v6259 = vld [vmem:[#allocation3 + $0x40] sm:$0xff]
        %v6260 = vld [vmem:[#allocation3 + $0x48] sm:$0xff]
        %v6261 = vld [vmem:[#allocation3 + $0x50] sm:$0xff]
        %v6262 = vld [vmem:[#allocation3 + $0x58] sm:$0xff]
        %v6263 = vld [vmem:[#allocation3 + $0x60] sm:$0xff]
        %v6264 = vld [vmem:[#allocation3 + $0x68] sm:$0xff]
        %v6265 = vld [vmem:[#allocation3 + $0x70] sm:$0xff]
        %v6266 = vld [vmem:[#allocation3 + $0x78] sm:$0xff]
        %v6267 = vld [vmem:[#allocation3 + $0x80] sm:$0xff]
        %v6268 = vld [vmem:[#allocation3 + $0x88] sm:$0xff]
        %v6269 = vld [vmem:[#allocation3 + $0x90] sm:$0xff]
        %v6270 = vld [vmem:[#allocation3 + $0x98] sm:$0xff]
        %v6271 = vld [vmem:[#allocation3 + $0xa0] sm:$0xff]
        %v6272 = vld [vmem:[#allocation3 + $0xa8] sm:$0xff]
        %v6273 = vld [vmem:[#allocation3 + $0xb0] sm:$0xff]
        %v6274 = vld [vmem:[#allocation3 + $0xb8] sm:$0xff]
        %v6275 = vld [vmem:[#allocation3 + $0xc0] sm:$0xff]
        %v6276 = vld [vmem:[#allocation3 + $0xc8] sm:$0xff]
        %v6277 = vld [vmem:[#allocation3 + $0xd0] sm:$0xff]
        %v6278 = vld [vmem:[#allocation3 + $0xd8] sm:$0xff]
        %v6279 = vld [vmem:[#allocation3 + $0xe0] sm:$0xff]
        %v6280 = vld [vmem:[#allocation3 + $0xe8] sm:$0xff]
        %v6281 = vld [vmem:[#allocation3 + $0xf0] sm:$0xff]
        %v6282 = vld [vmem:[#allocation3 + $0xf8] sm:$0xff]
        %v6283 = vld [vmem:[#allocation3 + $0x100] sm:$0xff]
        %v6284 = vld [vmem:[#allocation3 + $0x108] sm:$0xff]
        %v6285 = vld [vmem:[#allocation3 + $0x110] sm:$0xff]
        %v6286 = vld [vmem:[#allocation3 + $0x118] sm:$0xff]
        %s6287 = scalar_lea.vmem %s219, 1280
        %v6288 = vld [vmem:[%s6287] sm:$0xff]
        %v6289 = vld [vmem:[%s6287 + $0x8] sm:$0xff]
        %v6290 = vld [vmem:[%s6287 + $0x10] sm:$0xff]
        %v6291 = vld [vmem:[%s6287 + $0x18] sm:$0xff]
        %v6292 = vld [vmem:[%s6287 + $0x20] sm:$0xff]
        %v6293 = vld [vmem:[%s6287 + $0x28] sm:$0xff]
        %v6294 = vld [vmem:[%s6287 + $0x30] sm:$0xff]
        %v6295 = vld [vmem:[%s6287 + $0x38] sm:$0xff]
        %v6296 = vld [vmem:[%s6287 + $0x40] sm:$0xff]
        %v6297 = vld [vmem:[%s6287 + $0x48] sm:$0xff]
        %v6298 = vld [vmem:[%s6287 + $0x50] sm:$0xff]
        %v6299 = vld [vmem:[%s6287 + $0x58] sm:$0xff]
        %v6300 = vld [vmem:[%s6287 + $0x60] sm:$0xff]
        %v6301 = vld [vmem:[%s6287 + $0x68] sm:$0xff]
        %v6302 = vld [vmem:[%s6287 + $0x70] sm:$0xff]
        %v6303 = vld [vmem:[%s6287 + $0x78] sm:$0xff]
        %v6304 = vld [vmem:[%s6287 + $0x80] sm:$0xff]
        %v6305 = vld [vmem:[%s6287 + $0x88] sm:$0xff]
        %v6306 = vld [vmem:[%s6287 + $0x90] sm:$0xff]
        %v6307 = vld [vmem:[%s6287 + $0x98] sm:$0xff]
        %v6308 = vld [vmem:[%s6287 + $0xa0] sm:$0xff]
        %v6309 = vld [vmem:[%s6287 + $0xa8] sm:$0xff]
        %v6310 = vld [vmem:[%s6287 + $0xb0] sm:$0xff]
        %v6311 = vld [vmem:[%s6287 + $0xb8] sm:$0xff]
        %v6312 = vld [vmem:[%s6287 + $0xc0] sm:$0xff]
        %v6313 = vld [vmem:[%s6287 + $0xc8] sm:$0xff]
        %v6314 = vld [vmem:[%s6287 + $0xd0] sm:$0xff]
        %v6315 = vld [vmem:[%s6287 + $0xd8] sm:$0xff]
        %v6316 = vld [vmem:[%s6287 + $0xe0] sm:$0xff]
        %v6317 = vld [vmem:[%s6287 + $0xe8] sm:$0xff]
        %v6318 = vld [vmem:[%s6287 + $0xf0] sm:$0xff]
        %v6319 = vld [vmem:[%s6287 + $0xf8] sm:$0xff]
        %v6352 = vunpack.c.l.b16 %v6255
        %v6353 = vunpack.c.h.b16 %v6255
        %v6354 = vunpack.c.l.b16 %v6256
        %v6355 = vunpack.c.h.b16 %v6256
        %v6356 = vunpack.c.l.b16 %v6257
        %v6357 = vunpack.c.h.b16 %v6257
        %v6358 = vunpack.c.l.b16 %v6258
        %v6359 = vunpack.c.h.b16 %v6258
        %v6360 = vunpack.c.l.b16 %v6259
        %v6361 = vunpack.c.h.b16 %v6259
        %v6362 = vunpack.c.l.b16 %v6260
        %v6363 = vunpack.c.h.b16 %v6260
        %v6364 = vunpack.c.l.b16 %v6261
        %v6365 = vunpack.c.h.b16 %v6261
        %v6366 = vunpack.c.l.b16 %v6262
        %v6367 = vunpack.c.h.b16 %v6262
        %v6368 = vunpack.c.l.b16 %v6263
        %v6369 = vunpack.c.h.b16 %v6263
        %v6370 = vunpack.c.l.b16 %v6264
        %v6371 = vunpack.c.h.b16 %v6264
        %v6372 = vunpack.c.l.b16 %v6265
        %v6373 = vunpack.c.h.b16 %v6265
        %v6374 = vunpack.c.l.b16 %v6266
        %v6375 = vunpack.c.h.b16 %v6266
        %v6376 = vunpack.c.l.b16 %v6267
        %v6377 = vunpack.c.h.b16 %v6267
        %v6378 = vunpack.c.l.b16 %v6268
        %v6379 = vunpack.c.h.b16 %v6268
        %v6380 = vunpack.c.l.b16 %v6269
        %v6381 = vunpack.c.h.b16 %v6269
        %v6382 = vunpack.c.l.b16 %v6270
        %v6383 = vunpack.c.h.b16 %v6270
        %v6384 = vunpack.c.l.b16 %v6271
        %v6385 = vunpack.c.h.b16 %v6271
        %v6386 = vunpack.c.l.b16 %v6272
        %v6387 = vunpack.c.h.b16 %v6272
        %v6388 = vunpack.c.l.b16 %v6273
        %v6389 = vunpack.c.h.b16 %v6273
        %v6390 = vunpack.c.l.b16 %v6274
        %v6391 = vunpack.c.h.b16 %v6274
        %v6392 = vunpack.c.l.b16 %v6275
        %v6393 = vunpack.c.h.b16 %v6275
        %v6394 = vunpack.c.l.b16 %v6276
        %v6395 = vunpack.c.h.b16 %v6276
        %v6396 = vunpack.c.l.b16 %v6277
        %v6397 = vunpack.c.h.b16 %v6277
        %v6398 = vunpack.c.l.b16 %v6278
        %v6399 = vunpack.c.h.b16 %v6278
        %v6400 = vunpack.c.l.b16 %v6279
        %v6401 = vunpack.c.h.b16 %v6279
        %v6402 = vunpack.c.l.b16 %v6280
        %v6403 = vunpack.c.h.b16 %v6280
        %v6404 = vunpack.c.l.b16 %v6281
        %v6405 = vunpack.c.h.b16 %v6281
        %v6406 = vunpack.c.l.b16 %v6282
        %v6407 = vunpack.c.h.b16 %v6282
        %v6408 = vunpack.c.l.b16 %v6283
        %v6409 = vunpack.c.h.b16 %v6283
        %v6410 = vunpack.c.l.b16 %v6284
        %v6411 = vunpack.c.h.b16 %v6284
        %v6412 = vunpack.c.l.b16 %v6285
        %v6413 = vunpack.c.h.b16 %v6285
        %v6414 = vunpack.c.l.b16 %v6286
        %v6415 = vunpack.c.h.b16 %v6286
        %v6416 = vpack.c.b16 %v6354, %v6352
        %v6417 = vpack.c.b16 %v6355, %v6353
        %v6418 = vpack.c.b16 %v6358, %v6356
        %v6419 = vpack.c.b16 %v6359, %v6357
        %v6420 = vpack.c.b16 %v6362, %v6360
        %v6421 = vpack.c.b16 %v6363, %v6361
        %v6422 = vpack.c.b16 %v6366, %v6364
        %v6423 = vpack.c.b16 %v6367, %v6365
        %v6424 = vpack.c.b16 %v6370, %v6368
        %v6425 = vpack.c.b16 %v6371, %v6369
        %v6426 = vpack.c.b16 %v6374, %v6372
        %v6427 = vpack.c.b16 %v6375, %v6373
        %v6428 = vpack.c.b16 %v6378, %v6376
        %v6429 = vpack.c.b16 %v6379, %v6377
        %v6430 = vpack.c.b16 %v6382, %v6380
        %v6431 = vpack.c.b16 %v6383, %v6381
        %v6432 = vpack.c.b16 %v6386, %v6384
        %v6433 = vpack.c.b16 %v6387, %v6385
        %v6434 = vpack.c.b16 %v6390, %v6388
        %v6435 = vpack.c.b16 %v6391, %v6389
        %v6436 = vpack.c.b16 %v6394, %v6392
        %v6437 = vpack.c.b16 %v6395, %v6393
        %v6438 = vpack.c.b16 %v6398, %v6396
        %v6439 = vpack.c.b16 %v6399, %v6397
        %v6440 = vpack.c.b16 %v6402, %v6400
        %v6441 = vpack.c.b16 %v6403, %v6401
        %v6442 = vpack.c.b16 %v6406, %v6404
        %v6443 = vpack.c.b16 %v6407, %v6405
        %v6444 = vpack.c.b16 %v6410, %v6408
        %v6445 = vpack.c.b16 %v6411, %v6409
        %v6446 = vpack.c.b16 %v6414, %v6412
        %v6447 = vpack.c.b16 %v6415, %v6413
        %v6512 = vunpack.c.l.b16 %v6288
        %v6513 = vunpack.c.h.b16 %v6288
        %v6514 = vunpack.c.l.b16 %v6289
        %v6515 = vunpack.c.h.b16 %v6289
        %v6516 = vunpack.c.l.b16 %v6290
        %v6517 = vunpack.c.h.b16 %v6290
        %v6518 = vunpack.c.l.b16 %v6291
        %v6519 = vunpack.c.h.b16 %v6291
        %v6520 = vunpack.c.l.b16 %v6292
        %v6521 = vunpack.c.h.b16 %v6292
        %v6522 = vunpack.c.l.b16 %v6293
        %v6523 = vunpack.c.h.b16 %v6293
        %v6524 = vunpack.c.l.b16 %v6294
        %v6525 = vunpack.c.h.b16 %v6294
        %v6526 = vunpack.c.l.b16 %v6295
        %v6527 = vunpack.c.h.b16 %v6295
        %v6528 = vunpack.c.l.b16 %v6296
        %v6529 = vunpack.c.h.b16 %v6296
        %v6530 = vunpack.c.l.b16 %v6297
        %v6531 = vunpack.c.h.b16 %v6297
        %v6532 = vunpack.c.l.b16 %v6298
        %v6533 = vunpack.c.h.b16 %v6298
        %v6534 = vunpack.c.l.b16 %v6299
        %v6535 = vunpack.c.h.b16 %v6299
        %v6536 = vunpack.c.l.b16 %v6300
        %v6537 = vunpack.c.h.b16 %v6300
        %v6538 = vunpack.c.l.b16 %v6301
        %v6539 = vunpack.c.h.b16 %v6301
        %v6540 = vunpack.c.l.b16 %v6302
        %v6541 = vunpack.c.h.b16 %v6302
        %v6542 = vunpack.c.l.b16 %v6303
        %v6543 = vunpack.c.h.b16 %v6303
        %v6544 = vunpack.c.l.b16 %v6304
        %v6545 = vunpack.c.h.b16 %v6304
        %v6546 = vunpack.c.l.b16 %v6305
        %v6547 = vunpack.c.h.b16 %v6305
        %v6548 = vunpack.c.l.b16 %v6306
        %v6549 = vunpack.c.h.b16 %v6306
        %v6550 = vunpack.c.l.b16 %v6307
        %v6551 = vunpack.c.h.b16 %v6307
        %v6552 = vunpack.c.l.b16 %v6308
        %v6553 = vunpack.c.h.b16 %v6308
        %v6554 = vunpack.c.l.b16 %v6309
        %v6555 = vunpack.c.h.b16 %v6309
        %v6556 = vunpack.c.l.b16 %v6310
        %v6557 = vunpack.c.h.b16 %v6310
        %v6558 = vunpack.c.l.b16 %v6311
        %v6559 = vunpack.c.h.b16 %v6311
        %v6560 = vunpack.c.l.b16 %v6312
        %v6561 = vunpack.c.h.b16 %v6312
        %v6562 = vunpack.c.l.b16 %v6313
        %v6563 = vunpack.c.h.b16 %v6313
        %v6564 = vunpack.c.l.b16 %v6314
        %v6565 = vunpack.c.h.b16 %v6314
        %v6566 = vunpack.c.l.b16 %v6315
        %v6567 = vunpack.c.h.b16 %v6315
        %v6568 = vunpack.c.l.b16 %v6316
        %v6569 = vunpack.c.h.b16 %v6316
        %v6570 = vunpack.c.l.b16 %v6317
        %v6571 = vunpack.c.h.b16 %v6317
        %v6572 = vunpack.c.l.b16 %v6318
        %v6573 = vunpack.c.h.b16 %v6318
        %v6574 = vunpack.c.l.b16 %v6319
        %v6575 = vunpack.c.h.b16 %v6319
        %v6576 = vpack.c.b16 %v6514, %v6512
        %v6577 = vpack.c.b16 %v6515, %v6513
        %v6578 = vpack.c.b16 %v6518, %v6516
        %v6579 = vpack.c.b16 %v6519, %v6517
        %v6580 = vpack.c.b16 %v6522, %v6520
        %v6581 = vpack.c.b16 %v6523, %v6521
        %v6582 = vpack.c.b16 %v6526, %v6524
        %v6583 = vpack.c.b16 %v6527, %v6525
        %v6584 = vpack.c.b16 %v6530, %v6528
        %v6585 = vpack.c.b16 %v6531, %v6529
        %v6586 = vpack.c.b16 %v6534, %v6532
        %v6587 = vpack.c.b16 %v6535, %v6533
        %v6588 = vpack.c.b16 %v6538, %v6536
        %v6589 = vpack.c.b16 %v6539, %v6537
        %v6590 = vpack.c.b16 %v6542, %v6540
        %v6591 = vpack.c.b16 %v6543, %v6541
        %v6592 = vpack.c.b16 %v6546, %v6544
        %v6593 = vpack.c.b16 %v6547, %v6545
        %v6594 = vpack.c.b16 %v6550, %v6548
        %v6595 = vpack.c.b16 %v6551, %v6549
        %v6596 = vpack.c.b16 %v6554, %v6552
        %v6597 = vpack.c.b16 %v6555, %v6553
        %v6598 = vpack.c.b16 %v6558, %v6556
        %v6599 = vpack.c.b16 %v6559, %v6557
        %v6600 = vpack.c.b16 %v6562, %v6560
        %v6601 = vpack.c.b16 %v6563, %v6561
        %v6602 = vpack.c.b16 %v6566, %v6564
        %v6603 = vpack.c.b16 %v6567, %v6565
        %v6604 = vpack.c.b16 %v6570, %v6568
        %v6605 = vpack.c.b16 %v6571, %v6569
        %v6606 = vpack.c.b16 %v6574, %v6572
        %v6607 = vpack.c.b16 %v6575, %v6573
        %6640 = vmatprep.subr.bf16.mxu0 %v6591
        %6641 = vmatpush1.bf16.msra.mxu0 %v6590
        %6642 = vmatprep.subr.bf16.mxu0 %v6589
        %6643 = vmatpush1.bf16.msra.mxu0 %v6588
        %6644 = vmatprep.subr.bf16.mxu0 %v6587
        %6645 = vmatpush1.bf16.msra.mxu0 %v6586
        %6646 = vmatprep.subr.bf16.mxu0 %v6585
        %6647 = vmatpush1.bf16.msra.mxu0 %v6584
        %6648 = vmatprep.subr.bf16.mxu0 %v6583
        %6649 = vmatpush1.bf16.msra.mxu0 %v6582
        %6650 = vmatprep.subr.bf16.mxu0 %v6581
        %6651 = vmatpush1.bf16.msra.mxu0 %v6580
        %6652 = vmatprep.subr.bf16.mxu0 %v6579
        %6653 = vmatpush1.bf16.msra.mxu0 %v6578
        %6654 = vmatprep.subr.bf16.mxu0 %v6577
        %6655 = vmatpush1.bf16.msra.mxu0 %v6576
        %6656 = vmatprep.subr.bf16.mxu0 %v6607
        %6657 = vmatpush2.bf16.msra.mxu0 %v6606
        %6658 = vmatprep.subr.bf16.mxu0 %v6605
        %6659 = vmatpush2.bf16.msra.mxu0 %v6604
        %6660 = vmatprep.subr.bf16.mxu0 %v6603
        %6661 = vmatpush2.bf16.msra.mxu0 %v6602
        %6662 = vmatprep.subr.bf16.mxu0 %v6601
        %6663 = vmatpush2.bf16.msra.mxu0 %v6600
        %6664 = vmatprep.subr.bf16.mxu0 %v6599
        %6665 = vmatpush2.bf16.msra.mxu0 %v6598
        %6666 = vmatprep.subr.bf16.mxu0 %v6597
        %6667 = vmatpush2.bf16.msra.mxu0 %v6596
        %6668 = vmatprep.subr.bf16.mxu0 %v6595
        %6669 = vmatpush2.bf16.msra.mxu0 %v6594
        %6670 = vmatprep.subr.bf16.mxu0 %v6593
        %6671 = vmatpush2.bf16.msra.mxu0 %v6592
        %6672 = vmatprep.mubr.bf16.mxu0 %v6417
        %6673 = vmatmul.mubr.bf16.gmra.mxu0 %v6416
        %v6674 = vpop.f32.mrf.mxu0
        %v6675 = vadd.f32 0.0, %v6674
        %v6676 = vpop.f32.mrf.mxu0
        %v6677 = vadd.f32 0.0, %v6676
        %v6678 = vpop.f32.mrf.mxu0
        %v6679 = vadd.f32 0.0, %v6678
        %v6680 = vpop.f32.mrf.mxu0
        %v6681 = vadd.f32 0.0, %v6680
        %6682 = vmatprep.mubr.bf16.mxu0 %v6419
        %6683 = vmatmul.mubr.bf16.gmra.mxu0 %v6418
        %v6684 = vpop.f32.mrf.mxu0
        %v6685 = vadd.f32 0.0, %v6684
        %v6686 = vpop.f32.mrf.mxu0
        %v6687 = vadd.f32 0.0, %v6686
        %v6688 = vpop.f32.mrf.mxu0
        %v6689 = vadd.f32 0.0, %v6688
        %v6690 = vpop.f32.mrf.mxu0
        %v6691 = vadd.f32 0.0, %v6690
        %6692 = vmatprep.mubr.bf16.mxu0 %v6421
        %6693 = vmatmul.mubr.bf16.gmra.mxu0 %v6420
        %v6694 = vpop.f32.mrf.mxu0
        %v6695 = vadd.f32 0.0, %v6694
        %v6696 = vpop.f32.mrf.mxu0
        %v6697 = vadd.f32 0.0, %v6696
        %v6698 = vpop.f32.mrf.mxu0
        %v6699 = vadd.f32 0.0, %v6698
        %v6700 = vpop.f32.mrf.mxu0
        %v6701 = vadd.f32 0.0, %v6700
        %6702 = vmatprep.mubr.bf16.mxu0 %v6423
        %6703 = vmatmul.mubr.bf16.gmra.mxu0 %v6422
        %v6704 = vpop.f32.mrf.mxu0
        %v6705 = vadd.f32 0.0, %v6704
        %v6706 = vpop.f32.mrf.mxu0
        %v6707 = vadd.f32 0.0, %v6706
        %v6708 = vpop.f32.mrf.mxu0
        %v6709 = vadd.f32 0.0, %v6708
        %v6710 = vpop.f32.mrf.mxu0
        %v6711 = vadd.f32 0.0, %v6710
        %6712 = vmatprep.mubr.bf16.mxu0 %v6425
        %6713 = vmatmul.mubr.bf16.gmra.mxu0 %v6424
        %v6714 = vpop.f32.mrf.mxu0
        %v6715 = vadd.f32 0.0, %v6714
        %v6716 = vpop.f32.mrf.mxu0
        %v6717 = vadd.f32 0.0, %v6716
        %v6718 = vpop.f32.mrf.mxu0
        %v6719 = vadd.f32 0.0, %v6718
        %v6720 = vpop.f32.mrf.mxu0
        %v6721 = vadd.f32 0.0, %v6720
        %6722 = vmatprep.mubr.bf16.mxu0 %v6427
        %6723 = vmatmul.mubr.bf16.gmra.mxu0 %v6426
        %v6724 = vpop.f32.mrf.mxu0
        %v6725 = vadd.f32 0.0, %v6724
        %v6726 = vpop.f32.mrf.mxu0
        %v6727 = vadd.f32 0.0, %v6726
        %v6728 = vpop.f32.mrf.mxu0
        %v6729 = vadd.f32 0.0, %v6728
        %v6730 = vpop.f32.mrf.mxu0
        %v6731 = vadd.f32 0.0, %v6730
        %6732 = vmatprep.mubr.bf16.mxu0 %v6429
        %6733 = vmatmul.mubr.bf16.gmra.mxu0 %v6428
        %v6734 = vpop.f32.mrf.mxu0
        %v6735 = vadd.f32 0.0, %v6734
        %v6736 = vpop.f32.mrf.mxu0
        %v6737 = vadd.f32 0.0, %v6736
        %v6738 = vpop.f32.mrf.mxu0
        %v6739 = vadd.f32 0.0, %v6738
        %v6740 = vpop.f32.mrf.mxu0
        %v6741 = vadd.f32 0.0, %v6740
        %6742 = vmatprep.mubr.bf16.mxu0 %v6431
        %6743 = vmatmul.mubr.bf16.gmra.mxu0 %v6430
        %v6744 = vpop.f32.mrf.mxu0
        %v6745 = vadd.f32 0.0, %v6744
        %v6746 = vpop.f32.mrf.mxu0
        %v6747 = vadd.f32 0.0, %v6746
        %v6748 = vpop.f32.mrf.mxu0
        %v6749 = vadd.f32 0.0, %v6748
        %v6750 = vpop.f32.mrf.mxu0
        %v6751 = vadd.f32 0.0, %v6750
        %6752 = vmatprep.mubr.bf16.mxu0 %v6433
        %6753 = vmatmul.mubr.bf16.gmra.mxu0 %v6432
        %v6754 = vpop.f32.mrf.mxu0
        %v6755 = vadd.f32 0.0, %v6754
        %v6756 = vpop.f32.mrf.mxu0
        %v6757 = vadd.f32 0.0, %v6756
        %v6758 = vpop.f32.mrf.mxu0
        %v6759 = vadd.f32 0.0, %v6758
        %v6760 = vpop.f32.mrf.mxu0
        %v6761 = vadd.f32 0.0, %v6760
        %6762 = vmatprep.mubr.bf16.mxu0 %v6435
        %6763 = vmatmul.mubr.bf16.gmra.mxu0 %v6434
        %v6764 = vpop.f32.mrf.mxu0
        %v6765 = vadd.f32 0.0, %v6764
        %v6766 = vpop.f32.mrf.mxu0
        %v6767 = vadd.f32 0.0, %v6766
        %v6768 = vpop.f32.mrf.mxu0
        %v6769 = vadd.f32 0.0, %v6768
        %v6770 = vpop.f32.mrf.mxu0
        %v6771 = vadd.f32 0.0, %v6770
        %6772 = vmatprep.mubr.bf16.mxu0 %v6437
        %6773 = vmatmul.mubr.bf16.gmra.mxu0 %v6436
        %v6774 = vpop.f32.mrf.mxu0
        %v6775 = vadd.f32 0.0, %v6774
        %v6776 = vpop.f32.mrf.mxu0
        %v6777 = vadd.f32 0.0, %v6776
        %v6778 = vpop.f32.mrf.mxu0
        %v6779 = vadd.f32 0.0, %v6778
        %v6780 = vpop.f32.mrf.mxu0
        %v6781 = vadd.f32 0.0, %v6780
        %6782 = vmatprep.mubr.bf16.mxu0 %v6439
        %6783 = vmatmul.mubr.bf16.gmra.mxu0 %v6438
        %v6784 = vpop.f32.mrf.mxu0
        %v6785 = vadd.f32 0.0, %v6784
        %v6786 = vpop.f32.mrf.mxu0
        %v6787 = vadd.f32 0.0, %v6786
        %v6788 = vpop.f32.mrf.mxu0
        %v6789 = vadd.f32 0.0, %v6788
        %v6790 = vpop.f32.mrf.mxu0
        %v6791 = vadd.f32 0.0, %v6790
        %6792 = vmatprep.mubr.bf16.mxu0 %v6441
        %6793 = vmatmul.mubr.bf16.gmra.mxu0 %v6440
        %v6794 = vpop.f32.mrf.mxu0
        %v6795 = vadd.f32 0.0, %v6794
        %v6796 = vpop.f32.mrf.mxu0
        %v6797 = vadd.f32 0.0, %v6796
        %v6798 = vpop.f32.mrf.mxu0
        %v6799 = vadd.f32 0.0, %v6798
        %v6800 = vpop.f32.mrf.mxu0
        %v6801 = vadd.f32 0.0, %v6800
        %6802 = vmatprep.mubr.bf16.mxu0 %v6443
        %6803 = vmatmul.mubr.bf16.gmra.mxu0 %v6442
        %v6804 = vpop.f32.mrf.mxu0
        %v6805 = vadd.f32 0.0, %v6804
        %v6806 = vpop.f32.mrf.mxu0
        %v6807 = vadd.f32 0.0, %v6806
        %v6808 = vpop.f32.mrf.mxu0
        %v6809 = vadd.f32 0.0, %v6808
        %v6810 = vpop.f32.mrf.mxu0
        %v6811 = vadd.f32 0.0, %v6810
        %6812 = vmatprep.mubr.bf16.mxu0 %v6445
        %6813 = vmatmul.mubr.bf16.gmra.mxu0 %v6444
        %v6814 = vpop.f32.mrf.mxu0
        %v6815 = vadd.f32 0.0, %v6814
        %v6816 = vpop.f32.mrf.mxu0
        %v6817 = vadd.f32 0.0, %v6816
        %v6818 = vpop.f32.mrf.mxu0
        %v6819 = vadd.f32 0.0, %v6818
        %v6820 = vpop.f32.mrf.mxu0
        %v6821 = vadd.f32 0.0, %v6820
        %6822 = vmatprep.mubr.bf16.mxu0 %v6447
        %6823 = vmatmul.mubr.bf16.gmra.mxu0 %v6446
        %v6824 = vpop.f32.mrf.mxu0
        %v6825 = vadd.f32 0.0, %v6824
        %v6826 = vpop.f32.mrf.mxu0
        %v6827 = vadd.f32 0.0, %v6826
        %v6828 = vpop.f32.mrf.mxu0
        %v6829 = vadd.f32 0.0, %v6828
        %v6830 = vpop.f32.mrf.mxu0
        %v6831 = vadd.f32 0.0, %v6830
        %6832 = vdwg.mxu0
        %v6833 = vld [vmem:[#allocation2] sm:$0xff]
        %v6834 = vld [vmem:[#allocation2 + $0x8] sm:$0xff]
        %v6835 = vld [vmem:[#allocation2 + $0x10] sm:$0xff]
        %v6836 = vld [vmem:[#allocation2 + $0x18] sm:$0xff]
        %v6837 = vld [vmem:[#allocation2 + $0x20] sm:$0xff]
        %v6838 = vld [vmem:[#allocation2 + $0x28] sm:$0xff]
        %v6839 = vld [vmem:[#allocation2 + $0x30] sm:$0xff]
        %v6840 = vld [vmem:[#allocation2 + $0x38] sm:$0xff]
        %v6841 = vld [vmem:[#allocation2 + $0x40] sm:$0xff]
        %v6842 = vld [vmem:[#allocation2 + $0x48] sm:$0xff]
        %v6843 = vld [vmem:[#allocation2 + $0x50] sm:$0xff]
        %v6844 = vld [vmem:[#allocation2 + $0x58] sm:$0xff]
        %v6845 = vld [vmem:[#allocation2 + $0x60] sm:$0xff]
        %v6846 = vld [vmem:[#allocation2 + $0x68] sm:$0xff]
        %v6847 = vld [vmem:[#allocation2 + $0x70] sm:$0xff]
        %v6848 = vld [vmem:[#allocation2 + $0x78] sm:$0xff]
        %v6849 = vld [vmem:[#allocation2 + $0x80] sm:$0xff]
        %v6850 = vld [vmem:[#allocation2 + $0x88] sm:$0xff]
        %v6851 = vld [vmem:[#allocation2 + $0x90] sm:$0xff]
        %v6852 = vld [vmem:[#allocation2 + $0x98] sm:$0xff]
        %v6853 = vld [vmem:[#allocation2 + $0xa0] sm:$0xff]
        %v6854 = vld [vmem:[#allocation2 + $0xa8] sm:$0xff]
        %v6855 = vld [vmem:[#allocation2 + $0xb0] sm:$0xff]
        %v6856 = vld [vmem:[#allocation2 + $0xb8] sm:$0xff]
        %v6857 = vld [vmem:[#allocation2 + $0xc0] sm:$0xff]
        %v6858 = vld [vmem:[#allocation2 + $0xc8] sm:$0xff]
        %v6859 = vld [vmem:[#allocation2 + $0xd0] sm:$0xff]
        %v6860 = vld [vmem:[#allocation2 + $0xd8] sm:$0xff]
        %v6861 = vld [vmem:[#allocation2 + $0xe0] sm:$0xff]
        %v6862 = vld [vmem:[#allocation2 + $0xe8] sm:$0xff]
        %v6863 = vld [vmem:[#allocation2 + $0xf0] sm:$0xff]
        %v6864 = vld [vmem:[#allocation2 + $0xf8] sm:$0xff]
        %v6865 = vld [vmem:[#allocation2 + $0x100] sm:$0xff]
        %v6866 = vld [vmem:[#allocation2 + $0x108] sm:$0xff]
        %v6867 = vld [vmem:[#allocation2 + $0x110] sm:$0xff]
        %v6868 = vld [vmem:[#allocation2 + $0x118] sm:$0xff]
        %v6869 = vld [vmem:[#allocation2 + $0x120] sm:$0xff]
        %v6870 = vld [vmem:[#allocation2 + $0x128] sm:$0xff]
        %v6871 = vld [vmem:[#allocation2 + $0x130] sm:$0xff]
        %v6872 = vld [vmem:[#allocation2 + $0x138] sm:$0xff]
        %v6873 = vld [vmem:[#allocation2 + $0x140] sm:$0xff]
        %v6874 = vld [vmem:[#allocation2 + $0x148] sm:$0xff]
        %v6875 = vld [vmem:[#allocation2 + $0x150] sm:$0xff]
        %v6876 = vld [vmem:[#allocation2 + $0x158] sm:$0xff]
        %v6877 = vld [vmem:[#allocation2 + $0x160] sm:$0xff]
        %v6878 = vld [vmem:[#allocation2 + $0x168] sm:$0xff]
        %v6879 = vld [vmem:[#allocation2 + $0x170] sm:$0xff]
        %v6880 = vld [vmem:[#allocation2 + $0x178] sm:$0xff]
        %v6881 = vld [vmem:[#allocation2 + $0x180] sm:$0xff]
        %v6882 = vld [vmem:[#allocation2 + $0x188] sm:$0xff]
        %v6883 = vld [vmem:[#allocation2 + $0x190] sm:$0xff]
        %v6884 = vld [vmem:[#allocation2 + $0x198] sm:$0xff]
        %v6885 = vld [vmem:[#allocation2 + $0x1a0] sm:$0xff]
        %v6886 = vld [vmem:[#allocation2 + $0x1a8] sm:$0xff]
        %v6887 = vld [vmem:[#allocation2 + $0x1b0] sm:$0xff]
        %v6888 = vld [vmem:[#allocation2 + $0x1b8] sm:$0xff]
        %v6889 = vld [vmem:[#allocation2 + $0x1c0] sm:$0xff]
        %v6890 = vld [vmem:[#allocation2 + $0x1c8] sm:$0xff]
        %v6891 = vld [vmem:[#allocation2 + $0x1d0] sm:$0xff]
        %v6892 = vld [vmem:[#allocation2 + $0x1d8] sm:$0xff]
        %v6893 = vld [vmem:[#allocation2 + $0x1e0] sm:$0xff]
        %v6894 = vld [vmem:[#allocation2 + $0x1e8] sm:$0xff]
        %v6895 = vld [vmem:[#allocation2 + $0x1f0] sm:$0xff]
        %v6896 = vld [vmem:[#allocation2 + $0x1f8] sm:$0xff]
        %v6897 = vadd.f32 %v6833, %v6675
        %v6898 = vadd.f32 %v6834, %v6677
        %v6899 = vadd.f32 %v6835, %v6679
        %v6900 = vadd.f32 %v6836, %v6681
        %v6901 = vadd.f32 %v6837, %v6685
        %v6902 = vadd.f32 %v6838, %v6687
        %v6903 = vadd.f32 %v6839, %v6689
        %v6904 = vadd.f32 %v6840, %v6691
        %v6905 = vadd.f32 %v6841, %v6695
        %v6906 = vadd.f32 %v6842, %v6697
        %v6907 = vadd.f32 %v6843, %v6699
        %v6908 = vadd.f32 %v6844, %v6701
        %v6909 = vadd.f32 %v6845, %v6705
        %v6910 = vadd.f32 %v6846, %v6707
        %v6911 = vadd.f32 %v6847, %v6709
        %v6912 = vadd.f32 %v6848, %v6711
        %v6913 = vadd.f32 %v6849, %v6715
        %v6914 = vadd.f32 %v6850, %v6717
        %v6915 = vadd.f32 %v6851, %v6719
        %v6916 = vadd.f32 %v6852, %v6721
        %v6917 = vadd.f32 %v6853, %v6725
        %v6918 = vadd.f32 %v6854, %v6727
        %v6919 = vadd.f32 %v6855, %v6729
        %v6920 = vadd.f32 %v6856, %v6731
        %v6921 = vadd.f32 %v6857, %v6735
        %v6922 = vadd.f32 %v6858, %v6737
        %v6923 = vadd.f32 %v6859, %v6739
        %v6924 = vadd.f32 %v6860, %v6741
        %v6925 = vadd.f32 %v6861, %v6745
        %v6926 = vadd.f32 %v6862, %v6747
        %v6927 = vadd.f32 %v6863, %v6749
        %v6928 = vadd.f32 %v6864, %v6751
        %v6929 = vadd.f32 %v6865, %v6755
        %v6930 = vadd.f32 %v6866, %v6757
        %v6931 = vadd.f32 %v6867, %v6759
        %v6932 = vadd.f32 %v6868, %v6761
        %v6933 = vadd.f32 %v6869, %v6765
        %v6934 = vadd.f32 %v6870, %v6767
        %v6935 = vadd.f32 %v6871, %v6769
        %v6936 = vadd.f32 %v6872, %v6771
        %v6937 = vadd.f32 %v6873, %v6775
        %v6938 = vadd.f32 %v6874, %v6777
        %v6939 = vadd.f32 %v6875, %v6779
        %v6940 = vadd.f32 %v6876, %v6781
        %v6941 = vadd.f32 %v6877, %v6785
        %v6942 = vadd.f32 %v6878, %v6787
        %v6943 = vadd.f32 %v6879, %v6789
        %v6944 = vadd.f32 %v6880, %v6791
        %v6945 = vadd.f32 %v6881, %v6795
        %v6946 = vadd.f32 %v6882, %v6797
        %v6947 = vadd.f32 %v6883, %v6799
        %v6948 = vadd.f32 %v6884, %v6801
        %v6949 = vadd.f32 %v6885, %v6805
        %v6950 = vadd.f32 %v6886, %v6807
        %v6951 = vadd.f32 %v6887, %v6809
        %v6952 = vadd.f32 %v6888, %v6811
        %v6953 = vadd.f32 %v6889, %v6815
        %v6954 = vadd.f32 %v6890, %v6817
        %v6955 = vadd.f32 %v6891, %v6819
        %v6956 = vadd.f32 %v6892, %v6821
        %v6957 = vadd.f32 %v6893, %v6825
        %v6958 = vadd.f32 %v6894, %v6827
        %v6959 = vadd.f32 %v6895, %v6829
        %v6960 = vadd.f32 %v6896, %v6831
        %6961 = vst [vmem:[#allocation2] sm:$0xff] %v6897
        %6962 = vst [vmem:[#allocation2 + $0x8] sm:$0xff] %v6898
        %6963 = vst [vmem:[#allocation2 + $0x10] sm:$0xff] %v6899
        %6964 = vst [vmem:[#allocation2 + $0x18] sm:$0xff] %v6900
        %6965 = vst [vmem:[#allocation2 + $0x20] sm:$0xff] %v6901
        %6966 = vst [vmem:[#allocation2 + $0x28] sm:$0xff] %v6902
        %6967 = vst [vmem:[#allocation2 + $0x30] sm:$0xff] %v6903
        %6968 = vst [vmem:[#allocation2 + $0x38] sm:$0xff] %v6904
        %6969 = vst [vmem:[#allocation2 + $0x40] sm:$0xff] %v6905
        %6970 = vst [vmem:[#allocation2 + $0x48] sm:$0xff] %v6906
        %6971 = vst [vmem:[#allocation2 + $0x50] sm:$0xff] %v6907
        %6972 = vst [vmem:[#allocation2 + $0x58] sm:$0xff] %v6908
        %6973 = vst [vmem:[#allocation2 + $0x60] sm:$0xff] %v6909
        %6974 = vst [vmem:[#allocation2 + $0x68] sm:$0xff] %v6910
        %6975 = vst [vmem:[#allocation2 + $0x70] sm:$0xff] %v6911
        %6976 = vst [vmem:[#allocation2 + $0x78] sm:$0xff] %v6912
        %6977 = vst [vmem:[#allocation2 + $0x80] sm:$0xff] %v6913
        %6978 = vst [vmem:[#allocation2 + $0x88] sm:$0xff] %v6914
        %6979 = vst [vmem:[#allocation2 + $0x90] sm:$0xff] %v6915
        %6980 = vst [vmem:[#allocation2 + $0x98] sm:$0xff] %v6916
        %6981 = vst [vmem:[#allocation2 + $0xa0] sm:$0xff] %v6917
        %6982 = vst [vmem:[#allocation2 + $0xa8] sm:$0xff] %v6918
        %6983 = vst [vmem:[#allocation2 + $0xb0] sm:$0xff] %v6919
        %6984 = vst [vmem:[#allocation2 + $0xb8] sm:$0xff] %v6920
        %6985 = vst [vmem:[#allocation2 + $0xc0] sm:$0xff] %v6921
        %6986 = vst [vmem:[#allocation2 + $0xc8] sm:$0xff] %v6922
        %6987 = vst [vmem:[#allocation2 + $0xd0] sm:$0xff] %v6923
        %6988 = vst [vmem:[#allocation2 + $0xd8] sm:$0xff] %v6924
        %6989 = vst [vmem:[#allocation2 + $0xe0] sm:$0xff] %v6925
        %6990 = vst [vmem:[#allocation2 + $0xe8] sm:$0xff] %v6926
        %6991 = vst [vmem:[#allocation2 + $0xf0] sm:$0xff] %v6927
        %6992 = vst [vmem:[#allocation2 + $0xf8] sm:$0xff] %v6928
        %6993 = vst [vmem:[#allocation2 + $0x100] sm:$0xff] %v6929
        %6994 = vst [vmem:[#allocation2 + $0x108] sm:$0xff] %v6930
        %6995 = vst [vmem:[#allocation2 + $0x110] sm:$0xff] %v6931
        %6996 = vst [vmem:[#allocation2 + $0x118] sm:$0xff] %v6932
        %6997 = vst [vmem:[#allocation2 + $0x120] sm:$0xff] %v6933
        %6998 = vst [vmem:[#allocation2 + $0x128] sm:$0xff] %v6934
        %6999 = vst [vmem:[#allocation2 + $0x130] sm:$0xff] %v6935
        %7000 = vst [vmem:[#allocation2 + $0x138] sm:$0xff] %v6936
        %7001 = vst [vmem:[#allocation2 + $0x140] sm:$0xff] %v6937
        %7002 = vst [vmem:[#allocation2 + $0x148] sm:$0xff] %v6938
        %7003 = vst [vmem:[#allocation2 + $0x150] sm:$0xff] %v6939
        %7004 = vst [vmem:[#allocation2 + $0x158] sm:$0xff] %v6940
        %7005 = vst [vmem:[#allocation2 + $0x160] sm:$0xff] %v6941
        %7006 = vst [vmem:[#allocation2 + $0x168] sm:$0xff] %v6942
        %7007 = vst [vmem:[#allocation2 + $0x170] sm:$0xff] %v6943
        %7008 = vst [vmem:[#allocation2 + $0x178] sm:$0xff] %v6944
        %7009 = vst [vmem:[#allocation2 + $0x180] sm:$0xff] %v6945
        %7010 = vst [vmem:[#allocation2 + $0x188] sm:$0xff] %v6946
        %7011 = vst [vmem:[#allocation2 + $0x190] sm:$0xff] %v6947
        %7012 = vst [vmem:[#allocation2 + $0x198] sm:$0xff] %v6948
        %7013 = vst [vmem:[#allocation2 + $0x1a0] sm:$0xff] %v6949
        %7014 = vst [vmem:[#allocation2 + $0x1a8] sm:$0xff] %v6950
        %7015 = vst [vmem:[#allocation2 + $0x1b0] sm:$0xff] %v6951
        %7016 = vst [vmem:[#allocation2 + $0x1b8] sm:$0xff] %v6952
        %7017 = vst [vmem:[#allocation2 + $0x1c0] sm:$0xff] %v6953
        %7018 = vst [vmem:[#allocation2 + $0x1c8] sm:$0xff] %v6954
        %7019 = vst [vmem:[#allocation2 + $0x1d0] sm:$0xff] %v6955
        %7020 = vst [vmem:[#allocation2 + $0x1d8] sm:$0xff] %v6956
        %7021 = vst [vmem:[#allocation2 + $0x1e0] sm:$0xff] %v6957
        %7022 = vst [vmem:[#allocation2 + $0x1e8] sm:$0xff] %v6958
        %7023 = vst [vmem:[#allocation2 + $0x1f0] sm:$0xff] %v6959
        %7024 = vst [vmem:[#allocation2 + $0x1f8] sm:$0xff] %v6960
        %v7025 = vld [vmem:[#allocation3 + $0x40] sm:$0xff]
        %v7026 = vld [vmem:[#allocation3 + $0x48] sm:$0xff]
        %v7027 = vld [vmem:[#allocation3 + $0x50] sm:$0xff]
        %v7028 = vld [vmem:[#allocation3 + $0x58] sm:$0xff]
        %v7029 = vld [vmem:[#allocation3 + $0x60] sm:$0xff]
        %v7030 = vld [vmem:[#allocation3 + $0x68] sm:$0xff]
        %v7031 = vld [vmem:[#allocation3 + $0x70] sm:$0xff]
        %v7032 = vld [vmem:[#allocation3 + $0x78] sm:$0xff]
        %v7033 = vld [vmem:[#allocation3 + $0x80] sm:$0xff]
        %v7034 = vld [vmem:[#allocation3 + $0x88] sm:$0xff]
        %v7035 = vld [vmem:[#allocation3 + $0x90] sm:$0xff]
        %v7036 = vld [vmem:[#allocation3 + $0x98] sm:$0xff]
        %v7037 = vld [vmem:[#allocation3 + $0xa0] sm:$0xff]
        %v7038 = vld [vmem:[#allocation3 + $0xa8] sm:$0xff]
        %v7039 = vld [vmem:[#allocation3 + $0xb0] sm:$0xff]
        %v7040 = vld [vmem:[#allocation3 + $0xb8] sm:$0xff]
        %v7041 = vld [vmem:[#allocation3 + $0xc0] sm:$0xff]
        %v7042 = vld [vmem:[#allocation3 + $0xc8] sm:$0xff]
        %v7043 = vld [vmem:[#allocation3 + $0xd0] sm:$0xff]
        %v7044 = vld [vmem:[#allocation3 + $0xd8] sm:$0xff]
        %v7045 = vld [vmem:[#allocation3 + $0xe0] sm:$0xff]
        %v7046 = vld [vmem:[#allocation3 + $0xe8] sm:$0xff]
        %v7047 = vld [vmem:[#allocation3 + $0xf0] sm:$0xff]
        %v7048 = vld [vmem:[#allocation3 + $0xf8] sm:$0xff]
        %v7049 = vld [vmem:[#allocation3 + $0x100] sm:$0xff]
        %v7050 = vld [vmem:[#allocation3 + $0x108] sm:$0xff]
        %v7051 = vld [vmem:[#allocation3 + $0x110] sm:$0xff]
        %v7052 = vld [vmem:[#allocation3 + $0x118] sm:$0xff]
        %v7053 = vld [vmem:[#allocation3 + $0x120] sm:$0xff]
        %v7054 = vld [vmem:[#allocation3 + $0x128] sm:$0xff]
        %v7055 = vld [vmem:[#allocation3 + $0x130] sm:$0xff]
        %v7056 = vld [vmem:[#allocation3 + $0x138] sm:$0xff]
        %s7057 = scalar_lea.vmem %s219, 2048
        %v7058 = vld [vmem:[%s7057] sm:$0xff]
        %v7059 = vld [vmem:[%s7057 + $0x8] sm:$0xff]
        %v7060 = vld [vmem:[%s7057 + $0x10] sm:$0xff]
        %v7061 = vld [vmem:[%s7057 + $0x18] sm:$0xff]
        %v7062 = vld [vmem:[%s7057 + $0x20] sm:$0xff]
        %v7063 = vld [vmem:[%s7057 + $0x28] sm:$0xff]
        %v7064 = vld [vmem:[%s7057 + $0x30] sm:$0xff]
        %v7065 = vld [vmem:[%s7057 + $0x38] sm:$0xff]
        %v7066 = vld [vmem:[%s7057 + $0x40] sm:$0xff]
        %v7067 = vld [vmem:[%s7057 + $0x48] sm:$0xff]
        %v7068 = vld [vmem:[%s7057 + $0x50] sm:$0xff]
        %v7069 = vld [vmem:[%s7057 + $0x58] sm:$0xff]
        %v7070 = vld [vmem:[%s7057 + $0x60] sm:$0xff]
        %v7071 = vld [vmem:[%s7057 + $0x68] sm:$0xff]
        %v7072 = vld [vmem:[%s7057 + $0x70] sm:$0xff]
        %v7073 = vld [vmem:[%s7057 + $0x78] sm:$0xff]
        %v7074 = vld [vmem:[%s7057 + $0x80] sm:$0xff]
        %v7075 = vld [vmem:[%s7057 + $0x88] sm:$0xff]
        %v7076 = vld [vmem:[%s7057 + $0x90] sm:$0xff]
        %v7077 = vld [vmem:[%s7057 + $0x98] sm:$0xff]
        %v7078 = vld [vmem:[%s7057 + $0xa0] sm:$0xff]
        %v7079 = vld [vmem:[%s7057 + $0xa8] sm:$0xff]
        %v7080 = vld [vmem:[%s7057 + $0xb0] sm:$0xff]
        %v7081 = vld [vmem:[%s7057 + $0xb8] sm:$0xff]
        %v7082 = vld [vmem:[%s7057 + $0xc0] sm:$0xff]
        %v7083 = vld [vmem:[%s7057 + $0xc8] sm:$0xff]
        %v7084 = vld [vmem:[%s7057 + $0xd0] sm:$0xff]
        %v7085 = vld [vmem:[%s7057 + $0xd8] sm:$0xff]
        %v7086 = vld [vmem:[%s7057 + $0xe0] sm:$0xff]
        %v7087 = vld [vmem:[%s7057 + $0xe8] sm:$0xff]
        %v7088 = vld [vmem:[%s7057 + $0xf0] sm:$0xff]
        %v7089 = vld [vmem:[%s7057 + $0xf8] sm:$0xff]
        %v7122 = vunpack.c.l.b16 %v7025
        %v7123 = vunpack.c.h.b16 %v7025
        %v7124 = vunpack.c.l.b16 %v7026
        %v7125 = vunpack.c.h.b16 %v7026
        %v7126 = vunpack.c.l.b16 %v7027
        %v7127 = vunpack.c.h.b16 %v7027
        %v7128 = vunpack.c.l.b16 %v7028
        %v7129 = vunpack.c.h.b16 %v7028
        %v7130 = vunpack.c.l.b16 %v7029
        %v7131 = vunpack.c.h.b16 %v7029
        %v7132 = vunpack.c.l.b16 %v7030
        %v7133 = vunpack.c.h.b16 %v7030
        %v7134 = vunpack.c.l.b16 %v7031
        %v7135 = vunpack.c.h.b16 %v7031
        %v7136 = vunpack.c.l.b16 %v7032
        %v7137 = vunpack.c.h.b16 %v7032
        %v7138 = vunpack.c.l.b16 %v7033
        %v7139 = vunpack.c.h.b16 %v7033
        %v7140 = vunpack.c.l.b16 %v7034
        %v7141 = vunpack.c.h.b16 %v7034
        %v7142 = vunpack.c.l.b16 %v7035
        %v7143 = vunpack.c.h.b16 %v7035
        %v7144 = vunpack.c.l.b16 %v7036
        %v7145 = vunpack.c.h.b16 %v7036
        %v7146 = vunpack.c.l.b16 %v7037
        %v7147 = vunpack.c.h.b16 %v7037
        %v7148 = vunpack.c.l.b16 %v7038
        %v7149 = vunpack.c.h.b16 %v7038
        %v7150 = vunpack.c.l.b16 %v7039
        %v7151 = vunpack.c.h.b16 %v7039
        %v7152 = vunpack.c.l.b16 %v7040
        %v7153 = vunpack.c.h.b16 %v7040
        %v7154 = vunpack.c.l.b16 %v7041
        %v7155 = vunpack.c.h.b16 %v7041
        %v7156 = vunpack.c.l.b16 %v7042
        %v7157 = vunpack.c.h.b16 %v7042
        %v7158 = vunpack.c.l.b16 %v7043
        %v7159 = vunpack.c.h.b16 %v7043
        %v7160 = vunpack.c.l.b16 %v7044
        %v7161 = vunpack.c.h.b16 %v7044
        %v7162 = vunpack.c.l.b16 %v7045
        %v7163 = vunpack.c.h.b16 %v7045
        %v7164 = vunpack.c.l.b16 %v7046
        %v7165 = vunpack.c.h.b16 %v7046
        %v7166 = vunpack.c.l.b16 %v7047
        %v7167 = vunpack.c.h.b16 %v7047
        %v7168 = vunpack.c.l.b16 %v7048
        %v7169 = vunpack.c.h.b16 %v7048
        %v7170 = vunpack.c.l.b16 %v7049
        %v7171 = vunpack.c.h.b16 %v7049
        %v7172 = vunpack.c.l.b16 %v7050
        %v7173 = vunpack.c.h.b16 %v7050
        %v7174 = vunpack.c.l.b16 %v7051
        %v7175 = vunpack.c.h.b16 %v7051
        %v7176 = vunpack.c.l.b16 %v7052
        %v7177 = vunpack.c.h.b16 %v7052
        %v7178 = vunpack.c.l.b16 %v7053
        %v7179 = vunpack.c.h.b16 %v7053
        %v7180 = vunpack.c.l.b16 %v7054
        %v7181 = vunpack.c.h.b16 %v7054
        %v7182 = vunpack.c.l.b16 %v7055
        %v7183 = vunpack.c.h.b16 %v7055
        %v7184 = vunpack.c.l.b16 %v7056
        %v7185 = vunpack.c.h.b16 %v7056
        %v7186 = vpack.c.b16 %v7124, %v7122
        %v7187 = vpack.c.b16 %v7125, %v7123
        %v7188 = vpack.c.b16 %v7128, %v7126
        %v7189 = vpack.c.b16 %v7129, %v7127
        %v7190 = vpack.c.b16 %v7132, %v7130
        %v7191 = vpack.c.b16 %v7133, %v7131
        %v7192 = vpack.c.b16 %v7136, %v7134
        %v7193 = vpack.c.b16 %v7137, %v7135
        %v7194 = vpack.c.b16 %v7140, %v7138
        %v7195 = vpack.c.b16 %v7141, %v7139
        %v7196 = vpack.c.b16 %v7144, %v7142
        %v7197 = vpack.c.b16 %v7145, %v7143
        %v7198 = vpack.c.b16 %v7148, %v7146
        %v7199 = vpack.c.b16 %v7149, %v7147
        %v7200 = vpack.c.b16 %v7152, %v7150
        %v7201 = vpack.c.b16 %v7153, %v7151
        %v7202 = vpack.c.b16 %v7156, %v7154
        %v7203 = vpack.c.b16 %v7157, %v7155
        %v7204 = vpack.c.b16 %v7160, %v7158
        %v7205 = vpack.c.b16 %v7161, %v7159
        %v7206 = vpack.c.b16 %v7164, %v7162
        %v7207 = vpack.c.b16 %v7165, %v7163
        %v7208 = vpack.c.b16 %v7168, %v7166
        %v7209 = vpack.c.b16 %v7169, %v7167
        %v7210 = vpack.c.b16 %v7172, %v7170
        %v7211 = vpack.c.b16 %v7173, %v7171
        %v7212 = vpack.c.b16 %v7176, %v7174
        %v7213 = vpack.c.b16 %v7177, %v7175
        %v7214 = vpack.c.b16 %v7180, %v7178
        %v7215 = vpack.c.b16 %v7181, %v7179
        %v7216 = vpack.c.b16 %v7184, %v7182
        %v7217 = vpack.c.b16 %v7185, %v7183
        %v7282 = vunpack.c.l.b16 %v7058
        %v7283 = vunpack.c.h.b16 %v7058
        %v7284 = vunpack.c.l.b16 %v7059
        %v7285 = vunpack.c.h.b16 %v7059
        %v7286 = vunpack.c.l.b16 %v7060
        %v7287 = vunpack.c.h.b16 %v7060
        %v7288 = vunpack.c.l.b16 %v7061
        %v7289 = vunpack.c.h.b16 %v7061
        %v7290 = vunpack.c.l.b16 %v7062
        %v7291 = vunpack.c.h.b16 %v7062
        %v7292 = vunpack.c.l.b16 %v7063
        %v7293 = vunpack.c.h.b16 %v7063
        %v7294 = vunpack.c.l.b16 %v7064
        %v7295 = vunpack.c.h.b16 %v7064
        %v7296 = vunpack.c.l.b16 %v7065
        %v7297 = vunpack.c.h.b16 %v7065
        %v7298 = vunpack.c.l.b16 %v7066
        %v7299 = vunpack.c.h.b16 %v7066
        %v7300 = vunpack.c.l.b16 %v7067
        %v7301 = vunpack.c.h.b16 %v7067
        %v7302 = vunpack.c.l.b16 %v7068
        %v7303 = vunpack.c.h.b16 %v7068
        %v7304 = vunpack.c.l.b16 %v7069
        %v7305 = vunpack.c.h.b16 %v7069
        %v7306 = vunpack.c.l.b16 %v7070
        %v7307 = vunpack.c.h.b16 %v7070
        %v7308 = vunpack.c.l.b16 %v7071
        %v7309 = vunpack.c.h.b16 %v7071
        %v7310 = vunpack.c.l.b16 %v7072
        %v7311 = vunpack.c.h.b16 %v7072
        %v7312 = vunpack.c.l.b16 %v7073
        %v7313 = vunpack.c.h.b16 %v7073
        %v7314 = vunpack.c.l.b16 %v7074
        %v7315 = vunpack.c.h.b16 %v7074
        %v7316 = vunpack.c.l.b16 %v7075
        %v7317 = vunpack.c.h.b16 %v7075
        %v7318 = vunpack.c.l.b16 %v7076
        %v7319 = vunpack.c.h.b16 %v7076
        %v7320 = vunpack.c.l.b16 %v7077
        %v7321 = vunpack.c.h.b16 %v7077
        %v7322 = vunpack.c.l.b16 %v7078
        %v7323 = vunpack.c.h.b16 %v7078
        %v7324 = vunpack.c.l.b16 %v7079
        %v7325 = vunpack.c.h.b16 %v7079
        %v7326 = vunpack.c.l.b16 %v7080
        %v7327 = vunpack.c.h.b16 %v7080
        %v7328 = vunpack.c.l.b16 %v7081
        %v7329 = vunpack.c.h.b16 %v7081
        %v7330 = vunpack.c.l.b16 %v7082
        %v7331 = vunpack.c.h.b16 %v7082
        %v7332 = vunpack.c.l.b16 %v7083
        %v7333 = vunpack.c.h.b16 %v7083
        %v7334 = vunpack.c.l.b16 %v7084
        %v7335 = vunpack.c.h.b16 %v7084
        %v7336 = vunpack.c.l.b16 %v7085
        %v7337 = vunpack.c.h.b16 %v7085
        %v7338 = vunpack.c.l.b16 %v7086
        %v7339 = vunpack.c.h.b16 %v7086
        %v7340 = vunpack.c.l.b16 %v7087
        %v7341 = vunpack.c.h.b16 %v7087
        %v7342 = vunpack.c.l.b16 %v7088
        %v7343 = vunpack.c.h.b16 %v7088
        %v7344 = vunpack.c.l.b16 %v7089
        %v7345 = vunpack.c.h.b16 %v7089
        %v7346 = vpack.c.b16 %v7284, %v7282
        %v7347 = vpack.c.b16 %v7285, %v7283
        %v7348 = vpack.c.b16 %v7288, %v7286
        %v7349 = vpack.c.b16 %v7289, %v7287
        %v7350 = vpack.c.b16 %v7292, %v7290
        %v7351 = vpack.c.b16 %v7293, %v7291
        %v7352 = vpack.c.b16 %v7296, %v7294
        %v7353 = vpack.c.b16 %v7297, %v7295
        %v7354 = vpack.c.b16 %v7300, %v7298
        %v7355 = vpack.c.b16 %v7301, %v7299
        %v7356 = vpack.c.b16 %v7304, %v7302
        %v7357 = vpack.c.b16 %v7305, %v7303
        %v7358 = vpack.c.b16 %v7308, %v7306
        %v7359 = vpack.c.b16 %v7309, %v7307
        %v7360 = vpack.c.b16 %v7312, %v7310
        %v7361 = vpack.c.b16 %v7313, %v7311
        %v7362 = vpack.c.b16 %v7316, %v7314
        %v7363 = vpack.c.b16 %v7317, %v7315
        %v7364 = vpack.c.b16 %v7320, %v7318
        %v7365 = vpack.c.b16 %v7321, %v7319
        %v7366 = vpack.c.b16 %v7324, %v7322
        %v7367 = vpack.c.b16 %v7325, %v7323
        %v7368 = vpack.c.b16 %v7328, %v7326
        %v7369 = vpack.c.b16 %v7329, %v7327
        %v7370 = vpack.c.b16 %v7332, %v7330
        %v7371 = vpack.c.b16 %v7333, %v7331
        %v7372 = vpack.c.b16 %v7336, %v7334
        %v7373 = vpack.c.b16 %v7337, %v7335
        %v7374 = vpack.c.b16 %v7340, %v7338
        %v7375 = vpack.c.b16 %v7341, %v7339
        %v7376 = vpack.c.b16 %v7344, %v7342
        %v7377 = vpack.c.b16 %v7345, %v7343
        %7410 = vmatprep.subr.bf16.mxu0 %v7361
        %7411 = vmatpush1.bf16.msra.mxu0 %v7360
        %7412 = vmatprep.subr.bf16.mxu0 %v7359
        %7413 = vmatpush1.bf16.msra.mxu0 %v7358
        %7414 = vmatprep.subr.bf16.mxu0 %v7357
        %7415 = vmatpush1.bf16.msra.mxu0 %v7356
        %7416 = vmatprep.subr.bf16.mxu0 %v7355
        %7417 = vmatpush1.bf16.msra.mxu0 %v7354
        %7418 = vmatprep.subr.bf16.mxu0 %v7353
        %7419 = vmatpush1.bf16.msra.mxu0 %v7352
        %7420 = vmatprep.subr.bf16.mxu0 %v7351
        %7421 = vmatpush1.bf16.msra.mxu0 %v7350
        %7422 = vmatprep.subr.bf16.mxu0 %v7349
        %7423 = vmatpush1.bf16.msra.mxu0 %v7348
        %7424 = vmatprep.subr.bf16.mxu0 %v7347
        %7425 = vmatpush1.bf16.msra.mxu0 %v7346
        %7426 = vmatprep.subr.bf16.mxu0 %v7377
        %7427 = vmatpush2.bf16.msra.mxu0 %v7376
        %7428 = vmatprep.subr.bf16.mxu0 %v7375
        %7429 = vmatpush2.bf16.msra.mxu0 %v7374
        %7430 = vmatprep.subr.bf16.mxu0 %v7373
        %7431 = vmatpush2.bf16.msra.mxu0 %v7372
        %7432 = vmatprep.subr.bf16.mxu0 %v7371
        %7433 = vmatpush2.bf16.msra.mxu0 %v7370
        %7434 = vmatprep.subr.bf16.mxu0 %v7369
        %7435 = vmatpush2.bf16.msra.mxu0 %v7368
        %7436 = vmatprep.subr.bf16.mxu0 %v7367
        %7437 = vmatpush2.bf16.msra.mxu0 %v7366
        %7438 = vmatprep.subr.bf16.mxu0 %v7365
        %7439 = vmatpush2.bf16.msra.mxu0 %v7364
        %7440 = vmatprep.subr.bf16.mxu0 %v7363
        %7441 = vmatpush2.bf16.msra.mxu0 %v7362
        %7442 = vmatprep.mubr.bf16.mxu0 %v7187
        %7443 = vmatmul.mubr.bf16.gmra.mxu0 %v7186
        %v7444 = vpop.f32.mrf.mxu0
        %v7445 = vadd.f32 0.0, %v7444
        %v7446 = vpop.f32.mrf.mxu0
        %v7447 = vadd.f32 0.0, %v7446
        %v7448 = vpop.f32.mrf.mxu0
        %v7449 = vadd.f32 0.0, %v7448
        %v7450 = vpop.f32.mrf.mxu0
        %v7451 = vadd.f32 0.0, %v7450
        %7452 = vmatprep.mubr.bf16.mxu0 %v7189
        %7453 = vmatmul.mubr.bf16.gmra.mxu0 %v7188
        %v7454 = vpop.f32.mrf.mxu0
        %v7455 = vadd.f32 0.0, %v7454
        %v7456 = vpop.f32.mrf.mxu0
        %v7457 = vadd.f32 0.0, %v7456
        %v7458 = vpop.f32.mrf.mxu0
        %v7459 = vadd.f32 0.0, %v7458
        %v7460 = vpop.f32.mrf.mxu0
        %v7461 = vadd.f32 0.0, %v7460
        %7462 = vmatprep.mubr.bf16.mxu0 %v7191
        %7463 = vmatmul.mubr.bf16.gmra.mxu0 %v7190
        %v7464 = vpop.f32.mrf.mxu0
        %v7465 = vadd.f32 0.0, %v7464
        %v7466 = vpop.f32.mrf.mxu0
        %v7467 = vadd.f32 0.0, %v7466
        %v7468 = vpop.f32.mrf.mxu0
        %v7469 = vadd.f32 0.0, %v7468
        %v7470 = vpop.f32.mrf.mxu0
        %v7471 = vadd.f32 0.0, %v7470
        %7472 = vmatprep.mubr.bf16.mxu0 %v7193
        %7473 = vmatmul.mubr.bf16.gmra.mxu0 %v7192
        %v7474 = vpop.f32.mrf.mxu0
        %v7475 = vadd.f32 0.0, %v7474
        %v7476 = vpop.f32.mrf.mxu0
        %v7477 = vadd.f32 0.0, %v7476
        %v7478 = vpop.f32.mrf.mxu0
        %v7479 = vadd.f32 0.0, %v7478
        %v7480 = vpop.f32.mrf.mxu0
        %v7481 = vadd.f32 0.0, %v7480
        %7482 = vmatprep.mubr.bf16.mxu0 %v7195
        %7483 = vmatmul.mubr.bf16.gmra.mxu0 %v7194
        %v7484 = vpop.f32.mrf.mxu0
        %v7485 = vadd.f32 0.0, %v7484
        %v7486 = vpop.f32.mrf.mxu0
        %v7487 = vadd.f32 0.0, %v7486
        %v7488 = vpop.f32.mrf.mxu0
        %v7489 = vadd.f32 0.0, %v7488
        %v7490 = vpop.f32.mrf.mxu0
        %v7491 = vadd.f32 0.0, %v7490
        %7492 = vmatprep.mubr.bf16.mxu0 %v7197
        %7493 = vmatmul.mubr.bf16.gmra.mxu0 %v7196
        %v7494 = vpop.f32.mrf.mxu0
        %v7495 = vadd.f32 0.0, %v7494
        %v7496 = vpop.f32.mrf.mxu0
        %v7497 = vadd.f32 0.0, %v7496
        %v7498 = vpop.f32.mrf.mxu0
        %v7499 = vadd.f32 0.0, %v7498
        %v7500 = vpop.f32.mrf.mxu0
        %v7501 = vadd.f32 0.0, %v7500
        %7502 = vmatprep.mubr.bf16.mxu0 %v7199
        %7503 = vmatmul.mubr.bf16.gmra.mxu0 %v7198
        %v7504 = vpop.f32.mrf.mxu0
        %v7505 = vadd.f32 0.0, %v7504
        %v7506 = vpop.f32.mrf.mxu0
        %v7507 = vadd.f32 0.0, %v7506
        %v7508 = vpop.f32.mrf.mxu0
        %v7509 = vadd.f32 0.0, %v7508
        %v7510 = vpop.f32.mrf.mxu0
        %v7511 = vadd.f32 0.0, %v7510
        %7512 = vmatprep.mubr.bf16.mxu0 %v7201
        %7513 = vmatmul.mubr.bf16.gmra.mxu0 %v7200
        %v7514 = vpop.f32.mrf.mxu0
        %v7515 = vadd.f32 0.0, %v7514
        %v7516 = vpop.f32.mrf.mxu0
        %v7517 = vadd.f32 0.0, %v7516
        %v7518 = vpop.f32.mrf.mxu0
        %v7519 = vadd.f32 0.0, %v7518
        %v7520 = vpop.f32.mrf.mxu0
        %v7521 = vadd.f32 0.0, %v7520
        %7522 = vmatprep.mubr.bf16.mxu0 %v7203
        %7523 = vmatmul.mubr.bf16.gmra.mxu0 %v7202
        %v7524 = vpop.f32.mrf.mxu0
        %v7525 = vadd.f32 0.0, %v7524
        %v7526 = vpop.f32.mrf.mxu0
        %v7527 = vadd.f32 0.0, %v7526
        %v7528 = vpop.f32.mrf.mxu0
        %v7529 = vadd.f32 0.0, %v7528
        %v7530 = vpop.f32.mrf.mxu0
        %v7531 = vadd.f32 0.0, %v7530
        %7532 = vmatprep.mubr.bf16.mxu0 %v7205
        %7533 = vmatmul.mubr.bf16.gmra.mxu0 %v7204
        %v7534 = vpop.f32.mrf.mxu0
        %v7535 = vadd.f32 0.0, %v7534
        %v7536 = vpop.f32.mrf.mxu0
        %v7537 = vadd.f32 0.0, %v7536
        %v7538 = vpop.f32.mrf.mxu0
        %v7539 = vadd.f32 0.0, %v7538
        %v7540 = vpop.f32.mrf.mxu0
        %v7541 = vadd.f32 0.0, %v7540
        %7542 = vmatprep.mubr.bf16.mxu0 %v7207
        %7543 = vmatmul.mubr.bf16.gmra.mxu0 %v7206
        %v7544 = vpop.f32.mrf.mxu0
        %v7545 = vadd.f32 0.0, %v7544
        %v7546 = vpop.f32.mrf.mxu0
        %v7547 = vadd.f32 0.0, %v7546
        %v7548 = vpop.f32.mrf.mxu0
        %v7549 = vadd.f32 0.0, %v7548
        %v7550 = vpop.f32.mrf.mxu0
        %v7551 = vadd.f32 0.0, %v7550
        %7552 = vmatprep.mubr.bf16.mxu0 %v7209
        %7553 = vmatmul.mubr.bf16.gmra.mxu0 %v7208
        %v7554 = vpop.f32.mrf.mxu0
        %v7555 = vadd.f32 0.0, %v7554
        %v7556 = vpop.f32.mrf.mxu0
        %v7557 = vadd.f32 0.0, %v7556
        %v7558 = vpop.f32.mrf.mxu0
        %v7559 = vadd.f32 0.0, %v7558
        %v7560 = vpop.f32.mrf.mxu0
        %v7561 = vadd.f32 0.0, %v7560
        %7562 = vmatprep.mubr.bf16.mxu0 %v7211
        %7563 = vmatmul.mubr.bf16.gmra.mxu0 %v7210
        %v7564 = vpop.f32.mrf.mxu0
        %v7565 = vadd.f32 0.0, %v7564
        %v7566 = vpop.f32.mrf.mxu0
        %v7567 = vadd.f32 0.0, %v7566
        %v7568 = vpop.f32.mrf.mxu0
        %v7569 = vadd.f32 0.0, %v7568
        %v7570 = vpop.f32.mrf.mxu0
        %v7571 = vadd.f32 0.0, %v7570
        %7572 = vmatprep.mubr.bf16.mxu0 %v7213
        %7573 = vmatmul.mubr.bf16.gmra.mxu0 %v7212
        %v7574 = vpop.f32.mrf.mxu0
        %v7575 = vadd.f32 0.0, %v7574
        %v7576 = vpop.f32.mrf.mxu0
        %v7577 = vadd.f32 0.0, %v7576
        %v7578 = vpop.f32.mrf.mxu0
        %v7579 = vadd.f32 0.0, %v7578
        %v7580 = vpop.f32.mrf.mxu0
        %v7581 = vadd.f32 0.0, %v7580
        %7582 = vmatprep.mubr.bf16.mxu0 %v7215
        %7583 = vmatmul.mubr.bf16.gmra.mxu0 %v7214
        %v7584 = vpop.f32.mrf.mxu0
        %v7585 = vadd.f32 0.0, %v7584
        %v7586 = vpop.f32.mrf.mxu0
        %v7587 = vadd.f32 0.0, %v7586
        %v7588 = vpop.f32.mrf.mxu0
        %v7589 = vadd.f32 0.0, %v7588
        %v7590 = vpop.f32.mrf.mxu0
        %v7591 = vadd.f32 0.0, %v7590
        %7592 = vmatprep.mubr.bf16.mxu0 %v7217
        %7593 = vmatmul.mubr.bf16.gmra.mxu0 %v7216
        %v7594 = vpop.f32.mrf.mxu0
        %v7595 = vadd.f32 0.0, %v7594
        %v7596 = vpop.f32.mrf.mxu0
        %v7597 = vadd.f32 0.0, %v7596
        %v7598 = vpop.f32.mrf.mxu0
        %v7599 = vadd.f32 0.0, %v7598
        %v7600 = vpop.f32.mrf.mxu0
        %v7601 = vadd.f32 0.0, %v7600
        %7602 = vdwg.mxu0
        %v7603 = vld [vmem:[#allocation2] sm:$0xff]
        %v7604 = vld [vmem:[#allocation2 + $0x8] sm:$0xff]
        %v7605 = vld [vmem:[#allocation2 + $0x10] sm:$0xff]
        %v7606 = vld [vmem:[#allocation2 + $0x18] sm:$0xff]
        %v7607 = vld [vmem:[#allocation2 + $0x20] sm:$0xff]
        %v7608 = vld [vmem:[#allocation2 + $0x28] sm:$0xff]
        %v7609 = vld [vmem:[#allocation2 + $0x30] sm:$0xff]
        %v7610 = vld [vmem:[#allocation2 + $0x38] sm:$0xff]
        %v7611 = vld [vmem:[#allocation2 + $0x40] sm:$0xff]
        %v7612 = vld [vmem:[#allocation2 + $0x48] sm:$0xff]
        %v7613 = vld [vmem:[#allocation2 + $0x50] sm:$0xff]
        %v7614 = vld [vmem:[#allocation2 + $0x58] sm:$0xff]
        %v7615 = vld [vmem:[#allocation2 + $0x60] sm:$0xff]
        %v7616 = vld [vmem:[#allocation2 + $0x68] sm:$0xff]
        %v7617 = vld [vmem:[#allocation2 + $0x70] sm:$0xff]
        %v7618 = vld [vmem:[#allocation2 + $0x78] sm:$0xff]
        %v7619 = vld [vmem:[#allocation2 + $0x80] sm:$0xff]
        %v7620 = vld [vmem:[#allocation2 + $0x88] sm:$0xff]
        %v7621 = vld [vmem:[#allocation2 + $0x90] sm:$0xff]
        %v7622 = vld [vmem:[#allocation2 + $0x98] sm:$0xff]
        %v7623 = vld [vmem:[#allocation2 + $0xa0] sm:$0xff]
        %v7624 = vld [vmem:[#allocation2 + $0xa8] sm:$0xff]
        %v7625 = vld [vmem:[#allocation2 + $0xb0] sm:$0xff]
        %v7626 = vld [vmem:[#allocation2 + $0xb8] sm:$0xff]
        %v7627 = vld [vmem:[#allocation2 + $0xc0] sm:$0xff]
        %v7628 = vld [vmem:[#allocation2 + $0xc8] sm:$0xff]
        %v7629 = vld [vmem:[#allocation2 + $0xd0] sm:$0xff]
        %v7630 = vld [vmem:[#allocation2 + $0xd8] sm:$0xff]
        %v7631 = vld [vmem:[#allocation2 + $0xe0] sm:$0xff]
        %v7632 = vld [vmem:[#allocation2 + $0xe8] sm:$0xff]
        %v7633 = vld [vmem:[#allocation2 + $0xf0] sm:$0xff]
        %v7634 = vld [vmem:[#allocation2 + $0xf8] sm:$0xff]
        %v7635 = vld [vmem:[#allocation2 + $0x100] sm:$0xff]
        %v7636 = vld [vmem:[#allocation2 + $0x108] sm:$0xff]
        %v7637 = vld [vmem:[#allocation2 + $0x110] sm:$0xff]
        %v7638 = vld [vmem:[#allocation2 + $0x118] sm:$0xff]
        %v7639 = vld [vmem:[#allocation2 + $0x120] sm:$0xff]
        %v7640 = vld [vmem:[#allocation2 + $0x128] sm:$0xff]
        %v7641 = vld [vmem:[#allocation2 + $0x130] sm:$0xff]
        %v7642 = vld [vmem:[#allocation2 + $0x138] sm:$0xff]
        %v7643 = vld [vmem:[#allocation2 + $0x140] sm:$0xff]
        %v7644 = vld [vmem:[#allocation2 + $0x148] sm:$0xff]
        %v7645 = vld [vmem:[#allocation2 + $0x150] sm:$0xff]
        %v7646 = vld [vmem:[#allocation2 + $0x158] sm:$0xff]
        %v7647 = vld [vmem:[#allocation2 + $0x160] sm:$0xff]
        %v7648 = vld [vmem:[#allocation2 + $0x168] sm:$0xff]
        %v7649 = vld [vmem:[#allocation2 + $0x170] sm:$0xff]
        %v7650 = vld [vmem:[#allocation2 + $0x178] sm:$0xff]
        %v7651 = vld [vmem:[#allocation2 + $0x180] sm:$0xff]
        %v7652 = vld [vmem:[#allocation2 + $0x188] sm:$0xff]
        %v7653 = vld [vmem:[#allocation2 + $0x190] sm:$0xff]
        %v7654 = vld [vmem:[#allocation2 + $0x198] sm:$0xff]
        %v7655 = vld [vmem:[#allocation2 + $0x1a0] sm:$0xff]
        %v7656 = vld [vmem:[#allocation2 + $0x1a8] sm:$0xff]
        %v7657 = vld [vmem:[#allocation2 + $0x1b0] sm:$0xff]
        %v7658 = vld [vmem:[#allocation2 + $0x1b8] sm:$0xff]
        %v7659 = vld [vmem:[#allocation2 + $0x1c0] sm:$0xff]
        %v7660 = vld [vmem:[#allocation2 + $0x1c8] sm:$0xff]
        %v7661 = vld [vmem:[#allocation2 + $0x1d0] sm:$0xff]
        %v7662 = vld [vmem:[#allocation2 + $0x1d8] sm:$0xff]
        %v7663 = vld [vmem:[#allocation2 + $0x1e0] sm:$0xff]
        %v7664 = vld [vmem:[#allocation2 + $0x1e8] sm:$0xff]
        %v7665 = vld [vmem:[#allocation2 + $0x1f0] sm:$0xff]
        %v7666 = vld [vmem:[#allocation2 + $0x1f8] sm:$0xff]
        %v7667 = vadd.f32 %v7603, %v7445
        %v7668 = vadd.f32 %v7604, %v7447
        %v7669 = vadd.f32 %v7605, %v7449
        %v7670 = vadd.f32 %v7606, %v7451
        %v7671 = vadd.f32 %v7607, %v7455
        %v7672 = vadd.f32 %v7608, %v7457
        %v7673 = vadd.f32 %v7609, %v7459
        %v7674 = vadd.f32 %v7610, %v7461
        %v7675 = vadd.f32 %v7611, %v7465
        %v7676 = vadd.f32 %v7612, %v7467
        %v7677 = vadd.f32 %v7613, %v7469
        %v7678 = vadd.f32 %v7614, %v7471
        %v7679 = vadd.f32 %v7615, %v7475
        %v7680 = vadd.f32 %v7616, %v7477
        %v7681 = vadd.f32 %v7617, %v7479
        %v7682 = vadd.f32 %v7618, %v7481
        %v7683 = vadd.f32 %v7619, %v7485
        %v7684 = vadd.f32 %v7620, %v7487
        %v7685 = vadd.f32 %v7621, %v7489
        %v7686 = vadd.f32 %v7622, %v7491
        %v7687 = vadd.f32 %v7623, %v7495
        %v7688 = vadd.f32 %v7624, %v7497
        %v7689 = vadd.f32 %v7625, %v7499
        %v7690 = vadd.f32 %v7626, %v7501
        %v7691 = vadd.f32 %v7627, %v7505
        %v7692 = vadd.f32 %v7628, %v7507
        %v7693 = vadd.f32 %v7629, %v7509
        %v7694 = vadd.f32 %v7630, %v7511
        %v7695 = vadd.f32 %v7631, %v7515
        %v7696 = vadd.f32 %v7632, %v7517
        %v7697 = vadd.f32 %v7633, %v7519
        %v7698 = vadd.f32 %v7634, %v7521
        %v7699 = vadd.f32 %v7635, %v7525
        %v7700 = vadd.f32 %v7636, %v7527
        %v7701 = vadd.f32 %v7637, %v7529
        %v7702 = vadd.f32 %v7638, %v7531
        %v7703 = vadd.f32 %v7639, %v7535
        %v7704 = vadd.f32 %v7640, %v7537
        %v7705 = vadd.f32 %v7641, %v7539
        %v7706 = vadd.f32 %v7642, %v7541
        %v7707 = vadd.f32 %v7643, %v7545
        %v7708 = vadd.f32 %v7644, %v7547
        %v7709 = vadd.f32 %v7645, %v7549
        %v7710 = vadd.f32 %v7646, %v7551
        %v7711 = vadd.f32 %v7647, %v7555
        %v7712 = vadd.f32 %v7648, %v7557
        %v7713 = vadd.f32 %v7649, %v7559
        %v7714 = vadd.f32 %v7650, %v7561
        %v7715 = vadd.f32 %v7651, %v7565
        %v7716 = vadd.f32 %v7652, %v7567
        %v7717 = vadd.f32 %v7653, %v7569
        %v7718 = vadd.f32 %v7654, %v7571
        %v7719 = vadd.f32 %v7655, %v7575
        %v7720 = vadd.f32 %v7656, %v7577
        %v7721 = vadd.f32 %v7657, %v7579
        %v7722 = vadd.f32 %v7658, %v7581
        %v7723 = vadd.f32 %v7659, %v7585
        %v7724 = vadd.f32 %v7660, %v7587
        %v7725 = vadd.f32 %v7661, %v7589
        %v7726 = vadd.f32 %v7662, %v7591
        %v7727 = vadd.f32 %v7663, %v7595
        %v7728 = vadd.f32 %v7664, %v7597
        %v7729 = vadd.f32 %v7665, %v7599
        %v7730 = vadd.f32 %v7666, %v7601
        %7731 = vst [vmem:[#allocation2] sm:$0xff] %v7667
        %7732 = vst [vmem:[#allocation2 + $0x8] sm:$0xff] %v7668
        %7733 = vst [vmem:[#allocation2 + $0x10] sm:$0xff] %v7669
        %7734 = vst [vmem:[#allocation2 + $0x18] sm:$0xff] %v7670
        %7735 = vst [vmem:[#allocation2 + $0x20] sm:$0xff] %v7671
        %7736 = vst [vmem:[#allocation2 + $0x28] sm:$0xff] %v7672
        %7737 = vst [vmem:[#allocation2 + $0x30] sm:$0xff] %v7673
        %7738 = vst [vmem:[#allocation2 + $0x38] sm:$0xff] %v7674
        %7739 = vst [vmem:[#allocation2 + $0x40] sm:$0xff] %v7675
        %7740 = vst [vmem:[#allocation2 + $0x48] sm:$0xff] %v7676
        %7741 = vst [vmem:[#allocation2 + $0x50] sm:$0xff] %v7677
        %7742 = vst [vmem:[#allocation2 + $0x58] sm:$0xff] %v7678
        %7743 = vst [vmem:[#allocation2 + $0x60] sm:$0xff] %v7679
        %7744 = vst [vmem:[#allocation2 + $0x68] sm:$0xff] %v7680
        %7745 = vst [vmem:[#allocation2 + $0x70] sm:$0xff] %v7681
        %7746 = vst [vmem:[#allocation2 + $0x78] sm:$0xff] %v7682
        %7747 = vst [vmem:[#allocation2 + $0x80] sm:$0xff] %v7683
        %7748 = vst [vmem:[#allocation2 + $0x88] sm:$0xff] %v7684
        %7749 = vst [vmem:[#allocation2 + $0x90] sm:$0xff] %v7685
        %7750 = vst [vmem:[#allocation2 + $0x98] sm:$0xff] %v7686
        %7751 = vst [vmem:[#allocation2 + $0xa0] sm:$0xff] %v7687
        %7752 = vst [vmem:[#allocation2 + $0xa8] sm:$0xff] %v7688
        %7753 = vst [vmem:[#allocation2 + $0xb0] sm:$0xff] %v7689
        %7754 = vst [vmem:[#allocation2 + $0xb8] sm:$0xff] %v7690
        %7755 = vst [vmem:[#allocation2 + $0xc0] sm:$0xff] %v7691
        %7756 = vst [vmem:[#allocation2 + $0xc8] sm:$0xff] %v7692
        %7757 = vst [vmem:[#allocation2 + $0xd0] sm:$0xff] %v7693
        %7758 = vst [vmem:[#allocation2 + $0xd8] sm:$0xff] %v7694
        %7759 = vst [vmem:[#allocation2 + $0xe0] sm:$0xff] %v7695
        %7760 = vst [vmem:[#allocation2 + $0xe8] sm:$0xff] %v7696
        %7761 = vst [vmem:[#allocation2 + $0xf0] sm:$0xff] %v7697
        %7762 = vst [vmem:[#allocation2 + $0xf8] sm:$0xff] %v7698
        %7763 = vst [vmem:[#allocation2 + $0x100] sm:$0xff] %v7699
        %7764 = vst [vmem:[#allocation2 + $0x108] sm:$0xff] %v7700
        %7765 = vst [vmem:[#allocation2 + $0x110] sm:$0xff] %v7701
        %7766 = vst [vmem:[#allocation2 + $0x118] sm:$0xff] %v7702
        %7767 = vst [vmem:[#allocation2 + $0x120] sm:$0xff] %v7703
        %7768 = vst [vmem:[#allocation2 + $0x128] sm:$0xff] %v7704
        %7769 = vst [vmem:[#allocation2 + $0x130] sm:$0xff] %v7705
        %7770 = vst [vmem:[#allocation2 + $0x138] sm:$0xff] %v7706
        %7771 = vst [vmem:[#allocation2 + $0x140] sm:$0xff] %v7707
        %7772 = vst [vmem:[#allocation2 + $0x148] sm:$0xff] %v7708
        %7773 = vst [vmem:[#allocation2 + $0x150] sm:$0xff] %v7709
        %7774 = vst [vmem:[#allocation2 + $0x158] sm:$0xff] %v7710
        %7775 = vst [vmem:[#allocation2 + $0x160] sm:$0xff] %v7711
        %7776 = vst [vmem:[#allocation2 + $0x168] sm:$0xff] %v7712
        %7777 = vst [vmem:[#allocation2 + $0x170] sm:$0xff] %v7713
        %7778 = vst [vmem:[#allocation2 + $0x178] sm:$0xff] %v7714
        %7779 = vst [vmem:[#allocation2 + $0x180] sm:$0xff] %v7715
        %7780 = vst [vmem:[#allocation2 + $0x188] sm:$0xff] %v7716
        %7781 = vst [vmem:[#allocation2 + $0x190] sm:$0xff] %v7717
        %7782 = vst [vmem:[#allocation2 + $0x198] sm:$0xff] %v7718
        %7783 = vst [vmem:[#allocation2 + $0x1a0] sm:$0xff] %v7719
        %7784 = vst [vmem:[#allocation2 + $0x1a8] sm:$0xff] %v7720
        %7785 = vst [vmem:[#allocation2 + $0x1b0] sm:$0xff] %v7721
        %7786 = vst [vmem:[#allocation2 + $0x1b8] sm:$0xff] %v7722
        %7787 = vst [vmem:[#allocation2 + $0x1c0] sm:$0xff] %v7723
        %7788 = vst [vmem:[#allocation2 + $0x1c8] sm:$0xff] %v7724
        %7789 = vst [vmem:[#allocation2 + $0x1d0] sm:$0xff] %v7725
        %7790 = vst [vmem:[#allocation2 + $0x1d8] sm:$0xff] %v7726
        %7791 = vst [vmem:[#allocation2 + $0x1e0] sm:$0xff] %v7727
        %7792 = vst [vmem:[#allocation2 + $0x1e8] sm:$0xff] %v7728
        %7793 = vst [vmem:[#allocation2 + $0x1f0] sm:$0xff] %v7729
        %7794 = vst [vmem:[#allocation2 + $0x1f8] sm:$0xff] %v7730
        %v7795 = vld [vmem:[%s225] sm:$0xf]
        %v7796 = vld [vmem:[#allocation2] sm:$0xff]
        %v7797 = vld [vmem:[#allocation2 + $0x8] sm:$0xff]
        %v7798 = vld [vmem:[#allocation2 + $0x10] sm:$0xff]
        %v7799 = vld [vmem:[#allocation2 + $0x18] sm:$0xff]
        %v7800 = vld [vmem:[#allocation2 + $0x20] sm:$0xff]
        %v7801 = vld [vmem:[#allocation2 + $0x28] sm:$0xff]
        %v7802 = vld [vmem:[#allocation2 + $0x30] sm:$0xff]
        %v7803 = vld [vmem:[#allocation2 + $0x38] sm:$0xff]
        %v7804 = vld [vmem:[#allocation2 + $0x40] sm:$0xff]
        %v7805 = vld [vmem:[#allocation2 + $0x48] sm:$0xff]
        %v7806 = vld [vmem:[#allocation2 + $0x50] sm:$0xff]
        %v7807 = vld [vmem:[#allocation2 + $0x58] sm:$0xff]
        %v7808 = vld [vmem:[#allocation2 + $0x60] sm:$0xff]
        %v7809 = vld [vmem:[#allocation2 + $0x68] sm:$0xff]
        %v7810 = vld [vmem:[#allocation2 + $0x70] sm:$0xff]
        %v7811 = vld [vmem:[#allocation2 + $0x78] sm:$0xff]
        %v7812 = vld [vmem:[#allocation2 + $0x80] sm:$0xff]
        %v7813 = vld [vmem:[#allocation2 + $0x88] sm:$0xff]
        %v7814 = vld [vmem:[#allocation2 + $0x90] sm:$0xff]
        %v7815 = vld [vmem:[#allocation2 + $0x98] sm:$0xff]
        %v7816 = vld [vmem:[#allocation2 + $0xa0] sm:$0xff]
        %v7817 = vld [vmem:[#allocation2 + $0xa8] sm:$0xff]
        %v7818 = vld [vmem:[#allocation2 + $0xb0] sm:$0xff]
        %v7819 = vld [vmem:[#allocation2 + $0xb8] sm:$0xff]
        %v7820 = vld [vmem:[#allocation2 + $0xc0] sm:$0xff]
        %v7821 = vld [vmem:[#allocation2 + $0xc8] sm:$0xff]
        %v7822 = vld [vmem:[#allocation2 + $0xd0] sm:$0xff]
        %v7823 = vld [vmem:[#allocation2 + $0xd8] sm:$0xff]
        %v7824 = vld [vmem:[#allocation2 + $0xe0] sm:$0xff]
        %v7825 = vld [vmem:[#allocation2 + $0xe8] sm:$0xff]
        %v7826 = vld [vmem:[#allocation2 + $0xf0] sm:$0xff]
        %v7827 = vld [vmem:[#allocation2 + $0xf8] sm:$0xff]
        %v7828 = vld [vmem:[#allocation2 + $0x100] sm:$0xff]
        %v7829 = vld [vmem:[#allocation2 + $0x108] sm:$0xff]
        %v7830 = vld [vmem:[#allocation2 + $0x110] sm:$0xff]
        %v7831 = vld [vmem:[#allocation2 + $0x118] sm:$0xff]
        %v7832 = vld [vmem:[#allocation2 + $0x120] sm:$0xff]
        %v7833 = vld [vmem:[#allocation2 + $0x128] sm:$0xff]
        %v7834 = vld [vmem:[#allocation2 + $0x130] sm:$0xff]
        %v7835 = vld [vmem:[#allocation2 + $0x138] sm:$0xff]
        %v7836 = vld [vmem:[#allocation2 + $0x140] sm:$0xff]
        %v7837 = vld [vmem:[#allocation2 + $0x148] sm:$0xff]
        %v7838 = vld [vmem:[#allocation2 + $0x150] sm:$0xff]
        %v7839 = vld [vmem:[#allocation2 + $0x158] sm:$0xff]
        %v7840 = vld [vmem:[#allocation2 + $0x160] sm:$0xff]
        %v7841 = vld [vmem:[#allocation2 + $0x168] sm:$0xff]
        %v7842 = vld [vmem:[#allocation2 + $0x170] sm:$0xff]
        %v7843 = vld [vmem:[#allocation2 + $0x178] sm:$0xff]
        %v7844 = vld [vmem:[#allocation2 + $0x180] sm:$0xff]
        %v7845 = vld [vmem:[#allocation2 + $0x188] sm:$0xff]
        %v7846 = vld [vmem:[#allocation2 + $0x190] sm:$0xff]
        %v7847 = vld [vmem:[#allocation2 + $0x198] sm:$0xff]
        %v7848 = vld [vmem:[#allocation2 + $0x1a0] sm:$0xff]
        %v7849 = vld [vmem:[#allocation2 + $0x1a8] sm:$0xff]
        %v7850 = vld [vmem:[#allocation2 + $0x1b0] sm:$0xff]
        %v7851 = vld [vmem:[#allocation2 + $0x1b8] sm:$0xff]
        %v7852 = vld [vmem:[#allocation2 + $0x1c0] sm:$0xff]
        %v7853 = vld [vmem:[#allocation2 + $0x1c8] sm:$0xff]
        %v7854 = vld [vmem:[#allocation2 + $0x1d0] sm:$0xff]
        %v7855 = vld [vmem:[#allocation2 + $0x1d8] sm:$0xff]
        %v7856 = vld [vmem:[#allocation2 + $0x1e0] sm:$0xff]
        %v7857 = vld [vmem:[#allocation2 + $0x1e8] sm:$0xff]
        %v7858 = vld [vmem:[#allocation2 + $0x1f0] sm:$0xff]
        %v7859 = vld [vmem:[#allocation2 + $0x1f8] sm:$0xff]
        %v7861 = vlaneseq
        %v7862 = vshrl.u32 %v7861, 7
        %v7863 = vsub.s32 0, %v7862
        %v7864 = vrot.slane %v7795, %v7863
        %v7865 = vlaneseq
        %v7866 = vshrl.u32 %v7865, 7
        %v7867 = vsub.s32 2, %v7866
        %v7868 = vrot.slane %v7795, %v7867
        %v7871 = vlaneseq
        %v7872 = vshrl.u32 %v7871, 7
        %v7873 = vsub.s32 0, %v7872
        %v7874 = vrot.slane %v7864, %v7873
        %v7875 = vlaneseq
        %v7876 = vshrl.u32 %v7875, 7
        %v7877 = vsub.s32 0, %v7876
        %v7878 = vrot.slane %v7868, %v7877
        %v7879 = vmul.f32 %v7796, %v7874
        %v7880 = vmul.f32 %v7797, %v7878
        %v7881 = vmul.f32 %v7798, %v7874
        %v7882 = vmul.f32 %v7799, %v7878
        %v7883 = vmul.f32 %v7800, %v7874
        %v7884 = vmul.f32 %v7801, %v7878
        %v7885 = vmul.f32 %v7802, %v7874
        %v7886 = vmul.f32 %v7803, %v7878
        %v7887 = vmul.f32 %v7804, %v7874
        %v7888 = vmul.f32 %v7805, %v7878
        %v7889 = vmul.f32 %v7806, %v7874
        %v7890 = vmul.f32 %v7807, %v7878
        %v7891 = vmul.f32 %v7808, %v7874
        %v7892 = vmul.f32 %v7809, %v7878
        %v7893 = vmul.f32 %v7810, %v7874
        %v7894 = vmul.f32 %v7811, %v7878
        %v7895 = vmul.f32 %v7812, %v7874
        %v7896 = vmul.f32 %v7813, %v7878
        %v7897 = vmul.f32 %v7814, %v7874
        %v7898 = vmul.f32 %v7815, %v7878
        %v7899 = vmul.f32 %v7816, %v7874
        %v7900 = vmul.f32 %v7817, %v7878
        %v7901 = vmul.f32 %v7818, %v7874
        %v7902 = vmul.f32 %v7819, %v7878
        %v7903 = vmul.f32 %v7820, %v7874
        %v7904 = vmul.f32 %v7821, %v7878
        %v7905 = vmul.f32 %v7822, %v7874
        %v7906 = vmul.f32 %v7823, %v7878
        %v7907 = vmul.f32 %v7824, %v7874
        %v7908 = vmul.f32 %v7825, %v7878
        %v7909 = vmul.f32 %v7826, %v7874
        %v7910 = vmul.f32 %v7827, %v7878
        %v7911 = vmul.f32 %v7828, %v7874
        %v7912 = vmul.f32 %v7829, %v7878
        %v7913 = vmul.f32 %v7830, %v7874
        %v7914 = vmul.f32 %v7831, %v7878
        %v7915 = vmul.f32 %v7832, %v7874
        %v7916 = vmul.f32 %v7833, %v7878
        %v7917 = vmul.f32 %v7834, %v7874
        %v7918 = vmul.f32 %v7835, %v7878
        %v7919 = vmul.f32 %v7836, %v7874
        %v7920 = vmul.f32 %v7837, %v7878
        %v7921 = vmul.f32 %v7838, %v7874
        %v7922 = vmul.f32 %v7839, %v7878
        %v7923 = vmul.f32 %v7840, %v7874
        %v7924 = vmul.f32 %v7841, %v7878
        %v7925 = vmul.f32 %v7842, %v7874
        %v7926 = vmul.f32 %v7843, %v7878
        %v7927 = vmul.f32 %v7844, %v7874
        %v7928 = vmul.f32 %v7845, %v7878
        %v7929 = vmul.f32 %v7846, %v7874
        %v7930 = vmul.f32 %v7847, %v7878
        %v7931 = vmul.f32 %v7848, %v7874
        %v7932 = vmul.f32 %v7849, %v7878
        %v7933 = vmul.f32 %v7850, %v7874
        %v7934 = vmul.f32 %v7851, %v7878
        %v7935 = vmul.f32 %v7852, %v7874
        %v7936 = vmul.f32 %v7853, %v7878
        %v7937 = vmul.f32 %v7854, %v7874
        %v7938 = vmul.f32 %v7855, %v7878
        %v7939 = vmul.f32 %v7856, %v7874
        %v7940 = vmul.f32 %v7857, %v7878
        %v7941 = vmul.f32 %v7858, %v7874
        %v7942 = vmul.f32 %v7859, %v7878
        %v7943 = vlaneseq
        %v7944 = vshrl.u32 %v7943, 7
        %v7945 = vsub.s32 1, %v7944
        %v7946 = vrot.slane %v7795, %v7945
        %v7947 = vlaneseq
        %v7948 = vshrl.u32 %v7947, 7
        %v7949 = vsub.s32 3, %v7948
        %v7950 = vrot.slane %v7795, %v7949
        %v7953 = vlaneseq
        %v7954 = vshrl.u32 %v7953, 7
        %v7955 = vsub.s32 1, %v7954
        %v7956 = vrot.slane %v7946, %v7955
        %v7957 = vlaneseq
        %v7958 = vshrl.u32 %v7957, 7
        %v7959 = vsub.s32 1, %v7958
        %v7960 = vrot.slane %v7950, %v7959
        %v7961 = vadd.f32 %v7879, %v7956
        %v7962 = vadd.f32 %v7880, %v7960
        %v7963 = vadd.f32 %v7881, %v7956
        %v7964 = vadd.f32 %v7882, %v7960
        %v7965 = vadd.f32 %v7883, %v7956
        %v7966 = vadd.f32 %v7884, %v7960
        %v7967 = vadd.f32 %v7885, %v7956
        %v7968 = vadd.f32 %v7886, %v7960
        %v7969 = vadd.f32 %v7887, %v7956
        %v7970 = vadd.f32 %v7888, %v7960
        %v7971 = vadd.f32 %v7889, %v7956
        %v7972 = vadd.f32 %v7890, %v7960
        %v7973 = vadd.f32 %v7891, %v7956
        %v7974 = vadd.f32 %v7892, %v7960
        %v7975 = vadd.f32 %v7893, %v7956
        %v7976 = vadd.f32 %v7894, %v7960
        %v7977 = vadd.f32 %v7895, %v7956
        %v7978 = vadd.f32 %v7896, %v7960
        %v7979 = vadd.f32 %v7897, %v7956
        %v7980 = vadd.f32 %v7898, %v7960
        %v7981 = vadd.f32 %v7899, %v7956
        %v7982 = vadd.f32 %v7900, %v7960
        %v7983 = vadd.f32 %v7901, %v7956
        %v7984 = vadd.f32 %v7902, %v7960
        %v7985 = vadd.f32 %v7903, %v7956
        %v7986 = vadd.f32 %v7904, %v7960
        %v7987 = vadd.f32 %v7905, %v7956
        %v7988 = vadd.f32 %v7906, %v7960
        %v7989 = vadd.f32 %v7907, %v7956
        %v7990 = vadd.f32 %v7908, %v7960
        %v7991 = vadd.f32 %v7909, %v7956
        %v7992 = vadd.f32 %v7910, %v7960
        %v7993 = vadd.f32 %v7911, %v7956
        %v7994 = vadd.f32 %v7912, %v7960
        %v7995 = vadd.f32 %v7913, %v7956
        %v7996 = vadd.f32 %v7914, %v7960
        %v7997 = vadd.f32 %v7915, %v7956
        %v7998 = vadd.f32 %v7916, %v7960
        %v7999 = vadd.f32 %v7917, %v7956
        %v8000 = vadd.f32 %v7918, %v7960
        %v8001 = vadd.f32 %v7919, %v7956
        %v8002 = vadd.f32 %v7920, %v7960
        %v8003 = vadd.f32 %v7921, %v7956
        %v8004 = vadd.f32 %v7922, %v7960
        %v8005 = vadd.f32 %v7923, %v7956
        %v8006 = vadd.f32 %v7924, %v7960
        %v8007 = vadd.f32 %v7925, %v7956
        %v8008 = vadd.f32 %v7926, %v7960
        %v8009 = vadd.f32 %v7927, %v7956
        %v8010 = vadd.f32 %v7928, %v7960
        %v8011 = vadd.f32 %v7929, %v7956
        %v8012 = vadd.f32 %v7930, %v7960
        %v8013 = vadd.f32 %v7931, %v7956
        %v8014 = vadd.f32 %v7932, %v7960
        %v8015 = vadd.f32 %v7933, %v7956
        %v8016 = vadd.f32 %v7934, %v7960
        %v8017 = vadd.f32 %v7935, %v7956
        %v8018 = vadd.f32 %v7936, %v7960
        %v8019 = vadd.f32 %v7937, %v7956
        %v8020 = vadd.f32 %v7938, %v7960
        %v8021 = vadd.f32 %v7939, %v7956
        %v8022 = vadd.f32 %v7940, %v7960
        %v8023 = vadd.f32 %v7941, %v7956
        %v8024 = vadd.f32 %v7942, %v7960
        %v8025 = vmax.f32 %v7961, 0.0
        %v8026 = vmax.f32 %v7962, 0.0
        %v8027 = vmax.f32 %v7963, 0.0
        %v8028 = vmax.f32 %v7964, 0.0
        %v8029 = vmax.f32 %v7965, 0.0
        %v8030 = vmax.f32 %v7966, 0.0
        %v8031 = vmax.f32 %v7967, 0.0
        %v8032 = vmax.f32 %v7968, 0.0
        %v8033 = vmax.f32 %v7969, 0.0
        %v8034 = vmax.f32 %v7970, 0.0
        %v8035 = vmax.f32 %v7971, 0.0
        %v8036 = vmax.f32 %v7972, 0.0
        %v8037 = vmax.f32 %v7973, 0.0
        %v8038 = vmax.f32 %v7974, 0.0
        %v8039 = vmax.f32 %v7975, 0.0
        %v8040 = vmax.f32 %v7976, 0.0
        %v8041 = vmax.f32 %v7977, 0.0
        %v8042 = vmax.f32 %v7978, 0.0
        %v8043 = vmax.f32 %v7979, 0.0
        %v8044 = vmax.f32 %v7980, 0.0
        %v8045 = vmax.f32 %v7981, 0.0
        %v8046 = vmax.f32 %v7982, 0.0
        %v8047 = vmax.f32 %v7983, 0.0
        %v8048 = vmax.f32 %v7984, 0.0
        %v8049 = vmax.f32 %v7985, 0.0
        %v8050 = vmax.f32 %v7986, 0.0
        %v8051 = vmax.f32 %v7987, 0.0
        %v8052 = vmax.f32 %v7988, 0.0
        %v8053 = vmax.f32 %v7989, 0.0
        %v8054 = vmax.f32 %v7990, 0.0
        %v8055 = vmax.f32 %v7991, 0.0
        %v8056 = vmax.f32 %v7992, 0.0
        %v8057 = vmax.f32 %v7993, 0.0
        %v8058 = vmax.f32 %v7994, 0.0
        %v8059 = vmax.f32 %v7995, 0.0
        %v8060 = vmax.f32 %v7996, 0.0
        %v8061 = vmax.f32 %v7997, 0.0
        %v8062 = vmax.f32 %v7998, 0.0
        %v8063 = vmax.f32 %v7999, 0.0
        %v8064 = vmax.f32 %v8000, 0.0
        %v8065 = vmax.f32 %v8001, 0.0
        %v8066 = vmax.f32 %v8002, 0.0
        %v8067 = vmax.f32 %v8003, 0.0
        %v8068 = vmax.f32 %v8004, 0.0
        %v8069 = vmax.f32 %v8005, 0.0
        %v8070 = vmax.f32 %v8006, 0.0
        %v8071 = vmax.f32 %v8007, 0.0
        %v8072 = vmax.f32 %v8008, 0.0
        %v8073 = vmax.f32 %v8009, 0.0
        %v8074 = vmax.f32 %v8010, 0.0
        %v8075 = vmax.f32 %v8011, 0.0
        %v8076 = vmax.f32 %v8012, 0.0
        %v8077 = vmax.f32 %v8013, 0.0
        %v8078 = vmax.f32 %v8014, 0.0
        %v8079 = vmax.f32 %v8015, 0.0
        %v8080 = vmax.f32 %v8016, 0.0
        %v8081 = vmax.f32 %v8017, 0.0
        %v8082 = vmax.f32 %v8018, 0.0
        %v8083 = vmax.f32 %v8019, 0.0
        %v8084 = vmax.f32 %v8020, 0.0
        %v8085 = vmax.f32 %v8021, 0.0
        %v8086 = vmax.f32 %v8022, 0.0
        %v8087 = vmax.f32 %v8023, 0.0
        %v8088 = vmax.f32 %v8024, 0.0
        %v8089 = vpack.c.bf16 %v8027, %v8025
        %v8090 = vpack.c.bf16 %v8028, %v8026
        %v8091 = vpack.c.bf16 %v8031, %v8029
        %v8092 = vpack.c.bf16 %v8032, %v8030
        %v8093 = vpack.c.bf16 %v8035, %v8033
        %v8094 = vpack.c.bf16 %v8036, %v8034
        %v8095 = vpack.c.bf16 %v8039, %v8037
        %v8096 = vpack.c.bf16 %v8040, %v8038
        %v8097 = vpack.c.bf16 %v8043, %v8041
        %v8098 = vpack.c.bf16 %v8044, %v8042
        %v8099 = vpack.c.bf16 %v8047, %v8045
        %v8100 = vpack.c.bf16 %v8048, %v8046
        %v8101 = vpack.c.bf16 %v8051, %v8049
        %v8102 = vpack.c.bf16 %v8052, %v8050
        %v8103 = vpack.c.bf16 %v8055, %v8053
        %v8104 = vpack.c.bf16 %v8056, %v8054
        %v8105 = vpack.c.bf16 %v8059, %v8057
        %v8106 = vpack.c.bf16 %v8060, %v8058
        %v8107 = vpack.c.bf16 %v8063, %v8061
        %v8108 = vpack.c.bf16 %v8064, %v8062
        %v8109 = vpack.c.bf16 %v8067, %v8065
        %v8110 = vpack.c.bf16 %v8068, %v8066
        %v8111 = vpack.c.bf16 %v8071, %v8069
        %v8112 = vpack.c.bf16 %v8072, %v8070
        %v8113 = vpack.c.bf16 %v8075, %v8073
        %v8114 = vpack.c.bf16 %v8076, %v8074
        %v8115 = vpack.c.bf16 %v8079, %v8077
        %v8116 = vpack.c.bf16 %v8080, %v8078
        %v8117 = vpack.c.bf16 %v8083, %v8081
        %v8118 = vpack.c.bf16 %v8084, %v8082
        %v8119 = vpack.c.bf16 %v8087, %v8085
        %v8120 = vpack.c.bf16 %v8088, %v8086
        %v8153 = vunpack.c.l.b16 %v8089
        %v8154 = vunpack.c.l.b16 %v8090
        %v8155 = vunpack.c.h.b16 %v8089
        %v8156 = vunpack.c.h.b16 %v8090
        %v8157 = vunpack.c.l.b16 %v8091
        %v8158 = vunpack.c.l.b16 %v8092
        %v8159 = vunpack.c.h.b16 %v8091
        %v8160 = vunpack.c.h.b16 %v8092
        %v8161 = vunpack.c.l.b16 %v8093
        %v8162 = vunpack.c.l.b16 %v8094
        %v8163 = vunpack.c.h.b16 %v8093
        %v8164 = vunpack.c.h.b16 %v8094
        %v8165 = vunpack.c.l.b16 %v8095
        %v8166 = vunpack.c.l.b16 %v8096
        %v8167 = vunpack.c.h.b16 %v8095
        %v8168 = vunpack.c.h.b16 %v8096
        %v8169 = vunpack.c.l.b16 %v8097
        %v8170 = vunpack.c.l.b16 %v8098
        %v8171 = vunpack.c.h.b16 %v8097
        %v8172 = vunpack.c.h.b16 %v8098
        %v8173 = vunpack.c.l.b16 %v8099
        %v8174 = vunpack.c.l.b16 %v8100
        %v8175 = vunpack.c.h.b16 %v8099
        %v8176 = vunpack.c.h.b16 %v8100
        %v8177 = vunpack.c.l.b16 %v8101
        %v8178 = vunpack.c.l.b16 %v8102
        %v8179 = vunpack.c.h.b16 %v8101
        %v8180 = vunpack.c.h.b16 %v8102
        %v8181 = vunpack.c.l.b16 %v8103
        %v8182 = vunpack.c.l.b16 %v8104
        %v8183 = vunpack.c.h.b16 %v8103
        %v8184 = vunpack.c.h.b16 %v8104
        %v8185 = vunpack.c.l.b16 %v8105
        %v8186 = vunpack.c.l.b16 %v8106
        %v8187 = vunpack.c.h.b16 %v8105
        %v8188 = vunpack.c.h.b16 %v8106
        %v8189 = vunpack.c.l.b16 %v8107
        %v8190 = vunpack.c.l.b16 %v8108
        %v8191 = vunpack.c.h.b16 %v8107
        %v8192 = vunpack.c.h.b16 %v8108
        %v8193 = vunpack.c.l.b16 %v8109
        %v8194 = vunpack.c.l.b16 %v8110
        %v8195 = vunpack.c.h.b16 %v8109
        %v8196 = vunpack.c.h.b16 %v8110
        %v8197 = vunpack.c.l.b16 %v8111
        %v8198 = vunpack.c.l.b16 %v8112
        %v8199 = vunpack.c.h.b16 %v8111
        %v8200 = vunpack.c.h.b16 %v8112
        %v8201 = vunpack.c.l.b16 %v8113
        %v8202 = vunpack.c.l.b16 %v8114
        %v8203 = vunpack.c.h.b16 %v8113
        %v8204 = vunpack.c.h.b16 %v8114
        %v8205 = vunpack.c.l.b16 %v8115
        %v8206 = vunpack.c.l.b16 %v8116
        %v8207 = vunpack.c.h.b16 %v8115
        %v8208 = vunpack.c.h.b16 %v8116
        %v8209 = vunpack.c.l.b16 %v8117
        %v8210 = vunpack.c.l.b16 %v8118
        %v8211 = vunpack.c.h.b16 %v8117
        %v8212 = vunpack.c.h.b16 %v8118
        %v8213 = vunpack.c.l.b16 %v8119
        %v8214 = vunpack.c.l.b16 %v8120
        %v8215 = vunpack.c.h.b16 %v8119
        %v8216 = vunpack.c.h.b16 %v8120
        %v8217 = vpack.c.b16 %v8154, %v8153
        %v8218 = vpack.c.b16 %v8156, %v8155
        %v8219 = vpack.c.b16 %v8158, %v8157
        %v8220 = vpack.c.b16 %v8160, %v8159
        %v8221 = vpack.c.b16 %v8162, %v8161
        %v8222 = vpack.c.b16 %v8164, %v8163
        %v8223 = vpack.c.b16 %v8166, %v8165
        %v8224 = vpack.c.b16 %v8168, %v8167
        %v8225 = vpack.c.b16 %v8170, %v8169
        %v8226 = vpack.c.b16 %v8172, %v8171
        %v8227 = vpack.c.b16 %v8174, %v8173
        %v8228 = vpack.c.b16 %v8176, %v8175
        %v8229 = vpack.c.b16 %v8178, %v8177
        %v8230 = vpack.c.b16 %v8180, %v8179
        %v8231 = vpack.c.b16 %v8182, %v8181
        %v8232 = vpack.c.b16 %v8184, %v8183
        %v8233 = vpack.c.b16 %v8186, %v8185
        %v8234 = vpack.c.b16 %v8188, %v8187
        %v8235 = vpack.c.b16 %v8190, %v8189
        %v8236 = vpack.c.b16 %v8192, %v8191
        %v8237 = vpack.c.b16 %v8194, %v8193
        %v8238 = vpack.c.b16 %v8196, %v8195
        %v8239 = vpack.c.b16 %v8198, %v8197
        %v8240 = vpack.c.b16 %v8200, %v8199
        %v8241 = vpack.c.b16 %v8202, %v8201
        %v8242 = vpack.c.b16 %v8204, %v8203
        %v8243 = vpack.c.b16 %v8206, %v8205
        %v8244 = vpack.c.b16 %v8208, %v8207
        %v8245 = vpack.c.b16 %v8210, %v8209
        %v8246 = vpack.c.b16 %v8212, %v8211
        %v8247 = vpack.c.b16 %v8214, %v8213
        %v8248 = vpack.c.b16 %v8216, %v8215
        %8281 = vst [vmem:[%s209] sm:$0xff] %v8217
        %8282 = vst [vmem:[%s209 + $0x8] sm:$0xff] %v8218
        %8283 = vst [vmem:[%s209 + $0x10] sm:$0xff] %v8219
        %8284 = vst [vmem:[%s209 + $0x18] sm:$0xff] %v8220
        %8285 = vst [vmem:[%s209 + $0x20] sm:$0xff] %v8221
        %8286 = vst [vmem:[%s209 + $0x28] sm:$0xff] %v8222
        %8287 = vst [vmem:[%s209 + $0x30] sm:$0xff] %v8223
        %8288 = vst [vmem:[%s209 + $0x38] sm:$0xff] %v8224
        %8289 = vst [vmem:[%s209 + $0x40] sm:$0xff] %v8225
        %8290 = vst [vmem:[%s209 + $0x48] sm:$0xff] %v8226
        %8291 = vst [vmem:[%s209 + $0x50] sm:$0xff] %v8227
        %8292 = vst [vmem:[%s209 + $0x58] sm:$0xff] %v8228
        %8293 = vst [vmem:[%s209 + $0x60] sm:$0xff] %v8229
        %8294 = vst [vmem:[%s209 + $0x68] sm:$0xff] %v8230
        %8295 = vst [vmem:[%s209 + $0x70] sm:$0xff] %v8231
        %8296 = vst [vmem:[%s209 + $0x78] sm:$0xff] %v8232
        %8297 = vst [vmem:[%s209 + $0x80] sm:$0xff] %v8233
        %8298 = vst [vmem:[%s209 + $0x88] sm:$0xff] %v8234
        %8299 = vst [vmem:[%s209 + $0x90] sm:$0xff] %v8235
        %8300 = vst [vmem:[%s209 + $0x98] sm:$0xff] %v8236
        %8301 = vst [vmem:[%s209 + $0xa0] sm:$0xff] %v8237
        %8302 = vst [vmem:[%s209 + $0xa8] sm:$0xff] %v8238
        %8303 = vst [vmem:[%s209 + $0xb0] sm:$0xff] %v8239
        %8304 = vst [vmem:[%s209 + $0xb8] sm:$0xff] %v8240
        %8305 = vst [vmem:[%s209 + $0xc0] sm:$0xff] %v8241
        %8306 = vst [vmem:[%s209 + $0xc8] sm:$0xff] %v8242
        %8307 = vst [vmem:[%s209 + $0xd0] sm:$0xff] %v8243
        %8308 = vst [vmem:[%s209 + $0xd8] sm:$0xff] %v8244
        %8309 = vst [vmem:[%s209 + $0xe0] sm:$0xff] %v8245
        %8310 = vst [vmem:[%s209 + $0xe8] sm:$0xff] %v8246
        %8311 = vst [vmem:[%s209 + $0xf0] sm:$0xff] %v8247
        %8312 = vst [vmem:[%s209 + $0xf8] sm:$0xff] %v8248
        %s8313 = sand.u32 %s117, 1
        %s8314 = scalar_lea.sflag [#allocation5], %s8313
        %s8315 = sand.u32 %s117, 1
        %s8316 = smul.addr %s8315, 256
        %s8317 = scalar_lea.vmem [#allocation4], %s8316
        // Predicated region
        $region33: #{dilated_block_forward.1} parent=31 // pred_check
          %p8318 = pneg %p127
        $region34: #{dilated_block_forward.1} parent=31 // pred_check_branch
          %8320 = sbr.rel (%p8318) target = $region36
        $region35: #{dilated_block_forward.1} parent=31 // pred_region
          %s8321 = smul.u32 2, %s21
          %s8323 = ssub.s32 4096, 4096
          %8324 = vsyncadd %s8314, %s8323
          %s8325 = smul.addr %s22, 64
          %s8326 = sadd.s32 %s8321, %s8325
          %s8327 = smul.addr %s8326, 64
          %s8328 = scalar_lea.hbm %s3, %s8327
          %s8329 = sshll.u32 %s8317, 4
          %s8330 = int_to_ptr.vmem [resolvable:$true] %s8329
          %8335 = dma.vmem_to_hbm [thread:$0]  %s8330, 4096, %s8328, %s8314, 128, 128, 8
        $region36: #{dilated_block_forward.1} parent=31 // pred_fallthru
          _
      $region32: #{dilated_block_forward.1} parent=5 // pred_fallthru
        _
      %p8336 = scmp.le.s32.totalorder 2, %s12
      // Predicated region
      $region37: #{dilated_block_forward.1} parent=5 // pred_check
        %p8337 = pneg %p8336
      $region38: #{dilated_block_forward.1} parent=5 // pred_check_branch
        %8339 = sbr.rel (%p8337) target = $region40
      $region39: #{dilated_block_forward.1} parent=5 // pred_region
        %s8340 = ssub.s32 %s12, 2
        // Predicated region
        $region41: #{dilated_block_forward.1} parent=39 // pred_check
          %p8341 = pneg %p133
        $region42: #{dilated_block_forward.1} parent=39 // pred_check_branch
          %8343 = sbr.rel (%p8341) target = $region44
        $region43: #{dilated_block_forward.1} parent=39 // pred_region
          %s8344 = sand.u32 %s118, 1
          %s8345 = scalar_lea.sflag [#allocation5], %s8344
          %s8346 = sand.u32 %s118, 1
          %s8347 = smul.addr %s8346, 256
          %s8348 = scalar_lea.vmem [#allocation4], %s8347
          %8349 = dma.done %s8345, 4096
        $region44: #{dilated_block_forward.1} parent=39 // pred_fallthru
          _
      $region40: #{dilated_block_forward.1} parent=5 // pred_fallthru
        _
    $region6: #{dilated_block_forward.1} parent=1 // loop_footer
      %s16 = sadd.s32 1, %s12
    $region7: #{dilated_block_forward.1} parent=1 // loop_footer_branch
      %11 = sbr.rel target = $region3
    $region8: #{dilated_block_forward.1} parent=1 // loop_exit
      _
    %8350 = vsyncpa [#allocation5], 1
    %s8351 = scalar_lea.sflag [#allocation5], 1
    %8352 = vsyncpa %s8351, 1

</llo_original>
